<compile_context>
chip_gen: v5e
topology: v5e:2x2
jax: 0.10.0
libtpu: 0.0.40
codegen_flags: <defaults>
</compile_context>

<pallas_src>
import jax
import jax.numpy as jnp
from jax import lax
from jax.experimental import pallas as pl
from jax.experimental.pallas import tpu as pltpu

EPS = 1e-3  # BatchNorm2d(..., eps=0.001)


def _bn_kernel(x_ref, gamma_ref, beta_ref, o_ref):
    # x_ref: (TC, L) block — TC channels, full reduction axis L.
    x = x_ref[...]
    l = x.shape[1]
    inv_l = 1.0 / l
    # Per-channel batch statistics (biased variance, PyTorch BN training fwd).
    mean = jnp.sum(x, axis=1, keepdims=True) * inv_l
    centered = x - mean
    var = jnp.sum(centered * centered, axis=1, keepdims=True) * inv_l
    # Fold gamma into the scale while it is still (TC, 1) — one cheap
    # sublane-wide multiply instead of a second lane-wide multiply.
    scale = lax.rsqrt(var + EPS) * gamma_ref[...]
    o_ref[...] = centered * scale + beta_ref[...]


def _default_channel_tile(c):
    """Pick the channel tile: whole tensor in one grid step on single-TC
    chips (v5e/v6e); split channels across two grid steps on v7x so both
    TensorCores get work via dimension_semantics=("parallel",)."""
    try:
        kind = jax.devices()[0].device_kind.lower()
    except Exception:
        kind = ""
    if "v7" in kind and c % 2 == 0:
        return c // 2
    return c


def batchnorm2d_pallas(x_nchw, gamma, beta, *, channel_tile=None):
    """BatchNorm2d forward (training-mode batch stats) as a Pallas TPU kernel.

    x_nchw : (N, C, H, W) float32
    gamma  : (C,) float32
    beta   : (C,) float32
    """
    n, c, h, w = x_nchw.shape
    l = n * h * w

    if channel_tile is None:
        channel_tile = _default_channel_tile(c)
    assert c % channel_tile == 0, "channel count must divide by channel_tile"
    assert channel_tile % 8 == 0, "channel_tile must be a multiple of 8"

    # (N, C, H, W) -> (C, N*H*W).  With N == 1 this is a pure reshape.
    if n == 1:
        x_cl = x_nchw.reshape(c, l)
    else:
        x_cl = jnp.transpose(x_nchw, (1, 0, 2, 3)).reshape(c, l)
    gamma_c1 = gamma.reshape(c, 1).astype(jnp.float32)
    beta_c1 = beta.reshape(c, 1).astype(jnp.float32)

    grid = (c // channel_tile,)
    out_cl = pl.pallas_call(
        _bn_kernel,
        out_shape=jax.ShapeDtypeStruct((c, l), jnp.float32),
        grid_spec=pltpu.PrefetchScalarGridSpec(
            num_scalar_prefetch=0,
            grid=grid,
            in_specs=[
                pl.BlockSpec((channel_tile, l), lambda i: (i, 0)),
                pl.BlockSpec((channel_tile, 1), lambda i: (i, 0)),
                pl.BlockSpec((channel_tile, 1), lambda i: (i, 0)),
            ],
            out_specs=pl.BlockSpec((channel_tile, l), lambda i: (i, 0)),
        ),
        compiler_params=pltpu.CompilerParams(
            dimension_semantics=("parallel",)
        ),
    )(x_cl, gamma_c1, beta_c1)

    # (C, N*H*W) -> (N, C, H, W); pure reshape for N == 1.
    if n == 1:
        return out_cl.reshape(n, c, h, w)
    return jnp.transpose(out_cl.reshape(c, n, h, w), (1, 0, 2, 3))


def _reference_bn(x_nchw, gamma, beta):
    mean = jnp.mean(x_nchw, axis=(0, 2, 3), keepdims=True)
    var = jnp.mean((x_nchw - mean) ** 2, axis=(0, 2, 3), keepdims=True)
    g = gamma.reshape(1, -1, 1, 1)
    b = beta.reshape(1, -1, 1, 1)
    return (x_nchw - mean) * lax.rsqrt(var + EPS) * g + b


if __name__ == "__main__":
    key = jax.random.PRNGKey(0)
    kx, kg, kb = jax.random.split(key, 3)

    # Shapes implied by BatchNorm2d(1344) applied to [1, 1344, 14, 14].
    N, C, H, W = 1, 1344, 14, 14
    x = jax.random.normal(kx, (N, C, H, W), dtype=jnp.float32)
    # Deterministic affine parameters (PyTorch default is ones/zeros; random
    # values exercise the affine path while staying deterministic).
    gamma = 1.0 + 0.1 * jax.random.normal(kg, (C,), dtype=jnp.float32)
    beta = 0.1 * jax.random.normal(kb, (C,), dtype=jnp.float32)

    out = batchnorm2d_pallas(x, gamma, beta)
    out = jax.block_until_ready(out)

    ref = _reference_bn(x, gamma, beta)
    assert out.shape == (N, C, H, W)
    assert jnp.allclose(out, ref, atol=1e-4, rtol=1e-4), "mismatch vs reference"

    # TODO(synk): running_mean / running_var updates (track_running_stats) are
    # not produced; only the normalized forward output is computed.

    print("KERNEL_OK")
</pallas_src>

<mosaic_0001>
module attributes {stable_mosaic.version = 11 : i64} {
  func.func @_bn_kernel(%arg0: i32, %arg1: memref<1344x196xf32, #tpu.memory_space<vmem>>, %arg2: memref<1344x1xf32, #tpu.memory_space<vmem>>, %arg3: memref<1344x1xf32, #tpu.memory_space<vmem>>, %arg4: memref<1344x196xf32, #tpu.memory_space<vmem>>) attributes {dimension_semantics = [#tpu.dimension_semantics<parallel>], iteration_bounds = array<i64: 1>, scalar_prefetch = 0 : i64, scratch_operands = 0 : i64, tpu.core_type = #tpu.core_type<tc>, window_params = [{transform_indices = @transform_0, window_bounds = array<i64: 1344, 196>}, {transform_indices = @transform_1, window_bounds = array<i64: 1344, 1>}, {transform_indices = @transform_2, window_bounds = array<i64: 1344, 1>}, {transform_indices = @transform_3, window_bounds = array<i64: 1344, 196>}]} {
    %c0 = arith.constant 0 : index
    %c0_0 = arith.constant 0 : index
    %0 = vector.load %arg1[%c0, %c0_0] : memref<1344x196xf32, #tpu.memory_space<vmem>>, vector<1344x196xf32>
    %cst = arith.constant dense<0.000000e+00> : vector<1344xf32>
    %1 = vector.multi_reduction <add>, %0, %cst [1] : vector<1344x196xf32> to vector<1344xf32>
    %2 = vector.shape_cast %1 : vector<1344xf32> to vector<1344x1xf32>
    %cst_1 = arith.constant 0.00510204071 : f32
    %3 = vector.broadcast %cst_1 : f32 to vector<1344x1xf32>
    %4 = arith.mulf %2, %3 : vector<1344x1xf32>
    %5 = vector.broadcast %4 : vector<1344x1xf32> to vector<1344x196xf32>
    %6 = arith.subf %0, %5 : vector<1344x196xf32>
    %7 = arith.mulf %6, %6 : vector<1344x196xf32>
    %cst_2 = arith.constant dense<0.000000e+00> : vector<1344xf32>
    %8 = vector.multi_reduction <add>, %7, %cst_2 [1] : vector<1344x196xf32> to vector<1344xf32>
    %9 = vector.shape_cast %8 : vector<1344xf32> to vector<1344x1xf32>
    %cst_3 = arith.constant 0.00510204071 : f32
    %10 = vector.broadcast %cst_3 : f32 to vector<1344x1xf32>
    %11 = arith.mulf %9, %10 : vector<1344x1xf32>
    %cst_4 = arith.constant 1.000000e-03 : f32
    %12 = vector.broadcast %cst_4 : f32 to vector<1344x1xf32>
    %13 = arith.addf %11, %12 : vector<1344x1xf32>
    %14 = math.rsqrt %13 : vector<1344x1xf32>
    %c0_5 = arith.constant 0 : index
    %c0_6 = arith.constant 0 : index
    %15 = vector.load %arg2[%c0_5, %c0_6] : memref<1344x1xf32, #tpu.memory_space<vmem>>, vector<1344x1xf32>
    %16 = arith.mulf %14, %15 : vector<1344x1xf32>
    %17 = vector.broadcast %16 : vector<1344x1xf32> to vector<1344x196xf32>
    %18 = arith.mulf %6, %17 : vector<1344x196xf32>
    %c0_7 = arith.constant 0 : index
    %c0_8 = arith.constant 0 : index
    %19 = vector.load %arg3[%c0_7, %c0_8] : memref<1344x1xf32, #tpu.memory_space<vmem>>, vector<1344x1xf32>
    %20 = vector.broadcast %19 : vector<1344x1xf32> to vector<1344x196xf32>
    %21 = arith.addf %18, %20 : vector<1344x196xf32>
    %c0_9 = arith.constant 0 : index
    %c0_10 = arith.constant 0 : index
    %22 = vector.load %arg4[%c0_9, %c0_10] : memref<1344x196xf32, #tpu.memory_space<vmem>>, vector<1344x196xf32>
    tpu.vector_store %arg4[%c0_9, %c0_10], %21 {strides = array<i32>} : memref<1344x196xf32, #tpu.memory_space<vmem>>, vector<1344x196xf32>,
    return
  }
  func.func @transform_0(%arg0: i32) -> (i32, i32) {
    %c0_i32 = arith.constant 0 : i32
    %c0_i32_0 = arith.constant 0 : i32
    return %arg0, %c0_i32 : i32, i32
  }
  func.func @transform_1(%arg0: i32) -> (i32, i32) {
    %c0_i32 = arith.constant 0 : i32
    %c0_i32_0 = arith.constant 0 : i32
    return %arg0, %c0_i32 : i32, i32
  }
  func.func @transform_2(%arg0: i32) -> (i32, i32) {
    %c0_i32 = arith.constant 0 : i32
    %c0_i32_0 = arith.constant 0 : i32
    return %arg0, %c0_i32 : i32, i32
  }
  func.func @transform_3(%arg0: i32) -> (i32, i32) {
    %c0_i32 = arith.constant 0 : i32
    %c0_i32_0 = arith.constant 0 : i32
    return %arg0, %c0_i32 : i32, i32
  }
}

</mosaic_0001>

<llo_original>
// kernel: tpu_custom_call.1
$region0: #{tpu_custom_call.1}
  #allocation0 [shape = 'u32[]', space=smem, size = 0x4, offset = 0x4, fixed_abs, tag = 'smem constant byte address 0x4 - core index']
  #allocation1 [shape = 'u32[72,128]{1,0:T(1,128)}', space=vmem, size = 0x9000, scoped, tag = 'internal scratch']
  %s0 = inlined_call_operand.vmem [shape: f32[1344,196], index: 0, kind: input, shape index: {}]
  %s1 = inlined_call_operand.vmem [shape: f32[1344,1], index: 1, kind: input, shape index: {}]
  %s2 = inlined_call_operand.vmem [shape: f32[1344,1], index: 2, kind: input, shape index: {}]
  %s3 = inlined_call_operand.vmem [shape: f32[1344,196], index: 3, kind: output, shape index: {}]
  %s4 = sld [smem:[#allocation0]]
  $region22: #{tpu_custom_call.1} parent=0
    _
  %s6 = ssub.s32 1, %s4
  %s7 = scalar_select 0, %s6, %s4
  // Predicated region
  $region2: #{tpu_custom_call.1} parent=0 // pred_check
    _
  $region3: #{tpu_custom_call.1} parent=0 // pred_check_branch
    %9 = sbr.rel (0) target = $region5
  $region4: #{tpu_custom_call.1} parent=0 // pred_region
    _
  $region5: #{tpu_custom_call.1} parent=0 // pred_fallthru
    _
  // Predicated region
  $region6: #{tpu_custom_call.1} parent=0 // pred_check
    _
  $region7: #{tpu_custom_call.1} parent=0 // pred_check_branch
    %11 = sbr.rel (0) target = $region9
  $region8: #{tpu_custom_call.1} parent=0 // pred_region
    _
  $region9: #{tpu_custom_call.1} parent=0 // pred_fallthru
    _
  // Predicated region
  $region10: #{tpu_custom_call.1} parent=0 // pred_check
    _
  $region11: #{tpu_custom_call.1} parent=0 // pred_check_branch
    %13 = sbr.rel (0) target = $region13
  $region12: #{tpu_custom_call.1} parent=0 // pred_region
    _
  $region13: #{tpu_custom_call.1} parent=0 // pred_fallthru
    _
  %v14 = vld [vmem:[%s0] sm:$0xff]
  %v15 = vld [vmem:[%s0 + $0x8] sm:$0xff]
  %v16 = vld [vmem:[%s0 + $0x10] sm:$0xff]
  %v17 = vld [vmem:[%s0 + $0x18] sm:$0xff]
  %v18 = vld [vmem:[%s0 + $0x20] sm:$0xff]
  %v19 = vld [vmem:[%s0 + $0x28] sm:$0xff]
  %v20 = vld [vmem:[%s0 + $0x30] sm:$0xff]
  %v21 = vld [vmem:[%s0 + $0x38] sm:$0xff]
  %v22 = vld [vmem:[%s0 + $0x40] sm:$0xff]
  %v23 = vld [vmem:[%s0 + $0x48] sm:$0xff]
  %v24 = vld [vmem:[%s0 + $0x50] sm:$0xff]
  %v25 = vld [vmem:[%s0 + $0x58] sm:$0xff]
  %v26 = vld [vmem:[%s0 + $0x60] sm:$0xff]
  %v27 = vld [vmem:[%s0 + $0x68] sm:$0xff]
  %v28 = vld [vmem:[%s0 + $0x70] sm:$0xff]
  %v29 = vld [vmem:[%s0 + $0x78] sm:$0xff]
  %v30 = vld [vmem:[%s0 + $0x80] sm:$0xff]
  %v31 = vld [vmem:[%s0 + $0x88] sm:$0xff]
  %v32 = vld [vmem:[%s0 + $0x90] sm:$0xff]
  %v33 = vld [vmem:[%s0 + $0x98] sm:$0xff]
  %v34 = vld [vmem:[%s0 + $0xa0] sm:$0xff]
  %v35 = vld [vmem:[%s0 + $0xa8] sm:$0xff]
  %v36 = vld [vmem:[%s0 + $0xb0] sm:$0xff]
  %v37 = vld [vmem:[%s0 + $0xb8] sm:$0xff]
  %v38 = vld [vmem:[%s0 + $0xc0] sm:$0xff]
  %v39 = vld [vmem:[%s0 + $0xc8] sm:$0xff]
  %v40 = vld [vmem:[%s0 + $0xd0] sm:$0xff]
  %v41 = vld [vmem:[%s0 + $0xd8] sm:$0xff]
  %v42 = vld [vmem:[%s0 + $0xe0] sm:$0xff]
  %v43 = vld [vmem:[%s0 + $0xe8] sm:$0xff]
  %v44 = vld [vmem:[%s0 + $0xf0] sm:$0xff]
  %v45 = vld [vmem:[%s0 + $0xf8] sm:$0xff]
  %v46 = vld [vmem:[%s0 + $0x100] sm:$0xff]
  %v47 = vld [vmem:[%s0 + $0x108] sm:$0xff]
  %v48 = vld [vmem:[%s0 + $0x110] sm:$0xff]
  %v49 = vld [vmem:[%s0 + $0x118] sm:$0xff]
  %v50 = vld [vmem:[%s0 + $0x120] sm:$0xff]
  %v51 = vld [vmem:[%s0 + $0x128] sm:$0xff]
  %v52 = vld [vmem:[%s0 + $0x130] sm:$0xff]
  %v53 = vld [vmem:[%s0 + $0x138] sm:$0xff]
  %v54 = vld [vmem:[%s0 + $0x140] sm:$0xff]
  %v55 = vld [vmem:[%s0 + $0x148] sm:$0xff]
  %v56 = vld [vmem:[%s0 + $0x150] sm:$0xff]
  %v57 = vld [vmem:[%s0 + $0x158] sm:$0xff]
  %v58 = vld [vmem:[%s0 + $0x160] sm:$0xff]
  %v59 = vld [vmem:[%s0 + $0x168] sm:$0xff]
  %v60 = vld [vmem:[%s0 + $0x170] sm:$0xff]
  %v61 = vld [vmem:[%s0 + $0x178] sm:$0xff]
  %v62 = vld [vmem:[%s0 + $0x180] sm:$0xff]
  %v63 = vld [vmem:[%s0 + $0x188] sm:$0xff]
  %v64 = vld [vmem:[%s0 + $0x190] sm:$0xff]
  %v65 = vld [vmem:[%s0 + $0x198] sm:$0xff]
  %v66 = vld [vmem:[%s0 + $0x1a0] sm:$0xff]
  %v67 = vld [vmem:[%s0 + $0x1a8] sm:$0xff]
  %v68 = vld [vmem:[%s0 + $0x1b0] sm:$0xff]
  %v69 = vld [vmem:[%s0 + $0x1b8] sm:$0xff]
  %v70 = vld [vmem:[%s0 + $0x1c0] sm:$0xff]
  %v71 = vld [vmem:[%s0 + $0x1c8] sm:$0xff]
  %v72 = vld [vmem:[%s0 + $0x1d0] sm:$0xff]
  %v73 = vld [vmem:[%s0 + $0x1d8] sm:$0xff]
  %v74 = vld [vmem:[%s0 + $0x1e0] sm:$0xff]
  %v75 = vld [vmem:[%s0 + $0x1e8] sm:$0xff]
  %v76 = vld [vmem:[%s0 + $0x1f0] sm:$0xff]
  %v77 = vld [vmem:[%s0 + $0x1f8] sm:$0xff]
  %v78 = vld [vmem:[%s0 + $0x200] sm:$0xff]
  %v79 = vld [vmem:[%s0 + $0x208] sm:$0xff]
  %v80 = vld [vmem:[%s0 + $0x210] sm:$0xff]
  %v81 = vld [vmem:[%s0 + $0x218] sm:$0xff]
  %v82 = vld [vmem:[%s0 + $0x220] sm:$0xff]
  %v83 = vld [vmem:[%s0 + $0x228] sm:$0xff]
  %v84 = vld [vmem:[%s0 + $0x230] sm:$0xff]
  %v85 = vld [vmem:[%s0 + $0x238] sm:$0xff]
  %v86 = vld [vmem:[%s0 + $0x240] sm:$0xff]
  %v87 = vld [vmem:[%s0 + $0x248] sm:$0xff]
  %v88 = vld [vmem:[%s0 + $0x250] sm:$0xff]
  %v89 = vld [vmem:[%s0 + $0x258] sm:$0xff]
  %v90 = vld [vmem:[%s0 + $0x260] sm:$0xff]
  %v91 = vld [vmem:[%s0 + $0x268] sm:$0xff]
  %v92 = vld [vmem:[%s0 + $0x270] sm:$0xff]
  %v93 = vld [vmem:[%s0 + $0x278] sm:$0xff]
  %v94 = vld [vmem:[%s0 + $0x280] sm:$0xff]
  %v95 = vld [vmem:[%s0 + $0x288] sm:$0xff]
  %v96 = vld [vmem:[%s0 + $0x290] sm:$0xff]
  %v97 = vld [vmem:[%s0 + $0x298] sm:$0xff]
  %v98 = vld [vmem:[%s0 + $0x2a0] sm:$0xff]
  %v99 = vld [vmem:[%s0 + $0x2a8] sm:$0xff]
  %v100 = vld [vmem:[%s0 + $0x2b0] sm:$0xff]
  %v101 = vld [vmem:[%s0 + $0x2b8] sm:$0xff]
  %v102 = vld [vmem:[%s0 + $0x2c0] sm:$0xff]
  %v103 = vld [vmem:[%s0 + $0x2c8] sm:$0xff]
  %v104 = vld [vmem:[%s0 + $0x2d0] sm:$0xff]
  %v105 = vld [vmem:[%s0 + $0x2d8] sm:$0xff]
  %v106 = vld [vmem:[%s0 + $0x2e0] sm:$0xff]
  %v107 = vld [vmem:[%s0 + $0x2e8] sm:$0xff]
  %v108 = vld [vmem:[%s0 + $0x2f0] sm:$0xff]
  %v109 = vld [vmem:[%s0 + $0x2f8] sm:$0xff]
  %v110 = vld [vmem:[%s0 + $0x300] sm:$0xff]
  %v111 = vld [vmem:[%s0 + $0x308] sm:$0xff]
  %v112 = vld [vmem:[%s0 + $0x310] sm:$0xff]
  %v113 = vld [vmem:[%s0 + $0x318] sm:$0xff]
  %v114 = vld [vmem:[%s0 + $0x320] sm:$0xff]
  %v115 = vld [vmem:[%s0 + $0x328] sm:$0xff]
  %v116 = vld [vmem:[%s0 + $0x330] sm:$0xff]
  %v117 = vld [vmem:[%s0 + $0x338] sm:$0xff]
  %v118 = vld [vmem:[%s0 + $0x340] sm:$0xff]
  %v119 = vld [vmem:[%s0 + $0x348] sm:$0xff]
  %v120 = vld [vmem:[%s0 + $0x350] sm:$0xff]
  %v121 = vld [vmem:[%s0 + $0x358] sm:$0xff]
  %v122 = vld [vmem:[%s0 + $0x360] sm:$0xff]
  %v123 = vld [vmem:[%s0 + $0x368] sm:$0xff]
  %v124 = vld [vmem:[%s0 + $0x370] sm:$0xff]
  %v125 = vld [vmem:[%s0 + $0x378] sm:$0xff]
  %v126 = vld [vmem:[%s0 + $0x380] sm:$0xff]
  %v127 = vld [vmem:[%s0 + $0x388] sm:$0xff]
  %v128 = vld [vmem:[%s0 + $0x390] sm:$0xff]
  %v129 = vld [vmem:[%s0 + $0x398] sm:$0xff]
  %v130 = vld [vmem:[%s0 + $0x3a0] sm:$0xff]
  %v131 = vld [vmem:[%s0 + $0x3a8] sm:$0xff]
  %v132 = vld [vmem:[%s0 + $0x3b0] sm:$0xff]
  %v133 = vld [vmem:[%s0 + $0x3b8] sm:$0xff]
  %v134 = vld [vmem:[%s0 + $0x3c0] sm:$0xff]
  %v135 = vld [vmem:[%s0 + $0x3c8] sm:$0xff]
  %v136 = vld [vmem:[%s0 + $0x3d0] sm:$0xff]
  %v137 = vld [vmem:[%s0 + $0x3d8] sm:$0xff]
  %v138 = vld [vmem:[%s0 + $0x3e0] sm:$0xff]
  %v139 = vld [vmem:[%s0 + $0x3e8] sm:$0xff]
  %v140 = vld [vmem:[%s0 + $0x3f0] sm:$0xff]
  %v141 = vld [vmem:[%s0 + $0x3f8] sm:$0xff]
  %v142 = vld [vmem:[%s0 + $0x400] sm:$0xff]
  %v143 = vld [vmem:[%s0 + $0x408] sm:$0xff]
  %v144 = vld [vmem:[%s0 + $0x410] sm:$0xff]
  %v145 = vld [vmem:[%s0 + $0x418] sm:$0xff]
  %v146 = vld [vmem:[%s0 + $0x420] sm:$0xff]
  %v147 = vld [vmem:[%s0 + $0x428] sm:$0xff]
  %v148 = vld [vmem:[%s0 + $0x430] sm:$0xff]
  %v149 = vld [vmem:[%s0 + $0x438] sm:$0xff]
  %v150 = vld [vmem:[%s0 + $0x440] sm:$0xff]
  %v151 = vld [vmem:[%s0 + $0x448] sm:$0xff]
  %v152 = vld [vmem:[%s0 + $0x450] sm:$0xff]
  %v153 = vld [vmem:[%s0 + $0x458] sm:$0xff]
  %v154 = vld [vmem:[%s0 + $0x460] sm:$0xff]
  %v155 = vld [vmem:[%s0 + $0x468] sm:$0xff]
  %v156 = vld [vmem:[%s0 + $0x470] sm:$0xff]
  %v157 = vld [vmem:[%s0 + $0x478] sm:$0xff]
  %v158 = vld [vmem:[%s0 + $0x480] sm:$0xff]
  %v159 = vld [vmem:[%s0 + $0x488] sm:$0xff]
  %v160 = vld [vmem:[%s0 + $0x490] sm:$0xff]
  %v161 = vld [vmem:[%s0 + $0x498] sm:$0xff]
  %v162 = vld [vmem:[%s0 + $0x4a0] sm:$0xff]
  %v163 = vld [vmem:[%s0 + $0x4a8] sm:$0xff]
  %v164 = vld [vmem:[%s0 + $0x4b0] sm:$0xff]
  %v165 = vld [vmem:[%s0 + $0x4b8] sm:$0xff]
  %v166 = vld [vmem:[%s0 + $0x4c0] sm:$0xff]
  %v167 = vld [vmem:[%s0 + $0x4c8] sm:$0xff]
  %v168 = vld [vmem:[%s0 + $0x4d0] sm:$0xff]
  %v169 = vld [vmem:[%s0 + $0x4d8] sm:$0xff]
  %v170 = vld [vmem:[%s0 + $0x4e0] sm:$0xff]
  %v171 = vld [vmem:[%s0 + $0x4e8] sm:$0xff]
  %v172 = vld [vmem:[%s0 + $0x4f0] sm:$0xff]
  %v173 = vld [vmem:[%s0 + $0x4f8] sm:$0xff]
  %v174 = vld [vmem:[%s0 + $0x500] sm:$0xff]
  %v175 = vld [vmem:[%s0 + $0x508] sm:$0xff]
  %v176 = vld [vmem:[%s0 + $0x510] sm:$0xff]
  %v177 = vld [vmem:[%s0 + $0x518] sm:$0xff]
  %v178 = vld [vmem:[%s0 + $0x520] sm:$0xff]
  %v179 = vld [vmem:[%s0 + $0x528] sm:$0xff]
  %v180 = vld [vmem:[%s0 + $0x530] sm:$0xff]
  %v181 = vld [vmem:[%s0 + $0x538] sm:$0xff]
  %v182 = vld [vmem:[%s0 + $0x540] sm:$0xff]
  %v183 = vld [vmem:[%s0 + $0x548] sm:$0xff]
  %v184 = vld [vmem:[%s0 + $0x550] sm:$0xff]
  %v185 = vld [vmem:[%s0 + $0x558] sm:$0xff]
  %v186 = vld [vmem:[%s0 + $0x560] sm:$0xff]
  %v187 = vld [vmem:[%s0 + $0x568] sm:$0xff]
  %v188 = vld [vmem:[%s0 + $0x570] sm:$0xff]
  %v189 = vld [vmem:[%s0 + $0x578] sm:$0xff]
  %v190 = vld [vmem:[%s0 + $0x580] sm:$0xff]
  %v191 = vld [vmem:[%s0 + $0x588] sm:$0xff]
  %v192 = vld [vmem:[%s0 + $0x590] sm:$0xff]
  %v193 = vld [vmem:[%s0 + $0x598] sm:$0xff]
  %v194 = vld [vmem:[%s0 + $0x5a0] sm:$0xff]
  %v195 = vld [vmem:[%s0 + $0x5a8] sm:$0xff]
  %v196 = vld [vmem:[%s0 + $0x5b0] sm:$0xff]
  %v197 = vld [vmem:[%s0 + $0x5b8] sm:$0xff]
  %v198 = vld [vmem:[%s0 + $0x5c0] sm:$0xff]
  %v199 = vld [vmem:[%s0 + $0x5c8] sm:$0xff]
  %v200 = vld [vmem:[%s0 + $0x5d0] sm:$0xff]
  %v201 = vld [vmem:[%s0 + $0x5d8] sm:$0xff]
  %v202 = vld [vmem:[%s0 + $0x5e0] sm:$0xff]
  %v203 = vld [vmem:[%s0 + $0x5e8] sm:$0xff]
  %v204 = vld [vmem:[%s0 + $0x5f0] sm:$0xff]
  %v205 = vld [vmem:[%s0 + $0x5f8] sm:$0xff]
  %v206 = vld [vmem:[%s0 + $0x600] sm:$0xff]
  %v207 = vld [vmem:[%s0 + $0x608] sm:$0xff]
  %v208 = vld [vmem:[%s0 + $0x610] sm:$0xff]
  %v209 = vld [vmem:[%s0 + $0x618] sm:$0xff]
  %v210 = vld [vmem:[%s0 + $0x620] sm:$0xff]
  %v211 = vld [vmem:[%s0 + $0x628] sm:$0xff]
  %v212 = vld [vmem:[%s0 + $0x630] sm:$0xff]
  %v213 = vld [vmem:[%s0 + $0x638] sm:$0xff]
  %v214 = vld [vmem:[%s0 + $0x640] sm:$0xff]
  %v215 = vld [vmem:[%s0 + $0x648] sm:$0xff]
  %v216 = vld [vmem:[%s0 + $0x650] sm:$0xff]
  %v217 = vld [vmem:[%s0 + $0x658] sm:$0xff]
  %v218 = vld [vmem:[%s0 + $0x660] sm:$0xff]
  %v219 = vld [vmem:[%s0 + $0x668] sm:$0xff]
  %v220 = vld [vmem:[%s0 + $0x670] sm:$0xff]
  %v221 = vld [vmem:[%s0 + $0x678] sm:$0xff]
  %v222 = vld [vmem:[%s0 + $0x680] sm:$0xff]
  %v223 = vld [vmem:[%s0 + $0x688] sm:$0xff]
  %v224 = vld [vmem:[%s0 + $0x690] sm:$0xff]
  %v225 = vld [vmem:[%s0 + $0x698] sm:$0xff]
  %v226 = vld [vmem:[%s0 + $0x6a0] sm:$0xff]
  %v227 = vld [vmem:[%s0 + $0x6a8] sm:$0xff]
  %v228 = vld [vmem:[%s0 + $0x6b0] sm:$0xff]
  %v229 = vld [vmem:[%s0 + $0x6b8] sm:$0xff]
  %v230 = vld [vmem:[%s0 + $0x6c0] sm:$0xff]
  %v231 = vld [vmem:[%s0 + $0x6c8] sm:$0xff]
  %v232 = vld [vmem:[%s0 + $0x6d0] sm:$0xff]
  %v233 = vld [vmem:[%s0 + $0x6d8] sm:$0xff]
  %v234 = vld [vmem:[%s0 + $0x6e0] sm:$0xff]
  %v235 = vld [vmem:[%s0 + $0x6e8] sm:$0xff]
  %v236 = vld [vmem:[%s0 + $0x6f0] sm:$0xff]
  %v237 = vld [vmem:[%s0 + $0x6f8] sm:$0xff]
  %v238 = vld [vmem:[%s0 + $0x700] sm:$0xff]
  %v239 = vld [vmem:[%s0 + $0x708] sm:$0xff]
  %v240 = vld [vmem:[%s0 + $0x710] sm:$0xff]
  %v241 = vld [vmem:[%s0 + $0x718] sm:$0xff]
  %v242 = vld [vmem:[%s0 + $0x720] sm:$0xff]
  %v243 = vld [vmem:[%s0 + $0x728] sm:$0xff]
  %v244 = vld [vmem:[%s0 + $0x730] sm:$0xff]
  %v245 = vld [vmem:[%s0 + $0x738] sm:$0xff]
  %v246 = vld [vmem:[%s0 + $0x740] sm:$0xff]
  %v247 = vld [vmem:[%s0 + $0x748] sm:$0xff]
  %v248 = vld [vmem:[%s0 + $0x750] sm:$0xff]
  %v249 = vld [vmem:[%s0 + $0x758] sm:$0xff]
  %v250 = vld [vmem:[%s0 + $0x760] sm:$0xff]
  %v251 = vld [vmem:[%s0 + $0x768] sm:$0xff]
  %v252 = vld [vmem:[%s0 + $0x770] sm:$0xff]
  %v253 = vld [vmem:[%s0 + $0x778] sm:$0xff]
  %v254 = vld [vmem:[%s0 + $0x780] sm:$0xff]
  %v255 = vld [vmem:[%s0 + $0x788] sm:$0xff]
  %v256 = vld [vmem:[%s0 + $0x790] sm:$0xff]
  %v257 = vld [vmem:[%s0 + $0x798] sm:$0xff]
  %v258 = vld [vmem:[%s0 + $0x7a0] sm:$0xff]
  %v259 = vld [vmem:[%s0 + $0x7a8] sm:$0xff]
  %v260 = vld [vmem:[%s0 + $0x7b0] sm:$0xff]
  %v261 = vld [vmem:[%s0 + $0x7b8] sm:$0xff]
  %v262 = vld [vmem:[%s0 + $0x7c0] sm:$0xff]
  %v263 = vld [vmem:[%s0 + $0x7c8] sm:$0xff]
  %v264 = vld [vmem:[%s0 + $0x7d0] sm:$0xff]
  %v265 = vld [vmem:[%s0 + $0x7d8] sm:$0xff]
  %v266 = vld [vmem:[%s0 + $0x7e0] sm:$0xff]
  %v267 = vld [vmem:[%s0 + $0x7e8] sm:$0xff]
  %v268 = vld [vmem:[%s0 + $0x7f0] sm:$0xff]
  %v269 = vld [vmem:[%s0 + $0x7f8] sm:$0xff]
  %v270 = vld [vmem:[%s0 + $0x800] sm:$0xff]
  %v271 = vld [vmem:[%s0 + $0x808] sm:$0xff]
  %v272 = vld [vmem:[%s0 + $0x810] sm:$0xff]
  %v273 = vld [vmem:[%s0 + $0x818] sm:$0xff]
  %v274 = vld [vmem:[%s0 + $0x820] sm:$0xff]
  %v275 = vld [vmem:[%s0 + $0x828] sm:$0xff]
  %v276 = vld [vmem:[%s0 + $0x830] sm:$0xff]
  %v277 = vld [vmem:[%s0 + $0x838] sm:$0xff]
  %v278 = vld [vmem:[%s0 + $0x840] sm:$0xff]
  %v279 = vld [vmem:[%s0 + $0x848] sm:$0xff]
  %v280 = vld [vmem:[%s0 + $0x850] sm:$0xff]
  %v281 = vld [vmem:[%s0 + $0x858] sm:$0xff]
  %v282 = vld [vmem:[%s0 + $0x860] sm:$0xff]
  %v283 = vld [vmem:[%s0 + $0x868] sm:$0xff]
  %v284 = vld [vmem:[%s0 + $0x870] sm:$0xff]
  %v285 = vld [vmem:[%s0 + $0x878] sm:$0xff]
  %v286 = vld [vmem:[%s0 + $0x880] sm:$0xff]
  %v287 = vld [vmem:[%s0 + $0x888] sm:$0xff]
  %v288 = vld [vmem:[%s0 + $0x890] sm:$0xff]
  %v289 = vld [vmem:[%s0 + $0x898] sm:$0xff]
  %v290 = vld [vmem:[%s0 + $0x8a0] sm:$0xff]
  %v291 = vld [vmem:[%s0 + $0x8a8] sm:$0xff]
  %v292 = vld [vmem:[%s0 + $0x8b0] sm:$0xff]
  %v293 = vld [vmem:[%s0 + $0x8b8] sm:$0xff]
  %v294 = vld [vmem:[%s0 + $0x8c0] sm:$0xff]
  %v295 = vld [vmem:[%s0 + $0x8c8] sm:$0xff]
  %v296 = vld [vmem:[%s0 + $0x8d0] sm:$0xff]
  %v297 = vld [vmem:[%s0 + $0x8d8] sm:$0xff]
  %v298 = vld [vmem:[%s0 + $0x8e0] sm:$0xff]
  %v299 = vld [vmem:[%s0 + $0x8e8] sm:$0xff]
  %v300 = vld [vmem:[%s0 + $0x8f0] sm:$0xff]
  %v301 = vld [vmem:[%s0 + $0x8f8] sm:$0xff]
  %v302 = vld [vmem:[%s0 + $0x900] sm:$0xff]
  %v303 = vld [vmem:[%s0 + $0x908] sm:$0xff]
  %v304 = vld [vmem:[%s0 + $0x910] sm:$0xff]
  %v305 = vld [vmem:[%s0 + $0x918] sm:$0xff]
  %v306 = vld [vmem:[%s0 + $0x920] sm:$0xff]
  %v307 = vld [vmem:[%s0 + $0x928] sm:$0xff]
  %v308 = vld [vmem:[%s0 + $0x930] sm:$0xff]
  %v309 = vld [vmem:[%s0 + $0x938] sm:$0xff]
  %v310 = vld [vmem:[%s0 + $0x940] sm:$0xff]
  %v311 = vld [vmem:[%s0 + $0x948] sm:$0xff]
  %v312 = vld [vmem:[%s0 + $0x950] sm:$0xff]
  %v313 = vld [vmem:[%s0 + $0x958] sm:$0xff]
  %v314 = vld [vmem:[%s0 + $0x960] sm:$0xff]
  %v315 = vld [vmem:[%s0 + $0x968] sm:$0xff]
  %v316 = vld [vmem:[%s0 + $0x970] sm:$0xff]
  %v317 = vld [vmem:[%s0 + $0x978] sm:$0xff]
  %v318 = vld [vmem:[%s0 + $0x980] sm:$0xff]
  %v319 = vld [vmem:[%s0 + $0x988] sm:$0xff]
  %v320 = vld [vmem:[%s0 + $0x990] sm:$0xff]
  %v321 = vld [vmem:[%s0 + $0x998] sm:$0xff]
  %v322 = vld [vmem:[%s0 + $0x9a0] sm:$0xff]
  %v323 = vld [vmem:[%s0 + $0x9a8] sm:$0xff]
  %v324 = vld [vmem:[%s0 + $0x9b0] sm:$0xff]
  %v325 = vld [vmem:[%s0 + $0x9b8] sm:$0xff]
  %v326 = vld [vmem:[%s0 + $0x9c0] sm:$0xff]
  %v327 = vld [vmem:[%s0 + $0x9c8] sm:$0xff]
  %v328 = vld [vmem:[%s0 + $0x9d0] sm:$0xff]
  %v329 = vld [vmem:[%s0 + $0x9d8] sm:$0xff]
  %v330 = vld [vmem:[%s0 + $0x9e0] sm:$0xff]
  %v331 = vld [vmem:[%s0 + $0x9e8] sm:$0xff]
  %v332 = vld [vmem:[%s0 + $0x9f0] sm:$0xff]
  %v333 = vld [vmem:[%s0 + $0x9f8] sm:$0xff]
  %v334 = vld [vmem:[%s0 + $0xa00] sm:$0xff]
  %v335 = vld [vmem:[%s0 + $0xa08] sm:$0xff]
  %v336 = vld [vmem:[%s0 + $0xa10] sm:$0xff]
  %v337 = vld [vmem:[%s0 + $0xa18] sm:$0xff]
  %v338 = vld [vmem:[%s0 + $0xa20] sm:$0xff]
  %v339 = vld [vmem:[%s0 + $0xa28] sm:$0xff]
  %v340 = vld [vmem:[%s0 + $0xa30] sm:$0xff]
  %v341 = vld [vmem:[%s0 + $0xa38] sm:$0xff]
  %v342 = vld [vmem:[%s0 + $0xa40] sm:$0xff]
  %v343 = vld [vmem:[%s0 + $0xa48] sm:$0xff]
  %v344 = vld [vmem:[%s0 + $0xa50] sm:$0xff]
  %v345 = vld [vmem:[%s0 + $0xa58] sm:$0xff]
  %v346 = vld [vmem:[%s0 + $0xa60] sm:$0xff]
  %v347 = vld [vmem:[%s0 + $0xa68] sm:$0xff]
  %v348 = vld [vmem:[%s0 + $0xa70] sm:$0xff]
  %v349 = vld [vmem:[%s0 + $0xa78] sm:$0xff]
  %vm350 = vcmask 556032
  %v351 = vsel %vm350, %v15, 0.0
  %v352 = vadd.f32 %v14, %v351
  %353 = vadd.xlane.f32.xlu0 %v352
  %v354 = vpop.xlane.xlu0 %353
  %v355 = vsel %vm350, %v17, 0.0
  %v356 = vadd.f32 %v16, %v355
  %357 = vadd.xlane.f32.xlu0 %v356
  %v358 = vpop.xlane.xlu0 %357
  %v359 = vsel %vm350, %v19, 0.0
  %v360 = vadd.f32 %v18, %v359
  %361 = vadd.xlane.f32.xlu0 %v360
  %v362 = vpop.xlane.xlu0 %361
  %v363 = vsel %vm350, %v21, 0.0
  %v364 = vadd.f32 %v20, %v363
  %365 = vadd.xlane.f32.xlu0 %v364
  %v366 = vpop.xlane.xlu0 %365
  %v367 = vsel %vm350, %v23, 0.0
  %v368 = vadd.f32 %v22, %v367
  %369 = vadd.xlane.f32.xlu0 %v368
  %v370 = vpop.xlane.xlu0 %369
  %v371 = vsel %vm350, %v25, 0.0
  %v372 = vadd.f32 %v24, %v371
  %373 = vadd.xlane.f32.xlu0 %v372
  %v374 = vpop.xlane.xlu0 %373
  %v375 = vsel %vm350, %v27, 0.0
  %v376 = vadd.f32 %v26, %v375
  %377 = vadd.xlane.f32.xlu0 %v376
  %v378 = vpop.xlane.xlu0 %377
  %v379 = vsel %vm350, %v29, 0.0
  %v380 = vadd.f32 %v28, %v379
  %381 = vadd.xlane.f32.xlu0 %v380
  %v382 = vpop.xlane.xlu0 %381
  %v383 = vsel %vm350, %v31, 0.0
  %v384 = vadd.f32 %v30, %v383
  %385 = vadd.xlane.f32.xlu0 %v384
  %v386 = vpop.xlane.xlu0 %385
  %v387 = vsel %vm350, %v33, 0.0
  %v388 = vadd.f32 %v32, %v387
  %389 = vadd.xlane.f32.xlu0 %v388
  %v390 = vpop.xlane.xlu0 %389
  %v391 = vsel %vm350, %v35, 0.0
  %v392 = vadd.f32 %v34, %v391
  %393 = vadd.xlane.f32.xlu0 %v392
  %v394 = vpop.xlane.xlu0 %393
  %v395 = vsel %vm350, %v37, 0.0
  %v396 = vadd.f32 %v36, %v395
  %397 = vadd.xlane.f32.xlu0 %v396
  %v398 = vpop.xlane.xlu0 %397
  %v399 = vsel %vm350, %v39, 0.0
  %v400 = vadd.f32 %v38, %v399
  %401 = vadd.xlane.f32.xlu0 %v400
  %v402 = vpop.xlane.xlu0 %401
  %v403 = vsel %vm350, %v41, 0.0
  %v404 = vadd.f32 %v40, %v403
  %405 = vadd.xlane.f32.xlu0 %v404
  %v406 = vpop.xlane.xlu0 %405
  %v407 = vsel %vm350, %v43, 0.0
  %v408 = vadd.f32 %v42, %v407
  %409 = vadd.xlane.f32.xlu0 %v408
  %v410 = vpop.xlane.xlu0 %409
  %v411 = vsel %vm350, %v45, 0.0
  %v412 = vadd.f32 %v44, %v411
  %413 = vadd.xlane.f32.xlu0 %v412
  %v414 = vpop.xlane.xlu0 %413
  %v415 = vsel %vm350, %v47, 0.0
  %v416 = vadd.f32 %v46, %v415
  %417 = vadd.xlane.f32.xlu0 %v416
  %v418 = vpop.xlane.xlu0 %417
  %v419 = vsel %vm350, %v49, 0.0
  %v420 = vadd.f32 %v48, %v419
  %421 = vadd.xlane.f32.xlu0 %v420
  %v422 = vpop.xlane.xlu0 %421
  %v423 = vsel %vm350, %v51, 0.0
  %v424 = vadd.f32 %v50, %v423
  %425 = vadd.xlane.f32.xlu0 %v424
  %v426 = vpop.xlane.xlu0 %425
  %v427 = vsel %vm350, %v53, 0.0
  %v428 = vadd.f32 %v52, %v427
  %429 = vadd.xlane.f32.xlu0 %v428
  %v430 = vpop.xlane.xlu0 %429
  %v431 = vsel %vm350, %v55, 0.0
  %v432 = vadd.f32 %v54, %v431
  %433 = vadd.xlane.f32.xlu0 %v432
  %v434 = vpop.xlane.xlu0 %433
  %v435 = vsel %vm350, %v57, 0.0
  %v436 = vadd.f32 %v56, %v435
  %437 = vadd.xlane.f32.xlu0 %v436
  %v438 = vpop.xlane.xlu0 %437
  %v439 = vsel %vm350, %v59, 0.0
  %v440 = vadd.f32 %v58, %v439
  %441 = vadd.xlane.f32.xlu0 %v440
  %v442 = vpop.xlane.xlu0 %441
  %v443 = vsel %vm350, %v61, 0.0
  %v444 = vadd.f32 %v60, %v443
  %445 = vadd.xlane.f32.xlu0 %v444
  %v446 = vpop.xlane.xlu0 %445
  %v447 = vsel %vm350, %v63, 0.0
  %v448 = vadd.f32 %v62, %v447
  %449 = vadd.xlane.f32.xlu0 %v448
  %v450 = vpop.xlane.xlu0 %449
  %v451 = vsel %vm350, %v65, 0.0
  %v452 = vadd.f32 %v64, %v451
  %453 = vadd.xlane.f32.xlu0 %v452
  %v454 = vpop.xlane.xlu0 %453
  %v455 = vsel %vm350, %v67, 0.0
  %v456 = vadd.f32 %v66, %v455
  %457 = vadd.xlane.f32.xlu0 %v456
  %v458 = vpop.xlane.xlu0 %457
  %v459 = vsel %vm350, %v69, 0.0
  %v460 = vadd.f32 %v68, %v459
  %461 = vadd.xlane.f32.xlu0 %v460
  %v462 = vpop.xlane.xlu0 %461
  %v463 = vsel %vm350, %v71, 0.0
  %v464 = vadd.f32 %v70, %v463
  %465 = vadd.xlane.f32.xlu0 %v464
  %v466 = vpop.xlane.xlu0 %465
  %v467 = vsel %vm350, %v73, 0.0
  %v468 = vadd.f32 %v72, %v467
  %469 = vadd.xlane.f32.xlu0 %v468
  %v470 = vpop.xlane.xlu0 %469
  %v471 = vsel %vm350, %v75, 0.0
  %v472 = vadd.f32 %v74, %v471
  %473 = vadd.xlane.f32.xlu0 %v472
  %v474 = vpop.xlane.xlu0 %473
  %v475 = vsel %vm350, %v77, 0.0
  %v476 = vadd.f32 %v76, %v475
  %477 = vadd.xlane.f32.xlu0 %v476
  %v478 = vpop.xlane.xlu0 %477
  %v479 = vsel %vm350, %v79, 0.0
  %v480 = vadd.f32 %v78, %v479
  %481 = vadd.xlane.f32.xlu0 %v480
  %v482 = vpop.xlane.xlu0 %481
  %v483 = vsel %vm350, %v81, 0.0
  %v484 = vadd.f32 %v80, %v483
  %485 = vadd.xlane.f32.xlu0 %v484
  %v486 = vpop.xlane.xlu0 %485
  %v487 = vsel %vm350, %v83, 0.0
  %v488 = vadd.f32 %v82, %v487
  %489 = vadd.xlane.f32.xlu0 %v488
  %v490 = vpop.xlane.xlu0 %489
  %v491 = vsel %vm350, %v85, 0.0
  %v492 = vadd.f32 %v84, %v491
  %493 = vadd.xlane.f32.xlu0 %v492
  %v494 = vpop.xlane.xlu0 %493
  %v495 = vsel %vm350, %v87, 0.0
  %v496 = vadd.f32 %v86, %v495
  %497 = vadd.xlane.f32.xlu0 %v496
  %v498 = vpop.xlane.xlu0 %497
  %v499 = vsel %vm350, %v89, 0.0
  %v500 = vadd.f32 %v88, %v499
  %501 = vadd.xlane.f32.xlu0 %v500
  %v502 = vpop.xlane.xlu0 %501
  %v503 = vsel %vm350, %v91, 0.0
  %v504 = vadd.f32 %v90, %v503
  %505 = vadd.xlane.f32.xlu0 %v504
  %v506 = vpop.xlane.xlu0 %505
  %v507 = vsel %vm350, %v93, 0.0
  %v508 = vadd.f32 %v92, %v507
  %509 = vadd.xlane.f32.xlu0 %v508
  %v510 = vpop.xlane.xlu0 %509
  %v511 = vsel %vm350, %v95, 0.0
  %v512 = vadd.f32 %v94, %v511
  %513 = vadd.xlane.f32.xlu0 %v512
  %v514 = vpop.xlane.xlu0 %513
  %v515 = vsel %vm350, %v97, 0.0
  %v516 = vadd.f32 %v96, %v515
  %517 = vadd.xlane.f32.xlu0 %v516
  %v518 = vpop.xlane.xlu0 %517
  %v519 = vsel %vm350, %v99, 0.0
  %v520 = vadd.f32 %v98, %v519
  %521 = vadd.xlane.f32.xlu0 %v520
  %v522 = vpop.xlane.xlu0 %521
  %v523 = vsel %vm350, %v101, 0.0
  %v524 = vadd.f32 %v100, %v523
  %525 = vadd.xlane.f32.xlu0 %v524
  %v526 = vpop.xlane.xlu0 %525
  %v527 = vsel %vm350, %v103, 0.0
  %v528 = vadd.f32 %v102, %v527
  %529 = vadd.xlane.f32.xlu0 %v528
  %v530 = vpop.xlane.xlu0 %529
  %v531 = vsel %vm350, %v105, 0.0
  %v532 = vadd.f32 %v104, %v531
  %533 = vadd.xlane.f32.xlu0 %v532
  %v534 = vpop.xlane.xlu0 %533
  %v535 = vsel %vm350, %v107, 0.0
  %v536 = vadd.f32 %v106, %v535
  %537 = vadd.xlane.f32.xlu0 %v536
  %v538 = vpop.xlane.xlu0 %537
  %v539 = vsel %vm350, %v109, 0.0
  %v540 = vadd.f32 %v108, %v539
  %541 = vadd.xlane.f32.xlu0 %v540
  %v542 = vpop.xlane.xlu0 %541
  %v543 = vsel %vm350, %v111, 0.0
  %v544 = vadd.f32 %v110, %v543
  %545 = vadd.xlane.f32.xlu0 %v544
  %v546 = vpop.xlane.xlu0 %545
  %v547 = vsel %vm350, %v113, 0.0
  %v548 = vadd.f32 %v112, %v547
  %549 = vadd.xlane.f32.xlu0 %v548
  %v550 = vpop.xlane.xlu0 %549
  %v551 = vsel %vm350, %v115, 0.0
  %v552 = vadd.f32 %v114, %v551
  %553 = vadd.xlane.f32.xlu0 %v552
  %v554 = vpop.xlane.xlu0 %553
  %v555 = vsel %vm350, %v117, 0.0
  %v556 = vadd.f32 %v116, %v555
  %557 = vadd.xlane.f32.xlu0 %v556
  %v558 = vpop.xlane.xlu0 %557
  %v559 = vsel %vm350, %v119, 0.0
  %v560 = vadd.f32 %v118, %v559
  %561 = vadd.xlane.f32.xlu0 %v560
  %v562 = vpop.xlane.xlu0 %561
  %v563 = vsel %vm350, %v121, 0.0
  %v564 = vadd.f32 %v120, %v563
  %565 = vadd.xlane.f32.xlu0 %v564
  %v566 = vpop.xlane.xlu0 %565
  %v567 = vsel %vm350, %v123, 0.0
  %v568 = vadd.f32 %v122, %v567
  %569 = vadd.xlane.f32.xlu0 %v568
  %v570 = vpop.xlane.xlu0 %569
  %v571 = vsel %vm350, %v125, 0.0
  %v572 = vadd.f32 %v124, %v571
  %573 = vadd.xlane.f32.xlu0 %v572
  %v574 = vpop.xlane.xlu0 %573
  %v575 = vsel %vm350, %v127, 0.0
  %v576 = vadd.f32 %v126, %v575
  %577 = vadd.xlane.f32.xlu0 %v576
  %v578 = vpop.xlane.xlu0 %577
  %v579 = vsel %vm350, %v129, 0.0
  %v580 = vadd.f32 %v128, %v579
  %581 = vadd.xlane.f32.xlu0 %v580
  %v582 = vpop.xlane.xlu0 %581
  %v583 = vsel %vm350, %v131, 0.0
  %v584 = vadd.f32 %v130, %v583
  %585 = vadd.xlane.f32.xlu0 %v584
  %v586 = vpop.xlane.xlu0 %585
  %v587 = vsel %vm350, %v133, 0.0
  %v588 = vadd.f32 %v132, %v587
  %589 = vadd.xlane.f32.xlu0 %v588
  %v590 = vpop.xlane.xlu0 %589
  %v591 = vsel %vm350, %v135, 0.0
  %v592 = vadd.f32 %v134, %v591
  %593 = vadd.xlane.f32.xlu0 %v592
  %v594 = vpop.xlane.xlu0 %593
  %v595 = vsel %vm350, %v137, 0.0
  %v596 = vadd.f32 %v136, %v595
  %597 = vadd.xlane.f32.xlu0 %v596
  %v598 = vpop.xlane.xlu0 %597
  %v599 = vsel %vm350, %v139, 0.0
  %v600 = vadd.f32 %v138, %v599
  %601 = vadd.xlane.f32.xlu0 %v600
  %v602 = vpop.xlane.xlu0 %601
  %v603 = vsel %vm350, %v141, 0.0
  %v604 = vadd.f32 %v140, %v603
  %605 = vadd.xlane.f32.xlu0 %v604
  %v606 = vpop.xlane.xlu0 %605
  %v607 = vsel %vm350, %v143, 0.0
  %v608 = vadd.f32 %v142, %v607
  %609 = vadd.xlane.f32.xlu0 %v608
  %v610 = vpop.xlane.xlu0 %609
  %v611 = vsel %vm350, %v145, 0.0
  %v612 = vadd.f32 %v144, %v611
  %613 = vadd.xlane.f32.xlu0 %v612
  %v614 = vpop.xlane.xlu0 %613
  %v615 = vsel %vm350, %v147, 0.0
  %v616 = vadd.f32 %v146, %v615
  %617 = vadd.xlane.f32.xlu0 %v616
  %v618 = vpop.xlane.xlu0 %617
  %v619 = vsel %vm350, %v149, 0.0
  %v620 = vadd.f32 %v148, %v619
  %621 = vadd.xlane.f32.xlu0 %v620
  %v622 = vpop.xlane.xlu0 %621
  %v623 = vsel %vm350, %v151, 0.0
  %v624 = vadd.f32 %v150, %v623
  %625 = vadd.xlane.f32.xlu0 %v624
  %v626 = vpop.xlane.xlu0 %625
  %v627 = vsel %vm350, %v153, 0.0
  %v628 = vadd.f32 %v152, %v627
  %629 = vadd.xlane.f32.xlu0 %v628
  %v630 = vpop.xlane.xlu0 %629
  %v631 = vsel %vm350, %v155, 0.0
  %v632 = vadd.f32 %v154, %v631
  %633 = vadd.xlane.f32.xlu0 %v632
  %v634 = vpop.xlane.xlu0 %633
  %v635 = vsel %vm350, %v157, 0.0
  %v636 = vadd.f32 %v156, %v635
  %637 = vadd.xlane.f32.xlu0 %v636
  %v638 = vpop.xlane.xlu0 %637
  %v639 = vsel %vm350, %v159, 0.0
  %v640 = vadd.f32 %v158, %v639
  %641 = vadd.xlane.f32.xlu0 %v640
  %v642 = vpop.xlane.xlu0 %641
  %v643 = vsel %vm350, %v161, 0.0
  %v644 = vadd.f32 %v160, %v643
  %645 = vadd.xlane.f32.xlu0 %v644
  %v646 = vpop.xlane.xlu0 %645
  %v647 = vsel %vm350, %v163, 0.0
  %v648 = vadd.f32 %v162, %v647
  %649 = vadd.xlane.f32.xlu0 %v648
  %v650 = vpop.xlane.xlu0 %649
  %v651 = vsel %vm350, %v165, 0.0
  %v652 = vadd.f32 %v164, %v651
  %653 = vadd.xlane.f32.xlu0 %v652
  %v654 = vpop.xlane.xlu0 %653
  %v655 = vsel %vm350, %v167, 0.0
  %v656 = vadd.f32 %v166, %v655
  %657 = vadd.xlane.f32.xlu0 %v656
  %v658 = vpop.xlane.xlu0 %657
  %v659 = vsel %vm350, %v169, 0.0
  %v660 = vadd.f32 %v168, %v659
  %661 = vadd.xlane.f32.xlu0 %v660
  %v662 = vpop.xlane.xlu0 %661
  %v663 = vsel %vm350, %v171, 0.0
  %v664 = vadd.f32 %v170, %v663
  %665 = vadd.xlane.f32.xlu0 %v664
  %v666 = vpop.xlane.xlu0 %665
  %v667 = vsel %vm350, %v173, 0.0
  %v668 = vadd.f32 %v172, %v667
  %669 = vadd.xlane.f32.xlu0 %v668
  %v670 = vpop.xlane.xlu0 %669
  %v671 = vsel %vm350, %v175, 0.0
  %v672 = vadd.f32 %v174, %v671
  %673 = vadd.xlane.f32.xlu0 %v672
  %v674 = vpop.xlane.xlu0 %673
  %v675 = vsel %vm350, %v177, 0.0
  %v676 = vadd.f32 %v176, %v675
  %677 = vadd.xlane.f32.xlu0 %v676
  %v678 = vpop.xlane.xlu0 %677
  %v679 = vsel %vm350, %v179, 0.0
  %v680 = vadd.f32 %v178, %v679
  %681 = vadd.xlane.f32.xlu0 %v680
  %v682 = vpop.xlane.xlu0 %681
  %v683 = vsel %vm350, %v181, 0.0
  %v684 = vadd.f32 %v180, %v683
  %685 = vadd.xlane.f32.xlu0 %v684
  %v686 = vpop.xlane.xlu0 %685
  %v687 = vsel %vm350, %v183, 0.0
  %v688 = vadd.f32 %v182, %v687
  %689 = vadd.xlane.f32.xlu0 %v688
  %v690 = vpop.xlane.xlu0 %689
  %v691 = vsel %vm350, %v185, 0.0
  %v692 = vadd.f32 %v184, %v691
  %693 = vadd.xlane.f32.xlu0 %v692
  %v694 = vpop.xlane.xlu0 %693
  %v695 = vsel %vm350, %v187, 0.0
  %v696 = vadd.f32 %v186, %v695
  %697 = vadd.xlane.f32.xlu0 %v696
  %v698 = vpop.xlane.xlu0 %697
  %v699 = vsel %vm350, %v189, 0.0
  %v700 = vadd.f32 %v188, %v699
  %701 = vadd.xlane.f32.xlu0 %v700
  %v702 = vpop.xlane.xlu0 %701
  %v703 = vsel %vm350, %v191, 0.0
  %v704 = vadd.f32 %v190, %v703
  %705 = vadd.xlane.f32.xlu0 %v704
  %v706 = vpop.xlane.xlu0 %705
  %v707 = vsel %vm350, %v193, 0.0
  %v708 = vadd.f32 %v192, %v707
  %709 = vadd.xlane.f32.xlu0 %v708
  %v710 = vpop.xlane.xlu0 %709
  %v711 = vsel %vm350, %v195, 0.0
  %v712 = vadd.f32 %v194, %v711
  %713 = vadd.xlane.f32.xlu0 %v712
  %v714 = vpop.xlane.xlu0 %713
  %v715 = vsel %vm350, %v197, 0.0
  %v716 = vadd.f32 %v196, %v715
  %717 = vadd.xlane.f32.xlu0 %v716
  %v718 = vpop.xlane.xlu0 %717
  %v719 = vsel %vm350, %v199, 0.0
  %v720 = vadd.f32 %v198, %v719
  %721 = vadd.xlane.f32.xlu0 %v720
  %v722 = vpop.xlane.xlu0 %721
  %v723 = vsel %vm350, %v201, 0.0
  %v724 = vadd.f32 %v200, %v723
  %725 = vadd.xlane.f32.xlu0 %v724
  %v726 = vpop.xlane.xlu0 %725
  %v727 = vsel %vm350, %v203, 0.0
  %v728 = vadd.f32 %v202, %v727
  %729 = vadd.xlane.f32.xlu0 %v728
  %v730 = vpop.xlane.xlu0 %729
  %v731 = vsel %vm350, %v205, 0.0
  %v732 = vadd.f32 %v204, %v731
  %733 = vadd.xlane.f32.xlu0 %v732
  %v734 = vpop.xlane.xlu0 %733
  %v735 = vsel %vm350, %v207, 0.0
  %v736 = vadd.f32 %v206, %v735
  %737 = vadd.xlane.f32.xlu0 %v736
  %v738 = vpop.xlane.xlu0 %737
  %v739 = vsel %vm350, %v209, 0.0
  %v740 = vadd.f32 %v208, %v739
  %741 = vadd.xlane.f32.xlu0 %v740
  %v742 = vpop.xlane.xlu0 %741
  %v743 = vsel %vm350, %v211, 0.0
  %v744 = vadd.f32 %v210, %v743
  %745 = vadd.xlane.f32.xlu0 %v744
  %v746 = vpop.xlane.xlu0 %745
  %v747 = vsel %vm350, %v213, 0.0
  %v748 = vadd.f32 %v212, %v747
  %749 = vadd.xlane.f32.xlu0 %v748
  %v750 = vpop.xlane.xlu0 %749
  %v751 = vsel %vm350, %v215, 0.0
  %v752 = vadd.f32 %v214, %v751
  %753 = vadd.xlane.f32.xlu0 %v752
  %v754 = vpop.xlane.xlu0 %753
  %v755 = vsel %vm350, %v217, 0.0
  %v756 = vadd.f32 %v216, %v755
  %757 = vadd.xlane.f32.xlu0 %v756
  %v758 = vpop.xlane.xlu0 %757
  %v759 = vsel %vm350, %v219, 0.0
  %v760 = vadd.f32 %v218, %v759
  %761 = vadd.xlane.f32.xlu0 %v760
  %v762 = vpop.xlane.xlu0 %761
  %v763 = vsel %vm350, %v221, 0.0
  %v764 = vadd.f32 %v220, %v763
  %765 = vadd.xlane.f32.xlu0 %v764
  %v766 = vpop.xlane.xlu0 %765
  %v767 = vsel %vm350, %v223, 0.0
  %v768 = vadd.f32 %v222, %v767
  %769 = vadd.xlane.f32.xlu0 %v768
  %v770 = vpop.xlane.xlu0 %769
  %v771 = vsel %vm350, %v225, 0.0
  %v772 = vadd.f32 %v224, %v771
  %773 = vadd.xlane.f32.xlu0 %v772
  %v774 = vpop.xlane.xlu0 %773
  %v775 = vsel %vm350, %v227, 0.0
  %v776 = vadd.f32 %v226, %v775
  %777 = vadd.xlane.f32.xlu0 %v776
  %v778 = vpop.xlane.xlu0 %777
  %v779 = vsel %vm350, %v229, 0.0
  %v780 = vadd.f32 %v228, %v779
  %781 = vadd.xlane.f32.xlu0 %v780
  %v782 = vpop.xlane.xlu0 %781
  %v783 = vsel %vm350, %v231, 0.0
  %v784 = vadd.f32 %v230, %v783
  %785 = vadd.xlane.f32.xlu0 %v784
  %v786 = vpop.xlane.xlu0 %785
  %v787 = vsel %vm350, %v233, 0.0
  %v788 = vadd.f32 %v232, %v787
  %789 = vadd.xlane.f32.xlu0 %v788
  %v790 = vpop.xlane.xlu0 %789
  %v791 = vsel %vm350, %v235, 0.0
  %v792 = vadd.f32 %v234, %v791
  %793 = vadd.xlane.f32.xlu0 %v792
  %v794 = vpop.xlane.xlu0 %793
  %v795 = vsel %vm350, %v237, 0.0
  %v796 = vadd.f32 %v236, %v795
  %797 = vadd.xlane.f32.xlu0 %v796
  %v798 = vpop.xlane.xlu0 %797
  %v799 = vsel %vm350, %v239, 0.0
  %v800 = vadd.f32 %v238, %v799
  %801 = vadd.xlane.f32.xlu0 %v800
  %v802 = vpop.xlane.xlu0 %801
  %v803 = vsel %vm350, %v241, 0.0
  %v804 = vadd.f32 %v240, %v803
  %805 = vadd.xlane.f32.xlu0 %v804
  %v806 = vpop.xlane.xlu0 %805
  %v807 = vsel %vm350, %v243, 0.0
  %v808 = vadd.f32 %v242, %v807
  %809 = vadd.xlane.f32.xlu0 %v808
  %v810 = vpop.xlane.xlu0 %809
  %v811 = vsel %vm350, %v245, 0.0
  %v812 = vadd.f32 %v244, %v811
  %813 = vadd.xlane.f32.xlu0 %v812
  %v814 = vpop.xlane.xlu0 %813
  %v815 = vsel %vm350, %v247, 0.0
  %v816 = vadd.f32 %v246, %v815
  %817 = vadd.xlane.f32.xlu0 %v816
  %v818 = vpop.xlane.xlu0 %817
  %v819 = vsel %vm350, %v249, 0.0
  %v820 = vadd.f32 %v248, %v819
  %821 = vadd.xlane.f32.xlu0 %v820
  %v822 = vpop.xlane.xlu0 %821
  %v823 = vsel %vm350, %v251, 0.0
  %v824 = vadd.f32 %v250, %v823
  %825 = vadd.xlane.f32.xlu0 %v824
  %v826 = vpop.xlane.xlu0 %825
  %v827 = vsel %vm350, %v253, 0.0
  %v828 = vadd.f32 %v252, %v827
  %829 = vadd.xlane.f32.xlu0 %v828
  %v830 = vpop.xlane.xlu0 %829
  %v831 = vsel %vm350, %v255, 0.0
  %v832 = vadd.f32 %v254, %v831
  %833 = vadd.xlane.f32.xlu0 %v832
  %v834 = vpop.xlane.xlu0 %833
  %v835 = vsel %vm350, %v257, 0.0
  %v836 = vadd.f32 %v256, %v835
  %837 = vadd.xlane.f32.xlu0 %v836
  %v838 = vpop.xlane.xlu0 %837
  %v839 = vsel %vm350, %v259, 0.0
  %v840 = vadd.f32 %v258, %v839
  %841 = vadd.xlane.f32.xlu0 %v840
  %v842 = vpop.xlane.xlu0 %841
  %v843 = vsel %vm350, %v261, 0.0
  %v844 = vadd.f32 %v260, %v843
  %845 = vadd.xlane.f32.xlu0 %v844
  %v846 = vpop.xlane.xlu0 %845
  %v847 = vsel %vm350, %v263, 0.0
  %v848 = vadd.f32 %v262, %v847
  %849 = vadd.xlane.f32.xlu0 %v848
  %v850 = vpop.xlane.xlu0 %849
  %v851 = vsel %vm350, %v265, 0.0
  %v852 = vadd.f32 %v264, %v851
  %853 = vadd.xlane.f32.xlu0 %v852
  %v854 = vpop.xlane.xlu0 %853
  %v855 = vsel %vm350, %v267, 0.0
  %v856 = vadd.f32 %v266, %v855
  %857 = vadd.xlane.f32.xlu0 %v856
  %v858 = vpop.xlane.xlu0 %857
  %v859 = vsel %vm350, %v269, 0.0
  %v860 = vadd.f32 %v268, %v859
  %861 = vadd.xlane.f32.xlu0 %v860
  %v862 = vpop.xlane.xlu0 %861
  %v863 = vsel %vm350, %v271, 0.0
  %v864 = vadd.f32 %v270, %v863
  %865 = vadd.xlane.f32.xlu0 %v864
  %v866 = vpop.xlane.xlu0 %865
  %v867 = vsel %vm350, %v273, 0.0
  %v868 = vadd.f32 %v272, %v867
  %869 = vadd.xlane.f32.xlu0 %v868
  %v870 = vpop.xlane.xlu0 %869
  %v871 = vsel %vm350, %v275, 0.0
  %v872 = vadd.f32 %v274, %v871
  %873 = vadd.xlane.f32.xlu0 %v872
  %v874 = vpop.xlane.xlu0 %873
  %v875 = vsel %vm350, %v277, 0.0
  %v876 = vadd.f32 %v276, %v875
  %877 = vadd.xlane.f32.xlu0 %v876
  %v878 = vpop.xlane.xlu0 %877
  %v879 = vsel %vm350, %v279, 0.0
  %v880 = vadd.f32 %v278, %v879
  %881 = vadd.xlane.f32.xlu0 %v880
  %v882 = vpop.xlane.xlu0 %881
  %v883 = vsel %vm350, %v281, 0.0
  %v884 = vadd.f32 %v280, %v883
  %885 = vadd.xlane.f32.xlu0 %v884
  %v886 = vpop.xlane.xlu0 %885
  %v887 = vsel %vm350, %v283, 0.0
  %v888 = vadd.f32 %v282, %v887
  %889 = vadd.xlane.f32.xlu0 %v888
  %v890 = vpop.xlane.xlu0 %889
  %v891 = vsel %vm350, %v285, 0.0
  %v892 = vadd.f32 %v284, %v891
  %893 = vadd.xlane.f32.xlu0 %v892
  %v894 = vpop.xlane.xlu0 %893
  %v895 = vsel %vm350, %v287, 0.0
  %v896 = vadd.f32 %v286, %v895
  %897 = vadd.xlane.f32.xlu0 %v896
  %v898 = vpop.xlane.xlu0 %897
  %v899 = vsel %vm350, %v289, 0.0
  %v900 = vadd.f32 %v288, %v899
  %901 = vadd.xlane.f32.xlu0 %v900
  %v902 = vpop.xlane.xlu0 %901
  %v903 = vsel %vm350, %v291, 0.0
  %v904 = vadd.f32 %v290, %v903
  %905 = vadd.xlane.f32.xlu0 %v904
  %v906 = vpop.xlane.xlu0 %905
  %v907 = vsel %vm350, %v293, 0.0
  %v908 = vadd.f32 %v292, %v907
  %909 = vadd.xlane.f32.xlu0 %v908
  %v910 = vpop.xlane.xlu0 %909
  %v911 = vsel %vm350, %v295, 0.0
  %v912 = vadd.f32 %v294, %v911
  %913 = vadd.xlane.f32.xlu0 %v912
  %v914 = vpop.xlane.xlu0 %913
  %v915 = vsel %vm350, %v297, 0.0
  %v916 = vadd.f32 %v296, %v915
  %917 = vadd.xlane.f32.xlu0 %v916
  %v918 = vpop.xlane.xlu0 %917
  %v919 = vsel %vm350, %v299, 0.0
  %v920 = vadd.f32 %v298, %v919
  %921 = vadd.xlane.f32.xlu0 %v920
  %v922 = vpop.xlane.xlu0 %921
  %v923 = vsel %vm350, %v301, 0.0
  %v924 = vadd.f32 %v300, %v923
  %925 = vadd.xlane.f32.xlu0 %v924
  %v926 = vpop.xlane.xlu0 %925
  %v927 = vsel %vm350, %v303, 0.0
  %v928 = vadd.f32 %v302, %v927
  %929 = vadd.xlane.f32.xlu0 %v928
  %v930 = vpop.xlane.xlu0 %929
  %v931 = vsel %vm350, %v305, 0.0
  %v932 = vadd.f32 %v304, %v931
  %933 = vadd.xlane.f32.xlu0 %v932
  %v934 = vpop.xlane.xlu0 %933
  %v935 = vsel %vm350, %v307, 0.0
  %v936 = vadd.f32 %v306, %v935
  %937 = vadd.xlane.f32.xlu0 %v936
  %v938 = vpop.xlane.xlu0 %937
  %v939 = vsel %vm350, %v309, 0.0
  %v940 = vadd.f32 %v308, %v939
  %941 = vadd.xlane.f32.xlu0 %v940
  %v942 = vpop.xlane.xlu0 %941
  %v943 = vsel %vm350, %v311, 0.0
  %v944 = vadd.f32 %v310, %v943
  %945 = vadd.xlane.f32.xlu0 %v944
  %v946 = vpop.xlane.xlu0 %945
  %v947 = vsel %vm350, %v313, 0.0
  %v948 = vadd.f32 %v312, %v947
  %949 = vadd.xlane.f32.xlu0 %v948
  %v950 = vpop.xlane.xlu0 %949
  %v951 = vsel %vm350, %v315, 0.0
  %v952 = vadd.f32 %v314, %v951
  %953 = vadd.xlane.f32.xlu0 %v952
  %v954 = vpop.xlane.xlu0 %953
  %v955 = vsel %vm350, %v317, 0.0
  %v956 = vadd.f32 %v316, %v955
  %957 = vadd.xlane.f32.xlu0 %v956
  %v958 = vpop.xlane.xlu0 %957
  %v959 = vsel %vm350, %v319, 0.0
  %v960 = vadd.f32 %v318, %v959
  %961 = vadd.xlane.f32.xlu0 %v960
  %v962 = vpop.xlane.xlu0 %961
  %v963 = vsel %vm350, %v321, 0.0
  %v964 = vadd.f32 %v320, %v963
  %965 = vadd.xlane.f32.xlu0 %v964
  %v966 = vpop.xlane.xlu0 %965
  %v967 = vsel %vm350, %v323, 0.0
  %v968 = vadd.f32 %v322, %v967
  %969 = vadd.xlane.f32.xlu0 %v968
  %v970 = vpop.xlane.xlu0 %969
  %v971 = vsel %vm350, %v325, 0.0
  %v972 = vadd.f32 %v324, %v971
  %973 = vadd.xlane.f32.xlu0 %v972
  %v974 = vpop.xlane.xlu0 %973
  %v975 = vsel %vm350, %v327, 0.0
  %v976 = vadd.f32 %v326, %v975
  %977 = vadd.xlane.f32.xlu0 %v976
  %v978 = vpop.xlane.xlu0 %977
  %v979 = vsel %vm350, %v329, 0.0
  %v980 = vadd.f32 %v328, %v979
  %981 = vadd.xlane.f32.xlu0 %v980
  %v982 = vpop.xlane.xlu0 %981
  %v983 = vsel %vm350, %v331, 0.0
  %v984 = vadd.f32 %v330, %v983
  %985 = vadd.xlane.f32.xlu0 %v984
  %v986 = vpop.xlane.xlu0 %985
  %v987 = vsel %vm350, %v333, 0.0
  %v988 = vadd.f32 %v332, %v987
  %989 = vadd.xlane.f32.xlu0 %v988
  %v990 = vpop.xlane.xlu0 %989
  %v991 = vsel %vm350, %v335, 0.0
  %v992 = vadd.f32 %v334, %v991
  %993 = vadd.xlane.f32.xlu0 %v992
  %v994 = vpop.xlane.xlu0 %993
  %v995 = vsel %vm350, %v337, 0.0
  %v996 = vadd.f32 %v336, %v995
  %997 = vadd.xlane.f32.xlu0 %v996
  %v998 = vpop.xlane.xlu0 %997
  %v999 = vsel %vm350, %v339, 0.0
  %v1000 = vadd.f32 %v338, %v999
  %1001 = vadd.xlane.f32.xlu0 %v1000
  %v1002 = vpop.xlane.xlu0 %1001
  %v1003 = vsel %vm350, %v341, 0.0
  %v1004 = vadd.f32 %v340, %v1003
  %1005 = vadd.xlane.f32.xlu0 %v1004
  %v1006 = vpop.xlane.xlu0 %1005
  %v1007 = vsel %vm350, %v343, 0.0
  %v1008 = vadd.f32 %v342, %v1007
  %1009 = vadd.xlane.f32.xlu0 %v1008
  %v1010 = vpop.xlane.xlu0 %1009
  %v1011 = vsel %vm350, %v345, 0.0
  %v1012 = vadd.f32 %v344, %v1011
  %1013 = vadd.xlane.f32.xlu0 %v1012
  %v1014 = vpop.xlane.xlu0 %1013
  %v1015 = vsel %vm350, %v347, 0.0
  %v1016 = vadd.f32 %v346, %v1015
  %1017 = vadd.xlane.f32.xlu0 %v1016
  %v1018 = vpop.xlane.xlu0 %1017
  %v1019 = vsel %vm350, %v349, 0.0
  %v1020 = vadd.f32 %v348, %v1019
  %1021 = vadd.xlane.f32.xlu0 %v1020
  %v1022 = vpop.xlane.xlu0 %1021
  %v1023 = vmul.f32 %v354, 0.0051020407
  %v1024 = vmul.f32 %v358, 0.0051020407
  %v1025 = vmul.f32 %v362, 0.0051020407
  %v1026 = vmul.f32 %v366, 0.0051020407
  %v1027 = vmul.f32 %v370, 0.0051020407
  %v1028 = vmul.f32 %v374, 0.0051020407
  %v1029 = vmul.f32 %v378, 0.0051020407
  %v1030 = vmul.f32 %v382, 0.0051020407
  %v1031 = vmul.f32 %v386, 0.0051020407
  %v1032 = vmul.f32 %v390, 0.0051020407
  %v1033 = vmul.f32 %v394, 0.0051020407
  %v1034 = vmul.f32 %v398, 0.0051020407
  %v1035 = vmul.f32 %v402, 0.0051020407
  %v1036 = vmul.f32 %v406, 0.0051020407
  %v1037 = vmul.f32 %v410, 0.0051020407
  %v1038 = vmul.f32 %v414, 0.0051020407
  %v1039 = vmul.f32 %v418, 0.0051020407
  %v1040 = vmul.f32 %v422, 0.0051020407
  %v1041 = vmul.f32 %v426, 0.0051020407
  %v1042 = vmul.f32 %v430, 0.0051020407
  %v1043 = vmul.f32 %v434, 0.0051020407
  %v1044 = vmul.f32 %v438, 0.0051020407
  %v1045 = vmul.f32 %v442, 0.0051020407
  %v1046 = vmul.f32 %v446, 0.0051020407
  %v1047 = vmul.f32 %v450, 0.0051020407
  %v1048 = vmul.f32 %v454, 0.0051020407
  %v1049 = vmul.f32 %v458, 0.0051020407
  %v1050 = vmul.f32 %v462, 0.0051020407
  %v1051 = vmul.f32 %v466, 0.0051020407
  %v1052 = vmul.f32 %v470, 0.0051020407
  %v1053 = vmul.f32 %v474, 0.0051020407
  %v1054 = vmul.f32 %v478, 0.0051020407
  %v1055 = vmul.f32 %v482, 0.0051020407
  %v1056 = vmul.f32 %v486, 0.0051020407
  %v1057 = vmul.f32 %v490, 0.0051020407
  %v1058 = vmul.f32 %v494, 0.0051020407
  %v1059 = vmul.f32 %v498, 0.0051020407
  %v1060 = vmul.f32 %v502, 0.0051020407
  %v1061 = vmul.f32 %v506, 0.0051020407
  %v1062 = vmul.f32 %v510, 0.0051020407
  %v1063 = vmul.f32 %v514, 0.0051020407
  %v1064 = vmul.f32 %v518, 0.0051020407
  %v1065 = vmul.f32 %v522, 0.0051020407
  %v1066 = vmul.f32 %v526, 0.0051020407
  %v1067 = vmul.f32 %v530, 0.0051020407
  %v1068 = vmul.f32 %v534, 0.0051020407
  %v1069 = vmul.f32 %v538, 0.0051020407
  %v1070 = vmul.f32 %v542, 0.0051020407
  %v1071 = vmul.f32 %v546, 0.0051020407
  %v1072 = vmul.f32 %v550, 0.0051020407
  %v1073 = vmul.f32 %v554, 0.0051020407
  %v1074 = vmul.f32 %v558, 0.0051020407
  %v1075 = vmul.f32 %v562, 0.0051020407
  %v1076 = vmul.f32 %v566, 0.0051020407
  %v1077 = vmul.f32 %v570, 0.0051020407
  %v1078 = vmul.f32 %v574, 0.0051020407
  %v1079 = vmul.f32 %v578, 0.0051020407
  %v1080 = vmul.f32 %v582, 0.0051020407
  %v1081 = vmul.f32 %v586, 0.0051020407
  %v1082 = vmul.f32 %v590, 0.0051020407
  %v1083 = vmul.f32 %v594, 0.0051020407
  %v1084 = vmul.f32 %v598, 0.0051020407
  %v1085 = vmul.f32 %v602, 0.0051020407
  %v1086 = vmul.f32 %v606, 0.0051020407
  %v1087 = vmul.f32 %v610, 0.0051020407
  %v1088 = vmul.f32 %v614, 0.0051020407
  %v1089 = vmul.f32 %v618, 0.0051020407
  %v1090 = vmul.f32 %v622, 0.0051020407
  %v1091 = vmul.f32 %v626, 0.0051020407
  %v1092 = vmul.f32 %v630, 0.0051020407
  %v1093 = vmul.f32 %v634, 0.0051020407
  %v1094 = vmul.f32 %v638, 0.0051020407
  %v1095 = vmul.f32 %v642, 0.0051020407
  %v1096 = vmul.f32 %v646, 0.0051020407
  %v1097 = vmul.f32 %v650, 0.0051020407
  %v1098 = vmul.f32 %v654, 0.0051020407
  %v1099 = vmul.f32 %v658, 0.0051020407
  %v1100 = vmul.f32 %v662, 0.0051020407
  %v1101 = vmul.f32 %v666, 0.0051020407
  %v1102 = vmul.f32 %v670, 0.0051020407
  %v1103 = vmul.f32 %v674, 0.0051020407
  %v1104 = vmul.f32 %v678, 0.0051020407
  %v1105 = vmul.f32 %v682, 0.0051020407
  %v1106 = vmul.f32 %v686, 0.0051020407
  %v1107 = vmul.f32 %v690, 0.0051020407
  %v1108 = vmul.f32 %v694, 0.0051020407
  %v1109 = vmul.f32 %v698, 0.0051020407
  %v1110 = vmul.f32 %v702, 0.0051020407
  %v1111 = vmul.f32 %v706, 0.0051020407
  %v1112 = vmul.f32 %v710, 0.0051020407
  %v1113 = vmul.f32 %v714, 0.0051020407
  %v1114 = vmul.f32 %v718, 0.0051020407
  %v1115 = vmul.f32 %v722, 0.0051020407
  %v1116 = vmul.f32 %v726, 0.0051020407
  %v1117 = vmul.f32 %v730, 0.0051020407
  %v1118 = vmul.f32 %v734, 0.0051020407
  %v1119 = vmul.f32 %v738, 0.0051020407
  %v1120 = vmul.f32 %v742, 0.0051020407
  %v1121 = vmul.f32 %v746, 0.0051020407
  %v1122 = vmul.f32 %v750, 0.0051020407
  %v1123 = vmul.f32 %v754, 0.0051020407
  %v1124 = vmul.f32 %v758, 0.0051020407
  %v1125 = vmul.f32 %v762, 0.0051020407
  %v1126 = vmul.f32 %v766, 0.0051020407
  %v1127 = vmul.f32 %v770, 0.0051020407
  %v1128 = vmul.f32 %v774, 0.0051020407
  %v1129 = vmul.f32 %v778, 0.0051020407
  %v1130 = vmul.f32 %v782, 0.0051020407
  %v1131 = vmul.f32 %v786, 0.0051020407
  %v1132 = vmul.f32 %v790, 0.0051020407
  %v1133 = vmul.f32 %v794, 0.0051020407
  %v1134 = vmul.f32 %v798, 0.0051020407
  %v1135 = vmul.f32 %v802, 0.0051020407
  %v1136 = vmul.f32 %v806, 0.0051020407
  %v1137 = vmul.f32 %v810, 0.0051020407
  %v1138 = vmul.f32 %v814, 0.0051020407
  %v1139 = vmul.f32 %v818, 0.0051020407
  %v1140 = vmul.f32 %v822, 0.0051020407
  %v1141 = vmul.f32 %v826, 0.0051020407
  %v1142 = vmul.f32 %v830, 0.0051020407
  %v1143 = vmul.f32 %v834, 0.0051020407
  %v1144 = vmul.f32 %v838, 0.0051020407
  %v1145 = vmul.f32 %v842, 0.0051020407
  %v1146 = vmul.f32 %v846, 0.0051020407
  %v1147 = vmul.f32 %v850, 0.0051020407
  %v1148 = vmul.f32 %v854, 0.0051020407
  %v1149 = vmul.f32 %v858, 0.0051020407
  %v1150 = vmul.f32 %v862, 0.0051020407
  %v1151 = vmul.f32 %v866, 0.0051020407
  %v1152 = vmul.f32 %v870, 0.0051020407
  %v1153 = vmul.f32 %v874, 0.0051020407
  %v1154 = vmul.f32 %v878, 0.0051020407
  %v1155 = vmul.f32 %v882, 0.0051020407
  %v1156 = vmul.f32 %v886, 0.0051020407
  %v1157 = vmul.f32 %v890, 0.0051020407
  %v1158 = vmul.f32 %v894, 0.0051020407
  %v1159 = vmul.f32 %v898, 0.0051020407
  %v1160 = vmul.f32 %v902, 0.0051020407
  %v1161 = vmul.f32 %v906, 0.0051020407
  %v1162 = vmul.f32 %v910, 0.0051020407
  %v1163 = vmul.f32 %v914, 0.0051020407
  %v1164 = vmul.f32 %v918, 0.0051020407
  %v1165 = vmul.f32 %v922, 0.0051020407
  %v1166 = vmul.f32 %v926, 0.0051020407
  %v1167 = vmul.f32 %v930, 0.0051020407
  %v1168 = vmul.f32 %v934, 0.0051020407
  %v1169 = vmul.f32 %v938, 0.0051020407
  %v1170 = vmul.f32 %v942, 0.0051020407
  %v1171 = vmul.f32 %v946, 0.0051020407
  %v1172 = vmul.f32 %v950, 0.0051020407
  %v1173 = vmul.f32 %v954, 0.0051020407
  %v1174 = vmul.f32 %v958, 0.0051020407
  %v1175 = vmul.f32 %v962, 0.0051020407
  %v1176 = vmul.f32 %v966, 0.0051020407
  %v1177 = vmul.f32 %v970, 0.0051020407
  %v1178 = vmul.f32 %v974, 0.0051020407
  %v1179 = vmul.f32 %v978, 0.0051020407
  %v1180 = vmul.f32 %v982, 0.0051020407
  %v1181 = vmul.f32 %v986, 0.0051020407
  %v1182 = vmul.f32 %v990, 0.0051020407
  %v1183 = vmul.f32 %v994, 0.0051020407
  %v1184 = vmul.f32 %v998, 0.0051020407
  %v1185 = vmul.f32 %v1002, 0.0051020407
  %v1186 = vmul.f32 %v1006, 0.0051020407
  %v1187 = vmul.f32 %v1010, 0.0051020407
  %v1188 = vmul.f32 %v1014, 0.0051020407
  %v1189 = vmul.f32 %v1018, 0.0051020407
  %v1190 = vmul.f32 %v1022, 0.0051020407
  %v1191 = vsub.f32 %v14, %v1023
  %v1192 = vsub.f32 %v15, %v1023
  %v1193 = vsub.f32 %v16, %v1024
  %v1194 = vsub.f32 %v17, %v1024
  %v1195 = vsub.f32 %v18, %v1025
  %v1196 = vsub.f32 %v19, %v1025
  %v1197 = vsub.f32 %v20, %v1026
  %v1198 = vsub.f32 %v21, %v1026
  %v1199 = vsub.f32 %v22, %v1027
  %v1200 = vsub.f32 %v23, %v1027
  %v1201 = vsub.f32 %v24, %v1028
  %v1202 = vsub.f32 %v25, %v1028
  %v1203 = vsub.f32 %v26, %v1029
  %v1204 = vsub.f32 %v27, %v1029
  %v1205 = vsub.f32 %v28, %v1030
  %v1206 = vsub.f32 %v29, %v1030
  %v1207 = vsub.f32 %v30, %v1031
  %v1208 = vsub.f32 %v31, %v1031
  %v1209 = vsub.f32 %v32, %v1032
  %v1210 = vsub.f32 %v33, %v1032
  %v1211 = vsub.f32 %v34, %v1033
  %v1212 = vsub.f32 %v35, %v1033
  %v1213 = vsub.f32 %v36, %v1034
  %v1214 = vsub.f32 %v37, %v1034
  %v1215 = vsub.f32 %v38, %v1035
  %v1216 = vsub.f32 %v39, %v1035
  %v1217 = vsub.f32 %v40, %v1036
  %v1218 = vsub.f32 %v41, %v1036
  %v1219 = vsub.f32 %v42, %v1037
  %v1220 = vsub.f32 %v43, %v1037
  %v1221 = vsub.f32 %v44, %v1038
  %v1222 = vsub.f32 %v45, %v1038
  %v1223 = vsub.f32 %v46, %v1039
  %v1224 = vsub.f32 %v47, %v1039
  %v1225 = vsub.f32 %v48, %v1040
  %v1226 = vsub.f32 %v49, %v1040
  %v1227 = vsub.f32 %v50, %v1041
  %v1228 = vsub.f32 %v51, %v1041
  %v1229 = vsub.f32 %v52, %v1042
  %v1230 = vsub.f32 %v53, %v1042
  %v1231 = vsub.f32 %v54, %v1043
  %v1232 = vsub.f32 %v55, %v1043
  %v1233 = vsub.f32 %v56, %v1044
  %v1234 = vsub.f32 %v57, %v1044
  %v1235 = vsub.f32 %v58, %v1045
  %v1236 = vsub.f32 %v59, %v1045
  %v1237 = vsub.f32 %v60, %v1046
  %v1238 = vsub.f32 %v61, %v1046
  %v1239 = vsub.f32 %v62, %v1047
  %v1240 = vsub.f32 %v63, %v1047
  %v1241 = vsub.f32 %v64, %v1048
  %v1242 = vsub.f32 %v65, %v1048
  %v1243 = vsub.f32 %v66, %v1049
  %v1244 = vsub.f32 %v67, %v1049
  %v1245 = vsub.f32 %v68, %v1050
  %v1246 = vsub.f32 %v69, %v1050
  %v1247 = vsub.f32 %v70, %v1051
  %v1248 = vsub.f32 %v71, %v1051
  %v1249 = vsub.f32 %v72, %v1052
  %v1250 = vsub.f32 %v73, %v1052
  %v1251 = vsub.f32 %v74, %v1053
  %v1252 = vsub.f32 %v75, %v1053
  %v1253 = vsub.f32 %v76, %v1054
  %v1254 = vsub.f32 %v77, %v1054
  %v1255 = vsub.f32 %v78, %v1055
  %v1256 = vsub.f32 %v79, %v1055
  %v1257 = vsub.f32 %v80, %v1056
  %v1258 = vsub.f32 %v81, %v1056
  %v1259 = vsub.f32 %v82, %v1057
  %v1260 = vsub.f32 %v83, %v1057
  %v1261 = vsub.f32 %v84, %v1058
  %v1262 = vsub.f32 %v85, %v1058
  %v1263 = vsub.f32 %v86, %v1059
  %v1264 = vsub.f32 %v87, %v1059
  %v1265 = vsub.f32 %v88, %v1060
  %v1266 = vsub.f32 %v89, %v1060
  %v1267 = vsub.f32 %v90, %v1061
  %v1268 = vsub.f32 %v91, %v1061
  %v1269 = vsub.f32 %v92, %v1062
  %v1270 = vsub.f32 %v93, %v1062
  %v1271 = vsub.f32 %v94, %v1063
  %v1272 = vsub.f32 %v95, %v1063
  %v1273 = vsub.f32 %v96, %v1064
  %v1274 = vsub.f32 %v97, %v1064
  %v1275 = vsub.f32 %v98, %v1065
  %v1276 = vsub.f32 %v99, %v1065
  %v1277 = vsub.f32 %v100, %v1066
  %v1278 = vsub.f32 %v101, %v1066
  %v1279 = vsub.f32 %v102, %v1067
  %v1280 = vsub.f32 %v103, %v1067
  %v1281 = vsub.f32 %v104, %v1068
  %v1282 = vsub.f32 %v105, %v1068
  %v1283 = vsub.f32 %v106, %v1069
  %v1284 = vsub.f32 %v107, %v1069
  %v1285 = vsub.f32 %v108, %v1070
  %v1286 = vsub.f32 %v109, %v1070
  %v1287 = vsub.f32 %v110, %v1071
  %v1288 = vsub.f32 %v111, %v1071
  %v1289 = vsub.f32 %v112, %v1072
  %v1290 = vsub.f32 %v113, %v1072
  %v1291 = vsub.f32 %v114, %v1073
  %v1292 = vsub.f32 %v115, %v1073
  %v1293 = vsub.f32 %v116, %v1074
  %v1294 = vsub.f32 %v117, %v1074
  %v1295 = vsub.f32 %v118, %v1075
  %v1296 = vsub.f32 %v119, %v1075
  %v1297 = vsub.f32 %v120, %v1076
  %v1298 = vsub.f32 %v121, %v1076
  %v1299 = vsub.f32 %v122, %v1077
  %v1300 = vsub.f32 %v123, %v1077
  %v1301 = vsub.f32 %v124, %v1078
  %v1302 = vsub.f32 %v125, %v1078
  %v1303 = vsub.f32 %v126, %v1079
  %v1304 = vsub.f32 %v127, %v1079
  %v1305 = vsub.f32 %v128, %v1080
  %v1306 = vsub.f32 %v129, %v1080
  %v1307 = vsub.f32 %v130, %v1081
  %v1308 = vsub.f32 %v131, %v1081
  %v1309 = vsub.f32 %v132, %v1082
  %v1310 = vsub.f32 %v133, %v1082
  %v1311 = vsub.f32 %v134, %v1083
  %v1312 = vsub.f32 %v135, %v1083
  %v1313 = vsub.f32 %v136, %v1084
  %v1314 = vsub.f32 %v137, %v1084
  %v1315 = vsub.f32 %v138, %v1085
  %v1316 = vsub.f32 %v139, %v1085
  %v1317 = vsub.f32 %v140, %v1086
  %v1318 = vsub.f32 %v141, %v1086
  %v1319 = vsub.f32 %v142, %v1087
  %v1320 = vsub.f32 %v143, %v1087
  %v1321 = vsub.f32 %v144, %v1088
  %v1322 = vsub.f32 %v145, %v1088
  %v1323 = vsub.f32 %v146, %v1089
  %v1324 = vsub.f32 %v147, %v1089
  %v1325 = vsub.f32 %v148, %v1090
  %v1326 = vsub.f32 %v149, %v1090
  %v1327 = vsub.f32 %v150, %v1091
  %v1328 = vsub.f32 %v151, %v1091
  %v1329 = vsub.f32 %v152, %v1092
  %v1330 = vsub.f32 %v153, %v1092
  %v1331 = vsub.f32 %v154, %v1093
  %v1332 = vsub.f32 %v155, %v1093
  %v1333 = vsub.f32 %v156, %v1094
  %v1334 = vsub.f32 %v157, %v1094
  %v1335 = vsub.f32 %v158, %v1095
  %v1336 = vsub.f32 %v159, %v1095
  %v1337 = vsub.f32 %v160, %v1096
  %v1338 = vsub.f32 %v161, %v1096
  %v1339 = vsub.f32 %v162, %v1097
  %v1340 = vsub.f32 %v163, %v1097
  %v1341 = vsub.f32 %v164, %v1098
  %v1342 = vsub.f32 %v165, %v1098
  %v1343 = vsub.f32 %v166, %v1099
  %v1344 = vsub.f32 %v167, %v1099
  %v1345 = vsub.f32 %v168, %v1100
  %v1346 = vsub.f32 %v169, %v1100
  %v1347 = vsub.f32 %v170, %v1101
  %v1348 = vsub.f32 %v171, %v1101
  %v1349 = vsub.f32 %v172, %v1102
  %v1350 = vsub.f32 %v173, %v1102
  %v1351 = vsub.f32 %v174, %v1103
  %v1352 = vsub.f32 %v175, %v1103
  %v1353 = vsub.f32 %v176, %v1104
  %v1354 = vsub.f32 %v177, %v1104
  %v1355 = vsub.f32 %v178, %v1105
  %v1356 = vsub.f32 %v179, %v1105
  %v1357 = vsub.f32 %v180, %v1106
  %v1358 = vsub.f32 %v181, %v1106
  %v1359 = vsub.f32 %v182, %v1107
  %v1360 = vsub.f32 %v183, %v1107
  %v1361 = vsub.f32 %v184, %v1108
  %v1362 = vsub.f32 %v185, %v1108
  %v1363 = vsub.f32 %v186, %v1109
  %v1364 = vsub.f32 %v187, %v1109
  %v1365 = vsub.f32 %v188, %v1110
  %v1366 = vsub.f32 %v189, %v1110
  %v1367 = vsub.f32 %v190, %v1111
  %v1368 = vsub.f32 %v191, %v1111
  %v1369 = vsub.f32 %v192, %v1112
  %v1370 = vsub.f32 %v193, %v1112
  %v1371 = vsub.f32 %v194, %v1113
  %v1372 = vsub.f32 %v195, %v1113
  %v1373 = vsub.f32 %v196, %v1114
  %v1374 = vsub.f32 %v197, %v1114
  %v1375 = vsub.f32 %v198, %v1115
  %v1376 = vsub.f32 %v199, %v1115
  %v1377 = vsub.f32 %v200, %v1116
  %v1378 = vsub.f32 %v201, %v1116
  %v1379 = vsub.f32 %v202, %v1117
  %v1380 = vsub.f32 %v203, %v1117
  %v1381 = vsub.f32 %v204, %v1118
  %v1382 = vsub.f32 %v205, %v1118
  %v1383 = vsub.f32 %v206, %v1119
  %v1384 = vsub.f32 %v207, %v1119
  %v1385 = vsub.f32 %v208, %v1120
  %v1386 = vsub.f32 %v209, %v1120
  %v1387 = vsub.f32 %v210, %v1121
  %v1388 = vsub.f32 %v211, %v1121
  %v1389 = vsub.f32 %v212, %v1122
  %v1390 = vsub.f32 %v213, %v1122
  %v1391 = vsub.f32 %v214, %v1123
  %v1392 = vsub.f32 %v215, %v1123
  %v1393 = vsub.f32 %v216, %v1124
  %v1394 = vsub.f32 %v217, %v1124
  %v1395 = vsub.f32 %v218, %v1125
  %v1396 = vsub.f32 %v219, %v1125
  %v1397 = vsub.f32 %v220, %v1126
  %v1398 = vsub.f32 %v221, %v1126
  %v1399 = vsub.f32 %v222, %v1127
  %v1400 = vsub.f32 %v223, %v1127
  %v1401 = vsub.f32 %v224, %v1128
  %v1402 = vsub.f32 %v225, %v1128
  %v1403 = vsub.f32 %v226, %v1129
  %v1404 = vsub.f32 %v227, %v1129
  %v1405 = vsub.f32 %v228, %v1130
  %v1406 = vsub.f32 %v229, %v1130
  %v1407 = vsub.f32 %v230, %v1131
  %v1408 = vsub.f32 %v231, %v1131
  %v1409 = vsub.f32 %v232, %v1132
  %v1410 = vsub.f32 %v233, %v1132
  %v1411 = vsub.f32 %v234, %v1133
  %v1412 = vsub.f32 %v235, %v1133
  %v1413 = vsub.f32 %v236, %v1134
  %v1414 = vsub.f32 %v237, %v1134
  %v1415 = vsub.f32 %v238, %v1135
  %v1416 = vsub.f32 %v239, %v1135
  %v1417 = vsub.f32 %v240, %v1136
  %v1418 = vsub.f32 %v241, %v1136
  %v1419 = vsub.f32 %v242, %v1137
  %v1420 = vsub.f32 %v243, %v1137
  %v1421 = vsub.f32 %v244, %v1138
  %v1422 = vsub.f32 %v245, %v1138
  %v1423 = vsub.f32 %v246, %v1139
  %v1424 = vsub.f32 %v247, %v1139
  %v1425 = vsub.f32 %v248, %v1140
  %v1426 = vsub.f32 %v249, %v1140
  %v1427 = vsub.f32 %v250, %v1141
  %v1428 = vsub.f32 %v251, %v1141
  %v1429 = vsub.f32 %v252, %v1142
  %v1430 = vsub.f32 %v253, %v1142
  %v1431 = vsub.f32 %v254, %v1143
  %v1432 = vsub.f32 %v255, %v1143
  %v1433 = vsub.f32 %v256, %v1144
  %v1434 = vsub.f32 %v257, %v1144
  %v1435 = vsub.f32 %v258, %v1145
  %v1436 = vsub.f32 %v259, %v1145
  %v1437 = vsub.f32 %v260, %v1146
  %v1438 = vsub.f32 %v261, %v1146
  %v1439 = vsub.f32 %v262, %v1147
  %v1440 = vsub.f32 %v263, %v1147
  %v1441 = vsub.f32 %v264, %v1148
  %v1442 = vsub.f32 %v265, %v1148
  %v1443 = vsub.f32 %v266, %v1149
  %v1444 = vsub.f32 %v267, %v1149
  %v1445 = vsub.f32 %v268, %v1150
  %v1446 = vsub.f32 %v269, %v1150
  %v1447 = vsub.f32 %v270, %v1151
  %v1448 = vsub.f32 %v271, %v1151
  %v1449 = vsub.f32 %v272, %v1152
  %v1450 = vsub.f32 %v273, %v1152
  %v1451 = vsub.f32 %v274, %v1153
  %v1452 = vsub.f32 %v275, %v1153
  %v1453 = vsub.f32 %v276, %v1154
  %v1454 = vsub.f32 %v277, %v1154
  %v1455 = vsub.f32 %v278, %v1155
  %v1456 = vsub.f32 %v279, %v1155
  %v1457 = vsub.f32 %v280, %v1156
  %v1458 = vsub.f32 %v281, %v1156
  %v1459 = vsub.f32 %v282, %v1157
  %v1460 = vsub.f32 %v283, %v1157
  %v1461 = vsub.f32 %v284, %v1158
  %v1462 = vsub.f32 %v285, %v1158
  %v1463 = vsub.f32 %v286, %v1159
  %v1464 = vsub.f32 %v287, %v1159
  %v1465 = vsub.f32 %v288, %v1160
  %v1466 = vsub.f32 %v289, %v1160
  %v1467 = vsub.f32 %v290, %v1161
  %v1468 = vsub.f32 %v291, %v1161
  %v1469 = vsub.f32 %v292, %v1162
  %v1470 = vsub.f32 %v293, %v1162
  %v1471 = vsub.f32 %v294, %v1163
  %v1472 = vsub.f32 %v295, %v1163
  %v1473 = vsub.f32 %v296, %v1164
  %v1474 = vsub.f32 %v297, %v1164
  %v1475 = vsub.f32 %v298, %v1165
  %v1476 = vsub.f32 %v299, %v1165
  %v1477 = vsub.f32 %v300, %v1166
  %v1478 = vsub.f32 %v301, %v1166
  %v1479 = vsub.f32 %v302, %v1167
  %v1480 = vsub.f32 %v303, %v1167
  %v1481 = vsub.f32 %v304, %v1168
  %v1482 = vsub.f32 %v305, %v1168
  %v1483 = vsub.f32 %v306, %v1169
  %v1484 = vsub.f32 %v307, %v1169
  %v1485 = vsub.f32 %v308, %v1170
  %v1486 = vsub.f32 %v309, %v1170
  %v1487 = vsub.f32 %v310, %v1171
  %v1488 = vsub.f32 %v311, %v1171
  %v1489 = vsub.f32 %v312, %v1172
  %v1490 = vsub.f32 %v313, %v1172
  %v1491 = vsub.f32 %v314, %v1173
  %v1492 = vsub.f32 %v315, %v1173
  %v1493 = vsub.f32 %v316, %v1174
  %v1494 = vsub.f32 %v317, %v1174
  %v1495 = vsub.f32 %v318, %v1175
  %v1496 = vsub.f32 %v319, %v1175
  %v1497 = vsub.f32 %v320, %v1176
  %v1498 = vsub.f32 %v321, %v1176
  %v1499 = vsub.f32 %v322, %v1177
  %v1500 = vsub.f32 %v323, %v1177
  %v1501 = vsub.f32 %v324, %v1178
  %v1502 = vsub.f32 %v325, %v1178
  %v1503 = vsub.f32 %v326, %v1179
  %v1504 = vsub.f32 %v327, %v1179
  %v1505 = vsub.f32 %v328, %v1180
  %v1506 = vsub.f32 %v329, %v1180
  %v1507 = vsub.f32 %v330, %v1181
  %v1508 = vsub.f32 %v331, %v1181
  %v1509 = vsub.f32 %v332, %v1182
  %v1510 = vsub.f32 %v333, %v1182
  %v1511 = vsub.f32 %v334, %v1183
  %v1512 = vsub.f32 %v335, %v1183
  %v1513 = vsub.f32 %v336, %v1184
  %v1514 = vsub.f32 %v337, %v1184
  %v1515 = vsub.f32 %v338, %v1185
  %v1516 = vsub.f32 %v339, %v1185
  %v1517 = vsub.f32 %v340, %v1186
  %v1518 = vsub.f32 %v341, %v1186
  %v1519 = vsub.f32 %v342, %v1187
  %v1520 = vsub.f32 %v343, %v1187
  %v1521 = vsub.f32 %v344, %v1188
  %v1522 = vsub.f32 %v345, %v1188
  %v1523 = vsub.f32 %v346, %v1189
  %v1524 = vsub.f32 %v347, %v1189
  %v1525 = vsub.f32 %v348, %v1190
  %v1526 = vsub.f32 %v349, %v1190
  %v1527 = vmul.f32 %v1191, %v1191
  %v1528 = vmul.f32 %v1192, %v1192
  %v1529 = vmul.f32 %v1193, %v1193
  %v1530 = vmul.f32 %v1194, %v1194
  %v1531 = vmul.f32 %v1195, %v1195
  %v1532 = vmul.f32 %v1196, %v1196
  %v1533 = vmul.f32 %v1197, %v1197
  %v1534 = vmul.f32 %v1198, %v1198
  %v1535 = vmul.f32 %v1199, %v1199
  %v1536 = vmul.f32 %v1200, %v1200
  %v1537 = vmul.f32 %v1201, %v1201
  %v1538 = vmul.f32 %v1202, %v1202
  %v1539 = vmul.f32 %v1203, %v1203
  %v1540 = vmul.f32 %v1204, %v1204
  %v1541 = vmul.f32 %v1205, %v1205
  %v1542 = vmul.f32 %v1206, %v1206
  %v1543 = vmul.f32 %v1207, %v1207
  %v1544 = vmul.f32 %v1208, %v1208
  %v1545 = vmul.f32 %v1209, %v1209
  %v1546 = vmul.f32 %v1210, %v1210
  %v1547 = vmul.f32 %v1211, %v1211
  %v1548 = vmul.f32 %v1212, %v1212
  %v1549 = vmul.f32 %v1213, %v1213
  %v1550 = vmul.f32 %v1214, %v1214
  %v1551 = vmul.f32 %v1215, %v1215
  %v1552 = vmul.f32 %v1216, %v1216
  %v1553 = vmul.f32 %v1217, %v1217
  %v1554 = vmul.f32 %v1218, %v1218
  %v1555 = vmul.f32 %v1219, %v1219
  %v1556 = vmul.f32 %v1220, %v1220
  %v1557 = vmul.f32 %v1221, %v1221
  %v1558 = vmul.f32 %v1222, %v1222
  %v1559 = vmul.f32 %v1223, %v1223
  %v1560 = vmul.f32 %v1224, %v1224
  %v1561 = vmul.f32 %v1225, %v1225
  %v1562 = vmul.f32 %v1226, %v1226
  %v1563 = vmul.f32 %v1227, %v1227
  %v1564 = vmul.f32 %v1228, %v1228
  %v1565 = vmul.f32 %v1229, %v1229
  %v1566 = vmul.f32 %v1230, %v1230
  %v1567 = vmul.f32 %v1231, %v1231
  %v1568 = vmul.f32 %v1232, %v1232
  %v1569 = vmul.f32 %v1233, %v1233
  %v1570 = vmul.f32 %v1234, %v1234
  %v1571 = vmul.f32 %v1235, %v1235
  %v1572 = vmul.f32 %v1236, %v1236
  %v1573 = vmul.f32 %v1237, %v1237
  %v1574 = vmul.f32 %v1238, %v1238
  %v1575 = vmul.f32 %v1239, %v1239
  %v1576 = vmul.f32 %v1240, %v1240
  %v1577 = vmul.f32 %v1241, %v1241
  %v1578 = vmul.f32 %v1242, %v1242
  %v1579 = vmul.f32 %v1243, %v1243
  %v1580 = vmul.f32 %v1244, %v1244
  %v1581 = vmul.f32 %v1245, %v1245
  %v1582 = vmul.f32 %v1246, %v1246
  %v1583 = vmul.f32 %v1247, %v1247
  %v1584 = vmul.f32 %v1248, %v1248
  %v1585 = vmul.f32 %v1249, %v1249
  %v1586 = vmul.f32 %v1250, %v1250
  %v1587 = vmul.f32 %v1251, %v1251
  %v1588 = vmul.f32 %v1252, %v1252
  %v1589 = vmul.f32 %v1253, %v1253
  %v1590 = vmul.f32 %v1254, %v1254
  %v1591 = vmul.f32 %v1255, %v1255
  %v1592 = vmul.f32 %v1256, %v1256
  %v1593 = vmul.f32 %v1257, %v1257
  %v1594 = vmul.f32 %v1258, %v1258
  %v1595 = vmul.f32 %v1259, %v1259
  %v1596 = vmul.f32 %v1260, %v1260
  %v1597 = vmul.f32 %v1261, %v1261
  %v1598 = vmul.f32 %v1262, %v1262
  %v1599 = vmul.f32 %v1263, %v1263
  %v1600 = vmul.f32 %v1264, %v1264
  %v1601 = vmul.f32 %v1265, %v1265
  %v1602 = vmul.f32 %v1266, %v1266
  %v1603 = vmul.f32 %v1267, %v1267
  %v1604 = vmul.f32 %v1268, %v1268
  %v1605 = vmul.f32 %v1269, %v1269
  %v1606 = vmul.f32 %v1270, %v1270
  %v1607 = vmul.f32 %v1271, %v1271
  %v1608 = vmul.f32 %v1272, %v1272
  %v1609 = vmul.f32 %v1273, %v1273
  %v1610 = vmul.f32 %v1274, %v1274
  %v1611 = vmul.f32 %v1275, %v1275
  %v1612 = vmul.f32 %v1276, %v1276
  %v1613 = vmul.f32 %v1277, %v1277
  %v1614 = vmul.f32 %v1278, %v1278
  %v1615 = vmul.f32 %v1279, %v1279
  %v1616 = vmul.f32 %v1280, %v1280
  %v1617 = vmul.f32 %v1281, %v1281
  %v1618 = vmul.f32 %v1282, %v1282
  %v1619 = vmul.f32 %v1283, %v1283
  %v1620 = vmul.f32 %v1284, %v1284
  %v1621 = vmul.f32 %v1285, %v1285
  %v1622 = vmul.f32 %v1286, %v1286
  %v1623 = vmul.f32 %v1287, %v1287
  %v1624 = vmul.f32 %v1288, %v1288
  %v1625 = vmul.f32 %v1289, %v1289
  %v1626 = vmul.f32 %v1290, %v1290
  %v1627 = vmul.f32 %v1291, %v1291
  %v1628 = vmul.f32 %v1292, %v1292
  %v1629 = vmul.f32 %v1293, %v1293
  %v1630 = vmul.f32 %v1294, %v1294
  %v1631 = vmul.f32 %v1295, %v1295
  %v1632 = vmul.f32 %v1296, %v1296
  %v1633 = vmul.f32 %v1297, %v1297
  %v1634 = vmul.f32 %v1298, %v1298
  %v1635 = vmul.f32 %v1299, %v1299
  %v1636 = vmul.f32 %v1300, %v1300
  %v1637 = vmul.f32 %v1301, %v1301
  %v1638 = vmul.f32 %v1302, %v1302
  %v1639 = vmul.f32 %v1303, %v1303
  %v1640 = vmul.f32 %v1304, %v1304
  %v1641 = vmul.f32 %v1305, %v1305
  %v1642 = vmul.f32 %v1306, %v1306
  %v1643 = vmul.f32 %v1307, %v1307
  %v1644 = vmul.f32 %v1308, %v1308
  %v1645 = vmul.f32 %v1309, %v1309
  %v1646 = vmul.f32 %v1310, %v1310
  %v1647 = vmul.f32 %v1311, %v1311
  %v1648 = vmul.f32 %v1312, %v1312
  %v1649 = vmul.f32 %v1313, %v1313
  %v1650 = vmul.f32 %v1314, %v1314
  %v1651 = vmul.f32 %v1315, %v1315
  %v1652 = vmul.f32 %v1316, %v1316
  %v1653 = vmul.f32 %v1317, %v1317
  %v1654 = vmul.f32 %v1318, %v1318
  %v1655 = vmul.f32 %v1319, %v1319
  %v1656 = vmul.f32 %v1320, %v1320
  %v1657 = vmul.f32 %v1321, %v1321
  %v1658 = vmul.f32 %v1322, %v1322
  %v1659 = vmul.f32 %v1323, %v1323
  %v1660 = vmul.f32 %v1324, %v1324
  %v1661 = vmul.f32 %v1325, %v1325
  %v1662 = vmul.f32 %v1326, %v1326
  %v1663 = vmul.f32 %v1327, %v1327
  %v1664 = vmul.f32 %v1328, %v1328
  %v1665 = vmul.f32 %v1329, %v1329
  %v1666 = vmul.f32 %v1330, %v1330
  %v1667 = vmul.f32 %v1331, %v1331
  %v1668 = vmul.f32 %v1332, %v1332
  %v1669 = vmul.f32 %v1333, %v1333
  %v1670 = vmul.f32 %v1334, %v1334
  %v1671 = vmul.f32 %v1335, %v1335
  %v1672 = vmul.f32 %v1336, %v1336
  %v1673 = vmul.f32 %v1337, %v1337
  %v1674 = vmul.f32 %v1338, %v1338
  %v1675 = vmul.f32 %v1339, %v1339
  %v1676 = vmul.f32 %v1340, %v1340
  %v1677 = vmul.f32 %v1341, %v1341
  %v1678 = vmul.f32 %v1342, %v1342
  %v1679 = vmul.f32 %v1343, %v1343
  %v1680 = vmul.f32 %v1344, %v1344
  %v1681 = vmul.f32 %v1345, %v1345
  %v1682 = vmul.f32 %v1346, %v1346
  %v1683 = vmul.f32 %v1347, %v1347
  %v1684 = vmul.f32 %v1348, %v1348
  %v1685 = vmul.f32 %v1349, %v1349
  %v1686 = vmul.f32 %v1350, %v1350
  %v1687 = vmul.f32 %v1351, %v1351
  %v1688 = vmul.f32 %v1352, %v1352
  %v1689 = vmul.f32 %v1353, %v1353
  %v1690 = vmul.f32 %v1354, %v1354
  %v1691 = vmul.f32 %v1355, %v1355
  %v1692 = vmul.f32 %v1356, %v1356
  %v1693 = vmul.f32 %v1357, %v1357
  %v1694 = vmul.f32 %v1358, %v1358
  %v1695 = vmul.f32 %v1359, %v1359
  %v1696 = vmul.f32 %v1360, %v1360
  %v1697 = vmul.f32 %v1361, %v1361
  %v1698 = vmul.f32 %v1362, %v1362
  %v1699 = vmul.f32 %v1363, %v1363
  %v1700 = vmul.f32 %v1364, %v1364
  %v1701 = vmul.f32 %v1365, %v1365
  %v1702 = vmul.f32 %v1366, %v1366
  %v1703 = vmul.f32 %v1367, %v1367
  %v1704 = vmul.f32 %v1368, %v1368
  %v1705 = vmul.f32 %v1369, %v1369
  %v1706 = vmul.f32 %v1370, %v1370
  %v1707 = vmul.f32 %v1371, %v1371
  %v1708 = vmul.f32 %v1372, %v1372
  %v1709 = vmul.f32 %v1373, %v1373
  %v1710 = vmul.f32 %v1374, %v1374
  %v1711 = vmul.f32 %v1375, %v1375
  %v1712 = vmul.f32 %v1376, %v1376
  %v1713 = vmul.f32 %v1377, %v1377
  %v1714 = vmul.f32 %v1378, %v1378
  %v1715 = vmul.f32 %v1379, %v1379
  %v1716 = vmul.f32 %v1380, %v1380
  %v1717 = vmul.f32 %v1381, %v1381
  %v1718 = vmul.f32 %v1382, %v1382
  %v1719 = vmul.f32 %v1383, %v1383
  %v1720 = vmul.f32 %v1384, %v1384
  %v1721 = vmul.f32 %v1385, %v1385
  %v1722 = vmul.f32 %v1386, %v1386
  %v1723 = vmul.f32 %v1387, %v1387
  %v1724 = vmul.f32 %v1388, %v1388
  %v1725 = vmul.f32 %v1389, %v1389
  %v1726 = vmul.f32 %v1390, %v1390
  %v1727 = vmul.f32 %v1391, %v1391
  %v1728 = vmul.f32 %v1392, %v1392
  %v1729 = vmul.f32 %v1393, %v1393
  %v1730 = vmul.f32 %v1394, %v1394
  %v1731 = vmul.f32 %v1395, %v1395
  %v1732 = vmul.f32 %v1396, %v1396
  %v1733 = vmul.f32 %v1397, %v1397
  %v1734 = vmul.f32 %v1398, %v1398
  %v1735 = vmul.f32 %v1399, %v1399
  %v1736 = vmul.f32 %v1400, %v1400
  %v1737 = vmul.f32 %v1401, %v1401
  %v1738 = vmul.f32 %v1402, %v1402
  %v1739 = vmul.f32 %v1403, %v1403
  %v1740 = vmul.f32 %v1404, %v1404
  %v1741 = vmul.f32 %v1405, %v1405
  %v1742 = vmul.f32 %v1406, %v1406
  %v1743 = vmul.f32 %v1407, %v1407
  %v1744 = vmul.f32 %v1408, %v1408
  %v1745 = vmul.f32 %v1409, %v1409
  %v1746 = vmul.f32 %v1410, %v1410
  %v1747 = vmul.f32 %v1411, %v1411
  %v1748 = vmul.f32 %v1412, %v1412
  %v1749 = vmul.f32 %v1413, %v1413
  %v1750 = vmul.f32 %v1414, %v1414
  %v1751 = vmul.f32 %v1415, %v1415
  %v1752 = vmul.f32 %v1416, %v1416
  %v1753 = vmul.f32 %v1417, %v1417
  %v1754 = vmul.f32 %v1418, %v1418
  %v1755 = vmul.f32 %v1419, %v1419
  %v1756 = vmul.f32 %v1420, %v1420
  %v1757 = vmul.f32 %v1421, %v1421
  %v1758 = vmul.f32 %v1422, %v1422
  %v1759 = vmul.f32 %v1423, %v1423
  %v1760 = vmul.f32 %v1424, %v1424
  %v1761 = vmul.f32 %v1425, %v1425
  %v1762 = vmul.f32 %v1426, %v1426
  %v1763 = vmul.f32 %v1427, %v1427
  %v1764 = vmul.f32 %v1428, %v1428
  %v1765 = vmul.f32 %v1429, %v1429
  %v1766 = vmul.f32 %v1430, %v1430
  %v1767 = vmul.f32 %v1431, %v1431
  %v1768 = vmul.f32 %v1432, %v1432
  %v1769 = vmul.f32 %v1433, %v1433
  %v1770 = vmul.f32 %v1434, %v1434
  %v1771 = vmul.f32 %v1435, %v1435
  %v1772 = vmul.f32 %v1436, %v1436
  %v1773 = vmul.f32 %v1437, %v1437
  %v1774 = vmul.f32 %v1438, %v1438
  %v1775 = vmul.f32 %v1439, %v1439
  %v1776 = vmul.f32 %v1440, %v1440
  %v1777 = vmul.f32 %v1441, %v1441
  %v1778 = vmul.f32 %v1442, %v1442
  %v1779 = vmul.f32 %v1443, %v1443
  %v1780 = vmul.f32 %v1444, %v1444
  %v1781 = vmul.f32 %v1445, %v1445
  %v1782 = vmul.f32 %v1446, %v1446
  %v1783 = vmul.f32 %v1447, %v1447
  %v1784 = vmul.f32 %v1448, %v1448
  %v1785 = vmul.f32 %v1449, %v1449
  %v1786 = vmul.f32 %v1450, %v1450
  %v1787 = vmul.f32 %v1451, %v1451
  %v1788 = vmul.f32 %v1452, %v1452
  %v1789 = vmul.f32 %v1453, %v1453
  %v1790 = vmul.f32 %v1454, %v1454
  %v1791 = vmul.f32 %v1455, %v1455
  %v1792 = vmul.f32 %v1456, %v1456
  %v1793 = vmul.f32 %v1457, %v1457
  %v1794 = vmul.f32 %v1458, %v1458
  %v1795 = vmul.f32 %v1459, %v1459
  %v1796 = vmul.f32 %v1460, %v1460
  %v1797 = vmul.f32 %v1461, %v1461
  %v1798 = vmul.f32 %v1462, %v1462
  %v1799 = vmul.f32 %v1463, %v1463
  %v1800 = vmul.f32 %v1464, %v1464
  %v1801 = vmul.f32 %v1465, %v1465
  %v1802 = vmul.f32 %v1466, %v1466
  %v1803 = vmul.f32 %v1467, %v1467
  %v1804 = vmul.f32 %v1468, %v1468
  %v1805 = vmul.f32 %v1469, %v1469
  %v1806 = vmul.f32 %v1470, %v1470
  %v1807 = vmul.f32 %v1471, %v1471
  %v1808 = vmul.f32 %v1472, %v1472
  %v1809 = vmul.f32 %v1473, %v1473
  %v1810 = vmul.f32 %v1474, %v1474
  %v1811 = vmul.f32 %v1475, %v1475
  %v1812 = vmul.f32 %v1476, %v1476
  %v1813 = vmul.f32 %v1477, %v1477
  %v1814 = vmul.f32 %v1478, %v1478
  %v1815 = vmul.f32 %v1479, %v1479
  %v1816 = vmul.f32 %v1480, %v1480
  %v1817 = vmul.f32 %v1481, %v1481
  %v1818 = vmul.f32 %v1482, %v1482
  %v1819 = vmul.f32 %v1483, %v1483
  %v1820 = vmul.f32 %v1484, %v1484
  %v1821 = vmul.f32 %v1485, %v1485
  %v1822 = vmul.f32 %v1486, %v1486
  %v1823 = vmul.f32 %v1487, %v1487
  %v1824 = vmul.f32 %v1488, %v1488
  %v1825 = vmul.f32 %v1489, %v1489
  %v1826 = vmul.f32 %v1490, %v1490
  %v1827 = vmul.f32 %v1491, %v1491
  %v1828 = vmul.f32 %v1492, %v1492
  %v1829 = vmul.f32 %v1493, %v1493
  %v1830 = vmul.f32 %v1494, %v1494
  %v1831 = vmul.f32 %v1495, %v1495
  %v1832 = vmul.f32 %v1496, %v1496
  %v1833 = vmul.f32 %v1497, %v1497
  %v1834 = vmul.f32 %v1498, %v1498
  %v1835 = vmul.f32 %v1499, %v1499
  %v1836 = vmul.f32 %v1500, %v1500
  %v1837 = vmul.f32 %v1501, %v1501
  %v1838 = vmul.f32 %v1502, %v1502
  %v1839 = vmul.f32 %v1503, %v1503
  %v1840 = vmul.f32 %v1504, %v1504
  %v1841 = vmul.f32 %v1505, %v1505
  %v1842 = vmul.f32 %v1506, %v1506
  %v1843 = vmul.f32 %v1507, %v1507
  %v1844 = vmul.f32 %v1508, %v1508
  %v1845 = vmul.f32 %v1509, %v1509
  %v1846 = vmul.f32 %v1510, %v1510
  %v1847 = vmul.f32 %v1511, %v1511
  %v1848 = vmul.f32 %v1512, %v1512
  %v1849 = vmul.f32 %v1513, %v1513
  %v1850 = vmul.f32 %v1514, %v1514
  %v1851 = vmul.f32 %v1515, %v1515
  %v1852 = vmul.f32 %v1516, %v1516
  %v1853 = vmul.f32 %v1517, %v1517
  %v1854 = vmul.f32 %v1518, %v1518
  %v1855 = vmul.f32 %v1519, %v1519
  %v1856 = vmul.f32 %v1520, %v1520
  %v1857 = vmul.f32 %v1521, %v1521
  %v1858 = vmul.f32 %v1522, %v1522
  %v1859 = vmul.f32 %v1523, %v1523
  %v1860 = vmul.f32 %v1524, %v1524
  %v1861 = vmul.f32 %v1525, %v1525
  %v1862 = vmul.f32 %v1526, %v1526
  %v1863 = vsel %vm350, %v1528, 0.0
  %v1864 = vadd.f32 %v1527, %v1863
  %1865 = vadd.xlane.f32.xlu0 %v1864
  %v1866 = vpop.xlane.xlu0 %1865
  %v1867 = vsel %vm350, %v1530, 0.0
  %v1868 = vadd.f32 %v1529, %v1867
  %1869 = vadd.xlane.f32.xlu0 %v1868
  %v1870 = vpop.xlane.xlu0 %1869
  %v1871 = vsel %vm350, %v1532, 0.0
  %v1872 = vadd.f32 %v1531, %v1871
  %1873 = vadd.xlane.f32.xlu0 %v1872
  %v1874 = vpop.xlane.xlu0 %1873
  %v1875 = vsel %vm350, %v1534, 0.0
  %v1876 = vadd.f32 %v1533, %v1875
  %1877 = vadd.xlane.f32.xlu0 %v1876
  %v1878 = vpop.xlane.xlu0 %1877
  %v1879 = vsel %vm350, %v1536, 0.0
  %v1880 = vadd.f32 %v1535, %v1879
  %1881 = vadd.xlane.f32.xlu0 %v1880
  %v1882 = vpop.xlane.xlu0 %1881
  %v1883 = vsel %vm350, %v1538, 0.0
  %v1884 = vadd.f32 %v1537, %v1883
  %1885 = vadd.xlane.f32.xlu0 %v1884
  %v1886 = vpop.xlane.xlu0 %1885
  %v1887 = vsel %vm350, %v1540, 0.0
  %v1888 = vadd.f32 %v1539, %v1887
  %1889 = vadd.xlane.f32.xlu0 %v1888
  %v1890 = vpop.xlane.xlu0 %1889
  %v1891 = vsel %vm350, %v1542, 0.0
  %v1892 = vadd.f32 %v1541, %v1891
  %1893 = vadd.xlane.f32.xlu0 %v1892
  %v1894 = vpop.xlane.xlu0 %1893
  %v1895 = vsel %vm350, %v1544, 0.0
  %v1896 = vadd.f32 %v1543, %v1895
  %1897 = vadd.xlane.f32.xlu0 %v1896
  %v1898 = vpop.xlane.xlu0 %1897
  %v1899 = vsel %vm350, %v1546, 0.0
  %v1900 = vadd.f32 %v1545, %v1899
  %1901 = vadd.xlane.f32.xlu0 %v1900
  %v1902 = vpop.xlane.xlu0 %1901
  %v1903 = vsel %vm350, %v1548, 0.0
  %v1904 = vadd.f32 %v1547, %v1903
  %1905 = vadd.xlane.f32.xlu0 %v1904
  %v1906 = vpop.xlane.xlu0 %1905
  %v1907 = vsel %vm350, %v1550, 0.0
  %v1908 = vadd.f32 %v1549, %v1907
  %1909 = vadd.xlane.f32.xlu0 %v1908
  %v1910 = vpop.xlane.xlu0 %1909
  %v1911 = vsel %vm350, %v1552, 0.0
  %v1912 = vadd.f32 %v1551, %v1911
  %1913 = vadd.xlane.f32.xlu0 %v1912
  %v1914 = vpop.xlane.xlu0 %1913
  %v1915 = vsel %vm350, %v1554, 0.0
  %v1916 = vadd.f32 %v1553, %v1915
  %1917 = vadd.xlane.f32.xlu0 %v1916
  %v1918 = vpop.xlane.xlu0 %1917
  %v1919 = vsel %vm350, %v1556, 0.0
  %v1920 = vadd.f32 %v1555, %v1919
  %1921 = vadd.xlane.f32.xlu0 %v1920
  %v1922 = vpop.xlane.xlu0 %1921
  %v1923 = vsel %vm350, %v1558, 0.0
  %v1924 = vadd.f32 %v1557, %v1923
  %1925 = vadd.xlane.f32.xlu0 %v1924
  %v1926 = vpop.xlane.xlu0 %1925
  %v1927 = vsel %vm350, %v1560, 0.0
  %v1928 = vadd.f32 %v1559, %v1927
  %1929 = vadd.xlane.f32.xlu0 %v1928
  %v1930 = vpop.xlane.xlu0 %1929
  %v1931 = vsel %vm350, %v1562, 0.0
  %v1932 = vadd.f32 %v1561, %v1931
  %1933 = vadd.xlane.f32.xlu0 %v1932
  %v1934 = vpop.xlane.xlu0 %1933
  %v1935 = vsel %vm350, %v1564, 0.0
  %v1936 = vadd.f32 %v1563, %v1935
  %1937 = vadd.xlane.f32.xlu0 %v1936
  %v1938 = vpop.xlane.xlu0 %1937
  %v1939 = vsel %vm350, %v1566, 0.0
  %v1940 = vadd.f32 %v1565, %v1939
  %1941 = vadd.xlane.f32.xlu0 %v1940
  %v1942 = vpop.xlane.xlu0 %1941
  %v1943 = vsel %vm350, %v1568, 0.0
  %v1944 = vadd.f32 %v1567, %v1943
  %1945 = vadd.xlane.f32.xlu0 %v1944
  %v1946 = vpop.xlane.xlu0 %1945
  %v1947 = vsel %vm350, %v1570, 0.0
  %v1948 = vadd.f32 %v1569, %v1947
  %1949 = vadd.xlane.f32.xlu0 %v1948
  %v1950 = vpop.xlane.xlu0 %1949
  %v1951 = vsel %vm350, %v1572, 0.0
  %v1952 = vadd.f32 %v1571, %v1951
  %1953 = vadd.xlane.f32.xlu0 %v1952
  %v1954 = vpop.xlane.xlu0 %1953
  %v1955 = vsel %vm350, %v1574, 0.0
  %v1956 = vadd.f32 %v1573, %v1955
  %1957 = vadd.xlane.f32.xlu0 %v1956
  %v1958 = vpop.xlane.xlu0 %1957
  %v1959 = vsel %vm350, %v1576, 0.0
  %v1960 = vadd.f32 %v1575, %v1959
  %1961 = vadd.xlane.f32.xlu0 %v1960
  %v1962 = vpop.xlane.xlu0 %1961
  %v1963 = vsel %vm350, %v1578, 0.0
  %v1964 = vadd.f32 %v1577, %v1963
  %1965 = vadd.xlane.f32.xlu0 %v1964
  %v1966 = vpop.xlane.xlu0 %1965
  %v1967 = vsel %vm350, %v1580, 0.0
  %v1968 = vadd.f32 %v1579, %v1967
  %1969 = vadd.xlane.f32.xlu0 %v1968
  %v1970 = vpop.xlane.xlu0 %1969
  %v1971 = vsel %vm350, %v1582, 0.0
  %v1972 = vadd.f32 %v1581, %v1971
  %1973 = vadd.xlane.f32.xlu0 %v1972
  %v1974 = vpop.xlane.xlu0 %1973
  %v1975 = vsel %vm350, %v1584, 0.0
  %v1976 = vadd.f32 %v1583, %v1975
  %1977 = vadd.xlane.f32.xlu0 %v1976
  %v1978 = vpop.xlane.xlu0 %1977
  %v1979 = vsel %vm350, %v1586, 0.0
  %v1980 = vadd.f32 %v1585, %v1979
  %1981 = vadd.xlane.f32.xlu0 %v1980
  %v1982 = vpop.xlane.xlu0 %1981
  %v1983 = vsel %vm350, %v1588, 0.0
  %v1984 = vadd.f32 %v1587, %v1983
  %1985 = vadd.xlane.f32.xlu0 %v1984
  %v1986 = vpop.xlane.xlu0 %1985
  %v1987 = vsel %vm350, %v1590, 0.0
  %v1988 = vadd.f32 %v1589, %v1987
  %1989 = vadd.xlane.f32.xlu0 %v1988
  %v1990 = vpop.xlane.xlu0 %1989
  %v1991 = vsel %vm350, %v1592, 0.0
  %v1992 = vadd.f32 %v1591, %v1991
  %1993 = vadd.xlane.f32.xlu0 %v1992
  %v1994 = vpop.xlane.xlu0 %1993
  %v1995 = vsel %vm350, %v1594, 0.0
  %v1996 = vadd.f32 %v1593, %v1995
  %1997 = vadd.xlane.f32.xlu0 %v1996
  %v1998 = vpop.xlane.xlu0 %1997
  %v1999 = vsel %vm350, %v1596, 0.0
  %v2000 = vadd.f32 %v1595, %v1999
  %2001 = vadd.xlane.f32.xlu0 %v2000
  %v2002 = vpop.xlane.xlu0 %2001
  %v2003 = vsel %vm350, %v1598, 0.0
  %v2004 = vadd.f32 %v1597, %v2003
  %2005 = vadd.xlane.f32.xlu0 %v2004
  %v2006 = vpop.xlane.xlu0 %2005
  %v2007 = vsel %vm350, %v1600, 0.0
  %v2008 = vadd.f32 %v1599, %v2007
  %2009 = vadd.xlane.f32.xlu0 %v2008
  %v2010 = vpop.xlane.xlu0 %2009
  %v2011 = vsel %vm350, %v1602, 0.0
  %v2012 = vadd.f32 %v1601, %v2011
  %2013 = vadd.xlane.f32.xlu0 %v2012
  %v2014 = vpop.xlane.xlu0 %2013
  %v2015 = vsel %vm350, %v1604, 0.0
  %v2016 = vadd.f32 %v1603, %v2015
  %2017 = vadd.xlane.f32.xlu0 %v2016
  %v2018 = vpop.xlane.xlu0 %2017
  %v2019 = vsel %vm350, %v1606, 0.0
  %v2020 = vadd.f32 %v1605, %v2019
  %2021 = vadd.xlane.f32.xlu0 %v2020
  %v2022 = vpop.xlane.xlu0 %2021
  %v2023 = vsel %vm350, %v1608, 0.0
  %v2024 = vadd.f32 %v1607, %v2023
  %2025 = vadd.xlane.f32.xlu0 %v2024
  %v2026 = vpop.xlane.xlu0 %2025
  %v2027 = vsel %vm350, %v1610, 0.0
  %v2028 = vadd.f32 %v1609, %v2027
  %2029 = vadd.xlane.f32.xlu0 %v2028
  %v2030 = vpop.xlane.xlu0 %2029
  %v2031 = vsel %vm350, %v1612, 0.0
  %v2032 = vadd.f32 %v1611, %v2031
  %2033 = vadd.xlane.f32.xlu0 %v2032
  %v2034 = vpop.xlane.xlu0 %2033
  %v2035 = vsel %vm350, %v1614, 0.0
  %v2036 = vadd.f32 %v1613, %v2035
  %2037 = vadd.xlane.f32.xlu0 %v2036
  %v2038 = vpop.xlane.xlu0 %2037
  %v2039 = vsel %vm350, %v1616, 0.0
  %v2040 = vadd.f32 %v1615, %v2039
  %2041 = vadd.xlane.f32.xlu0 %v2040
  %v2042 = vpop.xlane.xlu0 %2041
  %v2043 = vsel %vm350, %v1618, 0.0
  %v2044 = vadd.f32 %v1617, %v2043
  %2045 = vadd.xlane.f32.xlu0 %v2044
  %v2046 = vpop.xlane.xlu0 %2045
  %v2047 = vsel %vm350, %v1620, 0.0
  %v2048 = vadd.f32 %v1619, %v2047
  %2049 = vadd.xlane.f32.xlu0 %v2048
  %v2050 = vpop.xlane.xlu0 %2049
  %v2051 = vsel %vm350, %v1622, 0.0
  %v2052 = vadd.f32 %v1621, %v2051
  %2053 = vadd.xlane.f32.xlu0 %v2052
  %v2054 = vpop.xlane.xlu0 %2053
  %v2055 = vsel %vm350, %v1624, 0.0
  %v2056 = vadd.f32 %v1623, %v2055
  %2057 = vadd.xlane.f32.xlu0 %v2056
  %v2058 = vpop.xlane.xlu0 %2057
  %v2059 = vsel %vm350, %v1626, 0.0
  %v2060 = vadd.f32 %v1625, %v2059
  %2061 = vadd.xlane.f32.xlu0 %v2060
  %v2062 = vpop.xlane.xlu0 %2061
  %v2063 = vsel %vm350, %v1628, 0.0
  %v2064 = vadd.f32 %v1627, %v2063
  %2065 = vadd.xlane.f32.xlu0 %v2064
  %v2066 = vpop.xlane.xlu0 %2065
  %v2067 = vsel %vm350, %v1630, 0.0
  %v2068 = vadd.f32 %v1629, %v2067
  %2069 = vadd.xlane.f32.xlu0 %v2068
  %v2070 = vpop.xlane.xlu0 %2069
  %v2071 = vsel %vm350, %v1632, 0.0
  %v2072 = vadd.f32 %v1631, %v2071
  %2073 = vadd.xlane.f32.xlu0 %v2072
  %v2074 = vpop.xlane.xlu0 %2073
  %v2075 = vsel %vm350, %v1634, 0.0
  %v2076 = vadd.f32 %v1633, %v2075
  %2077 = vadd.xlane.f32.xlu0 %v2076
  %v2078 = vpop.xlane.xlu0 %2077
  %v2079 = vsel %vm350, %v1636, 0.0
  %v2080 = vadd.f32 %v1635, %v2079
  %2081 = vadd.xlane.f32.xlu0 %v2080
  %v2082 = vpop.xlane.xlu0 %2081
  %v2083 = vsel %vm350, %v1638, 0.0
  %v2084 = vadd.f32 %v1637, %v2083
  %2085 = vadd.xlane.f32.xlu0 %v2084
  %v2086 = vpop.xlane.xlu0 %2085
  %v2087 = vsel %vm350, %v1640, 0.0
  %v2088 = vadd.f32 %v1639, %v2087
  %2089 = vadd.xlane.f32.xlu0 %v2088
  %v2090 = vpop.xlane.xlu0 %2089
  %v2091 = vsel %vm350, %v1642, 0.0
  %v2092 = vadd.f32 %v1641, %v2091
  %2093 = vadd.xlane.f32.xlu0 %v2092
  %v2094 = vpop.xlane.xlu0 %2093
  %v2095 = vsel %vm350, %v1644, 0.0
  %v2096 = vadd.f32 %v1643, %v2095
  %2097 = vadd.xlane.f32.xlu0 %v2096
  %v2098 = vpop.xlane.xlu0 %2097
  %v2099 = vsel %vm350, %v1646, 0.0
  %v2100 = vadd.f32 %v1645, %v2099
  %2101 = vadd.xlane.f32.xlu0 %v2100
  %v2102 = vpop.xlane.xlu0 %2101
  %v2103 = vsel %vm350, %v1648, 0.0
  %v2104 = vadd.f32 %v1647, %v2103
  %2105 = vadd.xlane.f32.xlu0 %v2104
  %v2106 = vpop.xlane.xlu0 %2105
  %v2107 = vsel %vm350, %v1650, 0.0
  %v2108 = vadd.f32 %v1649, %v2107
  %2109 = vadd.xlane.f32.xlu0 %v2108
  %v2110 = vpop.xlane.xlu0 %2109
  %v2111 = vsel %vm350, %v1652, 0.0
  %v2112 = vadd.f32 %v1651, %v2111
  %2113 = vadd.xlane.f32.xlu0 %v2112
  %v2114 = vpop.xlane.xlu0 %2113
  %v2115 = vsel %vm350, %v1654, 0.0
  %v2116 = vadd.f32 %v1653, %v2115
  %2117 = vadd.xlane.f32.xlu0 %v2116
  %v2118 = vpop.xlane.xlu0 %2117
  %v2119 = vsel %vm350, %v1656, 0.0
  %v2120 = vadd.f32 %v1655, %v2119
  %2121 = vadd.xlane.f32.xlu0 %v2120
  %v2122 = vpop.xlane.xlu0 %2121
  %v2123 = vsel %vm350, %v1658, 0.0
  %v2124 = vadd.f32 %v1657, %v2123
  %2125 = vadd.xlane.f32.xlu0 %v2124
  %v2126 = vpop.xlane.xlu0 %2125
  %v2127 = vsel %vm350, %v1660, 0.0
  %v2128 = vadd.f32 %v1659, %v2127
  %2129 = vadd.xlane.f32.xlu0 %v2128
  %v2130 = vpop.xlane.xlu0 %2129
  %v2131 = vsel %vm350, %v1662, 0.0
  %v2132 = vadd.f32 %v1661, %v2131
  %2133 = vadd.xlane.f32.xlu0 %v2132
  %v2134 = vpop.xlane.xlu0 %2133
  %v2135 = vsel %vm350, %v1664, 0.0
  %v2136 = vadd.f32 %v1663, %v2135
  %2137 = vadd.xlane.f32.xlu0 %v2136
  %v2138 = vpop.xlane.xlu0 %2137
  %v2139 = vsel %vm350, %v1666, 0.0
  %v2140 = vadd.f32 %v1665, %v2139
  %2141 = vadd.xlane.f32.xlu0 %v2140
  %v2142 = vpop.xlane.xlu0 %2141
  %v2143 = vsel %vm350, %v1668, 0.0
  %v2144 = vadd.f32 %v1667, %v2143
  %2145 = vadd.xlane.f32.xlu0 %v2144
  %v2146 = vpop.xlane.xlu0 %2145
  %v2147 = vsel %vm350, %v1670, 0.0
  %v2148 = vadd.f32 %v1669, %v2147
  %2149 = vadd.xlane.f32.xlu0 %v2148
  %v2150 = vpop.xlane.xlu0 %2149
  %v2151 = vsel %vm350, %v1672, 0.0
  %v2152 = vadd.f32 %v1671, %v2151
  %2153 = vadd.xlane.f32.xlu0 %v2152
  %v2154 = vpop.xlane.xlu0 %2153
  %v2155 = vsel %vm350, %v1674, 0.0
  %v2156 = vadd.f32 %v1673, %v2155
  %2157 = vadd.xlane.f32.xlu0 %v2156
  %v2158 = vpop.xlane.xlu0 %2157
  %v2159 = vsel %vm350, %v1676, 0.0
  %v2160 = vadd.f32 %v1675, %v2159
  %2161 = vadd.xlane.f32.xlu0 %v2160
  %v2162 = vpop.xlane.xlu0 %2161
  %v2163 = vsel %vm350, %v1678, 0.0
  %v2164 = vadd.f32 %v1677, %v2163
  %2165 = vadd.xlane.f32.xlu0 %v2164
  %v2166 = vpop.xlane.xlu0 %2165
  %v2167 = vsel %vm350, %v1680, 0.0
  %v2168 = vadd.f32 %v1679, %v2167
  %2169 = vadd.xlane.f32.xlu0 %v2168
  %v2170 = vpop.xlane.xlu0 %2169
  %v2171 = vsel %vm350, %v1682, 0.0
  %v2172 = vadd.f32 %v1681, %v2171
  %2173 = vadd.xlane.f32.xlu0 %v2172
  %v2174 = vpop.xlane.xlu0 %2173
  %v2175 = vsel %vm350, %v1684, 0.0
  %v2176 = vadd.f32 %v1683, %v2175
  %2177 = vadd.xlane.f32.xlu0 %v2176
  %v2178 = vpop.xlane.xlu0 %2177
  %v2179 = vsel %vm350, %v1686, 0.0
  %v2180 = vadd.f32 %v1685, %v2179
  %2181 = vadd.xlane.f32.xlu0 %v2180
  %v2182 = vpop.xlane.xlu0 %2181
  %v2183 = vsel %vm350, %v1688, 0.0
  %v2184 = vadd.f32 %v1687, %v2183
  %2185 = vadd.xlane.f32.xlu0 %v2184
  %v2186 = vpop.xlane.xlu0 %2185
  %v2187 = vsel %vm350, %v1690, 0.0
  %v2188 = vadd.f32 %v1689, %v2187
  %2189 = vadd.xlane.f32.xlu0 %v2188
  %v2190 = vpop.xlane.xlu0 %2189
  %v2191 = vsel %vm350, %v1692, 0.0
  %v2192 = vadd.f32 %v1691, %v2191
  %2193 = vadd.xlane.f32.xlu0 %v2192
  %v2194 = vpop.xlane.xlu0 %2193
  %v2195 = vsel %vm350, %v1694, 0.0
  %v2196 = vadd.f32 %v1693, %v2195
  %2197 = vadd.xlane.f32.xlu0 %v2196
  %v2198 = vpop.xlane.xlu0 %2197
  %v2199 = vsel %vm350, %v1696, 0.0
  %v2200 = vadd.f32 %v1695, %v2199
  %2201 = vadd.xlane.f32.xlu0 %v2200
  %v2202 = vpop.xlane.xlu0 %2201
  %v2203 = vsel %vm350, %v1698, 0.0
  %v2204 = vadd.f32 %v1697, %v2203
  %2205 = vadd.xlane.f32.xlu0 %v2204
  %v2206 = vpop.xlane.xlu0 %2205
  %v2207 = vsel %vm350, %v1700, 0.0
  %v2208 = vadd.f32 %v1699, %v2207
  %2209 = vadd.xlane.f32.xlu0 %v2208
  %v2210 = vpop.xlane.xlu0 %2209
  %v2211 = vsel %vm350, %v1702, 0.0
  %v2212 = vadd.f32 %v1701, %v2211
  %2213 = vadd.xlane.f32.xlu0 %v2212
  %v2214 = vpop.xlane.xlu0 %2213
  %v2215 = vsel %vm350, %v1704, 0.0
  %v2216 = vadd.f32 %v1703, %v2215
  %2217 = vadd.xlane.f32.xlu0 %v2216
  %v2218 = vpop.xlane.xlu0 %2217
  %v2219 = vsel %vm350, %v1706, 0.0
  %v2220 = vadd.f32 %v1705, %v2219
  %2221 = vadd.xlane.f32.xlu0 %v2220
  %v2222 = vpop.xlane.xlu0 %2221
  %v2223 = vsel %vm350, %v1708, 0.0
  %v2224 = vadd.f32 %v1707, %v2223
  %2225 = vadd.xlane.f32.xlu0 %v2224
  %v2226 = vpop.xlane.xlu0 %2225
  %v2227 = vsel %vm350, %v1710, 0.0
  %v2228 = vadd.f32 %v1709, %v2227
  %2229 = vadd.xlane.f32.xlu0 %v2228
  %v2230 = vpop.xlane.xlu0 %2229
  %v2231 = vsel %vm350, %v1712, 0.0
  %v2232 = vadd.f32 %v1711, %v2231
  %2233 = vadd.xlane.f32.xlu0 %v2232
  %v2234 = vpop.xlane.xlu0 %2233
  %v2235 = vsel %vm350, %v1714, 0.0
  %v2236 = vadd.f32 %v1713, %v2235
  %2237 = vadd.xlane.f32.xlu0 %v2236
  %v2238 = vpop.xlane.xlu0 %2237
  %v2239 = vsel %vm350, %v1716, 0.0
  %v2240 = vadd.f32 %v1715, %v2239
  %2241 = vadd.xlane.f32.xlu0 %v2240
  %v2242 = vpop.xlane.xlu0 %2241
  %v2243 = vsel %vm350, %v1718, 0.0
  %v2244 = vadd.f32 %v1717, %v2243
  %2245 = vadd.xlane.f32.xlu0 %v2244
  %v2246 = vpop.xlane.xlu0 %2245
  %v2247 = vsel %vm350, %v1720, 0.0
  %v2248 = vadd.f32 %v1719, %v2247
  %2249 = vadd.xlane.f32.xlu0 %v2248
  %v2250 = vpop.xlane.xlu0 %2249
  %v2251 = vsel %vm350, %v1722, 0.0
  %v2252 = vadd.f32 %v1721, %v2251
  %2253 = vadd.xlane.f32.xlu0 %v2252
  %v2254 = vpop.xlane.xlu0 %2253
  %v2255 = vsel %vm350, %v1724, 0.0
  %v2256 = vadd.f32 %v1723, %v2255
  %2257 = vadd.xlane.f32.xlu0 %v2256
  %v2258 = vpop.xlane.xlu0 %2257
  %v2259 = vsel %vm350, %v1726, 0.0
  %v2260 = vadd.f32 %v1725, %v2259
  %2261 = vadd.xlane.f32.xlu0 %v2260
  %v2262 = vpop.xlane.xlu0 %2261
  %v2263 = vsel %vm350, %v1728, 0.0
  %v2264 = vadd.f32 %v1727, %v2263
  %2265 = vadd.xlane.f32.xlu0 %v2264
  %v2266 = vpop.xlane.xlu0 %2265
  %v2267 = vsel %vm350, %v1730, 0.0
  %v2268 = vadd.f32 %v1729, %v2267
  %2269 = vadd.xlane.f32.xlu0 %v2268
  %v2270 = vpop.xlane.xlu0 %2269
  %v2271 = vsel %vm350, %v1732, 0.0
  %v2272 = vadd.f32 %v1731, %v2271
  %2273 = vadd.xlane.f32.xlu0 %v2272
  %v2274 = vpop.xlane.xlu0 %2273
  %v2275 = vsel %vm350, %v1734, 0.0
  %v2276 = vadd.f32 %v1733, %v2275
  %2277 = vadd.xlane.f32.xlu0 %v2276
  %v2278 = vpop.xlane.xlu0 %2277
  %v2279 = vsel %vm350, %v1736, 0.0
  %v2280 = vadd.f32 %v1735, %v2279
  %2281 = vadd.xlane.f32.xlu0 %v2280
  %v2282 = vpop.xlane.xlu0 %2281
  %v2283 = vsel %vm350, %v1738, 0.0
  %v2284 = vadd.f32 %v1737, %v2283
  %2285 = vadd.xlane.f32.xlu0 %v2284
  %v2286 = vpop.xlane.xlu0 %2285
  %v2287 = vsel %vm350, %v1740, 0.0
  %v2288 = vadd.f32 %v1739, %v2287
  %2289 = vadd.xlane.f32.xlu0 %v2288
  %v2290 = vpop.xlane.xlu0 %2289
  %v2291 = vsel %vm350, %v1742, 0.0
  %v2292 = vadd.f32 %v1741, %v2291
  %2293 = vadd.xlane.f32.xlu0 %v2292
  %v2294 = vpop.xlane.xlu0 %2293
  %v2295 = vsel %vm350, %v1744, 0.0
  %v2296 = vadd.f32 %v1743, %v2295
  %2297 = vadd.xlane.f32.xlu0 %v2296
  %v2298 = vpop.xlane.xlu0 %2297
  %v2299 = vsel %vm350, %v1746, 0.0
  %v2300 = vadd.f32 %v1745, %v2299
  %2301 = vadd.xlane.f32.xlu0 %v2300
  %v2302 = vpop.xlane.xlu0 %2301
  %v2303 = vsel %vm350, %v1748, 0.0
  %v2304 = vadd.f32 %v1747, %v2303
  %2305 = vadd.xlane.f32.xlu0 %v2304
  %v2306 = vpop.xlane.xlu0 %2305
  %v2307 = vsel %vm350, %v1750, 0.0
  %v2308 = vadd.f32 %v1749, %v2307
  %2309 = vadd.xlane.f32.xlu0 %v2308
  %v2310 = vpop.xlane.xlu0 %2309
  %v2311 = vsel %vm350, %v1752, 0.0
  %v2312 = vadd.f32 %v1751, %v2311
  %2313 = vadd.xlane.f32.xlu0 %v2312
  %v2314 = vpop.xlane.xlu0 %2313
  %v2315 = vsel %vm350, %v1754, 0.0
  %v2316 = vadd.f32 %v1753, %v2315
  %2317 = vadd.xlane.f32.xlu0 %v2316
  %v2318 = vpop.xlane.xlu0 %2317
  %v2319 = vsel %vm350, %v1756, 0.0
  %v2320 = vadd.f32 %v1755, %v2319
  %2321 = vadd.xlane.f32.xlu0 %v2320
  %v2322 = vpop.xlane.xlu0 %2321
  %v2323 = vsel %vm350, %v1758, 0.0
  %v2324 = vadd.f32 %v1757, %v2323
  %2325 = vadd.xlane.f32.xlu0 %v2324
  %v2326 = vpop.xlane.xlu0 %2325
  %v2327 = vsel %vm350, %v1760, 0.0
  %v2328 = vadd.f32 %v1759, %v2327
  %2329 = vadd.xlane.f32.xlu0 %v2328
  %v2330 = vpop.xlane.xlu0 %2329
  %v2331 = vsel %vm350, %v1762, 0.0
  %v2332 = vadd.f32 %v1761, %v2331
  %2333 = vadd.xlane.f32.xlu0 %v2332
  %v2334 = vpop.xlane.xlu0 %2333
  %v2335 = vsel %vm350, %v1764, 0.0
  %v2336 = vadd.f32 %v1763, %v2335
  %2337 = vadd.xlane.f32.xlu0 %v2336
  %v2338 = vpop.xlane.xlu0 %2337
  %v2339 = vsel %vm350, %v1766, 0.0
  %v2340 = vadd.f32 %v1765, %v2339
  %2341 = vadd.xlane.f32.xlu0 %v2340
  %v2342 = vpop.xlane.xlu0 %2341
  %v2343 = vsel %vm350, %v1768, 0.0
  %v2344 = vadd.f32 %v1767, %v2343
  %2345 = vadd.xlane.f32.xlu0 %v2344
  %v2346 = vpop.xlane.xlu0 %2345
  %v2347 = vsel %vm350, %v1770, 0.0
  %v2348 = vadd.f32 %v1769, %v2347
  %2349 = vadd.xlane.f32.xlu0 %v2348
  %v2350 = vpop.xlane.xlu0 %2349
  %v2351 = vsel %vm350, %v1772, 0.0
  %v2352 = vadd.f32 %v1771, %v2351
  %2353 = vadd.xlane.f32.xlu0 %v2352
  %v2354 = vpop.xlane.xlu0 %2353
  %v2355 = vsel %vm350, %v1774, 0.0
  %v2356 = vadd.f32 %v1773, %v2355
  %2357 = vadd.xlane.f32.xlu0 %v2356
  %v2358 = vpop.xlane.xlu0 %2357
  %v2359 = vsel %vm350, %v1776, 0.0
  %v2360 = vadd.f32 %v1775, %v2359
  %2361 = vadd.xlane.f32.xlu0 %v2360
  %v2362 = vpop.xlane.xlu0 %2361
  %v2363 = vsel %vm350, %v1778, 0.0
  %v2364 = vadd.f32 %v1777, %v2363
  %2365 = vadd.xlane.f32.xlu0 %v2364
  %v2366 = vpop.xlane.xlu0 %2365
  %v2367 = vsel %vm350, %v1780, 0.0
  %v2368 = vadd.f32 %v1779, %v2367
  %2369 = vadd.xlane.f32.xlu0 %v2368
  %v2370 = vpop.xlane.xlu0 %2369
  %v2371 = vsel %vm350, %v1782, 0.0
  %v2372 = vadd.f32 %v1781, %v2371
  %2373 = vadd.xlane.f32.xlu0 %v2372
  %v2374 = vpop.xlane.xlu0 %2373
  %v2375 = vsel %vm350, %v1784, 0.0
  %v2376 = vadd.f32 %v1783, %v2375
  %2377 = vadd.xlane.f32.xlu0 %v2376
  %v2378 = vpop.xlane.xlu0 %2377
  %v2379 = vsel %vm350, %v1786, 0.0
  %v2380 = vadd.f32 %v1785, %v2379
  %2381 = vadd.xlane.f32.xlu0 %v2380
  %v2382 = vpop.xlane.xlu0 %2381
  %v2383 = vsel %vm350, %v1788, 0.0
  %v2384 = vadd.f32 %v1787, %v2383
  %2385 = vadd.xlane.f32.xlu0 %v2384
  %v2386 = vpop.xlane.xlu0 %2385
  %v2387 = vsel %vm350, %v1790, 0.0
  %v2388 = vadd.f32 %v1789, %v2387
  %2389 = vadd.xlane.f32.xlu0 %v2388
  %v2390 = vpop.xlane.xlu0 %2389
  %v2391 = vsel %vm350, %v1792, 0.0
  %v2392 = vadd.f32 %v1791, %v2391
  %2393 = vadd.xlane.f32.xlu0 %v2392
  %v2394 = vpop.xlane.xlu0 %2393
  %v2395 = vsel %vm350, %v1794, 0.0
  %v2396 = vadd.f32 %v1793, %v2395
  %2397 = vadd.xlane.f32.xlu0 %v2396
  %v2398 = vpop.xlane.xlu0 %2397
  %v2399 = vsel %vm350, %v1796, 0.0
  %v2400 = vadd.f32 %v1795, %v2399
  %2401 = vadd.xlane.f32.xlu0 %v2400
  %v2402 = vpop.xlane.xlu0 %2401
  %v2403 = vsel %vm350, %v1798, 0.0
  %v2404 = vadd.f32 %v1797, %v2403
  %2405 = vadd.xlane.f32.xlu0 %v2404
  %v2406 = vpop.xlane.xlu0 %2405
  %v2407 = vsel %vm350, %v1800, 0.0
  %v2408 = vadd.f32 %v1799, %v2407
  %2409 = vadd.xlane.f32.xlu0 %v2408
  %v2410 = vpop.xlane.xlu0 %2409
  %v2411 = vsel %vm350, %v1802, 0.0
  %v2412 = vadd.f32 %v1801, %v2411
  %2413 = vadd.xlane.f32.xlu0 %v2412
  %v2414 = vpop.xlane.xlu0 %2413
  %v2415 = vsel %vm350, %v1804, 0.0
  %v2416 = vadd.f32 %v1803, %v2415
  %2417 = vadd.xlane.f32.xlu0 %v2416
  %v2418 = vpop.xlane.xlu0 %2417
  %v2419 = vsel %vm350, %v1806, 0.0
  %v2420 = vadd.f32 %v1805, %v2419
  %2421 = vadd.xlane.f32.xlu0 %v2420
  %v2422 = vpop.xlane.xlu0 %2421
  %v2423 = vsel %vm350, %v1808, 0.0
  %v2424 = vadd.f32 %v1807, %v2423
  %2425 = vadd.xlane.f32.xlu0 %v2424
  %v2426 = vpop.xlane.xlu0 %2425
  %v2427 = vsel %vm350, %v1810, 0.0
  %v2428 = vadd.f32 %v1809, %v2427
  %2429 = vadd.xlane.f32.xlu0 %v2428
  %v2430 = vpop.xlane.xlu0 %2429
  %v2431 = vsel %vm350, %v1812, 0.0
  %v2432 = vadd.f32 %v1811, %v2431
  %2433 = vadd.xlane.f32.xlu0 %v2432
  %v2434 = vpop.xlane.xlu0 %2433
  %v2435 = vsel %vm350, %v1814, 0.0
  %v2436 = vadd.f32 %v1813, %v2435
  %2437 = vadd.xlane.f32.xlu0 %v2436
  %v2438 = vpop.xlane.xlu0 %2437
  %v2439 = vsel %vm350, %v1816, 0.0
  %v2440 = vadd.f32 %v1815, %v2439
  %2441 = vadd.xlane.f32.xlu0 %v2440
  %v2442 = vpop.xlane.xlu0 %2441
  %v2443 = vsel %vm350, %v1818, 0.0
  %v2444 = vadd.f32 %v1817, %v2443
  %2445 = vadd.xlane.f32.xlu0 %v2444
  %v2446 = vpop.xlane.xlu0 %2445
  %v2447 = vsel %vm350, %v1820, 0.0
  %v2448 = vadd.f32 %v1819, %v2447
  %2449 = vadd.xlane.f32.xlu0 %v2448
  %v2450 = vpop.xlane.xlu0 %2449
  %v2451 = vsel %vm350, %v1822, 0.0
  %v2452 = vadd.f32 %v1821, %v2451
  %2453 = vadd.xlane.f32.xlu0 %v2452
  %v2454 = vpop.xlane.xlu0 %2453
  %v2455 = vsel %vm350, %v1824, 0.0
  %v2456 = vadd.f32 %v1823, %v2455
  %2457 = vadd.xlane.f32.xlu0 %v2456
  %v2458 = vpop.xlane.xlu0 %2457
  %v2459 = vsel %vm350, %v1826, 0.0
  %v2460 = vadd.f32 %v1825, %v2459
  %2461 = vadd.xlane.f32.xlu0 %v2460
  %v2462 = vpop.xlane.xlu0 %2461
  %v2463 = vsel %vm350, %v1828, 0.0
  %v2464 = vadd.f32 %v1827, %v2463
  %2465 = vadd.xlane.f32.xlu0 %v2464
  %v2466 = vpop.xlane.xlu0 %2465
  %v2467 = vsel %vm350, %v1830, 0.0
  %v2468 = vadd.f32 %v1829, %v2467
  %2469 = vadd.xlane.f32.xlu0 %v2468
  %v2470 = vpop.xlane.xlu0 %2469
  %v2471 = vsel %vm350, %v1832, 0.0
  %v2472 = vadd.f32 %v1831, %v2471
  %2473 = vadd.xlane.f32.xlu0 %v2472
  %v2474 = vpop.xlane.xlu0 %2473
  %v2475 = vsel %vm350, %v1834, 0.0
  %v2476 = vadd.f32 %v1833, %v2475
  %2477 = vadd.xlane.f32.xlu0 %v2476
  %v2478 = vpop.xlane.xlu0 %2477
  %v2479 = vsel %vm350, %v1836, 0.0
  %v2480 = vadd.f32 %v1835, %v2479
  %2481 = vadd.xlane.f32.xlu0 %v2480
  %v2482 = vpop.xlane.xlu0 %2481
  %v2483 = vsel %vm350, %v1838, 0.0
  %v2484 = vadd.f32 %v1837, %v2483
  %2485 = vadd.xlane.f32.xlu0 %v2484
  %v2486 = vpop.xlane.xlu0 %2485
  %v2487 = vsel %vm350, %v1840, 0.0
  %v2488 = vadd.f32 %v1839, %v2487
  %2489 = vadd.xlane.f32.xlu0 %v2488
  %v2490 = vpop.xlane.xlu0 %2489
  %v2491 = vsel %vm350, %v1842, 0.0
  %v2492 = vadd.f32 %v1841, %v2491
  %2493 = vadd.xlane.f32.xlu0 %v2492
  %v2494 = vpop.xlane.xlu0 %2493
  %v2495 = vsel %vm350, %v1844, 0.0
  %v2496 = vadd.f32 %v1843, %v2495
  %2497 = vadd.xlane.f32.xlu0 %v2496
  %v2498 = vpop.xlane.xlu0 %2497
  %v2499 = vsel %vm350, %v1846, 0.0
  %v2500 = vadd.f32 %v1845, %v2499
  %2501 = vadd.xlane.f32.xlu0 %v2500
  %v2502 = vpop.xlane.xlu0 %2501
  %v2503 = vsel %vm350, %v1848, 0.0
  %v2504 = vadd.f32 %v1847, %v2503
  %2505 = vadd.xlane.f32.xlu0 %v2504
  %v2506 = vpop.xlane.xlu0 %2505
  %v2507 = vsel %vm350, %v1850, 0.0
  %v2508 = vadd.f32 %v1849, %v2507
  %2509 = vadd.xlane.f32.xlu0 %v2508
  %v2510 = vpop.xlane.xlu0 %2509
  %v2511 = vsel %vm350, %v1852, 0.0
  %v2512 = vadd.f32 %v1851, %v2511
  %2513 = vadd.xlane.f32.xlu0 %v2512
  %v2514 = vpop.xlane.xlu0 %2513
  %v2515 = vsel %vm350, %v1854, 0.0
  %v2516 = vadd.f32 %v1853, %v2515
  %2517 = vadd.xlane.f32.xlu0 %v2516
  %v2518 = vpop.xlane.xlu0 %2517
  %v2519 = vsel %vm350, %v1856, 0.0
  %v2520 = vadd.f32 %v1855, %v2519
  %2521 = vadd.xlane.f32.xlu0 %v2520
  %v2522 = vpop.xlane.xlu0 %2521
  %v2523 = vsel %vm350, %v1858, 0.0
  %v2524 = vadd.f32 %v1857, %v2523
  %2525 = vadd.xlane.f32.xlu0 %v2524
  %v2526 = vpop.xlane.xlu0 %2525
  %v2527 = vsel %vm350, %v1860, 0.0
  %v2528 = vadd.f32 %v1859, %v2527
  %2529 = vadd.xlane.f32.xlu0 %v2528
  %v2530 = vpop.xlane.xlu0 %2529
  %v2531 = vsel %vm350, %v1862, 0.0
  %v2532 = vadd.f32 %v1861, %v2531
  %2533 = vadd.xlane.f32.xlu0 %v2532
  %v2534 = vpop.xlane.xlu0 %2533
  %v2535 = vmul.f32 %v1866, 0.0051020407
  %v2536 = vmul.f32 %v1870, 0.0051020407
  %v2537 = vmul.f32 %v1874, 0.0051020407
  %v2538 = vmul.f32 %v1878, 0.0051020407
  %v2539 = vmul.f32 %v1882, 0.0051020407
  %v2540 = vmul.f32 %v1886, 0.0051020407
  %v2541 = vmul.f32 %v1890, 0.0051020407
  %v2542 = vmul.f32 %v1894, 0.0051020407
  %v2543 = vmul.f32 %v1898, 0.0051020407
  %v2544 = vmul.f32 %v1902, 0.0051020407
  %v2545 = vmul.f32 %v1906, 0.0051020407
  %v2546 = vmul.f32 %v1910, 0.0051020407
  %v2547 = vmul.f32 %v1914, 0.0051020407
  %v2548 = vmul.f32 %v1918, 0.0051020407
  %v2549 = vmul.f32 %v1922, 0.0051020407
  %v2550 = vmul.f32 %v1926, 0.0051020407
  %v2551 = vmul.f32 %v1930, 0.0051020407
  %v2552 = vmul.f32 %v1934, 0.0051020407
  %v2553 = vmul.f32 %v1938, 0.0051020407
  %v2554 = vmul.f32 %v1942, 0.0051020407
  %v2555 = vmul.f32 %v1946, 0.0051020407
  %v2556 = vmul.f32 %v1950, 0.0051020407
  %v2557 = vmul.f32 %v1954, 0.0051020407
  %v2558 = vmul.f32 %v1958, 0.0051020407
  %v2559 = vmul.f32 %v1962, 0.0051020407
  %v2560 = vmul.f32 %v1966, 0.0051020407
  %v2561 = vmul.f32 %v1970, 0.0051020407
  %v2562 = vmul.f32 %v1974, 0.0051020407
  %v2563 = vmul.f32 %v1978, 0.0051020407
  %v2564 = vmul.f32 %v1982, 0.0051020407
  %v2565 = vmul.f32 %v1986, 0.0051020407
  %v2566 = vmul.f32 %v1990, 0.0051020407
  %v2567 = vmul.f32 %v1994, 0.0051020407
  %v2568 = vmul.f32 %v1998, 0.0051020407
  %v2569 = vmul.f32 %v2002, 0.0051020407
  %v2570 = vmul.f32 %v2006, 0.0051020407
  %v2571 = vmul.f32 %v2010, 0.0051020407
  %v2572 = vmul.f32 %v2014, 0.0051020407
  %v2573 = vmul.f32 %v2018, 0.0051020407
  %v2574 = vmul.f32 %v2022, 0.0051020407
  %v2575 = vmul.f32 %v2026, 0.0051020407
  %v2576 = vmul.f32 %v2030, 0.0051020407
  %v2577 = vmul.f32 %v2034, 0.0051020407
  %v2578 = vmul.f32 %v2038, 0.0051020407
  %v2579 = vmul.f32 %v2042, 0.0051020407
  %v2580 = vmul.f32 %v2046, 0.0051020407
  %v2581 = vmul.f32 %v2050, 0.0051020407
  %v2582 = vmul.f32 %v2054, 0.0051020407
  %v2583 = vmul.f32 %v2058, 0.0051020407
  %v2584 = vmul.f32 %v2062, 0.0051020407
  %v2585 = vmul.f32 %v2066, 0.0051020407
  %v2586 = vmul.f32 %v2070, 0.0051020407
  %v2587 = vmul.f32 %v2074, 0.0051020407
  %v2588 = vmul.f32 %v2078, 0.0051020407
  %v2589 = vmul.f32 %v2082, 0.0051020407
  %v2590 = vmul.f32 %v2086, 0.0051020407
  %v2591 = vmul.f32 %v2090, 0.0051020407
  %v2592 = vmul.f32 %v2094, 0.0051020407
  %v2593 = vmul.f32 %v2098, 0.0051020407
  %v2594 = vmul.f32 %v2102, 0.0051020407
  %v2595 = vmul.f32 %v2106, 0.0051020407
  %v2596 = vmul.f32 %v2110, 0.0051020407
  %v2597 = vmul.f32 %v2114, 0.0051020407
  %v2598 = vmul.f32 %v2118, 0.0051020407
  %v2599 = vmul.f32 %v2122, 0.0051020407
  %v2600 = vmul.f32 %v2126, 0.0051020407
  %v2601 = vmul.f32 %v2130, 0.0051020407
  %v2602 = vmul.f32 %v2134, 0.0051020407
  %v2603 = vmul.f32 %v2138, 0.0051020407
  %v2604 = vmul.f32 %v2142, 0.0051020407
  %v2605 = vmul.f32 %v2146, 0.0051020407
  %v2606 = vmul.f32 %v2150, 0.0051020407
  %v2607 = vmul.f32 %v2154, 0.0051020407
  %v2608 = vmul.f32 %v2158, 0.0051020407
  %v2609 = vmul.f32 %v2162, 0.0051020407
  %v2610 = vmul.f32 %v2166, 0.0051020407
  %v2611 = vmul.f32 %v2170, 0.0051020407
  %v2612 = vmul.f32 %v2174, 0.0051020407
  %v2613 = vmul.f32 %v2178, 0.0051020407
  %v2614 = vmul.f32 %v2182, 0.0051020407
  %v2615 = vmul.f32 %v2186, 0.0051020407
  %v2616 = vmul.f32 %v2190, 0.0051020407
  %v2617 = vmul.f32 %v2194, 0.0051020407
  %v2618 = vmul.f32 %v2198, 0.0051020407
  %v2619 = vmul.f32 %v2202, 0.0051020407
  %v2620 = vmul.f32 %v2206, 0.0051020407
  %v2621 = vmul.f32 %v2210, 0.0051020407
  %v2622 = vmul.f32 %v2214, 0.0051020407
  %v2623 = vmul.f32 %v2218, 0.0051020407
  %v2624 = vmul.f32 %v2222, 0.0051020407
  %v2625 = vmul.f32 %v2226, 0.0051020407
  %v2626 = vmul.f32 %v2230, 0.0051020407
  %v2627 = vmul.f32 %v2234, 0.0051020407
  %v2628 = vmul.f32 %v2238, 0.0051020407
  %v2629 = vmul.f32 %v2242, 0.0051020407
  %v2630 = vmul.f32 %v2246, 0.0051020407
  %v2631 = vmul.f32 %v2250, 0.0051020407
  %v2632 = vmul.f32 %v2254, 0.0051020407
  %v2633 = vmul.f32 %v2258, 0.0051020407
  %v2634 = vmul.f32 %v2262, 0.0051020407
  %v2635 = vmul.f32 %v2266, 0.0051020407
  %v2636 = vmul.f32 %v2270, 0.0051020407
  %v2637 = vmul.f32 %v2274, 0.0051020407
  %v2638 = vmul.f32 %v2278, 0.0051020407
  %v2639 = vmul.f32 %v2282, 0.0051020407
  %v2640 = vmul.f32 %v2286, 0.0051020407
  %v2641 = vmul.f32 %v2290, 0.0051020407
  %v2642 = vmul.f32 %v2294, 0.0051020407
  %v2643 = vmul.f32 %v2298, 0.0051020407
  %v2644 = vmul.f32 %v2302, 0.0051020407
  %v2645 = vmul.f32 %v2306, 0.0051020407
  %v2646 = vmul.f32 %v2310, 0.0051020407
  %v2647 = vmul.f32 %v2314, 0.0051020407
  %v2648 = vmul.f32 %v2318, 0.0051020407
  %v2649 = vmul.f32 %v2322, 0.0051020407
  %v2650 = vmul.f32 %v2326, 0.0051020407
  %v2651 = vmul.f32 %v2330, 0.0051020407
  %v2652 = vmul.f32 %v2334, 0.0051020407
  %v2653 = vmul.f32 %v2338, 0.0051020407
  %v2654 = vmul.f32 %v2342, 0.0051020407
  %v2655 = vmul.f32 %v2346, 0.0051020407
  %v2656 = vmul.f32 %v2350, 0.0051020407
  %v2657 = vmul.f32 %v2354, 0.0051020407
  %v2658 = vmul.f32 %v2358, 0.0051020407
  %v2659 = vmul.f32 %v2362, 0.0051020407
  %v2660 = vmul.f32 %v2366, 0.0051020407
  %v2661 = vmul.f32 %v2370, 0.0051020407
  %v2662 = vmul.f32 %v2374, 0.0051020407
  %v2663 = vmul.f32 %v2378, 0.0051020407
  %v2664 = vmul.f32 %v2382, 0.0051020407
  %v2665 = vmul.f32 %v2386, 0.0051020407
  %v2666 = vmul.f32 %v2390, 0.0051020407
  %v2667 = vmul.f32 %v2394, 0.0051020407
  %v2668 = vmul.f32 %v2398, 0.0051020407
  %v2669 = vmul.f32 %v2402, 0.0051020407
  %v2670 = vmul.f32 %v2406, 0.0051020407
  %v2671 = vmul.f32 %v2410, 0.0051020407
  %v2672 = vmul.f32 %v2414, 0.0051020407
  %v2673 = vmul.f32 %v2418, 0.0051020407
  %v2674 = vmul.f32 %v2422, 0.0051020407
  %v2675 = vmul.f32 %v2426, 0.0051020407
  %v2676 = vmul.f32 %v2430, 0.0051020407
  %v2677 = vmul.f32 %v2434, 0.0051020407
  %v2678 = vmul.f32 %v2438, 0.0051020407
  %v2679 = vmul.f32 %v2442, 0.0051020407
  %v2680 = vmul.f32 %v2446, 0.0051020407
  %v2681 = vmul.f32 %v2450, 0.0051020407
  %v2682 = vmul.f32 %v2454, 0.0051020407
  %v2683 = vmul.f32 %v2458, 0.0051020407
  %v2684 = vmul.f32 %v2462, 0.0051020407
  %v2685 = vmul.f32 %v2466, 0.0051020407
  %v2686 = vmul.f32 %v2470, 0.0051020407
  %v2687 = vmul.f32 %v2474, 0.0051020407
  %v2688 = vmul.f32 %v2478, 0.0051020407
  %v2689 = vmul.f32 %v2482, 0.0051020407
  %v2690 = vmul.f32 %v2486, 0.0051020407
  %v2691 = vmul.f32 %v2490, 0.0051020407
  %v2692 = vmul.f32 %v2494, 0.0051020407
  %v2693 = vmul.f32 %v2498, 0.0051020407
  %v2694 = vmul.f32 %v2502, 0.0051020407
  %v2695 = vmul.f32 %v2506, 0.0051020407
  %v2696 = vmul.f32 %v2510, 0.0051020407
  %v2697 = vmul.f32 %v2514, 0.0051020407
  %v2698 = vmul.f32 %v2518, 0.0051020407
  %v2699 = vmul.f32 %v2522, 0.0051020407
  %v2700 = vmul.f32 %v2526, 0.0051020407
  %v2701 = vmul.f32 %v2530, 0.0051020407
  %v2702 = vmul.f32 %v2534, 0.0051020407
  %v2703 = vadd.f32 %v2535, 0.001
  %v2704 = vadd.f32 %v2536, 0.001
  %v2705 = vadd.f32 %v2537, 0.001
  %v2706 = vadd.f32 %v2538, 0.001
  %v2707 = vadd.f32 %v2539, 0.001
  %v2708 = vadd.f32 %v2540, 0.001
  %v2709 = vadd.f32 %v2541, 0.001
  %v2710 = vadd.f32 %v2542, 0.001
  %v2711 = vadd.f32 %v2543, 0.001
  %v2712 = vadd.f32 %v2544, 0.001
  %v2713 = vadd.f32 %v2545, 0.001
  %v2714 = vadd.f32 %v2546, 0.001
  %v2715 = vadd.f32 %v2547, 0.001
  %v2716 = vadd.f32 %v2548, 0.001
  %v2717 = vadd.f32 %v2549, 0.001
  %v2718 = vadd.f32 %v2550, 0.001
  %v2719 = vadd.f32 %v2551, 0.001
  %v2720 = vadd.f32 %v2552, 0.001
  %v2721 = vadd.f32 %v2553, 0.001
  %v2722 = vadd.f32 %v2554, 0.001
  %v2723 = vadd.f32 %v2555, 0.001
  %v2724 = vadd.f32 %v2556, 0.001
  %v2725 = vadd.f32 %v2557, 0.001
  %v2726 = vadd.f32 %v2558, 0.001
  %v2727 = vadd.f32 %v2559, 0.001
  %v2728 = vadd.f32 %v2560, 0.001
  %v2729 = vadd.f32 %v2561, 0.001
  %v2730 = vadd.f32 %v2562, 0.001
  %v2731 = vadd.f32 %v2563, 0.001
  %v2732 = vadd.f32 %v2564, 0.001
  %v2733 = vadd.f32 %v2565, 0.001
  %v2734 = vadd.f32 %v2566, 0.001
  %v2735 = vadd.f32 %v2567, 0.001
  %v2736 = vadd.f32 %v2568, 0.001
  %v2737 = vadd.f32 %v2569, 0.001
  %v2738 = vadd.f32 %v2570, 0.001
  %v2739 = vadd.f32 %v2571, 0.001
  %v2740 = vadd.f32 %v2572, 0.001
  %v2741 = vadd.f32 %v2573, 0.001
  %v2742 = vadd.f32 %v2574, 0.001
  %v2743 = vadd.f32 %v2575, 0.001
  %v2744 = vadd.f32 %v2576, 0.001
  %v2745 = vadd.f32 %v2577, 0.001
  %v2746 = vadd.f32 %v2578, 0.001
  %v2747 = vadd.f32 %v2579, 0.001
  %v2748 = vadd.f32 %v2580, 0.001
  %v2749 = vadd.f32 %v2581, 0.001
  %v2750 = vadd.f32 %v2582, 0.001
  %v2751 = vadd.f32 %v2583, 0.001
  %v2752 = vadd.f32 %v2584, 0.001
  %v2753 = vadd.f32 %v2585, 0.001
  %v2754 = vadd.f32 %v2586, 0.001
  %v2755 = vadd.f32 %v2587, 0.001
  %v2756 = vadd.f32 %v2588, 0.001
  %v2757 = vadd.f32 %v2589, 0.001
  %v2758 = vadd.f32 %v2590, 0.001
  %v2759 = vadd.f32 %v2591, 0.001
  %v2760 = vadd.f32 %v2592, 0.001
  %v2761 = vadd.f32 %v2593, 0.001
  %v2762 = vadd.f32 %v2594, 0.001
  %v2763 = vadd.f32 %v2595, 0.001
  %v2764 = vadd.f32 %v2596, 0.001
  %v2765 = vadd.f32 %v2597, 0.001
  %v2766 = vadd.f32 %v2598, 0.001
  %v2767 = vadd.f32 %v2599, 0.001
  %v2768 = vadd.f32 %v2600, 0.001
  %v2769 = vadd.f32 %v2601, 0.001
  %v2770 = vadd.f32 %v2602, 0.001
  %v2771 = vadd.f32 %v2603, 0.001
  %v2772 = vadd.f32 %v2604, 0.001
  %v2773 = vadd.f32 %v2605, 0.001
  %v2774 = vadd.f32 %v2606, 0.001
  %v2775 = vadd.f32 %v2607, 0.001
  %v2776 = vadd.f32 %v2608, 0.001
  %v2777 = vadd.f32 %v2609, 0.001
  %v2778 = vadd.f32 %v2610, 0.001
  %v2779 = vadd.f32 %v2611, 0.001
  %v2780 = vadd.f32 %v2612, 0.001
  %v2781 = vadd.f32 %v2613, 0.001
  %v2782 = vadd.f32 %v2614, 0.001
  %v2783 = vadd.f32 %v2615, 0.001
  %v2784 = vadd.f32 %v2616, 0.001
  %v2785 = vadd.f32 %v2617, 0.001
  %v2786 = vadd.f32 %v2618, 0.001
  %v2787 = vadd.f32 %v2619, 0.001
  %v2788 = vadd.f32 %v2620, 0.001
  %v2789 = vadd.f32 %v2621, 0.001
  %v2790 = vadd.f32 %v2622, 0.001
  %v2791 = vadd.f32 %v2623, 0.001
  %v2792 = vadd.f32 %v2624, 0.001
  %v2793 = vadd.f32 %v2625, 0.001
  %v2794 = vadd.f32 %v2626, 0.001
  %v2795 = vadd.f32 %v2627, 0.001
  %v2796 = vadd.f32 %v2628, 0.001
  %v2797 = vadd.f32 %v2629, 0.001
  %v2798 = vadd.f32 %v2630, 0.001
  %v2799 = vadd.f32 %v2631, 0.001
  %v2800 = vadd.f32 %v2632, 0.001
  %v2801 = vadd.f32 %v2633, 0.001
  %v2802 = vadd.f32 %v2634, 0.001
  %v2803 = vadd.f32 %v2635, 0.001
  %v2804 = vadd.f32 %v2636, 0.001
  %v2805 = vadd.f32 %v2637, 0.001
  %v2806 = vadd.f32 %v2638, 0.001
  %v2807 = vadd.f32 %v2639, 0.001
  %v2808 = vadd.f32 %v2640, 0.001
  %v2809 = vadd.f32 %v2641, 0.001
  %v2810 = vadd.f32 %v2642, 0.001
  %v2811 = vadd.f32 %v2643, 0.001
  %v2812 = vadd.f32 %v2644, 0.001
  %v2813 = vadd.f32 %v2645, 0.001
  %v2814 = vadd.f32 %v2646, 0.001
  %v2815 = vadd.f32 %v2647, 0.001
  %v2816 = vadd.f32 %v2648, 0.001
  %v2817 = vadd.f32 %v2649, 0.001
  %v2818 = vadd.f32 %v2650, 0.001
  %v2819 = vadd.f32 %v2651, 0.001
  %v2820 = vadd.f32 %v2652, 0.001
  %v2821 = vadd.f32 %v2653, 0.001
  %v2822 = vadd.f32 %v2654, 0.001
  %v2823 = vadd.f32 %v2655, 0.001
  %v2824 = vadd.f32 %v2656, 0.001
  %v2825 = vadd.f32 %v2657, 0.001
  %v2826 = vadd.f32 %v2658, 0.001
  %v2827 = vadd.f32 %v2659, 0.001
  %v2828 = vadd.f32 %v2660, 0.001
  %v2829 = vadd.f32 %v2661, 0.001
  %v2830 = vadd.f32 %v2662, 0.001
  %v2831 = vadd.f32 %v2663, 0.001
  %v2832 = vadd.f32 %v2664, 0.001
  %v2833 = vadd.f32 %v2665, 0.001
  %v2834 = vadd.f32 %v2666, 0.001
  %v2835 = vadd.f32 %v2667, 0.001
  %v2836 = vadd.f32 %v2668, 0.001
  %v2837 = vadd.f32 %v2669, 0.001
  %v2838 = vadd.f32 %v2670, 0.001
  %v2839 = vadd.f32 %v2671, 0.001
  %v2840 = vadd.f32 %v2672, 0.001
  %v2841 = vadd.f32 %v2673, 0.001
  %v2842 = vadd.f32 %v2674, 0.001
  %v2843 = vadd.f32 %v2675, 0.001
  %v2844 = vadd.f32 %v2676, 0.001
  %v2845 = vadd.f32 %v2677, 0.001
  %v2846 = vadd.f32 %v2678, 0.001
  %v2847 = vadd.f32 %v2679, 0.001
  %v2848 = vadd.f32 %v2680, 0.001
  %v2849 = vadd.f32 %v2681, 0.001
  %v2850 = vadd.f32 %v2682, 0.001
  %v2851 = vadd.f32 %v2683, 0.001
  %v2852 = vadd.f32 %v2684, 0.001
  %v2853 = vadd.f32 %v2685, 0.001
  %v2854 = vadd.f32 %v2686, 0.001
  %v2855 = vadd.f32 %v2687, 0.001
  %v2856 = vadd.f32 %v2688, 0.001
  %v2857 = vadd.f32 %v2689, 0.001
  %v2858 = vadd.f32 %v2690, 0.001
  %v2859 = vadd.f32 %v2691, 0.001
  %v2860 = vadd.f32 %v2692, 0.001
  %v2861 = vadd.f32 %v2693, 0.001
  %v2862 = vadd.f32 %v2694, 0.001
  %v2863 = vadd.f32 %v2695, 0.001
  %v2864 = vadd.f32 %v2696, 0.001
  %v2865 = vadd.f32 %v2697, 0.001
  %v2866 = vadd.f32 %v2698, 0.001
  %v2867 = vadd.f32 %v2699, 0.001
  %v2868 = vadd.f32 %v2700, 0.001
  %v2869 = vadd.f32 %v2701, 0.001
  %v2870 = vadd.f32 %v2702, 0.001
  %v2871 = vrsqrt.pop %v2703
  %v2872 = vmul.f32 %v2871, %v2703
  %v2873 = vmul.f32 %v2872, %v2871
  %v2874 = vmul.f32 0.5, %v2873
  %v2875 = vsub.f32 1.5, %v2874
  %v2876 = vmul.f32 %v2871, %v2875
  %vm2877 = vweird.f32 %v2703
  %vm2878 = vweird.f32 %v2871
  %vm2879 = vmor %vm2877, %vm2878
  %v2880 = vsel %vm2879, %v2871, %v2876
  %v2881 = vrsqrt.pop %v2704
  %v2882 = vmul.f32 %v2881, %v2704
  %v2883 = vmul.f32 %v2882, %v2881
  %v2884 = vmul.f32 0.5, %v2883
  %v2885 = vsub.f32 1.5, %v2884
  %v2886 = vmul.f32 %v2881, %v2885
  %vm2887 = vweird.f32 %v2704
  %vm2888 = vweird.f32 %v2881
  %vm2889 = vmor %vm2887, %vm2888
  %v2890 = vsel %vm2889, %v2881, %v2886
  %v2891 = vrsqrt.pop %v2705
  %v2892 = vmul.f32 %v2891, %v2705
  %v2893 = vmul.f32 %v2892, %v2891
  %v2894 = vmul.f32 0.5, %v2893
  %v2895 = vsub.f32 1.5, %v2894
  %v2896 = vmul.f32 %v2891, %v2895
  %vm2897 = vweird.f32 %v2705
  %vm2898 = vweird.f32 %v2891
  %vm2899 = vmor %vm2897, %vm2898
  %v2900 = vsel %vm2899, %v2891, %v2896
  %v2901 = vrsqrt.pop %v2706
  %v2902 = vmul.f32 %v2901, %v2706
  %v2903 = vmul.f32 %v2902, %v2901
  %v2904 = vmul.f32 0.5, %v2903
  %v2905 = vsub.f32 1.5, %v2904
  %v2906 = vmul.f32 %v2901, %v2905
  %vm2907 = vweird.f32 %v2706
  %vm2908 = vweird.f32 %v2901
  %vm2909 = vmor %vm2907, %vm2908
  %v2910 = vsel %vm2909, %v2901, %v2906
  %v2911 = vrsqrt.pop %v2707
  %v2912 = vmul.f32 %v2911, %v2707
  %v2913 = vmul.f32 %v2912, %v2911
  %v2914 = vmul.f32 0.5, %v2913
  %v2915 = vsub.f32 1.5, %v2914
  %v2916 = vmul.f32 %v2911, %v2915
  %vm2917 = vweird.f32 %v2707
  %vm2918 = vweird.f32 %v2911
  %vm2919 = vmor %vm2917, %vm2918
  %v2920 = vsel %vm2919, %v2911, %v2916
  %v2921 = vrsqrt.pop %v2708
  %v2922 = vmul.f32 %v2921, %v2708
  %v2923 = vmul.f32 %v2922, %v2921
  %v2924 = vmul.f32 0.5, %v2923
  %v2925 = vsub.f32 1.5, %v2924
  %v2926 = vmul.f32 %v2921, %v2925
  %vm2927 = vweird.f32 %v2708
  %vm2928 = vweird.f32 %v2921
  %vm2929 = vmor %vm2927, %vm2928
  %v2930 = vsel %vm2929, %v2921, %v2926
  %v2931 = vrsqrt.pop %v2709
  %v2932 = vmul.f32 %v2931, %v2709
  %v2933 = vmul.f32 %v2932, %v2931
  %v2934 = vmul.f32 0.5, %v2933
  %v2935 = vsub.f32 1.5, %v2934
  %v2936 = vmul.f32 %v2931, %v2935
  %vm2937 = vweird.f32 %v2709
  %vm2938 = vweird.f32 %v2931
  %vm2939 = vmor %vm2937, %vm2938
  %v2940 = vsel %vm2939, %v2931, %v2936
  %v2941 = vrsqrt.pop %v2710
  %v2942 = vmul.f32 %v2941, %v2710
  %v2943 = vmul.f32 %v2942, %v2941
  %v2944 = vmul.f32 0.5, %v2943
  %v2945 = vsub.f32 1.5, %v2944
  %v2946 = vmul.f32 %v2941, %v2945
  %vm2947 = vweird.f32 %v2710
  %vm2948 = vweird.f32 %v2941
  %vm2949 = vmor %vm2947, %vm2948
  %v2950 = vsel %vm2949, %v2941, %v2946
  %v2951 = vrsqrt.pop %v2711
  %v2952 = vmul.f32 %v2951, %v2711
  %v2953 = vmul.f32 %v2952, %v2951
  %v2954 = vmul.f32 0.5, %v2953
  %v2955 = vsub.f32 1.5, %v2954
  %v2956 = vmul.f32 %v2951, %v2955
  %vm2957 = vweird.f32 %v2711
  %vm2958 = vweird.f32 %v2951
  %vm2959 = vmor %vm2957, %vm2958
  %v2960 = vsel %vm2959, %v2951, %v2956
  %v2961 = vrsqrt.pop %v2712
  %v2962 = vmul.f32 %v2961, %v2712
  %v2963 = vmul.f32 %v2962, %v2961
  %v2964 = vmul.f32 0.5, %v2963
  %v2965 = vsub.f32 1.5, %v2964
  %v2966 = vmul.f32 %v2961, %v2965
  %vm2967 = vweird.f32 %v2712
  %vm2968 = vweird.f32 %v2961
  %vm2969 = vmor %vm2967, %vm2968
  %v2970 = vsel %vm2969, %v2961, %v2966
  %v2971 = vrsqrt.pop %v2713
  %v2972 = vmul.f32 %v2971, %v2713
  %v2973 = vmul.f32 %v2972, %v2971
  %v2974 = vmul.f32 0.5, %v2973
  %v2975 = vsub.f32 1.5, %v2974
  %v2976 = vmul.f32 %v2971, %v2975
  %vm2977 = vweird.f32 %v2713
  %vm2978 = vweird.f32 %v2971
  %vm2979 = vmor %vm2977, %vm2978
  %v2980 = vsel %vm2979, %v2971, %v2976
  %v2981 = vrsqrt.pop %v2714
  %v2982 = vmul.f32 %v2981, %v2714
  %v2983 = vmul.f32 %v2982, %v2981
  %v2984 = vmul.f32 0.5, %v2983
  %v2985 = vsub.f32 1.5, %v2984
  %v2986 = vmul.f32 %v2981, %v2985
  %vm2987 = vweird.f32 %v2714
  %vm2988 = vweird.f32 %v2981
  %vm2989 = vmor %vm2987, %vm2988
  %v2990 = vsel %vm2989, %v2981, %v2986
  %v2991 = vrsqrt.pop %v2715
  %v2992 = vmul.f32 %v2991, %v2715
  %v2993 = vmul.f32 %v2992, %v2991
  %v2994 = vmul.f32 0.5, %v2993
  %v2995 = vsub.f32 1.5, %v2994
  %v2996 = vmul.f32 %v2991, %v2995
  %vm2997 = vweird.f32 %v2715
  %vm2998 = vweird.f32 %v2991
  %vm2999 = vmor %vm2997, %vm2998
  %v3000 = vsel %vm2999, %v2991, %v2996
  %v3001 = vrsqrt.pop %v2716
  %v3002 = vmul.f32 %v3001, %v2716
  %v3003 = vmul.f32 %v3002, %v3001
  %v3004 = vmul.f32 0.5, %v3003
  %v3005 = vsub.f32 1.5, %v3004
  %v3006 = vmul.f32 %v3001, %v3005
  %vm3007 = vweird.f32 %v2716
  %vm3008 = vweird.f32 %v3001
  %vm3009 = vmor %vm3007, %vm3008
  %v3010 = vsel %vm3009, %v3001, %v3006
  %v3011 = vrsqrt.pop %v2717
  %v3012 = vmul.f32 %v3011, %v2717
  %v3013 = vmul.f32 %v3012, %v3011
  %v3014 = vmul.f32 0.5, %v3013
  %v3015 = vsub.f32 1.5, %v3014
  %v3016 = vmul.f32 %v3011, %v3015
  %vm3017 = vweird.f32 %v2717
  %vm3018 = vweird.f32 %v3011
  %vm3019 = vmor %vm3017, %vm3018
  %v3020 = vsel %vm3019, %v3011, %v3016
  %v3021 = vrsqrt.pop %v2718
  %v3022 = vmul.f32 %v3021, %v2718
  %v3023 = vmul.f32 %v3022, %v3021
  %v3024 = vmul.f32 0.5, %v3023
  %v3025 = vsub.f32 1.5, %v3024
  %v3026 = vmul.f32 %v3021, %v3025
  %vm3027 = vweird.f32 %v2718
  %vm3028 = vweird.f32 %v3021
  %vm3029 = vmor %vm3027, %vm3028
  %v3030 = vsel %vm3029, %v3021, %v3026
  %v3031 = vrsqrt.pop %v2719
  %v3032 = vmul.f32 %v3031, %v2719
  %v3033 = vmul.f32 %v3032, %v3031
  %v3034 = vmul.f32 0.5, %v3033
  %v3035 = vsub.f32 1.5, %v3034
  %v3036 = vmul.f32 %v3031, %v3035
  %vm3037 = vweird.f32 %v2719
  %vm3038 = vweird.f32 %v3031
  %vm3039 = vmor %vm3037, %vm3038
  %v3040 = vsel %vm3039, %v3031, %v3036
  %v3041 = vrsqrt.pop %v2720
  %v3042 = vmul.f32 %v3041, %v2720
  %v3043 = vmul.f32 %v3042, %v3041
  %v3044 = vmul.f32 0.5, %v3043
  %v3045 = vsub.f32 1.5, %v3044
  %v3046 = vmul.f32 %v3041, %v3045
  %vm3047 = vweird.f32 %v2720
  %vm3048 = vweird.f32 %v3041
  %vm3049 = vmor %vm3047, %vm3048
  %v3050 = vsel %vm3049, %v3041, %v3046
  %v3051 = vrsqrt.pop %v2721
  %v3052 = vmul.f32 %v3051, %v2721
  %v3053 = vmul.f32 %v3052, %v3051
  %v3054 = vmul.f32 0.5, %v3053
  %v3055 = vsub.f32 1.5, %v3054
  %v3056 = vmul.f32 %v3051, %v3055
  %vm3057 = vweird.f32 %v2721
  %vm3058 = vweird.f32 %v3051
  %vm3059 = vmor %vm3057, %vm3058
  %v3060 = vsel %vm3059, %v3051, %v3056
  %v3061 = vrsqrt.pop %v2722
  %v3062 = vmul.f32 %v3061, %v2722
  %v3063 = vmul.f32 %v3062, %v3061
  %v3064 = vmul.f32 0.5, %v3063
  %v3065 = vsub.f32 1.5, %v3064
  %v3066 = vmul.f32 %v3061, %v3065
  %vm3067 = vweird.f32 %v2722
  %vm3068 = vweird.f32 %v3061
  %vm3069 = vmor %vm3067, %vm3068
  %v3070 = vsel %vm3069, %v3061, %v3066
  %v3071 = vrsqrt.pop %v2723
  %v3072 = vmul.f32 %v3071, %v2723
  %v3073 = vmul.f32 %v3072, %v3071
  %v3074 = vmul.f32 0.5, %v3073
  %v3075 = vsub.f32 1.5, %v3074
  %v3076 = vmul.f32 %v3071, %v3075
  %vm3077 = vweird.f32 %v2723
  %vm3078 = vweird.f32 %v3071
  %vm3079 = vmor %vm3077, %vm3078
  %v3080 = vsel %vm3079, %v3071, %v3076
  %v3081 = vrsqrt.pop %v2724
  %v3082 = vmul.f32 %v3081, %v2724
  %v3083 = vmul.f32 %v3082, %v3081
  %v3084 = vmul.f32 0.5, %v3083
  %v3085 = vsub.f32 1.5, %v3084
  %v3086 = vmul.f32 %v3081, %v3085
  %vm3087 = vweird.f32 %v2724
  %vm3088 = vweird.f32 %v3081
  %vm3089 = vmor %vm3087, %vm3088
  %v3090 = vsel %vm3089, %v3081, %v3086
  %v3091 = vrsqrt.pop %v2725
  %v3092 = vmul.f32 %v3091, %v2725
  %v3093 = vmul.f32 %v3092, %v3091
  %v3094 = vmul.f32 0.5, %v3093
  %v3095 = vsub.f32 1.5, %v3094
  %v3096 = vmul.f32 %v3091, %v3095
  %vm3097 = vweird.f32 %v2725
  %vm3098 = vweird.f32 %v3091
  %vm3099 = vmor %vm3097, %vm3098
  %v3100 = vsel %vm3099, %v3091, %v3096
  %v3101 = vrsqrt.pop %v2726
  %v3102 = vmul.f32 %v3101, %v2726
  %v3103 = vmul.f32 %v3102, %v3101
  %v3104 = vmul.f32 0.5, %v3103
  %v3105 = vsub.f32 1.5, %v3104
  %v3106 = vmul.f32 %v3101, %v3105
  %vm3107 = vweird.f32 %v2726
  %vm3108 = vweird.f32 %v3101
  %vm3109 = vmor %vm3107, %vm3108
  %v3110 = vsel %vm3109, %v3101, %v3106
  %v3111 = vrsqrt.pop %v2727
  %v3112 = vmul.f32 %v3111, %v2727
  %v3113 = vmul.f32 %v3112, %v3111
  %v3114 = vmul.f32 0.5, %v3113
  %v3115 = vsub.f32 1.5, %v3114
  %v3116 = vmul.f32 %v3111, %v3115
  %vm3117 = vweird.f32 %v2727
  %vm3118 = vweird.f32 %v3111
  %vm3119 = vmor %vm3117, %vm3118
  %v3120 = vsel %vm3119, %v3111, %v3116
  %v3121 = vrsqrt.pop %v2728
  %v3122 = vmul.f32 %v3121, %v2728
  %v3123 = vmul.f32 %v3122, %v3121
  %v3124 = vmul.f32 0.5, %v3123
  %v3125 = vsub.f32 1.5, %v3124
  %v3126 = vmul.f32 %v3121, %v3125
  %vm3127 = vweird.f32 %v2728
  %vm3128 = vweird.f32 %v3121
  %vm3129 = vmor %vm3127, %vm3128
  %v3130 = vsel %vm3129, %v3121, %v3126
  %v3131 = vrsqrt.pop %v2729
  %v3132 = vmul.f32 %v3131, %v2729
  %v3133 = vmul.f32 %v3132, %v3131
  %v3134 = vmul.f32 0.5, %v3133
  %v3135 = vsub.f32 1.5, %v3134
  %v3136 = vmul.f32 %v3131, %v3135
  %vm3137 = vweird.f32 %v2729
  %vm3138 = vweird.f32 %v3131
  %vm3139 = vmor %vm3137, %vm3138
  %v3140 = vsel %vm3139, %v3131, %v3136
  %v3141 = vrsqrt.pop %v2730
  %v3142 = vmul.f32 %v3141, %v2730
  %v3143 = vmul.f32 %v3142, %v3141
  %v3144 = vmul.f32 0.5, %v3143
  %v3145 = vsub.f32 1.5, %v3144
  %v3146 = vmul.f32 %v3141, %v3145
  %vm3147 = vweird.f32 %v2730
  %vm3148 = vweird.f32 %v3141
  %vm3149 = vmor %vm3147, %vm3148
  %v3150 = vsel %vm3149, %v3141, %v3146
  %v3151 = vrsqrt.pop %v2731
  %v3152 = vmul.f32 %v3151, %v2731
  %v3153 = vmul.f32 %v3152, %v3151
  %v3154 = vmul.f32 0.5, %v3153
  %v3155 = vsub.f32 1.5, %v3154
  %v3156 = vmul.f32 %v3151, %v3155
  %vm3157 = vweird.f32 %v2731
  %vm3158 = vweird.f32 %v3151
  %vm3159 = vmor %vm3157, %vm3158
  %v3160 = vsel %vm3159, %v3151, %v3156
  %v3161 = vrsqrt.pop %v2732
  %v3162 = vmul.f32 %v3161, %v2732
  %v3163 = vmul.f32 %v3162, %v3161
  %v3164 = vmul.f32 0.5, %v3163
  %v3165 = vsub.f32 1.5, %v3164
  %v3166 = vmul.f32 %v3161, %v3165
  %vm3167 = vweird.f32 %v2732
  %vm3168 = vweird.f32 %v3161
  %vm3169 = vmor %vm3167, %vm3168
  %v3170 = vsel %vm3169, %v3161, %v3166
  %v3171 = vrsqrt.pop %v2733
  %v3172 = vmul.f32 %v3171, %v2733
  %v3173 = vmul.f32 %v3172, %v3171
  %v3174 = vmul.f32 0.5, %v3173
  %v3175 = vsub.f32 1.5, %v3174
  %v3176 = vmul.f32 %v3171, %v3175
  %vm3177 = vweird.f32 %v2733
  %vm3178 = vweird.f32 %v3171
  %vm3179 = vmor %vm3177, %vm3178
  %v3180 = vsel %vm3179, %v3171, %v3176
  %v3181 = vrsqrt.pop %v2734
  %v3182 = vmul.f32 %v3181, %v2734
  %v3183 = vmul.f32 %v3182, %v3181
  %v3184 = vmul.f32 0.5, %v3183
  %v3185 = vsub.f32 1.5, %v3184
  %v3186 = vmul.f32 %v3181, %v3185
  %vm3187 = vweird.f32 %v2734
  %vm3188 = vweird.f32 %v3181
  %vm3189 = vmor %vm3187, %vm3188
  %v3190 = vsel %vm3189, %v3181, %v3186
  %v3191 = vrsqrt.pop %v2735
  %v3192 = vmul.f32 %v3191, %v2735
  %v3193 = vmul.f32 %v3192, %v3191
  %v3194 = vmul.f32 0.5, %v3193
  %v3195 = vsub.f32 1.5, %v3194
  %v3196 = vmul.f32 %v3191, %v3195
  %vm3197 = vweird.f32 %v2735
  %vm3198 = vweird.f32 %v3191
  %vm3199 = vmor %vm3197, %vm3198
  %v3200 = vsel %vm3199, %v3191, %v3196
  %v3201 = vrsqrt.pop %v2736
  %v3202 = vmul.f32 %v3201, %v2736
  %v3203 = vmul.f32 %v3202, %v3201
  %v3204 = vmul.f32 0.5, %v3203
  %v3205 = vsub.f32 1.5, %v3204
  %v3206 = vmul.f32 %v3201, %v3205
  %vm3207 = vweird.f32 %v2736
  %vm3208 = vweird.f32 %v3201
  %vm3209 = vmor %vm3207, %vm3208
  %v3210 = vsel %vm3209, %v3201, %v3206
  %v3211 = vrsqrt.pop %v2737
  %v3212 = vmul.f32 %v3211, %v2737
  %v3213 = vmul.f32 %v3212, %v3211
  %v3214 = vmul.f32 0.5, %v3213
  %v3215 = vsub.f32 1.5, %v3214
  %v3216 = vmul.f32 %v3211, %v3215
  %vm3217 = vweird.f32 %v2737
  %vm3218 = vweird.f32 %v3211
  %vm3219 = vmor %vm3217, %vm3218
  %v3220 = vsel %vm3219, %v3211, %v3216
  %v3221 = vrsqrt.pop %v2738
  %v3222 = vmul.f32 %v3221, %v2738
  %v3223 = vmul.f32 %v3222, %v3221
  %v3224 = vmul.f32 0.5, %v3223
  %v3225 = vsub.f32 1.5, %v3224
  %v3226 = vmul.f32 %v3221, %v3225
  %vm3227 = vweird.f32 %v2738
  %vm3228 = vweird.f32 %v3221
  %vm3229 = vmor %vm3227, %vm3228
  %v3230 = vsel %vm3229, %v3221, %v3226
  %v3231 = vrsqrt.pop %v2739
  %v3232 = vmul.f32 %v3231, %v2739
  %v3233 = vmul.f32 %v3232, %v3231
  %v3234 = vmul.f32 0.5, %v3233
  %v3235 = vsub.f32 1.5, %v3234
  %v3236 = vmul.f32 %v3231, %v3235
  %vm3237 = vweird.f32 %v2739
  %vm3238 = vweird.f32 %v3231
  %vm3239 = vmor %vm3237, %vm3238
  %v3240 = vsel %vm3239, %v3231, %v3236
  %v3241 = vrsqrt.pop %v2740
  %v3242 = vmul.f32 %v3241, %v2740
  %v3243 = vmul.f32 %v3242, %v3241
  %v3244 = vmul.f32 0.5, %v3243
  %v3245 = vsub.f32 1.5, %v3244
  %v3246 = vmul.f32 %v3241, %v3245
  %vm3247 = vweird.f32 %v2740
  %vm3248 = vweird.f32 %v3241
  %vm3249 = vmor %vm3247, %vm3248
  %v3250 = vsel %vm3249, %v3241, %v3246
  %v3251 = vrsqrt.pop %v2741
  %v3252 = vmul.f32 %v3251, %v2741
  %v3253 = vmul.f32 %v3252, %v3251
  %v3254 = vmul.f32 0.5, %v3253
  %v3255 = vsub.f32 1.5, %v3254
  %v3256 = vmul.f32 %v3251, %v3255
  %vm3257 = vweird.f32 %v2741
  %vm3258 = vweird.f32 %v3251
  %vm3259 = vmor %vm3257, %vm3258
  %v3260 = vsel %vm3259, %v3251, %v3256
  %v3261 = vrsqrt.pop %v2742
  %v3262 = vmul.f32 %v3261, %v2742
  %v3263 = vmul.f32 %v3262, %v3261
  %v3264 = vmul.f32 0.5, %v3263
  %v3265 = vsub.f32 1.5, %v3264
  %v3266 = vmul.f32 %v3261, %v3265
  %vm3267 = vweird.f32 %v2742
  %vm3268 = vweird.f32 %v3261
  %vm3269 = vmor %vm3267, %vm3268
  %v3270 = vsel %vm3269, %v3261, %v3266
  %v3271 = vrsqrt.pop %v2743
  %v3272 = vmul.f32 %v3271, %v2743
  %v3273 = vmul.f32 %v3272, %v3271
  %v3274 = vmul.f32 0.5, %v3273
  %v3275 = vsub.f32 1.5, %v3274
  %v3276 = vmul.f32 %v3271, %v3275
  %vm3277 = vweird.f32 %v2743
  %vm3278 = vweird.f32 %v3271
  %vm3279 = vmor %vm3277, %vm3278
  %v3280 = vsel %vm3279, %v3271, %v3276
  %v3281 = vrsqrt.pop %v2744
  %v3282 = vmul.f32 %v3281, %v2744
  %v3283 = vmul.f32 %v3282, %v3281
  %v3284 = vmul.f32 0.5, %v3283
  %v3285 = vsub.f32 1.5, %v3284
  %v3286 = vmul.f32 %v3281, %v3285
  %vm3287 = vweird.f32 %v2744
  %vm3288 = vweird.f32 %v3281
  %vm3289 = vmor %vm3287, %vm3288
  %v3290 = vsel %vm3289, %v3281, %v3286
  %v3291 = vrsqrt.pop %v2745
  %v3292 = vmul.f32 %v3291, %v2745
  %v3293 = vmul.f32 %v3292, %v3291
  %v3294 = vmul.f32 0.5, %v3293
  %v3295 = vsub.f32 1.5, %v3294
  %v3296 = vmul.f32 %v3291, %v3295
  %vm3297 = vweird.f32 %v2745
  %vm3298 = vweird.f32 %v3291
  %vm3299 = vmor %vm3297, %vm3298
  %v3300 = vsel %vm3299, %v3291, %v3296
  %v3301 = vrsqrt.pop %v2746
  %v3302 = vmul.f32 %v3301, %v2746
  %v3303 = vmul.f32 %v3302, %v3301
  %v3304 = vmul.f32 0.5, %v3303
  %v3305 = vsub.f32 1.5, %v3304
  %v3306 = vmul.f32 %v3301, %v3305
  %vm3307 = vweird.f32 %v2746
  %vm3308 = vweird.f32 %v3301
  %vm3309 = vmor %vm3307, %vm3308
  %v3310 = vsel %vm3309, %v3301, %v3306
  %v3311 = vrsqrt.pop %v2747
  %v3312 = vmul.f32 %v3311, %v2747
  %v3313 = vmul.f32 %v3312, %v3311
  %v3314 = vmul.f32 0.5, %v3313
  %v3315 = vsub.f32 1.5, %v3314
  %v3316 = vmul.f32 %v3311, %v3315
  %vm3317 = vweird.f32 %v2747
  %vm3318 = vweird.f32 %v3311
  %vm3319 = vmor %vm3317, %vm3318
  %v3320 = vsel %vm3319, %v3311, %v3316
  %v3321 = vrsqrt.pop %v2748
  %v3322 = vmul.f32 %v3321, %v2748
  %v3323 = vmul.f32 %v3322, %v3321
  %v3324 = vmul.f32 0.5, %v3323
  %v3325 = vsub.f32 1.5, %v3324
  %v3326 = vmul.f32 %v3321, %v3325
  %vm3327 = vweird.f32 %v2748
  %vm3328 = vweird.f32 %v3321
  %vm3329 = vmor %vm3327, %vm3328
  %v3330 = vsel %vm3329, %v3321, %v3326
  %v3331 = vrsqrt.pop %v2749
  %v3332 = vmul.f32 %v3331, %v2749
  %v3333 = vmul.f32 %v3332, %v3331
  %v3334 = vmul.f32 0.5, %v3333
  %v3335 = vsub.f32 1.5, %v3334
  %v3336 = vmul.f32 %v3331, %v3335
  %vm3337 = vweird.f32 %v2749
  %vm3338 = vweird.f32 %v3331
  %vm3339 = vmor %vm3337, %vm3338
  %v3340 = vsel %vm3339, %v3331, %v3336
  %v3341 = vrsqrt.pop %v2750
  %v3342 = vmul.f32 %v3341, %v2750
  %v3343 = vmul.f32 %v3342, %v3341
  %v3344 = vmul.f32 0.5, %v3343
  %v3345 = vsub.f32 1.5, %v3344
  %v3346 = vmul.f32 %v3341, %v3345
  %vm3347 = vweird.f32 %v2750
  %vm3348 = vweird.f32 %v3341
  %vm3349 = vmor %vm3347, %vm3348
  %v3350 = vsel %vm3349, %v3341, %v3346
  %v3351 = vrsqrt.pop %v2751
  %v3352 = vmul.f32 %v3351, %v2751
  %v3353 = vmul.f32 %v3352, %v3351
  %v3354 = vmul.f32 0.5, %v3353
  %v3355 = vsub.f32 1.5, %v3354
  %v3356 = vmul.f32 %v3351, %v3355
  %vm3357 = vweird.f32 %v2751
  %vm3358 = vweird.f32 %v3351
  %vm3359 = vmor %vm3357, %vm3358
  %v3360 = vsel %vm3359, %v3351, %v3356
  %v3361 = vrsqrt.pop %v2752
  %v3362 = vmul.f32 %v3361, %v2752
  %v3363 = vmul.f32 %v3362, %v3361
  %v3364 = vmul.f32 0.5, %v3363
  %v3365 = vsub.f32 1.5, %v3364
  %v3366 = vmul.f32 %v3361, %v3365
  %vm3367 = vweird.f32 %v2752
  %vm3368 = vweird.f32 %v3361
  %vm3369 = vmor %vm3367, %vm3368
  %v3370 = vsel %vm3369, %v3361, %v3366
  %v3371 = vrsqrt.pop %v2753
  %v3372 = vmul.f32 %v3371, %v2753
  %v3373 = vmul.f32 %v3372, %v3371
  %v3374 = vmul.f32 0.5, %v3373
  %v3375 = vsub.f32 1.5, %v3374
  %v3376 = vmul.f32 %v3371, %v3375
  %vm3377 = vweird.f32 %v2753
  %vm3378 = vweird.f32 %v3371
  %vm3379 = vmor %vm3377, %vm3378
  %v3380 = vsel %vm3379, %v3371, %v3376
  %v3381 = vrsqrt.pop %v2754
  %v3382 = vmul.f32 %v3381, %v2754
  %v3383 = vmul.f32 %v3382, %v3381
  %v3384 = vmul.f32 0.5, %v3383
  %v3385 = vsub.f32 1.5, %v3384
  %v3386 = vmul.f32 %v3381, %v3385
  %vm3387 = vweird.f32 %v2754
  %vm3388 = vweird.f32 %v3381
  %vm3389 = vmor %vm3387, %vm3388
  %v3390 = vsel %vm3389, %v3381, %v3386
  %v3391 = vrsqrt.pop %v2755
  %v3392 = vmul.f32 %v3391, %v2755
  %v3393 = vmul.f32 %v3392, %v3391
  %v3394 = vmul.f32 0.5, %v3393
  %v3395 = vsub.f32 1.5, %v3394
  %v3396 = vmul.f32 %v3391, %v3395
  %vm3397 = vweird.f32 %v2755
  %vm3398 = vweird.f32 %v3391
  %vm3399 = vmor %vm3397, %vm3398
  %v3400 = vsel %vm3399, %v3391, %v3396
  %v3401 = vrsqrt.pop %v2756
  %v3402 = vmul.f32 %v3401, %v2756
  %v3403 = vmul.f32 %v3402, %v3401
  %v3404 = vmul.f32 0.5, %v3403
  %v3405 = vsub.f32 1.5, %v3404
  %v3406 = vmul.f32 %v3401, %v3405
  %vm3407 = vweird.f32 %v2756
  %vm3408 = vweird.f32 %v3401
  %vm3409 = vmor %vm3407, %vm3408
  %v3410 = vsel %vm3409, %v3401, %v3406
  %v3411 = vrsqrt.pop %v2757
  %v3412 = vmul.f32 %v3411, %v2757
  %v3413 = vmul.f32 %v3412, %v3411
  %v3414 = vmul.f32 0.5, %v3413
  %v3415 = vsub.f32 1.5, %v3414
  %v3416 = vmul.f32 %v3411, %v3415
  %vm3417 = vweird.f32 %v2757
  %vm3418 = vweird.f32 %v3411
  %vm3419 = vmor %vm3417, %vm3418
  %v3420 = vsel %vm3419, %v3411, %v3416
  %v3421 = vrsqrt.pop %v2758
  %v3422 = vmul.f32 %v3421, %v2758
  %v3423 = vmul.f32 %v3422, %v3421
  %v3424 = vmul.f32 0.5, %v3423
  %v3425 = vsub.f32 1.5, %v3424
  %v3426 = vmul.f32 %v3421, %v3425
  %vm3427 = vweird.f32 %v2758
  %vm3428 = vweird.f32 %v3421
  %vm3429 = vmor %vm3427, %vm3428
  %v3430 = vsel %vm3429, %v3421, %v3426
  %v3431 = vrsqrt.pop %v2759
  %v3432 = vmul.f32 %v3431, %v2759
  %v3433 = vmul.f32 %v3432, %v3431
  %v3434 = vmul.f32 0.5, %v3433
  %v3435 = vsub.f32 1.5, %v3434
  %v3436 = vmul.f32 %v3431, %v3435
  %vm3437 = vweird.f32 %v2759
  %vm3438 = vweird.f32 %v3431
  %vm3439 = vmor %vm3437, %vm3438
  %v3440 = vsel %vm3439, %v3431, %v3436
  %v3441 = vrsqrt.pop %v2760
  %v3442 = vmul.f32 %v3441, %v2760
  %v3443 = vmul.f32 %v3442, %v3441
  %v3444 = vmul.f32 0.5, %v3443
  %v3445 = vsub.f32 1.5, %v3444
  %v3446 = vmul.f32 %v3441, %v3445
  %vm3447 = vweird.f32 %v2760
  %vm3448 = vweird.f32 %v3441
  %vm3449 = vmor %vm3447, %vm3448
  %v3450 = vsel %vm3449, %v3441, %v3446
  %v3451 = vrsqrt.pop %v2761
  %v3452 = vmul.f32 %v3451, %v2761
  %v3453 = vmul.f32 %v3452, %v3451
  %v3454 = vmul.f32 0.5, %v3453
  %v3455 = vsub.f32 1.5, %v3454
  %v3456 = vmul.f32 %v3451, %v3455
  %vm3457 = vweird.f32 %v2761
  %vm3458 = vweird.f32 %v3451
  %vm3459 = vmor %vm3457, %vm3458
  %v3460 = vsel %vm3459, %v3451, %v3456
  %v3461 = vrsqrt.pop %v2762
  %v3462 = vmul.f32 %v3461, %v2762
  %v3463 = vmul.f32 %v3462, %v3461
  %v3464 = vmul.f32 0.5, %v3463
  %v3465 = vsub.f32 1.5, %v3464
  %v3466 = vmul.f32 %v3461, %v3465
  %vm3467 = vweird.f32 %v2762
  %vm3468 = vweird.f32 %v3461
  %vm3469 = vmor %vm3467, %vm3468
  %v3470 = vsel %vm3469, %v3461, %v3466
  %v3471 = vrsqrt.pop %v2763
  %v3472 = vmul.f32 %v3471, %v2763
  %v3473 = vmul.f32 %v3472, %v3471
  %v3474 = vmul.f32 0.5, %v3473
  %v3475 = vsub.f32 1.5, %v3474
  %v3476 = vmul.f32 %v3471, %v3475
  %vm3477 = vweird.f32 %v2763
  %vm3478 = vweird.f32 %v3471
  %vm3479 = vmor %vm3477, %vm3478
  %v3480 = vsel %vm3479, %v3471, %v3476
  %v3481 = vrsqrt.pop %v2764
  %v3482 = vmul.f32 %v3481, %v2764
  %v3483 = vmul.f32 %v3482, %v3481
  %v3484 = vmul.f32 0.5, %v3483
  %v3485 = vsub.f32 1.5, %v3484
  %v3486 = vmul.f32 %v3481, %v3485
  %vm3487 = vweird.f32 %v2764
  %vm3488 = vweird.f32 %v3481
  %vm3489 = vmor %vm3487, %vm3488
  %v3490 = vsel %vm3489, %v3481, %v3486
  %v3491 = vrsqrt.pop %v2765
  %v3492 = vmul.f32 %v3491, %v2765
  %v3493 = vmul.f32 %v3492, %v3491
  %v3494 = vmul.f32 0.5, %v3493
  %v3495 = vsub.f32 1.5, %v3494
  %v3496 = vmul.f32 %v3491, %v3495
  %vm3497 = vweird.f32 %v2765
  %vm3498 = vweird.f32 %v3491
  %vm3499 = vmor %vm3497, %vm3498
  %v3500 = vsel %vm3499, %v3491, %v3496
  %v3501 = vrsqrt.pop %v2766
  %v3502 = vmul.f32 %v3501, %v2766
  %v3503 = vmul.f32 %v3502, %v3501
  %v3504 = vmul.f32 0.5, %v3503
  %v3505 = vsub.f32 1.5, %v3504
  %v3506 = vmul.f32 %v3501, %v3505
  %vm3507 = vweird.f32 %v2766
  %vm3508 = vweird.f32 %v3501
  %vm3509 = vmor %vm3507, %vm3508
  %v3510 = vsel %vm3509, %v3501, %v3506
  %v3511 = vrsqrt.pop %v2767
  %v3512 = vmul.f32 %v3511, %v2767
  %v3513 = vmul.f32 %v3512, %v3511
  %v3514 = vmul.f32 0.5, %v3513
  %v3515 = vsub.f32 1.5, %v3514
  %v3516 = vmul.f32 %v3511, %v3515
  %vm3517 = vweird.f32 %v2767
  %vm3518 = vweird.f32 %v3511
  %vm3519 = vmor %vm3517, %vm3518
  %v3520 = vsel %vm3519, %v3511, %v3516
  %v3521 = vrsqrt.pop %v2768
  %v3522 = vmul.f32 %v3521, %v2768
  %v3523 = vmul.f32 %v3522, %v3521
  %v3524 = vmul.f32 0.5, %v3523
  %v3525 = vsub.f32 1.5, %v3524
  %v3526 = vmul.f32 %v3521, %v3525
  %vm3527 = vweird.f32 %v2768
  %vm3528 = vweird.f32 %v3521
  %vm3529 = vmor %vm3527, %vm3528
  %v3530 = vsel %vm3529, %v3521, %v3526
  %v3531 = vrsqrt.pop %v2769
  %v3532 = vmul.f32 %v3531, %v2769
  %v3533 = vmul.f32 %v3532, %v3531
  %v3534 = vmul.f32 0.5, %v3533
  %v3535 = vsub.f32 1.5, %v3534
  %v3536 = vmul.f32 %v3531, %v3535
  %vm3537 = vweird.f32 %v2769
  %vm3538 = vweird.f32 %v3531
  %vm3539 = vmor %vm3537, %vm3538
  %v3540 = vsel %vm3539, %v3531, %v3536
  %v3541 = vrsqrt.pop %v2770
  %v3542 = vmul.f32 %v3541, %v2770
  %v3543 = vmul.f32 %v3542, %v3541
  %v3544 = vmul.f32 0.5, %v3543
  %v3545 = vsub.f32 1.5, %v3544
  %v3546 = vmul.f32 %v3541, %v3545
  %vm3547 = vweird.f32 %v2770
  %vm3548 = vweird.f32 %v3541
  %vm3549 = vmor %vm3547, %vm3548
  %v3550 = vsel %vm3549, %v3541, %v3546
  %v3551 = vrsqrt.pop %v2771
  %v3552 = vmul.f32 %v3551, %v2771
  %v3553 = vmul.f32 %v3552, %v3551
  %v3554 = vmul.f32 0.5, %v3553
  %v3555 = vsub.f32 1.5, %v3554
  %v3556 = vmul.f32 %v3551, %v3555
  %vm3557 = vweird.f32 %v2771
  %vm3558 = vweird.f32 %v3551
  %vm3559 = vmor %vm3557, %vm3558
  %v3560 = vsel %vm3559, %v3551, %v3556
  %v3561 = vrsqrt.pop %v2772
  %v3562 = vmul.f32 %v3561, %v2772
  %v3563 = vmul.f32 %v3562, %v3561
  %v3564 = vmul.f32 0.5, %v3563
  %v3565 = vsub.f32 1.5, %v3564
  %v3566 = vmul.f32 %v3561, %v3565
  %vm3567 = vweird.f32 %v2772
  %vm3568 = vweird.f32 %v3561
  %vm3569 = vmor %vm3567, %vm3568
  %v3570 = vsel %vm3569, %v3561, %v3566
  %v3571 = vrsqrt.pop %v2773
  %v3572 = vmul.f32 %v3571, %v2773
  %v3573 = vmul.f32 %v3572, %v3571
  %v3574 = vmul.f32 0.5, %v3573
  %v3575 = vsub.f32 1.5, %v3574
  %v3576 = vmul.f32 %v3571, %v3575
  %vm3577 = vweird.f32 %v2773
  %vm3578 = vweird.f32 %v3571
  %vm3579 = vmor %vm3577, %vm3578
  %v3580 = vsel %vm3579, %v3571, %v3576
  %v3581 = vrsqrt.pop %v2774
  %v3582 = vmul.f32 %v3581, %v2774
  %v3583 = vmul.f32 %v3582, %v3581
  %v3584 = vmul.f32 0.5, %v3583
  %v3585 = vsub.f32 1.5, %v3584
  %v3586 = vmul.f32 %v3581, %v3585
  %vm3587 = vweird.f32 %v2774
  %vm3588 = vweird.f32 %v3581
  %vm3589 = vmor %vm3587, %vm3588
  %v3590 = vsel %vm3589, %v3581, %v3586
  %v3591 = vrsqrt.pop %v2775
  %v3592 = vmul.f32 %v3591, %v2775
  %v3593 = vmul.f32 %v3592, %v3591
  %v3594 = vmul.f32 0.5, %v3593
  %v3595 = vsub.f32 1.5, %v3594
  %v3596 = vmul.f32 %v3591, %v3595
  %vm3597 = vweird.f32 %v2775
  %vm3598 = vweird.f32 %v3591
  %vm3599 = vmor %vm3597, %vm3598
  %v3600 = vsel %vm3599, %v3591, %v3596
  %v3601 = vrsqrt.pop %v2776
  %v3602 = vmul.f32 %v3601, %v2776
  %v3603 = vmul.f32 %v3602, %v3601
  %v3604 = vmul.f32 0.5, %v3603
  %v3605 = vsub.f32 1.5, %v3604
  %v3606 = vmul.f32 %v3601, %v3605
  %vm3607 = vweird.f32 %v2776
  %vm3608 = vweird.f32 %v3601
  %vm3609 = vmor %vm3607, %vm3608
  %v3610 = vsel %vm3609, %v3601, %v3606
  %v3611 = vrsqrt.pop %v2777
  %v3612 = vmul.f32 %v3611, %v2777
  %v3613 = vmul.f32 %v3612, %v3611
  %v3614 = vmul.f32 0.5, %v3613
  %v3615 = vsub.f32 1.5, %v3614
  %v3616 = vmul.f32 %v3611, %v3615
  %vm3617 = vweird.f32 %v2777
  %vm3618 = vweird.f32 %v3611
  %vm3619 = vmor %vm3617, %vm3618
  %v3620 = vsel %vm3619, %v3611, %v3616
  %v3621 = vrsqrt.pop %v2778
  %v3622 = vmul.f32 %v3621, %v2778
  %v3623 = vmul.f32 %v3622, %v3621
  %v3624 = vmul.f32 0.5, %v3623
  %v3625 = vsub.f32 1.5, %v3624
  %v3626 = vmul.f32 %v3621, %v3625
  %vm3627 = vweird.f32 %v2778
  %vm3628 = vweird.f32 %v3621
  %vm3629 = vmor %vm3627, %vm3628
  %v3630 = vsel %vm3629, %v3621, %v3626
  %v3631 = vrsqrt.pop %v2779
  %v3632 = vmul.f32 %v3631, %v2779
  %v3633 = vmul.f32 %v3632, %v3631
  %v3634 = vmul.f32 0.5, %v3633
  %v3635 = vsub.f32 1.5, %v3634
  %v3636 = vmul.f32 %v3631, %v3635
  %vm3637 = vweird.f32 %v2779
  %vm3638 = vweird.f32 %v3631
  %vm3639 = vmor %vm3637, %vm3638
  %v3640 = vsel %vm3639, %v3631, %v3636
  %v3641 = vrsqrt.pop %v2780
  %v3642 = vmul.f32 %v3641, %v2780
  %v3643 = vmul.f32 %v3642, %v3641
  %v3644 = vmul.f32 0.5, %v3643
  %v3645 = vsub.f32 1.5, %v3644
  %v3646 = vmul.f32 %v3641, %v3645
  %vm3647 = vweird.f32 %v2780
  %vm3648 = vweird.f32 %v3641
  %vm3649 = vmor %vm3647, %vm3648
  %v3650 = vsel %vm3649, %v3641, %v3646
  %v3651 = vrsqrt.pop %v2781
  %v3652 = vmul.f32 %v3651, %v2781
  %v3653 = vmul.f32 %v3652, %v3651
  %v3654 = vmul.f32 0.5, %v3653
  %v3655 = vsub.f32 1.5, %v3654
  %v3656 = vmul.f32 %v3651, %v3655
  %vm3657 = vweird.f32 %v2781
  %vm3658 = vweird.f32 %v3651
  %vm3659 = vmor %vm3657, %vm3658
  %v3660 = vsel %vm3659, %v3651, %v3656
  %v3661 = vrsqrt.pop %v2782
  %v3662 = vmul.f32 %v3661, %v2782
  %v3663 = vmul.f32 %v3662, %v3661
  %v3664 = vmul.f32 0.5, %v3663
  %v3665 = vsub.f32 1.5, %v3664
  %v3666 = vmul.f32 %v3661, %v3665
  %vm3667 = vweird.f32 %v2782
  %vm3668 = vweird.f32 %v3661
  %vm3669 = vmor %vm3667, %vm3668
  %v3670 = vsel %vm3669, %v3661, %v3666
  %v3671 = vrsqrt.pop %v2783
  %v3672 = vmul.f32 %v3671, %v2783
  %v3673 = vmul.f32 %v3672, %v3671
  %v3674 = vmul.f32 0.5, %v3673
  %v3675 = vsub.f32 1.5, %v3674
  %v3676 = vmul.f32 %v3671, %v3675
  %vm3677 = vweird.f32 %v2783
  %vm3678 = vweird.f32 %v3671
  %vm3679 = vmor %vm3677, %vm3678
  %v3680 = vsel %vm3679, %v3671, %v3676
  %v3681 = vrsqrt.pop %v2784
  %v3682 = vmul.f32 %v3681, %v2784
  %v3683 = vmul.f32 %v3682, %v3681
  %v3684 = vmul.f32 0.5, %v3683
  %v3685 = vsub.f32 1.5, %v3684
  %v3686 = vmul.f32 %v3681, %v3685
  %vm3687 = vweird.f32 %v2784
  %vm3688 = vweird.f32 %v3681
  %vm3689 = vmor %vm3687, %vm3688
  %v3690 = vsel %vm3689, %v3681, %v3686
  %v3691 = vrsqrt.pop %v2785
  %v3692 = vmul.f32 %v3691, %v2785
  %v3693 = vmul.f32 %v3692, %v3691
  %v3694 = vmul.f32 0.5, %v3693
  %v3695 = vsub.f32 1.5, %v3694
  %v3696 = vmul.f32 %v3691, %v3695
  %vm3697 = vweird.f32 %v2785
  %vm3698 = vweird.f32 %v3691
  %vm3699 = vmor %vm3697, %vm3698
  %v3700 = vsel %vm3699, %v3691, %v3696
  %v3701 = vrsqrt.pop %v2786
  %v3702 = vmul.f32 %v3701, %v2786
  %v3703 = vmul.f32 %v3702, %v3701
  %v3704 = vmul.f32 0.5, %v3703
  %v3705 = vsub.f32 1.5, %v3704
  %v3706 = vmul.f32 %v3701, %v3705
  %vm3707 = vweird.f32 %v2786
  %vm3708 = vweird.f32 %v3701
  %vm3709 = vmor %vm3707, %vm3708
  %v3710 = vsel %vm3709, %v3701, %v3706
  %v3711 = vrsqrt.pop %v2787
  %v3712 = vmul.f32 %v3711, %v2787
  %v3713 = vmul.f32 %v3712, %v3711
  %v3714 = vmul.f32 0.5, %v3713
  %v3715 = vsub.f32 1.5, %v3714
  %v3716 = vmul.f32 %v3711, %v3715
  %vm3717 = vweird.f32 %v2787
  %vm3718 = vweird.f32 %v3711
  %vm3719 = vmor %vm3717, %vm3718
  %v3720 = vsel %vm3719, %v3711, %v3716
  %v3721 = vrsqrt.pop %v2788
  %v3722 = vmul.f32 %v3721, %v2788
  %v3723 = vmul.f32 %v3722, %v3721
  %v3724 = vmul.f32 0.5, %v3723
  %v3725 = vsub.f32 1.5, %v3724
  %v3726 = vmul.f32 %v3721, %v3725
  %vm3727 = vweird.f32 %v2788
  %vm3728 = vweird.f32 %v3721
  %vm3729 = vmor %vm3727, %vm3728
  %v3730 = vsel %vm3729, %v3721, %v3726
  %v3731 = vrsqrt.pop %v2789
  %v3732 = vmul.f32 %v3731, %v2789
  %v3733 = vmul.f32 %v3732, %v3731
  %v3734 = vmul.f32 0.5, %v3733
  %v3735 = vsub.f32 1.5, %v3734
  %v3736 = vmul.f32 %v3731, %v3735
  %vm3737 = vweird.f32 %v2789
  %vm3738 = vweird.f32 %v3731
  %vm3739 = vmor %vm3737, %vm3738
  %v3740 = vsel %vm3739, %v3731, %v3736
  %v3741 = vrsqrt.pop %v2790
  %v3742 = vmul.f32 %v3741, %v2790
  %v3743 = vmul.f32 %v3742, %v3741
  %v3744 = vmul.f32 0.5, %v3743
  %v3745 = vsub.f32 1.5, %v3744
  %v3746 = vmul.f32 %v3741, %v3745
  %vm3747 = vweird.f32 %v2790
  %vm3748 = vweird.f32 %v3741
  %vm3749 = vmor %vm3747, %vm3748
  %v3750 = vsel %vm3749, %v3741, %v3746
  %v3751 = vrsqrt.pop %v2791
  %v3752 = vmul.f32 %v3751, %v2791
  %v3753 = vmul.f32 %v3752, %v3751
  %v3754 = vmul.f32 0.5, %v3753
  %v3755 = vsub.f32 1.5, %v3754
  %v3756 = vmul.f32 %v3751, %v3755
  %vm3757 = vweird.f32 %v2791
  %vm3758 = vweird.f32 %v3751
  %vm3759 = vmor %vm3757, %vm3758
  %v3760 = vsel %vm3759, %v3751, %v3756
  %v3761 = vrsqrt.pop %v2792
  %v3762 = vmul.f32 %v3761, %v2792
  %v3763 = vmul.f32 %v3762, %v3761
  %v3764 = vmul.f32 0.5, %v3763
  %v3765 = vsub.f32 1.5, %v3764
  %v3766 = vmul.f32 %v3761, %v3765
  %vm3767 = vweird.f32 %v2792
  %vm3768 = vweird.f32 %v3761
  %vm3769 = vmor %vm3767, %vm3768
  %v3770 = vsel %vm3769, %v3761, %v3766
  %v3771 = vrsqrt.pop %v2793
  %v3772 = vmul.f32 %v3771, %v2793
  %v3773 = vmul.f32 %v3772, %v3771
  %v3774 = vmul.f32 0.5, %v3773
  %v3775 = vsub.f32 1.5, %v3774
  %v3776 = vmul.f32 %v3771, %v3775
  %vm3777 = vweird.f32 %v2793
  %vm3778 = vweird.f32 %v3771
  %vm3779 = vmor %vm3777, %vm3778
  %v3780 = vsel %vm3779, %v3771, %v3776
  %v3781 = vrsqrt.pop %v2794
  %v3782 = vmul.f32 %v3781, %v2794
  %v3783 = vmul.f32 %v3782, %v3781
  %v3784 = vmul.f32 0.5, %v3783
  %v3785 = vsub.f32 1.5, %v3784
  %v3786 = vmul.f32 %v3781, %v3785
  %vm3787 = vweird.f32 %v2794
  %vm3788 = vweird.f32 %v3781
  %vm3789 = vmor %vm3787, %vm3788
  %v3790 = vsel %vm3789, %v3781, %v3786
  %v3791 = vrsqrt.pop %v2795
  %v3792 = vmul.f32 %v3791, %v2795
  %v3793 = vmul.f32 %v3792, %v3791
  %v3794 = vmul.f32 0.5, %v3793
  %v3795 = vsub.f32 1.5, %v3794
  %v3796 = vmul.f32 %v3791, %v3795
  %vm3797 = vweird.f32 %v2795
  %vm3798 = vweird.f32 %v3791
  %vm3799 = vmor %vm3797, %vm3798
  %v3800 = vsel %vm3799, %v3791, %v3796
  %v3801 = vrsqrt.pop %v2796
  %v3802 = vmul.f32 %v3801, %v2796
  %v3803 = vmul.f32 %v3802, %v3801
  %v3804 = vmul.f32 0.5, %v3803
  %v3805 = vsub.f32 1.5, %v3804
  %v3806 = vmul.f32 %v3801, %v3805
  %vm3807 = vweird.f32 %v2796
  %vm3808 = vweird.f32 %v3801
  %vm3809 = vmor %vm3807, %vm3808
  %v3810 = vsel %vm3809, %v3801, %v3806
  %v3811 = vrsqrt.pop %v2797
  %v3812 = vmul.f32 %v3811, %v2797
  %v3813 = vmul.f32 %v3812, %v3811
  %v3814 = vmul.f32 0.5, %v3813
  %v3815 = vsub.f32 1.5, %v3814
  %v3816 = vmul.f32 %v3811, %v3815
  %vm3817 = vweird.f32 %v2797
  %vm3818 = vweird.f32 %v3811
  %vm3819 = vmor %vm3817, %vm3818
  %v3820 = vsel %vm3819, %v3811, %v3816
  %v3821 = vrsqrt.pop %v2798
  %v3822 = vmul.f32 %v3821, %v2798
  %v3823 = vmul.f32 %v3822, %v3821
  %v3824 = vmul.f32 0.5, %v3823
  %v3825 = vsub.f32 1.5, %v3824
  %v3826 = vmul.f32 %v3821, %v3825
  %vm3827 = vweird.f32 %v2798
  %vm3828 = vweird.f32 %v3821
  %vm3829 = vmor %vm3827, %vm3828
  %v3830 = vsel %vm3829, %v3821, %v3826
  %v3831 = vrsqrt.pop %v2799
  %v3832 = vmul.f32 %v3831, %v2799
  %v3833 = vmul.f32 %v3832, %v3831
  %v3834 = vmul.f32 0.5, %v3833
  %v3835 = vsub.f32 1.5, %v3834
  %v3836 = vmul.f32 %v3831, %v3835
  %vm3837 = vweird.f32 %v2799
  %vm3838 = vweird.f32 %v3831
  %vm3839 = vmor %vm3837, %vm3838
  %v3840 = vsel %vm3839, %v3831, %v3836
  %v3841 = vrsqrt.pop %v2800
  %v3842 = vmul.f32 %v3841, %v2800
  %v3843 = vmul.f32 %v3842, %v3841
  %v3844 = vmul.f32 0.5, %v3843
  %v3845 = vsub.f32 1.5, %v3844
  %v3846 = vmul.f32 %v3841, %v3845
  %vm3847 = vweird.f32 %v2800
  %vm3848 = vweird.f32 %v3841
  %vm3849 = vmor %vm3847, %vm3848
  %v3850 = vsel %vm3849, %v3841, %v3846
  %v3851 = vrsqrt.pop %v2801
  %v3852 = vmul.f32 %v3851, %v2801
  %v3853 = vmul.f32 %v3852, %v3851
  %v3854 = vmul.f32 0.5, %v3853
  %v3855 = vsub.f32 1.5, %v3854
  %v3856 = vmul.f32 %v3851, %v3855
  %vm3857 = vweird.f32 %v2801
  %vm3858 = vweird.f32 %v3851
  %vm3859 = vmor %vm3857, %vm3858
  %v3860 = vsel %vm3859, %v3851, %v3856
  %v3861 = vrsqrt.pop %v2802
  %v3862 = vmul.f32 %v3861, %v2802
  %v3863 = vmul.f32 %v3862, %v3861
  %v3864 = vmul.f32 0.5, %v3863
  %v3865 = vsub.f32 1.5, %v3864
  %v3866 = vmul.f32 %v3861, %v3865
  %vm3867 = vweird.f32 %v2802
  %vm3868 = vweird.f32 %v3861
  %vm3869 = vmor %vm3867, %vm3868
  %v3870 = vsel %vm3869, %v3861, %v3866
  %v3871 = vrsqrt.pop %v2803
  %v3872 = vmul.f32 %v3871, %v2803
  %v3873 = vmul.f32 %v3872, %v3871
  %v3874 = vmul.f32 0.5, %v3873
  %v3875 = vsub.f32 1.5, %v3874
  %v3876 = vmul.f32 %v3871, %v3875
  %vm3877 = vweird.f32 %v2803
  %vm3878 = vweird.f32 %v3871
  %vm3879 = vmor %vm3877, %vm3878
  %v3880 = vsel %vm3879, %v3871, %v3876
  %v3881 = vrsqrt.pop %v2804
  %v3882 = vmul.f32 %v3881, %v2804
  %v3883 = vmul.f32 %v3882, %v3881
  %v3884 = vmul.f32 0.5, %v3883
  %v3885 = vsub.f32 1.5, %v3884
  %v3886 = vmul.f32 %v3881, %v3885
  %vm3887 = vweird.f32 %v2804
  %vm3888 = vweird.f32 %v3881
  %vm3889 = vmor %vm3887, %vm3888
  %v3890 = vsel %vm3889, %v3881, %v3886
  %v3891 = vrsqrt.pop %v2805
  %v3892 = vmul.f32 %v3891, %v2805
  %v3893 = vmul.f32 %v3892, %v3891
  %v3894 = vmul.f32 0.5, %v3893
  %v3895 = vsub.f32 1.5, %v3894
  %v3896 = vmul.f32 %v3891, %v3895
  %vm3897 = vweird.f32 %v2805
  %vm3898 = vweird.f32 %v3891
  %vm3899 = vmor %vm3897, %vm3898
  %v3900 = vsel %vm3899, %v3891, %v3896
  %v3901 = vrsqrt.pop %v2806
  %v3902 = vmul.f32 %v3901, %v2806
  %v3903 = vmul.f32 %v3902, %v3901
  %v3904 = vmul.f32 0.5, %v3903
  %v3905 = vsub.f32 1.5, %v3904
  %v3906 = vmul.f32 %v3901, %v3905
  %vm3907 = vweird.f32 %v2806
  %vm3908 = vweird.f32 %v3901
  %vm3909 = vmor %vm3907, %vm3908
  %v3910 = vsel %vm3909, %v3901, %v3906
  %v3911 = vrsqrt.pop %v2807
  %v3912 = vmul.f32 %v3911, %v2807
  %v3913 = vmul.f32 %v3912, %v3911
  %v3914 = vmul.f32 0.5, %v3913
  %v3915 = vsub.f32 1.5, %v3914
  %v3916 = vmul.f32 %v3911, %v3915
  %vm3917 = vweird.f32 %v2807
  %vm3918 = vweird.f32 %v3911
  %vm3919 = vmor %vm3917, %vm3918
  %v3920 = vsel %vm3919, %v3911, %v3916
  %v3921 = vrsqrt.pop %v2808
  %v3922 = vmul.f32 %v3921, %v2808
  %v3923 = vmul.f32 %v3922, %v3921
  %v3924 = vmul.f32 0.5, %v3923
  %v3925 = vsub.f32 1.5, %v3924
  %v3926 = vmul.f32 %v3921, %v3925
  %vm3927 = vweird.f32 %v2808
  %vm3928 = vweird.f32 %v3921
  %vm3929 = vmor %vm3927, %vm3928
  %v3930 = vsel %vm3929, %v3921, %v3926
  %v3931 = vrsqrt.pop %v2809
  %v3932 = vmul.f32 %v3931, %v2809
  %v3933 = vmul.f32 %v3932, %v3931
  %v3934 = vmul.f32 0.5, %v3933
  %v3935 = vsub.f32 1.5, %v3934
  %v3936 = vmul.f32 %v3931, %v3935
  %vm3937 = vweird.f32 %v2809
  %vm3938 = vweird.f32 %v3931
  %vm3939 = vmor %vm3937, %vm3938
  %v3940 = vsel %vm3939, %v3931, %v3936
  %v3941 = vrsqrt.pop %v2810
  %v3942 = vmul.f32 %v3941, %v2810
  %v3943 = vmul.f32 %v3942, %v3941
  %v3944 = vmul.f32 0.5, %v3943
  %v3945 = vsub.f32 1.5, %v3944
  %v3946 = vmul.f32 %v3941, %v3945
  %vm3947 = vweird.f32 %v2810
  %vm3948 = vweird.f32 %v3941
  %vm3949 = vmor %vm3947, %vm3948
  %v3950 = vsel %vm3949, %v3941, %v3946
  %v3951 = vrsqrt.pop %v2811
  %v3952 = vmul.f32 %v3951, %v2811
  %v3953 = vmul.f32 %v3952, %v3951
  %v3954 = vmul.f32 0.5, %v3953
  %v3955 = vsub.f32 1.5, %v3954
  %v3956 = vmul.f32 %v3951, %v3955
  %vm3957 = vweird.f32 %v2811
  %vm3958 = vweird.f32 %v3951
  %vm3959 = vmor %vm3957, %vm3958
  %v3960 = vsel %vm3959, %v3951, %v3956
  %v3961 = vrsqrt.pop %v2812
  %v3962 = vmul.f32 %v3961, %v2812
  %v3963 = vmul.f32 %v3962, %v3961
  %v3964 = vmul.f32 0.5, %v3963
  %v3965 = vsub.f32 1.5, %v3964
  %v3966 = vmul.f32 %v3961, %v3965
  %vm3967 = vweird.f32 %v2812
  %vm3968 = vweird.f32 %v3961
  %vm3969 = vmor %vm3967, %vm3968
  %v3970 = vsel %vm3969, %v3961, %v3966
  %v3971 = vrsqrt.pop %v2813
  %v3972 = vmul.f32 %v3971, %v2813
  %v3973 = vmul.f32 %v3972, %v3971
  %v3974 = vmul.f32 0.5, %v3973
  %v3975 = vsub.f32 1.5, %v3974
  %v3976 = vmul.f32 %v3971, %v3975
  %vm3977 = vweird.f32 %v2813
  %vm3978 = vweird.f32 %v3971
  %vm3979 = vmor %vm3977, %vm3978
  %v3980 = vsel %vm3979, %v3971, %v3976
  %v3981 = vrsqrt.pop %v2814
  %v3982 = vmul.f32 %v3981, %v2814
  %v3983 = vmul.f32 %v3982, %v3981
  %v3984 = vmul.f32 0.5, %v3983
  %v3985 = vsub.f32 1.5, %v3984
  %v3986 = vmul.f32 %v3981, %v3985
  %vm3987 = vweird.f32 %v2814
  %vm3988 = vweird.f32 %v3981
  %vm3989 = vmor %vm3987, %vm3988
  %v3990 = vsel %vm3989, %v3981, %v3986
  %v3991 = vrsqrt.pop %v2815
  %v3992 = vmul.f32 %v3991, %v2815
  %v3993 = vmul.f32 %v3992, %v3991
  %v3994 = vmul.f32 0.5, %v3993
  %v3995 = vsub.f32 1.5, %v3994
  %v3996 = vmul.f32 %v3991, %v3995
  %vm3997 = vweird.f32 %v2815
  %vm3998 = vweird.f32 %v3991
  %vm3999 = vmor %vm3997, %vm3998
  %v4000 = vsel %vm3999, %v3991, %v3996
  %v4001 = vrsqrt.pop %v2816
  %v4002 = vmul.f32 %v4001, %v2816
  %v4003 = vmul.f32 %v4002, %v4001
  %v4004 = vmul.f32 0.5, %v4003
  %v4005 = vsub.f32 1.5, %v4004
  %v4006 = vmul.f32 %v4001, %v4005
  %vm4007 = vweird.f32 %v2816
  %vm4008 = vweird.f32 %v4001
  %vm4009 = vmor %vm4007, %vm4008
  %v4010 = vsel %vm4009, %v4001, %v4006
  %v4011 = vrsqrt.pop %v2817
  %v4012 = vmul.f32 %v4011, %v2817
  %v4013 = vmul.f32 %v4012, %v4011
  %v4014 = vmul.f32 0.5, %v4013
  %v4015 = vsub.f32 1.5, %v4014
  %v4016 = vmul.f32 %v4011, %v4015
  %vm4017 = vweird.f32 %v2817
  %vm4018 = vweird.f32 %v4011
  %vm4019 = vmor %vm4017, %vm4018
  %v4020 = vsel %vm4019, %v4011, %v4016
  %v4021 = vrsqrt.pop %v2818
  %v4022 = vmul.f32 %v4021, %v2818
  %v4023 = vmul.f32 %v4022, %v4021
  %v4024 = vmul.f32 0.5, %v4023
  %v4025 = vsub.f32 1.5, %v4024
  %v4026 = vmul.f32 %v4021, %v4025
  %vm4027 = vweird.f32 %v2818
  %vm4028 = vweird.f32 %v4021
  %vm4029 = vmor %vm4027, %vm4028
  %v4030 = vsel %vm4029, %v4021, %v4026
  %v4031 = vrsqrt.pop %v2819
  %v4032 = vmul.f32 %v4031, %v2819
  %v4033 = vmul.f32 %v4032, %v4031
  %v4034 = vmul.f32 0.5, %v4033
  %v4035 = vsub.f32 1.5, %v4034
  %v4036 = vmul.f32 %v4031, %v4035
  %vm4037 = vweird.f32 %v2819
  %vm4038 = vweird.f32 %v4031
  %vm4039 = vmor %vm4037, %vm4038
  %v4040 = vsel %vm4039, %v4031, %v4036
  %v4041 = vrsqrt.pop %v2820
  %v4042 = vmul.f32 %v4041, %v2820
  %v4043 = vmul.f32 %v4042, %v4041
  %v4044 = vmul.f32 0.5, %v4043
  %v4045 = vsub.f32 1.5, %v4044
  %v4046 = vmul.f32 %v4041, %v4045
  %vm4047 = vweird.f32 %v2820
  %vm4048 = vweird.f32 %v4041
  %vm4049 = vmor %vm4047, %vm4048
  %v4050 = vsel %vm4049, %v4041, %v4046
  %v4051 = vrsqrt.pop %v2821
  %v4052 = vmul.f32 %v4051, %v2821
  %v4053 = vmul.f32 %v4052, %v4051
  %v4054 = vmul.f32 0.5, %v4053
  %v4055 = vsub.f32 1.5, %v4054
  %v4056 = vmul.f32 %v4051, %v4055
  %vm4057 = vweird.f32 %v2821
  %vm4058 = vweird.f32 %v4051
  %vm4059 = vmor %vm4057, %vm4058
  %v4060 = vsel %vm4059, %v4051, %v4056
  %v4061 = vrsqrt.pop %v2822
  %v4062 = vmul.f32 %v4061, %v2822
  %v4063 = vmul.f32 %v4062, %v4061
  %v4064 = vmul.f32 0.5, %v4063
  %v4065 = vsub.f32 1.5, %v4064
  %v4066 = vmul.f32 %v4061, %v4065
  %vm4067 = vweird.f32 %v2822
  %vm4068 = vweird.f32 %v4061
  %vm4069 = vmor %vm4067, %vm4068
  %v4070 = vsel %vm4069, %v4061, %v4066
  %v4071 = vrsqrt.pop %v2823
  %v4072 = vmul.f32 %v4071, %v2823
  %v4073 = vmul.f32 %v4072, %v4071
  %v4074 = vmul.f32 0.5, %v4073
  %v4075 = vsub.f32 1.5, %v4074
  %v4076 = vmul.f32 %v4071, %v4075
  %vm4077 = vweird.f32 %v2823
  %vm4078 = vweird.f32 %v4071
  %vm4079 = vmor %vm4077, %vm4078
  %v4080 = vsel %vm4079, %v4071, %v4076
  %v4081 = vrsqrt.pop %v2824
  %v4082 = vmul.f32 %v4081, %v2824
  %v4083 = vmul.f32 %v4082, %v4081
  %v4084 = vmul.f32 0.5, %v4083
  %v4085 = vsub.f32 1.5, %v4084
  %v4086 = vmul.f32 %v4081, %v4085
  %vm4087 = vweird.f32 %v2824
  %vm4088 = vweird.f32 %v4081
  %vm4089 = vmor %vm4087, %vm4088
  %v4090 = vsel %vm4089, %v4081, %v4086
  %v4091 = vrsqrt.pop %v2825
  %v4092 = vmul.f32 %v4091, %v2825
  %v4093 = vmul.f32 %v4092, %v4091
  %v4094 = vmul.f32 0.5, %v4093
  %v4095 = vsub.f32 1.5, %v4094
  %v4096 = vmul.f32 %v4091, %v4095
  %vm4097 = vweird.f32 %v2825
  %vm4098 = vweird.f32 %v4091
  %vm4099 = vmor %vm4097, %vm4098
  %v4100 = vsel %vm4099, %v4091, %v4096
  %v4101 = vrsqrt.pop %v2826
  %v4102 = vmul.f32 %v4101, %v2826
  %v4103 = vmul.f32 %v4102, %v4101
  %v4104 = vmul.f32 0.5, %v4103
  %v4105 = vsub.f32 1.5, %v4104
  %v4106 = vmul.f32 %v4101, %v4105
  %vm4107 = vweird.f32 %v2826
  %vm4108 = vweird.f32 %v4101
  %vm4109 = vmor %vm4107, %vm4108
  %v4110 = vsel %vm4109, %v4101, %v4106
  %v4111 = vrsqrt.pop %v2827
  %v4112 = vmul.f32 %v4111, %v2827
  %v4113 = vmul.f32 %v4112, %v4111
  %v4114 = vmul.f32 0.5, %v4113
  %v4115 = vsub.f32 1.5, %v4114
  %v4116 = vmul.f32 %v4111, %v4115
  %vm4117 = vweird.f32 %v2827
  %vm4118 = vweird.f32 %v4111
  %vm4119 = vmor %vm4117, %vm4118
  %v4120 = vsel %vm4119, %v4111, %v4116
  %v4121 = vrsqrt.pop %v2828
  %v4122 = vmul.f32 %v4121, %v2828
  %v4123 = vmul.f32 %v4122, %v4121
  %v4124 = vmul.f32 0.5, %v4123
  %v4125 = vsub.f32 1.5, %v4124
  %v4126 = vmul.f32 %v4121, %v4125
  %vm4127 = vweird.f32 %v2828
  %vm4128 = vweird.f32 %v4121
  %vm4129 = vmor %vm4127, %vm4128
  %v4130 = vsel %vm4129, %v4121, %v4126
  %v4131 = vrsqrt.pop %v2829
  %v4132 = vmul.f32 %v4131, %v2829
  %v4133 = vmul.f32 %v4132, %v4131
  %v4134 = vmul.f32 0.5, %v4133
  %v4135 = vsub.f32 1.5, %v4134
  %v4136 = vmul.f32 %v4131, %v4135
  %vm4137 = vweird.f32 %v2829
  %vm4138 = vweird.f32 %v4131
  %vm4139 = vmor %vm4137, %vm4138
  %v4140 = vsel %vm4139, %v4131, %v4136
  %v4141 = vrsqrt.pop %v2830
  %v4142 = vmul.f32 %v4141, %v2830
  %v4143 = vmul.f32 %v4142, %v4141
  %v4144 = vmul.f32 0.5, %v4143
  %v4145 = vsub.f32 1.5, %v4144
  %v4146 = vmul.f32 %v4141, %v4145
  %vm4147 = vweird.f32 %v2830
  %vm4148 = vweird.f32 %v4141
  %vm4149 = vmor %vm4147, %vm4148
  %v4150 = vsel %vm4149, %v4141, %v4146
  %v4151 = vrsqrt.pop %v2831
  %v4152 = vmul.f32 %v4151, %v2831
  %v4153 = vmul.f32 %v4152, %v4151
  %v4154 = vmul.f32 0.5, %v4153
  %v4155 = vsub.f32 1.5, %v4154
  %v4156 = vmul.f32 %v4151, %v4155
  %vm4157 = vweird.f32 %v2831
  %vm4158 = vweird.f32 %v4151
  %vm4159 = vmor %vm4157, %vm4158
  %v4160 = vsel %vm4159, %v4151, %v4156
  %v4161 = vrsqrt.pop %v2832
  %v4162 = vmul.f32 %v4161, %v2832
  %v4163 = vmul.f32 %v4162, %v4161
  %v4164 = vmul.f32 0.5, %v4163
  %v4165 = vsub.f32 1.5, %v4164
  %v4166 = vmul.f32 %v4161, %v4165
  %vm4167 = vweird.f32 %v2832
  %vm4168 = vweird.f32 %v4161
  %vm4169 = vmor %vm4167, %vm4168
  %v4170 = vsel %vm4169, %v4161, %v4166
  %v4171 = vrsqrt.pop %v2833
  %v4172 = vmul.f32 %v4171, %v2833
  %v4173 = vmul.f32 %v4172, %v4171
  %v4174 = vmul.f32 0.5, %v4173
  %v4175 = vsub.f32 1.5, %v4174
  %v4176 = vmul.f32 %v4171, %v4175
  %vm4177 = vweird.f32 %v2833
  %vm4178 = vweird.f32 %v4171
  %vm4179 = vmor %vm4177, %vm4178
  %v4180 = vsel %vm4179, %v4171, %v4176
  %v4181 = vrsqrt.pop %v2834
  %v4182 = vmul.f32 %v4181, %v2834
  %v4183 = vmul.f32 %v4182, %v4181
  %v4184 = vmul.f32 0.5, %v4183
  %v4185 = vsub.f32 1.5, %v4184
  %v4186 = vmul.f32 %v4181, %v4185
  %vm4187 = vweird.f32 %v2834
  %vm4188 = vweird.f32 %v4181
  %vm4189 = vmor %vm4187, %vm4188
  %v4190 = vsel %vm4189, %v4181, %v4186
  %v4191 = vrsqrt.pop %v2835
  %v4192 = vmul.f32 %v4191, %v2835
  %v4193 = vmul.f32 %v4192, %v4191
  %v4194 = vmul.f32 0.5, %v4193
  %v4195 = vsub.f32 1.5, %v4194
  %v4196 = vmul.f32 %v4191, %v4195
  %vm4197 = vweird.f32 %v2835
  %vm4198 = vweird.f32 %v4191
  %vm4199 = vmor %vm4197, %vm4198
  %v4200 = vsel %vm4199, %v4191, %v4196
  %v4201 = vrsqrt.pop %v2836
  %v4202 = vmul.f32 %v4201, %v2836
  %v4203 = vmul.f32 %v4202, %v4201
  %v4204 = vmul.f32 0.5, %v4203
  %v4205 = vsub.f32 1.5, %v4204
  %v4206 = vmul.f32 %v4201, %v4205
  %vm4207 = vweird.f32 %v2836
  %vm4208 = vweird.f32 %v4201
  %vm4209 = vmor %vm4207, %vm4208
  %v4210 = vsel %vm4209, %v4201, %v4206
  %v4211 = vrsqrt.pop %v2837
  %v4212 = vmul.f32 %v4211, %v2837
  %v4213 = vmul.f32 %v4212, %v4211
  %v4214 = vmul.f32 0.5, %v4213
  %v4215 = vsub.f32 1.5, %v4214
  %v4216 = vmul.f32 %v4211, %v4215
  %vm4217 = vweird.f32 %v2837
  %vm4218 = vweird.f32 %v4211
  %vm4219 = vmor %vm4217, %vm4218
  %v4220 = vsel %vm4219, %v4211, %v4216
  %v4221 = vrsqrt.pop %v2838
  %v4222 = vmul.f32 %v4221, %v2838
  %v4223 = vmul.f32 %v4222, %v4221
  %v4224 = vmul.f32 0.5, %v4223
  %v4225 = vsub.f32 1.5, %v4224
  %v4226 = vmul.f32 %v4221, %v4225
  %vm4227 = vweird.f32 %v2838
  %vm4228 = vweird.f32 %v4221
  %vm4229 = vmor %vm4227, %vm4228
  %v4230 = vsel %vm4229, %v4221, %v4226
  %v4231 = vrsqrt.pop %v2839
  %v4232 = vmul.f32 %v4231, %v2839
  %v4233 = vmul.f32 %v4232, %v4231
  %v4234 = vmul.f32 0.5, %v4233
  %v4235 = vsub.f32 1.5, %v4234
  %v4236 = vmul.f32 %v4231, %v4235
  %vm4237 = vweird.f32 %v2839
  %vm4238 = vweird.f32 %v4231
  %vm4239 = vmor %vm4237, %vm4238
  %v4240 = vsel %vm4239, %v4231, %v4236
  %v4241 = vrsqrt.pop %v2840
  %v4242 = vmul.f32 %v4241, %v2840
  %v4243 = vmul.f32 %v4242, %v4241
  %v4244 = vmul.f32 0.5, %v4243
  %v4245 = vsub.f32 1.5, %v4244
  %v4246 = vmul.f32 %v4241, %v4245
  %vm4247 = vweird.f32 %v2840
  %vm4248 = vweird.f32 %v4241
  %vm4249 = vmor %vm4247, %vm4248
  %v4250 = vsel %vm4249, %v4241, %v4246
  %v4251 = vrsqrt.pop %v2841
  %v4252 = vmul.f32 %v4251, %v2841
  %v4253 = vmul.f32 %v4252, %v4251
  %v4254 = vmul.f32 0.5, %v4253
  %v4255 = vsub.f32 1.5, %v4254
  %v4256 = vmul.f32 %v4251, %v4255
  %vm4257 = vweird.f32 %v2841
  %vm4258 = vweird.f32 %v4251
  %vm4259 = vmor %vm4257, %vm4258
  %v4260 = vsel %vm4259, %v4251, %v4256
  %v4261 = vrsqrt.pop %v2842
  %v4262 = vmul.f32 %v4261, %v2842
  %v4263 = vmul.f32 %v4262, %v4261
  %v4264 = vmul.f32 0.5, %v4263
  %v4265 = vsub.f32 1.5, %v4264
  %v4266 = vmul.f32 %v4261, %v4265
  %vm4267 = vweird.f32 %v2842
  %vm4268 = vweird.f32 %v4261
  %vm4269 = vmor %vm4267, %vm4268
  %v4270 = vsel %vm4269, %v4261, %v4266
  %v4271 = vrsqrt.pop %v2843
  %v4272 = vmul.f32 %v4271, %v2843
  %v4273 = vmul.f32 %v4272, %v4271
  %v4274 = vmul.f32 0.5, %v4273
  %v4275 = vsub.f32 1.5, %v4274
  %v4276 = vmul.f32 %v4271, %v4275
  %vm4277 = vweird.f32 %v2843
  %vm4278 = vweird.f32 %v4271
  %vm4279 = vmor %vm4277, %vm4278
  %v4280 = vsel %vm4279, %v4271, %v4276
  %v4281 = vrsqrt.pop %v2844
  %v4282 = vmul.f32 %v4281, %v2844
  %v4283 = vmul.f32 %v4282, %v4281
  %v4284 = vmul.f32 0.5, %v4283
  %v4285 = vsub.f32 1.5, %v4284
  %v4286 = vmul.f32 %v4281, %v4285
  %vm4287 = vweird.f32 %v2844
  %vm4288 = vweird.f32 %v4281
  %vm4289 = vmor %vm4287, %vm4288
  %v4290 = vsel %vm4289, %v4281, %v4286
  %v4291 = vrsqrt.pop %v2845
  %v4292 = vmul.f32 %v4291, %v2845
  %v4293 = vmul.f32 %v4292, %v4291
  %v4294 = vmul.f32 0.5, %v4293
  %v4295 = vsub.f32 1.5, %v4294
  %v4296 = vmul.f32 %v4291, %v4295
  %vm4297 = vweird.f32 %v2845
  %vm4298 = vweird.f32 %v4291
  %vm4299 = vmor %vm4297, %vm4298
  %v4300 = vsel %vm4299, %v4291, %v4296
  %v4301 = vrsqrt.pop %v2846
  %v4302 = vmul.f32 %v4301, %v2846
  %v4303 = vmul.f32 %v4302, %v4301
  %v4304 = vmul.f32 0.5, %v4303
  %v4305 = vsub.f32 1.5, %v4304
  %v4306 = vmul.f32 %v4301, %v4305
  %vm4307 = vweird.f32 %v2846
  %vm4308 = vweird.f32 %v4301
  %vm4309 = vmor %vm4307, %vm4308
  %v4310 = vsel %vm4309, %v4301, %v4306
  %v4311 = vrsqrt.pop %v2847
  %v4312 = vmul.f32 %v4311, %v2847
  %v4313 = vmul.f32 %v4312, %v4311
  %v4314 = vmul.f32 0.5, %v4313
  %v4315 = vsub.f32 1.5, %v4314
  %v4316 = vmul.f32 %v4311, %v4315
  %vm4317 = vweird.f32 %v2847
  %vm4318 = vweird.f32 %v4311
  %vm4319 = vmor %vm4317, %vm4318
  %v4320 = vsel %vm4319, %v4311, %v4316
  %v4321 = vrsqrt.pop %v2848
  %v4322 = vmul.f32 %v4321, %v2848
  %v4323 = vmul.f32 %v4322, %v4321
  %v4324 = vmul.f32 0.5, %v4323
  %v4325 = vsub.f32 1.5, %v4324
  %v4326 = vmul.f32 %v4321, %v4325
  %vm4327 = vweird.f32 %v2848
  %vm4328 = vweird.f32 %v4321
  %vm4329 = vmor %vm4327, %vm4328
  %v4330 = vsel %vm4329, %v4321, %v4326
  %v4331 = vrsqrt.pop %v2849
  %v4332 = vmul.f32 %v4331, %v2849
  %v4333 = vmul.f32 %v4332, %v4331
  %v4334 = vmul.f32 0.5, %v4333
  %v4335 = vsub.f32 1.5, %v4334
  %v4336 = vmul.f32 %v4331, %v4335
  %vm4337 = vweird.f32 %v2849
  %vm4338 = vweird.f32 %v4331
  %vm4339 = vmor %vm4337, %vm4338
  %v4340 = vsel %vm4339, %v4331, %v4336
  %v4341 = vrsqrt.pop %v2850
  %v4342 = vmul.f32 %v4341, %v2850
  %v4343 = vmul.f32 %v4342, %v4341
  %v4344 = vmul.f32 0.5, %v4343
  %v4345 = vsub.f32 1.5, %v4344
  %v4346 = vmul.f32 %v4341, %v4345
  %vm4347 = vweird.f32 %v2850
  %vm4348 = vweird.f32 %v4341
  %vm4349 = vmor %vm4347, %vm4348
  %v4350 = vsel %vm4349, %v4341, %v4346
  %v4351 = vrsqrt.pop %v2851
  %v4352 = vmul.f32 %v4351, %v2851
  %v4353 = vmul.f32 %v4352, %v4351
  %v4354 = vmul.f32 0.5, %v4353
  %v4355 = vsub.f32 1.5, %v4354
  %v4356 = vmul.f32 %v4351, %v4355
  %vm4357 = vweird.f32 %v2851
  %vm4358 = vweird.f32 %v4351
  %vm4359 = vmor %vm4357, %vm4358
  %v4360 = vsel %vm4359, %v4351, %v4356
  %v4361 = vrsqrt.pop %v2852
  %v4362 = vmul.f32 %v4361, %v2852
  %v4363 = vmul.f32 %v4362, %v4361
  %v4364 = vmul.f32 0.5, %v4363
  %v4365 = vsub.f32 1.5, %v4364
  %v4366 = vmul.f32 %v4361, %v4365
  %vm4367 = vweird.f32 %v2852
  %vm4368 = vweird.f32 %v4361
  %vm4369 = vmor %vm4367, %vm4368
  %v4370 = vsel %vm4369, %v4361, %v4366
  %v4371 = vrsqrt.pop %v2853
  %v4372 = vmul.f32 %v4371, %v2853
  %v4373 = vmul.f32 %v4372, %v4371
  %v4374 = vmul.f32 0.5, %v4373
  %v4375 = vsub.f32 1.5, %v4374
  %v4376 = vmul.f32 %v4371, %v4375
  %vm4377 = vweird.f32 %v2853
  %vm4378 = vweird.f32 %v4371
  %vm4379 = vmor %vm4377, %vm4378
  %v4380 = vsel %vm4379, %v4371, %v4376
  %v4381 = vrsqrt.pop %v2854
  %v4382 = vmul.f32 %v4381, %v2854
  %v4383 = vmul.f32 %v4382, %v4381
  %v4384 = vmul.f32 0.5, %v4383
  %v4385 = vsub.f32 1.5, %v4384
  %v4386 = vmul.f32 %v4381, %v4385
  %vm4387 = vweird.f32 %v2854
  %vm4388 = vweird.f32 %v4381
  %vm4389 = vmor %vm4387, %vm4388
  %v4390 = vsel %vm4389, %v4381, %v4386
  %v4391 = vrsqrt.pop %v2855
  %v4392 = vmul.f32 %v4391, %v2855
  %v4393 = vmul.f32 %v4392, %v4391
  %v4394 = vmul.f32 0.5, %v4393
  %v4395 = vsub.f32 1.5, %v4394
  %v4396 = vmul.f32 %v4391, %v4395
  %vm4397 = vweird.f32 %v2855
  %vm4398 = vweird.f32 %v4391
  %vm4399 = vmor %vm4397, %vm4398
  %v4400 = vsel %vm4399, %v4391, %v4396
  %v4401 = vrsqrt.pop %v2856
  %v4402 = vmul.f32 %v4401, %v2856
  %v4403 = vmul.f32 %v4402, %v4401
  %v4404 = vmul.f32 0.5, %v4403
  %v4405 = vsub.f32 1.5, %v4404
  %v4406 = vmul.f32 %v4401, %v4405
  %vm4407 = vweird.f32 %v2856
  %vm4408 = vweird.f32 %v4401
  %vm4409 = vmor %vm4407, %vm4408
  %v4410 = vsel %vm4409, %v4401, %v4406
  %v4411 = vrsqrt.pop %v2857
  %v4412 = vmul.f32 %v4411, %v2857
  %v4413 = vmul.f32 %v4412, %v4411
  %v4414 = vmul.f32 0.5, %v4413
  %v4415 = vsub.f32 1.5, %v4414
  %v4416 = vmul.f32 %v4411, %v4415
  %vm4417 = vweird.f32 %v2857
  %vm4418 = vweird.f32 %v4411
  %vm4419 = vmor %vm4417, %vm4418
  %v4420 = vsel %vm4419, %v4411, %v4416
  %v4421 = vrsqrt.pop %v2858
  %v4422 = vmul.f32 %v4421, %v2858
  %v4423 = vmul.f32 %v4422, %v4421
  %v4424 = vmul.f32 0.5, %v4423
  %v4425 = vsub.f32 1.5, %v4424
  %v4426 = vmul.f32 %v4421, %v4425
  %vm4427 = vweird.f32 %v2858
  %vm4428 = vweird.f32 %v4421
  %vm4429 = vmor %vm4427, %vm4428
  %v4430 = vsel %vm4429, %v4421, %v4426
  %v4431 = vrsqrt.pop %v2859
  %v4432 = vmul.f32 %v4431, %v2859
  %v4433 = vmul.f32 %v4432, %v4431
  %v4434 = vmul.f32 0.5, %v4433
  %v4435 = vsub.f32 1.5, %v4434
  %v4436 = vmul.f32 %v4431, %v4435
  %vm4437 = vweird.f32 %v2859
  %vm4438 = vweird.f32 %v4431
  %vm4439 = vmor %vm4437, %vm4438
  %v4440 = vsel %vm4439, %v4431, %v4436
  %v4441 = vrsqrt.pop %v2860
  %v4442 = vmul.f32 %v4441, %v2860
  %v4443 = vmul.f32 %v4442, %v4441
  %v4444 = vmul.f32 0.5, %v4443
  %v4445 = vsub.f32 1.5, %v4444
  %v4446 = vmul.f32 %v4441, %v4445
  %vm4447 = vweird.f32 %v2860
  %vm4448 = vweird.f32 %v4441
  %vm4449 = vmor %vm4447, %vm4448
  %v4450 = vsel %vm4449, %v4441, %v4446
  %v4451 = vrsqrt.pop %v2861
  %v4452 = vmul.f32 %v4451, %v2861
  %v4453 = vmul.f32 %v4452, %v4451
  %v4454 = vmul.f32 0.5, %v4453
  %v4455 = vsub.f32 1.5, %v4454
  %v4456 = vmul.f32 %v4451, %v4455
  %vm4457 = vweird.f32 %v2861
  %vm4458 = vweird.f32 %v4451
  %vm4459 = vmor %vm4457, %vm4458
  %v4460 = vsel %vm4459, %v4451, %v4456
  %v4461 = vrsqrt.pop %v2862
  %v4462 = vmul.f32 %v4461, %v2862
  %v4463 = vmul.f32 %v4462, %v4461
  %v4464 = vmul.f32 0.5, %v4463
  %v4465 = vsub.f32 1.5, %v4464
  %v4466 = vmul.f32 %v4461, %v4465
  %vm4467 = vweird.f32 %v2862
  %vm4468 = vweird.f32 %v4461
  %vm4469 = vmor %vm4467, %vm4468
  %v4470 = vsel %vm4469, %v4461, %v4466
  %v4471 = vrsqrt.pop %v2863
  %v4472 = vmul.f32 %v4471, %v2863
  %v4473 = vmul.f32 %v4472, %v4471
  %v4474 = vmul.f32 0.5, %v4473
  %v4475 = vsub.f32 1.5, %v4474
  %v4476 = vmul.f32 %v4471, %v4475
  %vm4477 = vweird.f32 %v2863
  %vm4478 = vweird.f32 %v4471
  %vm4479 = vmor %vm4477, %vm4478
  %v4480 = vsel %vm4479, %v4471, %v4476
  %v4481 = vrsqrt.pop %v2864
  %v4482 = vmul.f32 %v4481, %v2864
  %v4483 = vmul.f32 %v4482, %v4481
  %v4484 = vmul.f32 0.5, %v4483
  %v4485 = vsub.f32 1.5, %v4484
  %v4486 = vmul.f32 %v4481, %v4485
  %vm4487 = vweird.f32 %v2864
  %vm4488 = vweird.f32 %v4481
  %vm4489 = vmor %vm4487, %vm4488
  %v4490 = vsel %vm4489, %v4481, %v4486
  %v4491 = vrsqrt.pop %v2865
  %v4492 = vmul.f32 %v4491, %v2865
  %v4493 = vmul.f32 %v4492, %v4491
  %v4494 = vmul.f32 0.5, %v4493
  %v4495 = vsub.f32 1.5, %v4494
  %v4496 = vmul.f32 %v4491, %v4495
  %vm4497 = vweird.f32 %v2865
  %vm4498 = vweird.f32 %v4491
  %vm4499 = vmor %vm4497, %vm4498
  %v4500 = vsel %vm4499, %v4491, %v4496
  %v4501 = vrsqrt.pop %v2866
  %v4502 = vmul.f32 %v4501, %v2866
  %v4503 = vmul.f32 %v4502, %v4501
  %v4504 = vmul.f32 0.5, %v4503
  %v4505 = vsub.f32 1.5, %v4504
  %v4506 = vmul.f32 %v4501, %v4505
  %vm4507 = vweird.f32 %v2866
  %vm4508 = vweird.f32 %v4501
  %vm4509 = vmor %vm4507, %vm4508
  %v4510 = vsel %vm4509, %v4501, %v4506
  %v4511 = vrsqrt.pop %v2867
  %v4512 = vmul.f32 %v4511, %v2867
  %v4513 = vmul.f32 %v4512, %v4511
  %v4514 = vmul.f32 0.5, %v4513
  %v4515 = vsub.f32 1.5, %v4514
  %v4516 = vmul.f32 %v4511, %v4515
  %vm4517 = vweird.f32 %v2867
  %vm4518 = vweird.f32 %v4511
  %vm4519 = vmor %vm4517, %vm4518
  %v4520 = vsel %vm4519, %v4511, %v4516
  %v4521 = vrsqrt.pop %v2868
  %v4522 = vmul.f32 %v4521, %v2868
  %v4523 = vmul.f32 %v4522, %v4521
  %v4524 = vmul.f32 0.5, %v4523
  %v4525 = vsub.f32 1.5, %v4524
  %v4526 = vmul.f32 %v4521, %v4525
  %vm4527 = vweird.f32 %v2868
  %vm4528 = vweird.f32 %v4521
  %vm4529 = vmor %vm4527, %vm4528
  %v4530 = vsel %vm4529, %v4521, %v4526
  %v4531 = vrsqrt.pop %v2869
  %v4532 = vmul.f32 %v4531, %v2869
  %v4533 = vmul.f32 %v4532, %v4531
  %v4534 = vmul.f32 0.5, %v4533
  %v4535 = vsub.f32 1.5, %v4534
  %v4536 = vmul.f32 %v4531, %v4535
  %vm4537 = vweird.f32 %v2869
  %vm4538 = vweird.f32 %v4531
  %vm4539 = vmor %vm4537, %vm4538
  %v4540 = vsel %vm4539, %v4531, %v4536
  %v4541 = vrsqrt.pop %v2870
  %v4542 = vmul.f32 %v4541, %v2870
  %v4543 = vmul.f32 %v4542, %v4541
  %v4544 = vmul.f32 0.5, %v4543
  %v4545 = vsub.f32 1.5, %v4544
  %v4546 = vmul.f32 %v4541, %v4545
  %vm4547 = vweird.f32 %v2870
  %vm4548 = vweird.f32 %v4541
  %vm4549 = vmor %vm4547, %vm4548
  %v4550 = vsel %vm4549, %v4541, %v4546
  %v4551 = vld [vmem:[%s1] sm:$0xff]
  %v4552 = vld [vmem:[%s1 + $0x8] sm:$0xff]
  %v4553 = vld [vmem:[%s1 + $0x10] sm:$0xff]
  %v4554 = vld [vmem:[%s1 + $0x18] sm:$0xff]
  %v4555 = vld [vmem:[%s1 + $0x20] sm:$0xff]
  %v4556 = vld [vmem:[%s1 + $0x28] sm:$0xff]
  %v4557 = vld [vmem:[%s1 + $0x30] sm:$0xff]
  %v4558 = vld [vmem:[%s1 + $0x38] sm:$0xff]
  %v4559 = vld [vmem:[%s1 + $0x40] sm:$0xff]
  %v4560 = vld [vmem:[%s1 + $0x48] sm:$0xff]
  %v4561 = vld [vmem:[%s1 + $0x50] sm:$0xff]
  %v4562 = vld [vmem:[%s1 + $0x58] sm:$0xff]
  %v4563 = vld [vmem:[%s1 + $0x60] sm:$0xff]
  %v4564 = vld [vmem:[%s1 + $0x68] sm:$0xff]
  %v4565 = vld [vmem:[%s1 + $0x70] sm:$0xff]
  %v4566 = vld [vmem:[%s1 + $0x78] sm:$0xff]
  %v4567 = vld [vmem:[%s1 + $0x80] sm:$0xff]
  %v4568 = vld [vmem:[%s1 + $0x88] sm:$0xff]
  %v4569 = vld [vmem:[%s1 + $0x90] sm:$0xff]
  %v4570 = vld [vmem:[%s1 + $0x98] sm:$0xff]
  %v4571 = vld [vmem:[%s1 + $0xa0] sm:$0xff]
  %v4572 = vld [vmem:[%s1 + $0xa8] sm:$0xff]
  %v4573 = vld [vmem:[%s1 + $0xb0] sm:$0xff]
  %v4574 = vld [vmem:[%s1 + $0xb8] sm:$0xff]
  %v4575 = vld [vmem:[%s1 + $0xc0] sm:$0xff]
  %v4576 = vld [vmem:[%s1 + $0xc8] sm:$0xff]
  %v4577 = vld [vmem:[%s1 + $0xd0] sm:$0xff]
  %v4578 = vld [vmem:[%s1 + $0xd8] sm:$0xff]
  %v4579 = vld [vmem:[%s1 + $0xe0] sm:$0xff]
  %v4580 = vld [vmem:[%s1 + $0xe8] sm:$0xff]
  %v4581 = vld [vmem:[%s1 + $0xf0] sm:$0xff]
  %v4582 = vld [vmem:[%s1 + $0xf8] sm:$0xff]
  %v4583 = vld [vmem:[%s1 + $0x100] sm:$0xff]
  %v4584 = vld [vmem:[%s1 + $0x108] sm:$0xff]
  %v4585 = vld [vmem:[%s1 + $0x110] sm:$0xff]
  %v4586 = vld [vmem:[%s1 + $0x118] sm:$0xff]
  %v4587 = vld [vmem:[%s1 + $0x120] sm:$0xff]
  %v4588 = vld [vmem:[%s1 + $0x128] sm:$0xff]
  %v4589 = vld [vmem:[%s1 + $0x130] sm:$0xff]
  %v4590 = vld [vmem:[%s1 + $0x138] sm:$0xff]
  %v4591 = vld [vmem:[%s1 + $0x140] sm:$0xff]
  %v4592 = vld [vmem:[%s1 + $0x148] sm:$0xff]
  %v4593 = vld [vmem:[%s1 + $0x150] sm:$0xff]
  %v4594 = vld [vmem:[%s1 + $0x158] sm:$0xff]
  %v4595 = vld [vmem:[%s1 + $0x160] sm:$0xff]
  %v4596 = vld [vmem:[%s1 + $0x168] sm:$0xff]
  %v4597 = vld [vmem:[%s1 + $0x170] sm:$0xff]
  %v4598 = vld [vmem:[%s1 + $0x178] sm:$0xff]
  %v4599 = vld [vmem:[%s1 + $0x180] sm:$0xff]
  %v4600 = vld [vmem:[%s1 + $0x188] sm:$0xff]
  %v4601 = vld [vmem:[%s1 + $0x190] sm:$0xff]
  %v4602 = vld [vmem:[%s1 + $0x198] sm:$0xff]
  %v4603 = vld [vmem:[%s1 + $0x1a0] sm:$0xff]
  %v4604 = vld [vmem:[%s1 + $0x1a8] sm:$0xff]
  %v4605 = vld [vmem:[%s1 + $0x1b0] sm:$0xff]
  %v4606 = vld [vmem:[%s1 + $0x1b8] sm:$0xff]
  %v4607 = vld [vmem:[%s1 + $0x1c0] sm:$0xff]
  %v4608 = vld [vmem:[%s1 + $0x1c8] sm:$0xff]
  %v4609 = vld [vmem:[%s1 + $0x1d0] sm:$0xff]
  %v4610 = vld [vmem:[%s1 + $0x1d8] sm:$0xff]
  %v4611 = vld [vmem:[%s1 + $0x1e0] sm:$0xff]
  %v4612 = vld [vmem:[%s1 + $0x1e8] sm:$0xff]
  %v4613 = vld [vmem:[%s1 + $0x1f0] sm:$0xff]
  %v4614 = vld [vmem:[%s1 + $0x1f8] sm:$0xff]
  %v4615 = vld [vmem:[%s1 + $0x200] sm:$0xff]
  %v4616 = vld [vmem:[%s1 + $0x208] sm:$0xff]
  %v4617 = vld [vmem:[%s1 + $0x210] sm:$0xff]
  %v4618 = vld [vmem:[%s1 + $0x218] sm:$0xff]
  %v4619 = vld [vmem:[%s1 + $0x220] sm:$0xff]
  %v4620 = vld [vmem:[%s1 + $0x228] sm:$0xff]
  %v4621 = vld [vmem:[%s1 + $0x230] sm:$0xff]
  %v4622 = vld [vmem:[%s1 + $0x238] sm:$0xff]
  %v4623 = vld [vmem:[%s1 + $0x240] sm:$0xff]
  %v4624 = vld [vmem:[%s1 + $0x248] sm:$0xff]
  %v4625 = vld [vmem:[%s1 + $0x250] sm:$0xff]
  %v4626 = vld [vmem:[%s1 + $0x258] sm:$0xff]
  %v4627 = vld [vmem:[%s1 + $0x260] sm:$0xff]
  %v4628 = vld [vmem:[%s1 + $0x268] sm:$0xff]
  %v4629 = vld [vmem:[%s1 + $0x270] sm:$0xff]
  %v4630 = vld [vmem:[%s1 + $0x278] sm:$0xff]
  %v4631 = vld [vmem:[%s1 + $0x280] sm:$0xff]
  %v4632 = vld [vmem:[%s1 + $0x288] sm:$0xff]
  %v4633 = vld [vmem:[%s1 + $0x290] sm:$0xff]
  %v4634 = vld [vmem:[%s1 + $0x298] sm:$0xff]
  %v4635 = vld [vmem:[%s1 + $0x2a0] sm:$0xff]
  %v4636 = vld [vmem:[%s1 + $0x2a8] sm:$0xff]
  %v4637 = vld [vmem:[%s1 + $0x2b0] sm:$0xff]
  %v4638 = vld [vmem:[%s1 + $0x2b8] sm:$0xff]
  %v4639 = vld [vmem:[%s1 + $0x2c0] sm:$0xff]
  %v4640 = vld [vmem:[%s1 + $0x2c8] sm:$0xff]
  %v4641 = vld [vmem:[%s1 + $0x2d0] sm:$0xff]
  %v4642 = vld [vmem:[%s1 + $0x2d8] sm:$0xff]
  %v4643 = vld [vmem:[%s1 + $0x2e0] sm:$0xff]
  %v4644 = vld [vmem:[%s1 + $0x2e8] sm:$0xff]
  %v4645 = vld [vmem:[%s1 + $0x2f0] sm:$0xff]
  %v4646 = vld [vmem:[%s1 + $0x2f8] sm:$0xff]
  %v4647 = vld [vmem:[%s1 + $0x300] sm:$0xff]
  %v4648 = vld [vmem:[%s1 + $0x308] sm:$0xff]
  %v4649 = vld [vmem:[%s1 + $0x310] sm:$0xff]
  %v4650 = vld [vmem:[%s1 + $0x318] sm:$0xff]
  %v4651 = vld [vmem:[%s1 + $0x320] sm:$0xff]
  %v4652 = vld [vmem:[%s1 + $0x328] sm:$0xff]
  %v4653 = vld [vmem:[%s1 + $0x330] sm:$0xff]
  %v4654 = vld [vmem:[%s1 + $0x338] sm:$0xff]
  %v4655 = vld [vmem:[%s1 + $0x340] sm:$0xff]
  %v4656 = vld [vmem:[%s1 + $0x348] sm:$0xff]
  %v4657 = vld [vmem:[%s1 + $0x350] sm:$0xff]
  %v4658 = vld [vmem:[%s1 + $0x358] sm:$0xff]
  %v4659 = vld [vmem:[%s1 + $0x360] sm:$0xff]
  %v4660 = vld [vmem:[%s1 + $0x368] sm:$0xff]
  %v4661 = vld [vmem:[%s1 + $0x370] sm:$0xff]
  %v4662 = vld [vmem:[%s1 + $0x378] sm:$0xff]
  %v4663 = vld [vmem:[%s1 + $0x380] sm:$0xff]
  %v4664 = vld [vmem:[%s1 + $0x388] sm:$0xff]
  %v4665 = vld [vmem:[%s1 + $0x390] sm:$0xff]
  %v4666 = vld [vmem:[%s1 + $0x398] sm:$0xff]
  %v4667 = vld [vmem:[%s1 + $0x3a0] sm:$0xff]
  %v4668 = vld [vmem:[%s1 + $0x3a8] sm:$0xff]
  %v4669 = vld [vmem:[%s1 + $0x3b0] sm:$0xff]
  %v4670 = vld [vmem:[%s1 + $0x3b8] sm:$0xff]
  %v4671 = vld [vmem:[%s1 + $0x3c0] sm:$0xff]
  %v4672 = vld [vmem:[%s1 + $0x3c8] sm:$0xff]
  %v4673 = vld [vmem:[%s1 + $0x3d0] sm:$0xff]
  %v4674 = vld [vmem:[%s1 + $0x3d8] sm:$0xff]
  %v4675 = vld [vmem:[%s1 + $0x3e0] sm:$0xff]
  %v4676 = vld [vmem:[%s1 + $0x3e8] sm:$0xff]
  %v4677 = vld [vmem:[%s1 + $0x3f0] sm:$0xff]
  %v4678 = vld [vmem:[%s1 + $0x3f8] sm:$0xff]
  %v4679 = vld [vmem:[%s1 + $0x400] sm:$0xff]
  %v4680 = vld [vmem:[%s1 + $0x408] sm:$0xff]
  %v4681 = vld [vmem:[%s1 + $0x410] sm:$0xff]
  %v4682 = vld [vmem:[%s1 + $0x418] sm:$0xff]
  %v4683 = vld [vmem:[%s1 + $0x420] sm:$0xff]
  %v4684 = vld [vmem:[%s1 + $0x428] sm:$0xff]
  %v4685 = vld [vmem:[%s1 + $0x430] sm:$0xff]
  %v4686 = vld [vmem:[%s1 + $0x438] sm:$0xff]
  %v4687 = vld [vmem:[%s1 + $0x440] sm:$0xff]
  %v4688 = vld [vmem:[%s1 + $0x448] sm:$0xff]
  %v4689 = vld [vmem:[%s1 + $0x450] sm:$0xff]
  %v4690 = vld [vmem:[%s1 + $0x458] sm:$0xff]
  %v4691 = vld [vmem:[%s1 + $0x460] sm:$0xff]
  %v4692 = vld [vmem:[%s1 + $0x468] sm:$0xff]
  %v4693 = vld [vmem:[%s1 + $0x470] sm:$0xff]
  %v4694 = vld [vmem:[%s1 + $0x478] sm:$0xff]
  %v4695 = vld [vmem:[%s1 + $0x480] sm:$0xff]
  %v4696 = vld [vmem:[%s1 + $0x488] sm:$0xff]
  %v4697 = vld [vmem:[%s1 + $0x490] sm:$0xff]
  %v4698 = vld [vmem:[%s1 + $0x498] sm:$0xff]
  %v4699 = vld [vmem:[%s1 + $0x4a0] sm:$0xff]
  %v4700 = vld [vmem:[%s1 + $0x4a8] sm:$0xff]
  %v4701 = vld [vmem:[%s1 + $0x4b0] sm:$0xff]
  %v4702 = vld [vmem:[%s1 + $0x4b8] sm:$0xff]
  %v4703 = vld [vmem:[%s1 + $0x4c0] sm:$0xff]
  %v4704 = vld [vmem:[%s1 + $0x4c8] sm:$0xff]
  %v4705 = vld [vmem:[%s1 + $0x4d0] sm:$0xff]
  %v4706 = vld [vmem:[%s1 + $0x4d8] sm:$0xff]
  %v4707 = vld [vmem:[%s1 + $0x4e0] sm:$0xff]
  %v4708 = vld [vmem:[%s1 + $0x4e8] sm:$0xff]
  %v4709 = vld [vmem:[%s1 + $0x4f0] sm:$0xff]
  %v4710 = vld [vmem:[%s1 + $0x4f8] sm:$0xff]
  %v4711 = vld [vmem:[%s1 + $0x500] sm:$0xff]
  %v4712 = vld [vmem:[%s1 + $0x508] sm:$0xff]
  %v4713 = vld [vmem:[%s1 + $0x510] sm:$0xff]
  %v4714 = vld [vmem:[%s1 + $0x518] sm:$0xff]
  %v4715 = vld [vmem:[%s1 + $0x520] sm:$0xff]
  %v4716 = vld [vmem:[%s1 + $0x528] sm:$0xff]
  %v4717 = vld [vmem:[%s1 + $0x530] sm:$0xff]
  %v4718 = vld [vmem:[%s1 + $0x538] sm:$0xff]
  %v4719 = vmul.f32 %v2880, %v4551
  %v4720 = vmul.f32 %v2890, %v4552
  %v4721 = vmul.f32 %v2900, %v4553
  %v4722 = vmul.f32 %v2910, %v4554
  %v4723 = vmul.f32 %v2920, %v4555
  %v4724 = vmul.f32 %v2930, %v4556
  %v4725 = vmul.f32 %v2940, %v4557
  %v4726 = vmul.f32 %v2950, %v4558
  %v4727 = vmul.f32 %v2960, %v4559
  %v4728 = vmul.f32 %v2970, %v4560
  %v4729 = vmul.f32 %v2980, %v4561
  %v4730 = vmul.f32 %v2990, %v4562
  %v4731 = vmul.f32 %v3000, %v4563
  %v4732 = vmul.f32 %v3010, %v4564
  %v4733 = vmul.f32 %v3020, %v4565
  %v4734 = vmul.f32 %v3030, %v4566
  %v4735 = vmul.f32 %v3040, %v4567
  %v4736 = vmul.f32 %v3050, %v4568
  %v4737 = vmul.f32 %v3060, %v4569
  %v4738 = vmul.f32 %v3070, %v4570
  %v4739 = vmul.f32 %v3080, %v4571
  %v4740 = vmul.f32 %v3090, %v4572
  %v4741 = vmul.f32 %v3100, %v4573
  %v4742 = vmul.f32 %v3110, %v4574
  %v4743 = vmul.f32 %v3120, %v4575
  %v4744 = vmul.f32 %v3130, %v4576
  %v4745 = vmul.f32 %v3140, %v4577
  %v4746 = vmul.f32 %v3150, %v4578
  %v4747 = vmul.f32 %v3160, %v4579
  %v4748 = vmul.f32 %v3170, %v4580
  %v4749 = vmul.f32 %v3180, %v4581
  %v4750 = vmul.f32 %v3190, %v4582
  %v4751 = vmul.f32 %v3200, %v4583
  %v4752 = vmul.f32 %v3210, %v4584
  %v4753 = vmul.f32 %v3220, %v4585
  %v4754 = vmul.f32 %v3230, %v4586
  %v4755 = vmul.f32 %v3240, %v4587
  %v4756 = vmul.f32 %v3250, %v4588
  %v4757 = vmul.f32 %v3260, %v4589
  %v4758 = vmul.f32 %v3270, %v4590
  %v4759 = vmul.f32 %v3280, %v4591
  %v4760 = vmul.f32 %v3290, %v4592
  %v4761 = vmul.f32 %v3300, %v4593
  %v4762 = vmul.f32 %v3310, %v4594
  %v4763 = vmul.f32 %v3320, %v4595
  %v4764 = vmul.f32 %v3330, %v4596
  %v4765 = vmul.f32 %v3340, %v4597
  %v4766 = vmul.f32 %v3350, %v4598
  %v4767 = vmul.f32 %v3360, %v4599
  %v4768 = vmul.f32 %v3370, %v4600
  %v4769 = vmul.f32 %v3380, %v4601
  %v4770 = vmul.f32 %v3390, %v4602
  %v4771 = vmul.f32 %v3400, %v4603
  %v4772 = vmul.f32 %v3410, %v4604
  %v4773 = vmul.f32 %v3420, %v4605
  %v4774 = vmul.f32 %v3430, %v4606
  %v4775 = vmul.f32 %v3440, %v4607
  %v4776 = vmul.f32 %v3450, %v4608
  %v4777 = vmul.f32 %v3460, %v4609
  %v4778 = vmul.f32 %v3470, %v4610
  %v4779 = vmul.f32 %v3480, %v4611
  %v4780 = vmul.f32 %v3490, %v4612
  %v4781 = vmul.f32 %v3500, %v4613
  %v4782 = vmul.f32 %v3510, %v4614
  %v4783 = vmul.f32 %v3520, %v4615
  %v4784 = vmul.f32 %v3530, %v4616
  %v4785 = vmul.f32 %v3540, %v4617
  %v4786 = vmul.f32 %v3550, %v4618
  %v4787 = vmul.f32 %v3560, %v4619
  %v4788 = vmul.f32 %v3570, %v4620
  %v4789 = vmul.f32 %v3580, %v4621
  %v4790 = vmul.f32 %v3590, %v4622
  %v4791 = vmul.f32 %v3600, %v4623
  %v4792 = vmul.f32 %v3610, %v4624
  %v4793 = vmul.f32 %v3620, %v4625
  %v4794 = vmul.f32 %v3630, %v4626
  %v4795 = vmul.f32 %v3640, %v4627
  %v4796 = vmul.f32 %v3650, %v4628
  %v4797 = vmul.f32 %v3660, %v4629
  %v4798 = vmul.f32 %v3670, %v4630
  %v4799 = vmul.f32 %v3680, %v4631
  %v4800 = vmul.f32 %v3690, %v4632
  %v4801 = vmul.f32 %v3700, %v4633
  %v4802 = vmul.f32 %v3710, %v4634
  %v4803 = vmul.f32 %v3720, %v4635
  %v4804 = vmul.f32 %v3730, %v4636
  %v4805 = vmul.f32 %v3740, %v4637
  %v4806 = vmul.f32 %v3750, %v4638
  %v4807 = vmul.f32 %v3760, %v4639
  %v4808 = vmul.f32 %v3770, %v4640
  %v4809 = vmul.f32 %v3780, %v4641
  %v4810 = vmul.f32 %v3790, %v4642
  %v4811 = vmul.f32 %v3800, %v4643
  %v4812 = vmul.f32 %v3810, %v4644
  %v4813 = vmul.f32 %v3820, %v4645
  %v4814 = vmul.f32 %v3830, %v4646
  %v4815 = vmul.f32 %v3840, %v4647
  %v4816 = vmul.f32 %v3850, %v4648
  %v4817 = vmul.f32 %v3860, %v4649
  %v4818 = vmul.f32 %v3870, %v4650
  %v4819 = vmul.f32 %v3880, %v4651
  %v4820 = vmul.f32 %v3890, %v4652
  %v4821 = vmul.f32 %v3900, %v4653
  %v4822 = vmul.f32 %v3910, %v4654
  %v4823 = vmul.f32 %v3920, %v4655
  %v4824 = vmul.f32 %v3930, %v4656
  %v4825 = vmul.f32 %v3940, %v4657
  %v4826 = vmul.f32 %v3950, %v4658
  %v4827 = vmul.f32 %v3960, %v4659
  %v4828 = vmul.f32 %v3970, %v4660
  %v4829 = vmul.f32 %v3980, %v4661
  %v4830 = vmul.f32 %v3990, %v4662
  %v4831 = vmul.f32 %v4000, %v4663
  %v4832 = vmul.f32 %v4010, %v4664
  %v4833 = vmul.f32 %v4020, %v4665
  %v4834 = vmul.f32 %v4030, %v4666
  %v4835 = vmul.f32 %v4040, %v4667
  %v4836 = vmul.f32 %v4050, %v4668
  %v4837 = vmul.f32 %v4060, %v4669
  %v4838 = vmul.f32 %v4070, %v4670
  %v4839 = vmul.f32 %v4080, %v4671
  %v4840 = vmul.f32 %v4090, %v4672
  %v4841 = vmul.f32 %v4100, %v4673
  %v4842 = vmul.f32 %v4110, %v4674
  %v4843 = vmul.f32 %v4120, %v4675
  %v4844 = vmul.f32 %v4130, %v4676
  %v4845 = vmul.f32 %v4140, %v4677
  %v4846 = vmul.f32 %v4150, %v4678
  %v4847 = vmul.f32 %v4160, %v4679
  %v4848 = vmul.f32 %v4170, %v4680
  %v4849 = vmul.f32 %v4180, %v4681
  %v4850 = vmul.f32 %v4190, %v4682
  %v4851 = vmul.f32 %v4200, %v4683
  %v4852 = vmul.f32 %v4210, %v4684
  %v4853 = vmul.f32 %v4220, %v4685
  %v4854 = vmul.f32 %v4230, %v4686
  %v4855 = vmul.f32 %v4240, %v4687
  %v4856 = vmul.f32 %v4250, %v4688
  %v4857 = vmul.f32 %v4260, %v4689
  %v4858 = vmul.f32 %v4270, %v4690
  %v4859 = vmul.f32 %v4280, %v4691
  %v4860 = vmul.f32 %v4290, %v4692
  %v4861 = vmul.f32 %v4300, %v4693
  %v4862 = vmul.f32 %v4310, %v4694
  %v4863 = vmul.f32 %v4320, %v4695
  %v4864 = vmul.f32 %v4330, %v4696
  %v4865 = vmul.f32 %v4340, %v4697
  %v4866 = vmul.f32 %v4350, %v4698
  %v4867 = vmul.f32 %v4360, %v4699
  %v4868 = vmul.f32 %v4370, %v4700
  %v4869 = vmul.f32 %v4380, %v4701
  %v4870 = vmul.f32 %v4390, %v4702
  %v4871 = vmul.f32 %v4400, %v4703
  %v4872 = vmul.f32 %v4410, %v4704
  %v4873 = vmul.f32 %v4420, %v4705
  %v4874 = vmul.f32 %v4430, %v4706
  %v4875 = vmul.f32 %v4440, %v4707
  %v4876 = vmul.f32 %v4450, %v4708
  %v4877 = vmul.f32 %v4460, %v4709
  %v4878 = vmul.f32 %v4470, %v4710
  %v4879 = vmul.f32 %v4480, %v4711
  %v4880 = vmul.f32 %v4490, %v4712
  %v4881 = vmul.f32 %v4500, %v4713
  %v4882 = vmul.f32 %v4510, %v4714
  %v4883 = vmul.f32 %v4520, %v4715
  %v4884 = vmul.f32 %v4530, %v4716
  %v4885 = vmul.f32 %v4540, %v4717
  %v4886 = vmul.f32 %v4550, %v4718
  %4888 = vset.pattern.permute.xlu0 0
  %4889 = vperm.xlu0 %4888, %v4719
  %v4890 = vpop.permute.xlu0 %4889
  %4893 = vset.pattern.permute.xlu0 0
  %4894 = vperm.xlu0 %4893, %v4720
  %v4895 = vpop.permute.xlu0 %4894
  %4898 = vset.pattern.permute.xlu0 0
  %4899 = vperm.xlu0 %4898, %v4721
  %v4900 = vpop.permute.xlu0 %4899
  %4903 = vset.pattern.permute.xlu0 0
  %4904 = vperm.xlu0 %4903, %v4722
  %v4905 = vpop.permute.xlu0 %4904
  %4908 = vset.pattern.permute.xlu0 0
  %4909 = vperm.xlu0 %4908, %v4723
  %v4910 = vpop.permute.xlu0 %4909
  %4913 = vset.pattern.permute.xlu0 0
  %4914 = vperm.xlu0 %4913, %v4724
  %v4915 = vpop.permute.xlu0 %4914
  %4918 = vset.pattern.permute.xlu0 0
  %4919 = vperm.xlu0 %4918, %v4725
  %v4920 = vpop.permute.xlu0 %4919
  %4923 = vset.pattern.permute.xlu0 0
  %4924 = vperm.xlu0 %4923, %v4726
  %v4925 = vpop.permute.xlu0 %4924
  %4928 = vset.pattern.permute.xlu0 0
  %4929 = vperm.xlu0 %4928, %v4727
  %v4930 = vpop.permute.xlu0 %4929
  %4933 = vset.pattern.permute.xlu0 0
  %4934 = vperm.xlu0 %4933, %v4728
  %v4935 = vpop.permute.xlu0 %4934
  %4938 = vset.pattern.permute.xlu0 0
  %4939 = vperm.xlu0 %4938, %v4729
  %v4940 = vpop.permute.xlu0 %4939
  %4943 = vset.pattern.permute.xlu0 0
  %4944 = vperm.xlu0 %4943, %v4730
  %v4945 = vpop.permute.xlu0 %4944
  %4948 = vset.pattern.permute.xlu0 0
  %4949 = vperm.xlu0 %4948, %v4731
  %v4950 = vpop.permute.xlu0 %4949
  %4953 = vset.pattern.permute.xlu0 0
  %4954 = vperm.xlu0 %4953, %v4732
  %v4955 = vpop.permute.xlu0 %4954
  %4958 = vset.pattern.permute.xlu0 0
  %4959 = vperm.xlu0 %4958, %v4733
  %v4960 = vpop.permute.xlu0 %4959
  %4963 = vset.pattern.permute.xlu0 0
  %4964 = vperm.xlu0 %4963, %v4734
  %v4965 = vpop.permute.xlu0 %4964
  %4968 = vset.pattern.permute.xlu0 0
  %4969 = vperm.xlu0 %4968, %v4735
  %v4970 = vpop.permute.xlu0 %4969
  %4973 = vset.pattern.permute.xlu0 0
  %4974 = vperm.xlu0 %4973, %v4736
  %v4975 = vpop.permute.xlu0 %4974
  %4978 = vset.pattern.permute.xlu0 0
  %4979 = vperm.xlu0 %4978, %v4737
  %v4980 = vpop.permute.xlu0 %4979
  %4983 = vset.pattern.permute.xlu0 0
  %4984 = vperm.xlu0 %4983, %v4738
  %v4985 = vpop.permute.xlu0 %4984
  %4988 = vset.pattern.permute.xlu0 0
  %4989 = vperm.xlu0 %4988, %v4739
  %v4990 = vpop.permute.xlu0 %4989
  %4993 = vset.pattern.permute.xlu0 0
  %4994 = vperm.xlu0 %4993, %v4740
  %v4995 = vpop.permute.xlu0 %4994
  %4998 = vset.pattern.permute.xlu0 0
  %4999 = vperm.xlu0 %4998, %v4741
  %v5000 = vpop.permute.xlu0 %4999
  %5003 = vset.pattern.permute.xlu0 0
  %5004 = vperm.xlu0 %5003, %v4742
  %v5005 = vpop.permute.xlu0 %5004
  %5008 = vset.pattern.permute.xlu0 0
  %5009 = vperm.xlu0 %5008, %v4743
  %v5010 = vpop.permute.xlu0 %5009
  %5013 = vset.pattern.permute.xlu0 0
  %5014 = vperm.xlu0 %5013, %v4744
  %v5015 = vpop.permute.xlu0 %5014
  %5018 = vset.pattern.permute.xlu0 0
  %5019 = vperm.xlu0 %5018, %v4745
  %v5020 = vpop.permute.xlu0 %5019
  %5023 = vset.pattern.permute.xlu0 0
  %5024 = vperm.xlu0 %5023, %v4746
  %v5025 = vpop.permute.xlu0 %5024
  %5028 = vset.pattern.permute.xlu0 0
  %5029 = vperm.xlu0 %5028, %v4747
  %v5030 = vpop.permute.xlu0 %5029
  %5033 = vset.pattern.permute.xlu0 0
  %5034 = vperm.xlu0 %5033, %v4748
  %v5035 = vpop.permute.xlu0 %5034
  %5038 = vset.pattern.permute.xlu0 0
  %5039 = vperm.xlu0 %5038, %v4749
  %v5040 = vpop.permute.xlu0 %5039
  %5043 = vset.pattern.permute.xlu0 0
  %5044 = vperm.xlu0 %5043, %v4750
  %v5045 = vpop.permute.xlu0 %5044
  %5048 = vset.pattern.permute.xlu0 0
  %5049 = vperm.xlu0 %5048, %v4751
  %v5050 = vpop.permute.xlu0 %5049
  %5053 = vset.pattern.permute.xlu0 0
  %5054 = vperm.xlu0 %5053, %v4752
  %v5055 = vpop.permute.xlu0 %5054
  %5058 = vset.pattern.permute.xlu0 0
  %5059 = vperm.xlu0 %5058, %v4753
  %v5060 = vpop.permute.xlu0 %5059
  %5063 = vset.pattern.permute.xlu0 0
  %5064 = vperm.xlu0 %5063, %v4754
  %v5065 = vpop.permute.xlu0 %5064
  %5068 = vset.pattern.permute.xlu0 0
  %5069 = vperm.xlu0 %5068, %v4755
  %v5070 = vpop.permute.xlu0 %5069
  %5073 = vset.pattern.permute.xlu0 0
  %5074 = vperm.xlu0 %5073, %v4756
  %v5075 = vpop.permute.xlu0 %5074
  %5078 = vset.pattern.permute.xlu0 0
  %5079 = vperm.xlu0 %5078, %v4757
  %v5080 = vpop.permute.xlu0 %5079
  %5083 = vset.pattern.permute.xlu0 0
  %5084 = vperm.xlu0 %5083, %v4758
  %v5085 = vpop.permute.xlu0 %5084
  %5088 = vset.pattern.permute.xlu0 0
  %5089 = vperm.xlu0 %5088, %v4759
  %v5090 = vpop.permute.xlu0 %5089
  %5093 = vset.pattern.permute.xlu0 0
  %5094 = vperm.xlu0 %5093, %v4760
  %v5095 = vpop.permute.xlu0 %5094
  %5098 = vset.pattern.permute.xlu0 0
  %5099 = vperm.xlu0 %5098, %v4761
  %v5100 = vpop.permute.xlu0 %5099
  %5103 = vset.pattern.permute.xlu0 0
  %5104 = vperm.xlu0 %5103, %v4762
  %v5105 = vpop.permute.xlu0 %5104
  %5108 = vset.pattern.permute.xlu0 0
  %5109 = vperm.xlu0 %5108, %v4763
  %v5110 = vpop.permute.xlu0 %5109
  %5113 = vset.pattern.permute.xlu0 0
  %5114 = vperm.xlu0 %5113, %v4764
  %v5115 = vpop.permute.xlu0 %5114
  %5118 = vset.pattern.permute.xlu0 0
  %5119 = vperm.xlu0 %5118, %v4765
  %v5120 = vpop.permute.xlu0 %5119
  %5123 = vset.pattern.permute.xlu0 0
  %5124 = vperm.xlu0 %5123, %v4766
  %v5125 = vpop.permute.xlu0 %5124
  %5128 = vset.pattern.permute.xlu0 0
  %5129 = vperm.xlu0 %5128, %v4767
  %v5130 = vpop.permute.xlu0 %5129
  %5133 = vset.pattern.permute.xlu0 0
  %5134 = vperm.xlu0 %5133, %v4768
  %v5135 = vpop.permute.xlu0 %5134
  %5138 = vset.pattern.permute.xlu0 0
  %5139 = vperm.xlu0 %5138, %v4769
  %v5140 = vpop.permute.xlu0 %5139
  %5143 = vset.pattern.permute.xlu0 0
  %5144 = vperm.xlu0 %5143, %v4770
  %v5145 = vpop.permute.xlu0 %5144
  %5148 = vset.pattern.permute.xlu0 0
  %5149 = vperm.xlu0 %5148, %v4771
  %v5150 = vpop.permute.xlu0 %5149
  %5153 = vset.pattern.permute.xlu0 0
  %5154 = vperm.xlu0 %5153, %v4772
  %v5155 = vpop.permute.xlu0 %5154
  %5158 = vset.pattern.permute.xlu0 0
  %5159 = vperm.xlu0 %5158, %v4773
  %v5160 = vpop.permute.xlu0 %5159
  %5163 = vset.pattern.permute.xlu0 0
  %5164 = vperm.xlu0 %5163, %v4774
  %v5165 = vpop.permute.xlu0 %5164
  %5168 = vset.pattern.permute.xlu0 0
  %5169 = vperm.xlu0 %5168, %v4775
  %v5170 = vpop.permute.xlu0 %5169
  %5173 = vset.pattern.permute.xlu0 0
  %5174 = vperm.xlu0 %5173, %v4776
  %v5175 = vpop.permute.xlu0 %5174
  %5178 = vset.pattern.permute.xlu0 0
  %5179 = vperm.xlu0 %5178, %v4777
  %v5180 = vpop.permute.xlu0 %5179
  %5183 = vset.pattern.permute.xlu0 0
  %5184 = vperm.xlu0 %5183, %v4778
  %v5185 = vpop.permute.xlu0 %5184
  %5188 = vset.pattern.permute.xlu0 0
  %5189 = vperm.xlu0 %5188, %v4779
  %v5190 = vpop.permute.xlu0 %5189
  %5193 = vset.pattern.permute.xlu0 0
  %5194 = vperm.xlu0 %5193, %v4780
  %v5195 = vpop.permute.xlu0 %5194
  %5198 = vset.pattern.permute.xlu0 0
  %5199 = vperm.xlu0 %5198, %v4781
  %v5200 = vpop.permute.xlu0 %5199
  %5203 = vset.pattern.permute.xlu0 0
  %5204 = vperm.xlu0 %5203, %v4782
  %v5205 = vpop.permute.xlu0 %5204
  %5208 = vset.pattern.permute.xlu0 0
  %5209 = vperm.xlu0 %5208, %v4783
  %v5210 = vpop.permute.xlu0 %5209
  %5213 = vset.pattern.permute.xlu0 0
  %5214 = vperm.xlu0 %5213, %v4784
  %v5215 = vpop.permute.xlu0 %5214
  %5218 = vset.pattern.permute.xlu0 0
  %5219 = vperm.xlu0 %5218, %v4785
  %v5220 = vpop.permute.xlu0 %5219
  %5223 = vset.pattern.permute.xlu0 0
  %5224 = vperm.xlu0 %5223, %v4786
  %v5225 = vpop.permute.xlu0 %5224
  %5228 = vset.pattern.permute.xlu0 0
  %5229 = vperm.xlu0 %5228, %v4787
  %v5230 = vpop.permute.xlu0 %5229
  %5233 = vset.pattern.permute.xlu0 0
  %5234 = vperm.xlu0 %5233, %v4788
  %v5235 = vpop.permute.xlu0 %5234
  %5238 = vset.pattern.permute.xlu0 0
  %5239 = vperm.xlu0 %5238, %v4789
  %v5240 = vpop.permute.xlu0 %5239
  %5243 = vset.pattern.permute.xlu0 0
  %5244 = vperm.xlu0 %5243, %v4790
  %v5245 = vpop.permute.xlu0 %5244
  %5248 = vset.pattern.permute.xlu0 0
  %5249 = vperm.xlu0 %5248, %v4791
  %v5250 = vpop.permute.xlu0 %5249
  %5253 = vset.pattern.permute.xlu0 0
  %5254 = vperm.xlu0 %5253, %v4792
  %v5255 = vpop.permute.xlu0 %5254
  %5258 = vset.pattern.permute.xlu0 0
  %5259 = vperm.xlu0 %5258, %v4793
  %v5260 = vpop.permute.xlu0 %5259
  %5263 = vset.pattern.permute.xlu0 0
  %5264 = vperm.xlu0 %5263, %v4794
  %v5265 = vpop.permute.xlu0 %5264
  %5268 = vset.pattern.permute.xlu0 0
  %5269 = vperm.xlu0 %5268, %v4795
  %v5270 = vpop.permute.xlu0 %5269
  %5273 = vset.pattern.permute.xlu0 0
  %5274 = vperm.xlu0 %5273, %v4796
  %v5275 = vpop.permute.xlu0 %5274
  %5278 = vset.pattern.permute.xlu0 0
  %5279 = vperm.xlu0 %5278, %v4797
  %v5280 = vpop.permute.xlu0 %5279
  %5283 = vset.pattern.permute.xlu0 0
  %5284 = vperm.xlu0 %5283, %v4798
  %v5285 = vpop.permute.xlu0 %5284
  %5288 = vset.pattern.permute.xlu0 0
  %5289 = vperm.xlu0 %5288, %v4799
  %v5290 = vpop.permute.xlu0 %5289
  %5293 = vset.pattern.permute.xlu0 0
  %5294 = vperm.xlu0 %5293, %v4800
  %v5295 = vpop.permute.xlu0 %5294
  %5298 = vset.pattern.permute.xlu0 0
  %5299 = vperm.xlu0 %5298, %v4801
  %v5300 = vpop.permute.xlu0 %5299
  %5303 = vset.pattern.permute.xlu0 0
  %5304 = vperm.xlu0 %5303, %v4802
  %v5305 = vpop.permute.xlu0 %5304
  %5308 = vset.pattern.permute.xlu0 0
  %5309 = vperm.xlu0 %5308, %v4803
  %v5310 = vpop.permute.xlu0 %5309
  %5313 = vset.pattern.permute.xlu0 0
  %5314 = vperm.xlu0 %5313, %v4804
  %v5315 = vpop.permute.xlu0 %5314
  %5318 = vset.pattern.permute.xlu0 0
  %5319 = vperm.xlu0 %5318, %v4805
  %v5320 = vpop.permute.xlu0 %5319
  %5323 = vset.pattern.permute.xlu0 0
  %5324 = vperm.xlu0 %5323, %v4806
  %v5325 = vpop.permute.xlu0 %5324
  %5328 = vset.pattern.permute.xlu0 0
  %5329 = vperm.xlu0 %5328, %v4807
  %v5330 = vpop.permute.xlu0 %5329
  %5333 = vset.pattern.permute.xlu0 0
  %5334 = vperm.xlu0 %5333, %v4808
  %v5335 = vpop.permute.xlu0 %5334
  %5338 = vset.pattern.permute.xlu0 0
  %5339 = vperm.xlu0 %5338, %v4809
  %v5340 = vpop.permute.xlu0 %5339
  %5343 = vset.pattern.permute.xlu0 0
  %5344 = vperm.xlu0 %5343, %v4810
  %v5345 = vpop.permute.xlu0 %5344
  %5348 = vset.pattern.permute.xlu0 0
  %5349 = vperm.xlu0 %5348, %v4811
  %v5350 = vpop.permute.xlu0 %5349
  %5353 = vset.pattern.permute.xlu0 0
  %5354 = vperm.xlu0 %5353, %v4812
  %v5355 = vpop.permute.xlu0 %5354
  %5358 = vset.pattern.permute.xlu0 0
  %5359 = vperm.xlu0 %5358, %v4813
  %v5360 = vpop.permute.xlu0 %5359
  %5363 = vset.pattern.permute.xlu0 0
  %5364 = vperm.xlu0 %5363, %v4814
  %v5365 = vpop.permute.xlu0 %5364
  %5368 = vset.pattern.permute.xlu0 0
  %5369 = vperm.xlu0 %5368, %v4815
  %v5370 = vpop.permute.xlu0 %5369
  %5373 = vset.pattern.permute.xlu0 0
  %5374 = vperm.xlu0 %5373, %v4816
  %v5375 = vpop.permute.xlu0 %5374
  %5378 = vset.pattern.permute.xlu0 0
  %5379 = vperm.xlu0 %5378, %v4817
  %v5380 = vpop.permute.xlu0 %5379
  %5383 = vset.pattern.permute.xlu0 0
  %5384 = vperm.xlu0 %5383, %v4818
  %v5385 = vpop.permute.xlu0 %5384
  %5388 = vset.pattern.permute.xlu0 0
  %5389 = vperm.xlu0 %5388, %v4819
  %v5390 = vpop.permute.xlu0 %5389
  %5393 = vset.pattern.permute.xlu0 0
  %5394 = vperm.xlu0 %5393, %v4820
  %v5395 = vpop.permute.xlu0 %5394
  %5398 = vset.pattern.permute.xlu0 0
  %5399 = vperm.xlu0 %5398, %v4821
  %v5400 = vpop.permute.xlu0 %5399
  %5403 = vset.pattern.permute.xlu0 0
  %5404 = vperm.xlu0 %5403, %v4822
  %v5405 = vpop.permute.xlu0 %5404
  %5408 = vset.pattern.permute.xlu0 0
  %5409 = vperm.xlu0 %5408, %v4823
  %v5410 = vpop.permute.xlu0 %5409
  %5413 = vset.pattern.permute.xlu0 0
  %5414 = vperm.xlu0 %5413, %v4824
  %v5415 = vpop.permute.xlu0 %5414
  %5418 = vset.pattern.permute.xlu0 0
  %5419 = vperm.xlu0 %5418, %v4825
  %v5420 = vpop.permute.xlu0 %5419
  %5423 = vset.pattern.permute.xlu0 0
  %5424 = vperm.xlu0 %5423, %v4826
  %v5425 = vpop.permute.xlu0 %5424
  %5428 = vset.pattern.permute.xlu0 0
  %5429 = vperm.xlu0 %5428, %v4827
  %v5430 = vpop.permute.xlu0 %5429
  %5433 = vset.pattern.permute.xlu0 0
  %5434 = vperm.xlu0 %5433, %v4828
  %v5435 = vpop.permute.xlu0 %5434
  %5438 = vset.pattern.permute.xlu0 0
  %5439 = vperm.xlu0 %5438, %v4829
  %v5440 = vpop.permute.xlu0 %5439
  %5443 = vset.pattern.permute.xlu0 0
  %5444 = vperm.xlu0 %5443, %v4830
  %v5445 = vpop.permute.xlu0 %5444
  %5448 = vset.pattern.permute.xlu0 0
  %5449 = vperm.xlu0 %5448, %v4831
  %v5450 = vpop.permute.xlu0 %5449
  %5453 = vset.pattern.permute.xlu0 0
  %5454 = vperm.xlu0 %5453, %v4832
  %v5455 = vpop.permute.xlu0 %5454
  %5458 = vset.pattern.permute.xlu0 0
  %5459 = vperm.xlu0 %5458, %v4833
  %v5460 = vpop.permute.xlu0 %5459
  %5463 = vset.pattern.permute.xlu0 0
  %5464 = vperm.xlu0 %5463, %v4834
  %v5465 = vpop.permute.xlu0 %5464
  %5468 = vset.pattern.permute.xlu0 0
  %5469 = vperm.xlu0 %5468, %v4835
  %v5470 = vpop.permute.xlu0 %5469
  %5473 = vset.pattern.permute.xlu0 0
  %5474 = vperm.xlu0 %5473, %v4836
  %v5475 = vpop.permute.xlu0 %5474
  %5478 = vset.pattern.permute.xlu0 0
  %5479 = vperm.xlu0 %5478, %v4837
  %v5480 = vpop.permute.xlu0 %5479
  %5483 = vset.pattern.permute.xlu0 0
  %5484 = vperm.xlu0 %5483, %v4838
  %v5485 = vpop.permute.xlu0 %5484
  %5488 = vset.pattern.permute.xlu0 0
  %5489 = vperm.xlu0 %5488, %v4839
  %v5490 = vpop.permute.xlu0 %5489
  %5493 = vset.pattern.permute.xlu0 0
  %5494 = vperm.xlu0 %5493, %v4840
  %v5495 = vpop.permute.xlu0 %5494
  %5498 = vset.pattern.permute.xlu0 0
  %5499 = vperm.xlu0 %5498, %v4841
  %v5500 = vpop.permute.xlu0 %5499
  %5503 = vset.pattern.permute.xlu0 0
  %5504 = vperm.xlu0 %5503, %v4842
  %v5505 = vpop.permute.xlu0 %5504
  %5508 = vset.pattern.permute.xlu0 0
  %5509 = vperm.xlu0 %5508, %v4843
  %v5510 = vpop.permute.xlu0 %5509
  %5513 = vset.pattern.permute.xlu0 0
  %5514 = vperm.xlu0 %5513, %v4844
  %v5515 = vpop.permute.xlu0 %5514
  %5518 = vset.pattern.permute.xlu0 0
  %5519 = vperm.xlu0 %5518, %v4845
  %v5520 = vpop.permute.xlu0 %5519
  %5523 = vset.pattern.permute.xlu0 0
  %5524 = vperm.xlu0 %5523, %v4846
  %v5525 = vpop.permute.xlu0 %5524
  %5528 = vset.pattern.permute.xlu0 0
  %5529 = vperm.xlu0 %5528, %v4847
  %v5530 = vpop.permute.xlu0 %5529
  %5533 = vset.pattern.permute.xlu0 0
  %5534 = vperm.xlu0 %5533, %v4848
  %v5535 = vpop.permute.xlu0 %5534
  %5538 = vset.pattern.permute.xlu0 0
  %5539 = vperm.xlu0 %5538, %v4849
  %v5540 = vpop.permute.xlu0 %5539
  %5543 = vset.pattern.permute.xlu0 0
  %5544 = vperm.xlu0 %5543, %v4850
  %v5545 = vpop.permute.xlu0 %5544
  %5548 = vset.pattern.permute.xlu0 0
  %5549 = vperm.xlu0 %5548, %v4851
  %v5550 = vpop.permute.xlu0 %5549
  %5553 = vset.pattern.permute.xlu0 0
  %5554 = vperm.xlu0 %5553, %v4852
  %v5555 = vpop.permute.xlu0 %5554
  %5558 = vset.pattern.permute.xlu0 0
  %5559 = vperm.xlu0 %5558, %v4853
  %v5560 = vpop.permute.xlu0 %5559
  %5563 = vset.pattern.permute.xlu0 0
  %5564 = vperm.xlu0 %5563, %v4854
  %v5565 = vpop.permute.xlu0 %5564
  %5568 = vset.pattern.permute.xlu0 0
  %5569 = vperm.xlu0 %5568, %v4855
  %v5570 = vpop.permute.xlu0 %5569
  %5573 = vset.pattern.permute.xlu0 0
  %5574 = vperm.xlu0 %5573, %v4856
  %v5575 = vpop.permute.xlu0 %5574
  %5578 = vset.pattern.permute.xlu0 0
  %5579 = vperm.xlu0 %5578, %v4857
  %v5580 = vpop.permute.xlu0 %5579
  %5583 = vset.pattern.permute.xlu0 0
  %5584 = vperm.xlu0 %5583, %v4858
  %v5585 = vpop.permute.xlu0 %5584
  %5588 = vset.pattern.permute.xlu0 0
  %5589 = vperm.xlu0 %5588, %v4859
  %v5590 = vpop.permute.xlu0 %5589
  %5593 = vset.pattern.permute.xlu0 0
  %5594 = vperm.xlu0 %5593, %v4860
  %v5595 = vpop.permute.xlu0 %5594
  %5598 = vset.pattern.permute.xlu0 0
  %5599 = vperm.xlu0 %5598, %v4861
  %v5600 = vpop.permute.xlu0 %5599
  %5603 = vset.pattern.permute.xlu0 0
  %5604 = vperm.xlu0 %5603, %v4862
  %v5605 = vpop.permute.xlu0 %5604
  %5608 = vset.pattern.permute.xlu0 0
  %5609 = vperm.xlu0 %5608, %v4863
  %v5610 = vpop.permute.xlu0 %5609
  %5613 = vset.pattern.permute.xlu0 0
  %5614 = vperm.xlu0 %5613, %v4864
  %v5615 = vpop.permute.xlu0 %5614
  %5618 = vset.pattern.permute.xlu0 0
  %5619 = vperm.xlu0 %5618, %v4865
  %v5620 = vpop.permute.xlu0 %5619
  %5623 = vset.pattern.permute.xlu0 0
  %5624 = vperm.xlu0 %5623, %v4866
  %v5625 = vpop.permute.xlu0 %5624
  %5628 = vset.pattern.permute.xlu0 0
  %5629 = vperm.xlu0 %5628, %v4867
  %v5630 = vpop.permute.xlu0 %5629
  %5633 = vset.pattern.permute.xlu0 0
  %5634 = vperm.xlu0 %5633, %v4868
  %v5635 = vpop.permute.xlu0 %5634
  %5638 = vset.pattern.permute.xlu0 0
  %5639 = vperm.xlu0 %5638, %v4869
  %v5640 = vpop.permute.xlu0 %5639
  %5643 = vset.pattern.permute.xlu0 0
  %5644 = vperm.xlu0 %5643, %v4870
  %v5645 = vpop.permute.xlu0 %5644
  %5648 = vset.pattern.permute.xlu0 0
  %5649 = vperm.xlu0 %5648, %v4871
  %v5650 = vpop.permute.xlu0 %5649
  %5653 = vset.pattern.permute.xlu0 0
  %5654 = vperm.xlu0 %5653, %v4872
  %v5655 = vpop.permute.xlu0 %5654
  %5658 = vset.pattern.permute.xlu0 0
  %5659 = vperm.xlu0 %5658, %v4873
  %v5660 = vpop.permute.xlu0 %5659
  %5663 = vset.pattern.permute.xlu0 0
  %5664 = vperm.xlu0 %5663, %v4874
  %v5665 = vpop.permute.xlu0 %5664
  %5668 = vset.pattern.permute.xlu0 0
  %5669 = vperm.xlu0 %5668, %v4875
  %v5670 = vpop.permute.xlu0 %5669
  %5673 = vset.pattern.permute.xlu0 0
  %5674 = vperm.xlu0 %5673, %v4876
  %v5675 = vpop.permute.xlu0 %5674
  %5678 = vset.pattern.permute.xlu0 0
  %5679 = vperm.xlu0 %5678, %v4877
  %v5680 = vpop.permute.xlu0 %5679
  %5683 = vset.pattern.permute.xlu0 0
  %5684 = vperm.xlu0 %5683, %v4878
  %v5685 = vpop.permute.xlu0 %5684
  %5688 = vset.pattern.permute.xlu0 0
  %5689 = vperm.xlu0 %5688, %v4879
  %v5690 = vpop.permute.xlu0 %5689
  %5693 = vset.pattern.permute.xlu0 0
  %5694 = vperm.xlu0 %5693, %v4880
  %v5695 = vpop.permute.xlu0 %5694
  %5698 = vset.pattern.permute.xlu0 0
  %5699 = vperm.xlu0 %5698, %v4881
  %v5700 = vpop.permute.xlu0 %5699
  %5703 = vset.pattern.permute.xlu0 0
  %5704 = vperm.xlu0 %5703, %v4882
  %v5705 = vpop.permute.xlu0 %5704
  %5708 = vset.pattern.permute.xlu0 0
  %5709 = vperm.xlu0 %5708, %v4883
  %v5710 = vpop.permute.xlu0 %5709
  %5713 = vset.pattern.permute.xlu0 0
  %5714 = vperm.xlu0 %5713, %v4884
  %v5715 = vpop.permute.xlu0 %5714
  %5718 = vset.pattern.permute.xlu0 0
  %5719 = vperm.xlu0 %5718, %v4885
  %v5720 = vpop.permute.xlu0 %5719
  %5723 = vset.pattern.permute.xlu0 0
  %5724 = vperm.xlu0 %5723, %v4886
  %v5725 = vpop.permute.xlu0 %5724
  %v5727 = vmul.f32 %v1191, %v4890
  %v5728 = vmul.f32 %v1192, %v4890
  %v5729 = vmul.f32 %v1193, %v4895
  %v5730 = vmul.f32 %v1194, %v4895
  %v5731 = vmul.f32 %v1195, %v4900
  %v5732 = vmul.f32 %v1196, %v4900
  %v5733 = vmul.f32 %v1197, %v4905
  %v5734 = vmul.f32 %v1198, %v4905
  %v5735 = vmul.f32 %v1199, %v4910
  %v5736 = vmul.f32 %v1200, %v4910
  %v5737 = vmul.f32 %v1201, %v4915
  %v5738 = vmul.f32 %v1202, %v4915
  %v5739 = vmul.f32 %v1203, %v4920
  %v5740 = vmul.f32 %v1204, %v4920
  %v5741 = vmul.f32 %v1205, %v4925
  %v5742 = vmul.f32 %v1206, %v4925
  %v5743 = vmul.f32 %v1207, %v4930
  %v5744 = vmul.f32 %v1208, %v4930
  %v5745 = vmul.f32 %v1209, %v4935
  %v5746 = vmul.f32 %v1210, %v4935
  %v5747 = vmul.f32 %v1211, %v4940
  %v5748 = vmul.f32 %v1212, %v4940
  %v5749 = vmul.f32 %v1213, %v4945
  %v5750 = vmul.f32 %v1214, %v4945
  %v5751 = vmul.f32 %v1215, %v4950
  %v5752 = vmul.f32 %v1216, %v4950
  %v5753 = vmul.f32 %v1217, %v4955
  %v5754 = vmul.f32 %v1218, %v4955
  %v5755 = vmul.f32 %v1219, %v4960
  %v5756 = vmul.f32 %v1220, %v4960
  %v5757 = vmul.f32 %v1221, %v4965
  %v5758 = vmul.f32 %v1222, %v4965
  %v5759 = vmul.f32 %v1223, %v4970
  %v5760 = vmul.f32 %v1224, %v4970
  %v5761 = vmul.f32 %v1225, %v4975
  %v5762 = vmul.f32 %v1226, %v4975
  %v5763 = vmul.f32 %v1227, %v4980
  %v5764 = vmul.f32 %v1228, %v4980
  %v5765 = vmul.f32 %v1229, %v4985
  %v5766 = vmul.f32 %v1230, %v4985
  %v5767 = vmul.f32 %v1231, %v4990
  %v5768 = vmul.f32 %v1232, %v4990
  %v5769 = vmul.f32 %v1233, %v4995
  %v5770 = vmul.f32 %v1234, %v4995
  %v5771 = vmul.f32 %v1235, %v5000
  %v5772 = vmul.f32 %v1236, %v5000
  %v5773 = vmul.f32 %v1237, %v5005
  %v5774 = vmul.f32 %v1238, %v5005
  %v5775 = vmul.f32 %v1239, %v5010
  %v5776 = vmul.f32 %v1240, %v5010
  %v5777 = vmul.f32 %v1241, %v5015
  %v5778 = vmul.f32 %v1242, %v5015
  %v5779 = vmul.f32 %v1243, %v5020
  %v5780 = vmul.f32 %v1244, %v5020
  %v5781 = vmul.f32 %v1245, %v5025
  %v5782 = vmul.f32 %v1246, %v5025
  %v5783 = vmul.f32 %v1247, %v5030
  %v5784 = vmul.f32 %v1248, %v5030
  %v5785 = vmul.f32 %v1249, %v5035
  %v5786 = vmul.f32 %v1250, %v5035
  %v5787 = vmul.f32 %v1251, %v5040
  %v5788 = vmul.f32 %v1252, %v5040
  %v5789 = vmul.f32 %v1253, %v5045
  %v5790 = vmul.f32 %v1254, %v5045
  %v5791 = vmul.f32 %v1255, %v5050
  %v5792 = vmul.f32 %v1256, %v5050
  %v5793 = vmul.f32 %v1257, %v5055
  %v5794 = vmul.f32 %v1258, %v5055
  %v5795 = vmul.f32 %v1259, %v5060
  %v5796 = vmul.f32 %v1260, %v5060
  %v5797 = vmul.f32 %v1261, %v5065
  %v5798 = vmul.f32 %v1262, %v5065
  %v5799 = vmul.f32 %v1263, %v5070
  %v5800 = vmul.f32 %v1264, %v5070
  %v5801 = vmul.f32 %v1265, %v5075
  %v5802 = vmul.f32 %v1266, %v5075
  %v5803 = vmul.f32 %v1267, %v5080
  %v5804 = vmul.f32 %v1268, %v5080
  %v5805 = vmul.f32 %v1269, %v5085
  %v5806 = vmul.f32 %v1270, %v5085
  %v5807 = vmul.f32 %v1271, %v5090
  %v5808 = vmul.f32 %v1272, %v5090
  %v5809 = vmul.f32 %v1273, %v5095
  %v5810 = vmul.f32 %v1274, %v5095
  %v5811 = vmul.f32 %v1275, %v5100
  %v5812 = vmul.f32 %v1276, %v5100
  %v5813 = vmul.f32 %v1277, %v5105
  %v5814 = vmul.f32 %v1278, %v5105
  %v5815 = vmul.f32 %v1279, %v5110
  %v5816 = vmul.f32 %v1280, %v5110
  %v5817 = vmul.f32 %v1281, %v5115
  %v5818 = vmul.f32 %v1282, %v5115
  %v5819 = vmul.f32 %v1283, %v5120
  %v5820 = vmul.f32 %v1284, %v5120
  %v5821 = vmul.f32 %v1285, %v5125
  %v5822 = vmul.f32 %v1286, %v5125
  %v5823 = vmul.f32 %v1287, %v5130
  %v5824 = vmul.f32 %v1288, %v5130
  %v5825 = vmul.f32 %v1289, %v5135
  %v5826 = vmul.f32 %v1290, %v5135
  %v5827 = vmul.f32 %v1291, %v5140
  %v5828 = vmul.f32 %v1292, %v5140
  %v5829 = vmul.f32 %v1293, %v5145
  %v5830 = vmul.f32 %v1294, %v5145
  %v5831 = vmul.f32 %v1295, %v5150
  %v5832 = vmul.f32 %v1296, %v5150
  %v5833 = vmul.f32 %v1297, %v5155
  %v5834 = vmul.f32 %v1298, %v5155
  %v5835 = vmul.f32 %v1299, %v5160
  %v5836 = vmul.f32 %v1300, %v5160
  %v5837 = vmul.f32 %v1301, %v5165
  %v5838 = vmul.f32 %v1302, %v5165
  %v5839 = vmul.f32 %v1303, %v5170
  %v5840 = vmul.f32 %v1304, %v5170
  %v5841 = vmul.f32 %v1305, %v5175
  %v5842 = vmul.f32 %v1306, %v5175
  %v5843 = vmul.f32 %v1307, %v5180
  %v5844 = vmul.f32 %v1308, %v5180
  %v5845 = vmul.f32 %v1309, %v5185
  %v5846 = vmul.f32 %v1310, %v5185
  %v5847 = vmul.f32 %v1311, %v5190
  %v5848 = vmul.f32 %v1312, %v5190
  %v5849 = vmul.f32 %v1313, %v5195
  %v5850 = vmul.f32 %v1314, %v5195
  %v5851 = vmul.f32 %v1315, %v5200
  %v5852 = vmul.f32 %v1316, %v5200
  %v5853 = vmul.f32 %v1317, %v5205
  %v5854 = vmul.f32 %v1318, %v5205
  %v5855 = vmul.f32 %v1319, %v5210
  %v5856 = vmul.f32 %v1320, %v5210
  %v5857 = vmul.f32 %v1321, %v5215
  %v5858 = vmul.f32 %v1322, %v5215
  %v5859 = vmul.f32 %v1323, %v5220
  %v5860 = vmul.f32 %v1324, %v5220
  %v5861 = vmul.f32 %v1325, %v5225
  %v5862 = vmul.f32 %v1326, %v5225
  %v5863 = vmul.f32 %v1327, %v5230
  %v5864 = vmul.f32 %v1328, %v5230
  %v5865 = vmul.f32 %v1329, %v5235
  %v5866 = vmul.f32 %v1330, %v5235
  %v5867 = vmul.f32 %v1331, %v5240
  %v5868 = vmul.f32 %v1332, %v5240
  %v5869 = vmul.f32 %v1333, %v5245
  %v5870 = vmul.f32 %v1334, %v5245
  %v5871 = vmul.f32 %v1335, %v5250
  %v5872 = vmul.f32 %v1336, %v5250
  %v5873 = vmul.f32 %v1337, %v5255
  %v5874 = vmul.f32 %v1338, %v5255
  %v5875 = vmul.f32 %v1339, %v5260
  %v5876 = vmul.f32 %v1340, %v5260
  %v5877 = vmul.f32 %v1341, %v5265
  %v5878 = vmul.f32 %v1342, %v5265
  %v5879 = vmul.f32 %v1343, %v5270
  %v5880 = vmul.f32 %v1344, %v5270
  %v5881 = vmul.f32 %v1345, %v5275
  %v5882 = vmul.f32 %v1346, %v5275
  %v5883 = vmul.f32 %v1347, %v5280
  %v5884 = vmul.f32 %v1348, %v5280
  %v5885 = vmul.f32 %v1349, %v5285
  %v5886 = vmul.f32 %v1350, %v5285
  %v5887 = vmul.f32 %v1351, %v5290
  %v5888 = vmul.f32 %v1352, %v5290
  %v5889 = vmul.f32 %v1353, %v5295
  %v5890 = vmul.f32 %v1354, %v5295
  %v5891 = vmul.f32 %v1355, %v5300
  %v5892 = vmul.f32 %v1356, %v5300
  %v5893 = vmul.f32 %v1357, %v5305
  %v5894 = vmul.f32 %v1358, %v5305
  %v5895 = vmul.f32 %v1359, %v5310
  %v5896 = vmul.f32 %v1360, %v5310
  %v5897 = vmul.f32 %v1361, %v5315
  %v5898 = vmul.f32 %v1362, %v5315
  %v5899 = vmul.f32 %v1363, %v5320
  %v5900 = vmul.f32 %v1364, %v5320
  %v5901 = vmul.f32 %v1365, %v5325
  %v5902 = vmul.f32 %v1366, %v5325
  %v5903 = vmul.f32 %v1367, %v5330
  %v5904 = vmul.f32 %v1368, %v5330
  %v5905 = vmul.f32 %v1369, %v5335
  %v5906 = vmul.f32 %v1370, %v5335
  %v5907 = vmul.f32 %v1371, %v5340
  %v5908 = vmul.f32 %v1372, %v5340
  %v5909 = vmul.f32 %v1373, %v5345
  %v5910 = vmul.f32 %v1374, %v5345
  %v5911 = vmul.f32 %v1375, %v5350
  %v5912 = vmul.f32 %v1376, %v5350
  %v5913 = vmul.f32 %v1377, %v5355
  %v5914 = vmul.f32 %v1378, %v5355
  %v5915 = vmul.f32 %v1379, %v5360
  %v5916 = vmul.f32 %v1380, %v5360
  %v5917 = vmul.f32 %v1381, %v5365
  %v5918 = vmul.f32 %v1382, %v5365
  %v5919 = vmul.f32 %v1383, %v5370
  %v5920 = vmul.f32 %v1384, %v5370
  %v5921 = vmul.f32 %v1385, %v5375
  %v5922 = vmul.f32 %v1386, %v5375
  %v5923 = vmul.f32 %v1387, %v5380
  %v5924 = vmul.f32 %v1388, %v5380
  %v5925 = vmul.f32 %v1389, %v5385
  %v5926 = vmul.f32 %v1390, %v5385
  %v5927 = vmul.f32 %v1391, %v5390
  %v5928 = vmul.f32 %v1392, %v5390
  %v5929 = vmul.f32 %v1393, %v5395
  %v5930 = vmul.f32 %v1394, %v5395
  %v5931 = vmul.f32 %v1395, %v5400
  %v5932 = vmul.f32 %v1396, %v5400
  %v5933 = vmul.f32 %v1397, %v5405
  %v5934 = vmul.f32 %v1398, %v5405
  %v5935 = vmul.f32 %v1399, %v5410
  %v5936 = vmul.f32 %v1400, %v5410
  %v5937 = vmul.f32 %v1401, %v5415
  %v5938 = vmul.f32 %v1402, %v5415
  %v5939 = vmul.f32 %v1403, %v5420
  %v5940 = vmul.f32 %v1404, %v5420
  %v5941 = vmul.f32 %v1405, %v5425
  %v5942 = vmul.f32 %v1406, %v5425
  %v5943 = vmul.f32 %v1407, %v5430
  %v5944 = vmul.f32 %v1408, %v5430
  %v5945 = vmul.f32 %v1409, %v5435
  %v5946 = vmul.f32 %v1410, %v5435
  %v5947 = vmul.f32 %v1411, %v5440
  %v5948 = vmul.f32 %v1412, %v5440
  %v5949 = vmul.f32 %v1413, %v5445
  %v5950 = vmul.f32 %v1414, %v5445
  %v5951 = vmul.f32 %v1415, %v5450
  %v5952 = vmul.f32 %v1416, %v5450
  %v5953 = vmul.f32 %v1417, %v5455
  %v5954 = vmul.f32 %v1418, %v5455
  %v5955 = vmul.f32 %v1419, %v5460
  %v5956 = vmul.f32 %v1420, %v5460
  %v5957 = vmul.f32 %v1421, %v5465
  %v5958 = vmul.f32 %v1422, %v5465
  %v5959 = vmul.f32 %v1423, %v5470
  %v5960 = vmul.f32 %v1424, %v5470
  %v5961 = vmul.f32 %v1425, %v5475
  %v5962 = vmul.f32 %v1426, %v5475
  %v5963 = vmul.f32 %v1427, %v5480
  %v5964 = vmul.f32 %v1428, %v5480
  %v5965 = vmul.f32 %v1429, %v5485
  %v5966 = vmul.f32 %v1430, %v5485
  %v5967 = vmul.f32 %v1431, %v5490
  %v5968 = vmul.f32 %v1432, %v5490
  %v5969 = vmul.f32 %v1433, %v5495
  %v5970 = vmul.f32 %v1434, %v5495
  %v5971 = vmul.f32 %v1435, %v5500
  %v5972 = vmul.f32 %v1436, %v5500
  %v5973 = vmul.f32 %v1437, %v5505
  %v5974 = vmul.f32 %v1438, %v5505
  %v5975 = vmul.f32 %v1439, %v5510
  %v5976 = vmul.f32 %v1440, %v5510
  %v5977 = vmul.f32 %v1441, %v5515
  %v5978 = vmul.f32 %v1442, %v5515
  %v5979 = vmul.f32 %v1443, %v5520
  %v5980 = vmul.f32 %v1444, %v5520
  %v5981 = vmul.f32 %v1445, %v5525
  %v5982 = vmul.f32 %v1446, %v5525
  %v5983 = vmul.f32 %v1447, %v5530
  %v5984 = vmul.f32 %v1448, %v5530
  %v5985 = vmul.f32 %v1449, %v5535
  %v5986 = vmul.f32 %v1450, %v5535
  %v5987 = vmul.f32 %v1451, %v5540
  %v5988 = vmul.f32 %v1452, %v5540
  %v5989 = vmul.f32 %v1453, %v5545
  %v5990 = vmul.f32 %v1454, %v5545
  %v5991 = vmul.f32 %v1455, %v5550
  %v5992 = vmul.f32 %v1456, %v5550
  %v5993 = vmul.f32 %v1457, %v5555
  %v5994 = vmul.f32 %v1458, %v5555
  %v5995 = vmul.f32 %v1459, %v5560
  %v5996 = vmul.f32 %v1460, %v5560
  %v5997 = vmul.f32 %v1461, %v5565
  %v5998 = vmul.f32 %v1462, %v5565
  %v5999 = vmul.f32 %v1463, %v5570
  %v6000 = vmul.f32 %v1464, %v5570
  %v6001 = vmul.f32 %v1465, %v5575
  %v6002 = vmul.f32 %v1466, %v5575
  %v6003 = vmul.f32 %v1467, %v5580
  %v6004 = vmul.f32 %v1468, %v5580
  %v6005 = vmul.f32 %v1469, %v5585
  %v6006 = vmul.f32 %v1470, %v5585
  %v6007 = vmul.f32 %v1471, %v5590
  %v6008 = vmul.f32 %v1472, %v5590
  %v6009 = vmul.f32 %v1473, %v5595
  %v6010 = vmul.f32 %v1474, %v5595
  %v6011 = vmul.f32 %v1475, %v5600
  %v6012 = vmul.f32 %v1476, %v5600
  %v6013 = vmul.f32 %v1477, %v5605
  %v6014 = vmul.f32 %v1478, %v5605
  %v6015 = vmul.f32 %v1479, %v5610
  %v6016 = vmul.f32 %v1480, %v5610
  %v6017 = vmul.f32 %v1481, %v5615
  %v6018 = vmul.f32 %v1482, %v5615
  %v6019 = vmul.f32 %v1483, %v5620
  %v6020 = vmul.f32 %v1484, %v5620
  %v6021 = vmul.f32 %v1485, %v5625
  %v6022 = vmul.f32 %v1486, %v5625
  %v6023 = vmul.f32 %v1487, %v5630
  %v6024 = vmul.f32 %v1488, %v5630
  %v6025 = vmul.f32 %v1489, %v5635
  %v6026 = vmul.f32 %v1490, %v5635
  %v6027 = vmul.f32 %v1491, %v5640
  %v6028 = vmul.f32 %v1492, %v5640
  %v6029 = vmul.f32 %v1493, %v5645
  %v6030 = vmul.f32 %v1494, %v5645
  %v6031 = vmul.f32 %v1495, %v5650
  %v6032 = vmul.f32 %v1496, %v5650
  %v6033 = vmul.f32 %v1497, %v5655
  %v6034 = vmul.f32 %v1498, %v5655
  %v6035 = vmul.f32 %v1499, %v5660
  %v6036 = vmul.f32 %v1500, %v5660
  %v6037 = vmul.f32 %v1501, %v5665
  %v6038 = vmul.f32 %v1502, %v5665
  %v6039 = vmul.f32 %v1503, %v5670
  %v6040 = vmul.f32 %v1504, %v5670
  %v6041 = vmul.f32 %v1505, %v5675
  %v6042 = vmul.f32 %v1506, %v5675
  %v6043 = vmul.f32 %v1507, %v5680
  %v6044 = vmul.f32 %v1508, %v5680
  %v6045 = vmul.f32 %v1509, %v5685
  %v6046 = vmul.f32 %v1510, %v5685
  %v6047 = vmul.f32 %v1511, %v5690
  %v6048 = vmul.f32 %v1512, %v5690
  %v6049 = vmul.f32 %v1513, %v5695
  %v6050 = vmul.f32 %v1514, %v5695
  %v6051 = vmul.f32 %v1515, %v5700
  %v6052 = vmul.f32 %v1516, %v5700
  %v6053 = vmul.f32 %v1517, %v5705
  %v6054 = vmul.f32 %v1518, %v5705
  %v6055 = vmul.f32 %v1519, %v5710
  %v6056 = vmul.f32 %v1520, %v5710
  %v6057 = vmul.f32 %v1521, %v5715
  %v6058 = vmul.f32 %v1522, %v5715
  %v6059 = vmul.f32 %v1523, %v5720
  %v6060 = vmul.f32 %v1524, %v5720
  %v6061 = vmul.f32 %v1525, %v5725
  %v6062 = vmul.f32 %v1526, %v5725
  %v6063 = vld [vmem:[%s2] sm:$0xff]
  %v6064 = vld [vmem:[%s2 + $0x8] sm:$0xff]
  %v6065 = vld [vmem:[%s2 + $0x10] sm:$0xff]
  %v6066 = vld [vmem:[%s2 + $0x18] sm:$0xff]
  %v6067 = vld [vmem:[%s2 + $0x20] sm:$0xff]
  %v6068 = vld [vmem:[%s2 + $0x28] sm:$0xff]
  %v6069 = vld [vmem:[%s2 + $0x30] sm:$0xff]
  %v6070 = vld [vmem:[%s2 + $0x38] sm:$0xff]
  %v6071 = vld [vmem:[%s2 + $0x40] sm:$0xff]
  %v6072 = vld [vmem:[%s2 + $0x48] sm:$0xff]
  %v6073 = vld [vmem:[%s2 + $0x50] sm:$0xff]
  %v6074 = vld [vmem:[%s2 + $0x58] sm:$0xff]
  %v6075 = vld [vmem:[%s2 + $0x60] sm:$0xff]
  %v6076 = vld [vmem:[%s2 + $0x68] sm:$0xff]
  %v6077 = vld [vmem:[%s2 + $0x70] sm:$0xff]
  %v6078 = vld [vmem:[%s2 + $0x78] sm:$0xff]
  %v6079 = vld [vmem:[%s2 + $0x80] sm:$0xff]
  %v6080 = vld [vmem:[%s2 + $0x88] sm:$0xff]
  %v6081 = vld [vmem:[%s2 + $0x90] sm:$0xff]
  %v6082 = vld [vmem:[%s2 + $0x98] sm:$0xff]
  %v6083 = vld [vmem:[%s2 + $0xa0] sm:$0xff]
  %v6084 = vld [vmem:[%s2 + $0xa8] sm:$0xff]
  %v6085 = vld [vmem:[%s2 + $0xb0] sm:$0xff]
  %v6086 = vld [vmem:[%s2 + $0xb8] sm:$0xff]
  %v6087 = vld [vmem:[%s2 + $0xc0] sm:$0xff]
  %v6088 = vld [vmem:[%s2 + $0xc8] sm:$0xff]
  %v6089 = vld [vmem:[%s2 + $0xd0] sm:$0xff]
  %v6090 = vld [vmem:[%s2 + $0xd8] sm:$0xff]
  %v6091 = vld [vmem:[%s2 + $0xe0] sm:$0xff]
  %v6092 = vld [vmem:[%s2 + $0xe8] sm:$0xff]
  %v6093 = vld [vmem:[%s2 + $0xf0] sm:$0xff]
  %v6094 = vld [vmem:[%s2 + $0xf8] sm:$0xff]
  %v6095 = vld [vmem:[%s2 + $0x100] sm:$0xff]
  %v6096 = vld [vmem:[%s2 + $0x108] sm:$0xff]
  %v6097 = vld [vmem:[%s2 + $0x110] sm:$0xff]
  %v6098 = vld [vmem:[%s2 + $0x118] sm:$0xff]
  %v6099 = vld [vmem:[%s2 + $0x120] sm:$0xff]
  %v6100 = vld [vmem:[%s2 + $0x128] sm:$0xff]
  %v6101 = vld [vmem:[%s2 + $0x130] sm:$0xff]
  %v6102 = vld [vmem:[%s2 + $0x138] sm:$0xff]
  %v6103 = vld [vmem:[%s2 + $0x140] sm:$0xff]
  %v6104 = vld [vmem:[%s2 + $0x148] sm:$0xff]
  %v6105 = vld [vmem:[%s2 + $0x150] sm:$0xff]
  %v6106 = vld [vmem:[%s2 + $0x158] sm:$0xff]
  %v6107 = vld [vmem:[%s2 + $0x160] sm:$0xff]
  %v6108 = vld [vmem:[%s2 + $0x168] sm:$0xff]
  %v6109 = vld [vmem:[%s2 + $0x170] sm:$0xff]
  %v6110 = vld [vmem:[%s2 + $0x178] sm:$0xff]
  %v6111 = vld [vmem:[%s2 + $0x180] sm:$0xff]
  %v6112 = vld [vmem:[%s2 + $0x188] sm:$0xff]
  %v6113 = vld [vmem:[%s2 + $0x190] sm:$0xff]
  %v6114 = vld [vmem:[%s2 + $0x198] sm:$0xff]
  %v6115 = vld [vmem:[%s2 + $0x1a0] sm:$0xff]
  %v6116 = vld [vmem:[%s2 + $0x1a8] sm:$0xff]
  %v6117 = vld [vmem:[%s2 + $0x1b0] sm:$0xff]
  %v6118 = vld [vmem:[%s2 + $0x1b8] sm:$0xff]
  %v6119 = vld [vmem:[%s2 + $0x1c0] sm:$0xff]
  %v6120 = vld [vmem:[%s2 + $0x1c8] sm:$0xff]
  %v6121 = vld [vmem:[%s2 + $0x1d0] sm:$0xff]
  %v6122 = vld [vmem:[%s2 + $0x1d8] sm:$0xff]
  %v6123 = vld [vmem:[%s2 + $0x1e0] sm:$0xff]
  %v6124 = vld [vmem:[%s2 + $0x1e8] sm:$0xff]
  %v6125 = vld [vmem:[%s2 + $0x1f0] sm:$0xff]
  %v6126 = vld [vmem:[%s2 + $0x1f8] sm:$0xff]
  %v6127 = vld [vmem:[%s2 + $0x200] sm:$0xff]
  %v6128 = vld [vmem:[%s2 + $0x208] sm:$0xff]
  %v6129 = vld [vmem:[%s2 + $0x210] sm:$0xff]
  %v6130 = vld [vmem:[%s2 + $0x218] sm:$0xff]
  %v6131 = vld [vmem:[%s2 + $0x220] sm:$0xff]
  %v6132 = vld [vmem:[%s2 + $0x228] sm:$0xff]
  %v6133 = vld [vmem:[%s2 + $0x230] sm:$0xff]
  %v6134 = vld [vmem:[%s2 + $0x238] sm:$0xff]
  %v6135 = vld [vmem:[%s2 + $0x240] sm:$0xff]
  %v6136 = vld [vmem:[%s2 + $0x248] sm:$0xff]
  %v6137 = vld [vmem:[%s2 + $0x250] sm:$0xff]
  %v6138 = vld [vmem:[%s2 + $0x258] sm:$0xff]
  %v6139 = vld [vmem:[%s2 + $0x260] sm:$0xff]
  %v6140 = vld [vmem:[%s2 + $0x268] sm:$0xff]
  %v6141 = vld [vmem:[%s2 + $0x270] sm:$0xff]
  %v6142 = vld [vmem:[%s2 + $0x278] sm:$0xff]
  %v6143 = vld [vmem:[%s2 + $0x280] sm:$0xff]
  %v6144 = vld [vmem:[%s2 + $0x288] sm:$0xff]
  %v6145 = vld [vmem:[%s2 + $0x290] sm:$0xff]
  %v6146 = vld [vmem:[%s2 + $0x298] sm:$0xff]
  %v6147 = vld [vmem:[%s2 + $0x2a0] sm:$0xff]
  %v6148 = vld [vmem:[%s2 + $0x2a8] sm:$0xff]
  %v6149 = vld [vmem:[%s2 + $0x2b0] sm:$0xff]
  %v6150 = vld [vmem:[%s2 + $0x2b8] sm:$0xff]
  %v6151 = vld [vmem:[%s2 + $0x2c0] sm:$0xff]
  %v6152 = vld [vmem:[%s2 + $0x2c8] sm:$0xff]
  %v6153 = vld [vmem:[%s2 + $0x2d0] sm:$0xff]
  %v6154 = vld [vmem:[%s2 + $0x2d8] sm:$0xff]
  %v6155 = vld [vmem:[%s2 + $0x2e0] sm:$0xff]
  %v6156 = vld [vmem:[%s2 + $0x2e8] sm:$0xff]
  %v6157 = vld [vmem:[%s2 + $0x2f0] sm:$0xff]
  %v6158 = vld [vmem:[%s2 + $0x2f8] sm:$0xff]
  %v6159 = vld [vmem:[%s2 + $0x300] sm:$0xff]
  %v6160 = vld [vmem:[%s2 + $0x308] sm:$0xff]
  %v6161 = vld [vmem:[%s2 + $0x310] sm:$0xff]
  %v6162 = vld [vmem:[%s2 + $0x318] sm:$0xff]
  %v6163 = vld [vmem:[%s2 + $0x320] sm:$0xff]
  %v6164 = vld [vmem:[%s2 + $0x328] sm:$0xff]
  %v6165 = vld [vmem:[%s2 + $0x330] sm:$0xff]
  %v6166 = vld [vmem:[%s2 + $0x338] sm:$0xff]
  %v6167 = vld [vmem:[%s2 + $0x340] sm:$0xff]
  %v6168 = vld [vmem:[%s2 + $0x348] sm:$0xff]
  %v6169 = vld [vmem:[%s2 + $0x350] sm:$0xff]
  %v6170 = vld [vmem:[%s2 + $0x358] sm:$0xff]
  %v6171 = vld [vmem:[%s2 + $0x360] sm:$0xff]
  %v6172 = vld [vmem:[%s2 + $0x368] sm:$0xff]
  %v6173 = vld [vmem:[%s2 + $0x370] sm:$0xff]
  %v6174 = vld [vmem:[%s2 + $0x378] sm:$0xff]
  %v6175 = vld [vmem:[%s2 + $0x380] sm:$0xff]
  %v6176 = vld [vmem:[%s2 + $0x388] sm:$0xff]
  %v6177 = vld [vmem:[%s2 + $0x390] sm:$0xff]
  %v6178 = vld [vmem:[%s2 + $0x398] sm:$0xff]
  %v6179 = vld [vmem:[%s2 + $0x3a0] sm:$0xff]
  %v6180 = vld [vmem:[%s2 + $0x3a8] sm:$0xff]
  %v6181 = vld [vmem:[%s2 + $0x3b0] sm:$0xff]
  %v6182 = vld [vmem:[%s2 + $0x3b8] sm:$0xff]
  %v6183 = vld [vmem:[%s2 + $0x3c0] sm:$0xff]
  %v6184 = vld [vmem:[%s2 + $0x3c8] sm:$0xff]
  %v6185 = vld [vmem:[%s2 + $0x3d0] sm:$0xff]
  %v6186 = vld [vmem:[%s2 + $0x3d8] sm:$0xff]
  %v6187 = vld [vmem:[%s2 + $0x3e0] sm:$0xff]
  %v6188 = vld [vmem:[%s2 + $0x3e8] sm:$0xff]
  %v6189 = vld [vmem:[%s2 + $0x3f0] sm:$0xff]
  %v6190 = vld [vmem:[%s2 + $0x3f8] sm:$0xff]
  %v6191 = vld [vmem:[%s2 + $0x400] sm:$0xff]
  %v6192 = vld [vmem:[%s2 + $0x408] sm:$0xff]
  %v6193 = vld [vmem:[%s2 + $0x410] sm:$0xff]
  %v6194 = vld [vmem:[%s2 + $0x418] sm:$0xff]
  %v6195 = vld [vmem:[%s2 + $0x420] sm:$0xff]
  %v6196 = vld [vmem:[%s2 + $0x428] sm:$0xff]
  %v6197 = vld [vmem:[%s2 + $0x430] sm:$0xff]
  %v6198 = vld [vmem:[%s2 + $0x438] sm:$0xff]
  %v6199 = vld [vmem:[%s2 + $0x440] sm:$0xff]
  %v6200 = vld [vmem:[%s2 + $0x448] sm:$0xff]
  %v6201 = vld [vmem:[%s2 + $0x450] sm:$0xff]
  %v6202 = vld [vmem:[%s2 + $0x458] sm:$0xff]
  %v6203 = vld [vmem:[%s2 + $0x460] sm:$0xff]
  %v6204 = vld [vmem:[%s2 + $0x468] sm:$0xff]
  %v6205 = vld [vmem:[%s2 + $0x470] sm:$0xff]
  %v6206 = vld [vmem:[%s2 + $0x478] sm:$0xff]
  %v6207 = vld [vmem:[%s2 + $0x480] sm:$0xff]
  %v6208 = vld [vmem:[%s2 + $0x488] sm:$0xff]
  %v6209 = vld [vmem:[%s2 + $0x490] sm:$0xff]
  %v6210 = vld [vmem:[%s2 + $0x498] sm:$0xff]
  %v6211 = vld [vmem:[%s2 + $0x4a0] sm:$0xff]
  %v6212 = vld [vmem:[%s2 + $0x4a8] sm:$0xff]
  %v6213 = vld [vmem:[%s2 + $0x4b0] sm:$0xff]
  %v6214 = vld [vmem:[%s2 + $0x4b8] sm:$0xff]
  %v6215 = vld [vmem:[%s2 + $0x4c0] sm:$0xff]
  %v6216 = vld [vmem:[%s2 + $0x4c8] sm:$0xff]
  %v6217 = vld [vmem:[%s2 + $0x4d0] sm:$0xff]
  %v6218 = vld [vmem:[%s2 + $0x4d8] sm:$0xff]
  %v6219 = vld [vmem:[%s2 + $0x4e0] sm:$0xff]
  %v6220 = vld [vmem:[%s2 + $0x4e8] sm:$0xff]
  %v6221 = vld [vmem:[%s2 + $0x4f0] sm:$0xff]
  %v6222 = vld [vmem:[%s2 + $0x4f8] sm:$0xff]
  %v6223 = vld [vmem:[%s2 + $0x500] sm:$0xff]
  %v6224 = vld [vmem:[%s2 + $0x508] sm:$0xff]
  %v6225 = vld [vmem:[%s2 + $0x510] sm:$0xff]
  %v6226 = vld [vmem:[%s2 + $0x518] sm:$0xff]
  %v6227 = vld [vmem:[%s2 + $0x520] sm:$0xff]
  %v6228 = vld [vmem:[%s2 + $0x528] sm:$0xff]
  %v6229 = vld [vmem:[%s2 + $0x530] sm:$0xff]
  %v6230 = vld [vmem:[%s2 + $0x538] sm:$0xff]
  %6232 = vset.pattern.permute.xlu0 0
  %6233 = vperm.xlu0 %6232, %v6063
  %v6234 = vpop.permute.xlu0 %6233
  %6237 = vset.pattern.permute.xlu0 0
  %6238 = vperm.xlu0 %6237, %v6064
  %v6239 = vpop.permute.xlu0 %6238
  %6242 = vset.pattern.permute.xlu0 0
  %6243 = vperm.xlu0 %6242, %v6065
  %v6244 = vpop.permute.xlu0 %6243
  %6247 = vset.pattern.permute.xlu0 0
  %6248 = vperm.xlu0 %6247, %v6066
  %v6249 = vpop.permute.xlu0 %6248
  %6252 = vset.pattern.permute.xlu0 0
  %6253 = vperm.xlu0 %6252, %v6067
  %v6254 = vpop.permute.xlu0 %6253
  %6257 = vset.pattern.permute.xlu0 0
  %6258 = vperm.xlu0 %6257, %v6068
  %v6259 = vpop.permute.xlu0 %6258
  %6262 = vset.pattern.permute.xlu0 0
  %6263 = vperm.xlu0 %6262, %v6069
  %v6264 = vpop.permute.xlu0 %6263
  %6267 = vset.pattern.permute.xlu0 0
  %6268 = vperm.xlu0 %6267, %v6070
  %v6269 = vpop.permute.xlu0 %6268
  %6272 = vset.pattern.permute.xlu0 0
  %6273 = vperm.xlu0 %6272, %v6071
  %v6274 = vpop.permute.xlu0 %6273
  %6277 = vset.pattern.permute.xlu0 0
  %6278 = vperm.xlu0 %6277, %v6072
  %v6279 = vpop.permute.xlu0 %6278
  %6282 = vset.pattern.permute.xlu0 0
  %6283 = vperm.xlu0 %6282, %v6073
  %v6284 = vpop.permute.xlu0 %6283
  %6287 = vset.pattern.permute.xlu0 0
  %6288 = vperm.xlu0 %6287, %v6074
  %v6289 = vpop.permute.xlu0 %6288
  %6292 = vset.pattern.permute.xlu0 0
  %6293 = vperm.xlu0 %6292, %v6075
  %v6294 = vpop.permute.xlu0 %6293
  %6297 = vset.pattern.permute.xlu0 0
  %6298 = vperm.xlu0 %6297, %v6076
  %v6299 = vpop.permute.xlu0 %6298
  %6302 = vset.pattern.permute.xlu0 0
  %6303 = vperm.xlu0 %6302, %v6077
  %v6304 = vpop.permute.xlu0 %6303
  %6307 = vset.pattern.permute.xlu0 0
  %6308 = vperm.xlu0 %6307, %v6078
  %v6309 = vpop.permute.xlu0 %6308
  %6312 = vset.pattern.permute.xlu0 0
  %6313 = vperm.xlu0 %6312, %v6079
  %v6314 = vpop.permute.xlu0 %6313
  %6317 = vset.pattern.permute.xlu0 0
  %6318 = vperm.xlu0 %6317, %v6080
  %v6319 = vpop.permute.xlu0 %6318
  %6322 = vset.pattern.permute.xlu0 0
  %6323 = vperm.xlu0 %6322, %v6081
  %v6324 = vpop.permute.xlu0 %6323
  %6327 = vset.pattern.permute.xlu0 0
  %6328 = vperm.xlu0 %6327, %v6082
  %v6329 = vpop.permute.xlu0 %6328
  %6332 = vset.pattern.permute.xlu0 0
  %6333 = vperm.xlu0 %6332, %v6083
  %v6334 = vpop.permute.xlu0 %6333
  %6337 = vset.pattern.permute.xlu0 0
  %6338 = vperm.xlu0 %6337, %v6084
  %v6339 = vpop.permute.xlu0 %6338
  %6342 = vset.pattern.permute.xlu0 0
  %6343 = vperm.xlu0 %6342, %v6085
  %v6344 = vpop.permute.xlu0 %6343
  %6347 = vset.pattern.permute.xlu0 0
  %6348 = vperm.xlu0 %6347, %v6086
  %v6349 = vpop.permute.xlu0 %6348
  %6352 = vset.pattern.permute.xlu0 0
  %6353 = vperm.xlu0 %6352, %v6087
  %v6354 = vpop.permute.xlu0 %6353
  %6357 = vset.pattern.permute.xlu0 0
  %6358 = vperm.xlu0 %6357, %v6088
  %v6359 = vpop.permute.xlu0 %6358
  %6362 = vset.pattern.permute.xlu0 0
  %6363 = vperm.xlu0 %6362, %v6089
  %v6364 = vpop.permute.xlu0 %6363
  %6367 = vset.pattern.permute.xlu0 0
  %6368 = vperm.xlu0 %6367, %v6090
  %v6369 = vpop.permute.xlu0 %6368
  %6372 = vset.pattern.permute.xlu0 0
  %6373 = vperm.xlu0 %6372, %v6091
  %v6374 = vpop.permute.xlu0 %6373
  %6377 = vset.pattern.permute.xlu0 0
  %6378 = vperm.xlu0 %6377, %v6092
  %v6379 = vpop.permute.xlu0 %6378
  %6382 = vset.pattern.permute.xlu0 0
  %6383 = vperm.xlu0 %6382, %v6093
  %v6384 = vpop.permute.xlu0 %6383
  %6387 = vset.pattern.permute.xlu0 0
  %6388 = vperm.xlu0 %6387, %v6094
  %v6389 = vpop.permute.xlu0 %6388
  %6392 = vset.pattern.permute.xlu0 0
  %6393 = vperm.xlu0 %6392, %v6095
  %v6394 = vpop.permute.xlu0 %6393
  %6397 = vset.pattern.permute.xlu0 0
  %6398 = vperm.xlu0 %6397, %v6096
  %v6399 = vpop.permute.xlu0 %6398
  %6402 = vset.pattern.permute.xlu0 0
  %6403 = vperm.xlu0 %6402, %v6097
  %v6404 = vpop.permute.xlu0 %6403
  %6407 = vset.pattern.permute.xlu0 0
  %6408 = vperm.xlu0 %6407, %v6098
  %v6409 = vpop.permute.xlu0 %6408
  %6412 = vset.pattern.permute.xlu0 0
  %6413 = vperm.xlu0 %6412, %v6099
  %v6414 = vpop.permute.xlu0 %6413
  %6417 = vset.pattern.permute.xlu0 0
  %6418 = vperm.xlu0 %6417, %v6100
  %v6419 = vpop.permute.xlu0 %6418
  %6422 = vset.pattern.permute.xlu0 0
  %6423 = vperm.xlu0 %6422, %v6101
  %v6424 = vpop.permute.xlu0 %6423
  %6427 = vset.pattern.permute.xlu0 0
  %6428 = vperm.xlu0 %6427, %v6102
  %v6429 = vpop.permute.xlu0 %6428
  %6432 = vset.pattern.permute.xlu0 0
  %6433 = vperm.xlu0 %6432, %v6103
  %v6434 = vpop.permute.xlu0 %6433
  %6437 = vset.pattern.permute.xlu0 0
  %6438 = vperm.xlu0 %6437, %v6104
  %v6439 = vpop.permute.xlu0 %6438
  %6442 = vset.pattern.permute.xlu0 0
  %6443 = vperm.xlu0 %6442, %v6105
  %v6444 = vpop.permute.xlu0 %6443
  %6447 = vset.pattern.permute.xlu0 0
  %6448 = vperm.xlu0 %6447, %v6106
  %v6449 = vpop.permute.xlu0 %6448
  %6452 = vset.pattern.permute.xlu0 0
  %6453 = vperm.xlu0 %6452, %v6107
  %v6454 = vpop.permute.xlu0 %6453
  %6457 = vset.pattern.permute.xlu0 0
  %6458 = vperm.xlu0 %6457, %v6108
  %v6459 = vpop.permute.xlu0 %6458
  %6462 = vset.pattern.permute.xlu0 0
  %6463 = vperm.xlu0 %6462, %v6109
  %v6464 = vpop.permute.xlu0 %6463
  %6467 = vset.pattern.permute.xlu0 0
  %6468 = vperm.xlu0 %6467, %v6110
  %v6469 = vpop.permute.xlu0 %6468
  %6472 = vset.pattern.permute.xlu0 0
  %6473 = vperm.xlu0 %6472, %v6111
  %v6474 = vpop.permute.xlu0 %6473
  %6477 = vset.pattern.permute.xlu0 0
  %6478 = vperm.xlu0 %6477, %v6112
  %v6479 = vpop.permute.xlu0 %6478
  %6482 = vset.pattern.permute.xlu0 0
  %6483 = vperm.xlu0 %6482, %v6113
  %v6484 = vpop.permute.xlu0 %6483
  %6487 = vset.pattern.permute.xlu0 0
  %6488 = vperm.xlu0 %6487, %v6114
  %v6489 = vpop.permute.xlu0 %6488
  %6492 = vset.pattern.permute.xlu0 0
  %6493 = vperm.xlu0 %6492, %v6115
  %v6494 = vpop.permute.xlu0 %6493
  %6497 = vset.pattern.permute.xlu0 0
  %6498 = vperm.xlu0 %6497, %v6116
  %v6499 = vpop.permute.xlu0 %6498
  %6502 = vset.pattern.permute.xlu0 0
  %6503 = vperm.xlu0 %6502, %v6117
  %v6504 = vpop.permute.xlu0 %6503
  %6507 = vset.pattern.permute.xlu0 0
  %6508 = vperm.xlu0 %6507, %v6118
  %v6509 = vpop.permute.xlu0 %6508
  %6512 = vset.pattern.permute.xlu0 0
  %6513 = vperm.xlu0 %6512, %v6119
  %v6514 = vpop.permute.xlu0 %6513
  %6517 = vset.pattern.permute.xlu0 0
  %6518 = vperm.xlu0 %6517, %v6120
  %v6519 = vpop.permute.xlu0 %6518
  %6522 = vset.pattern.permute.xlu0 0
  %6523 = vperm.xlu0 %6522, %v6121
  %v6524 = vpop.permute.xlu0 %6523
  %6527 = vset.pattern.permute.xlu0 0
  %6528 = vperm.xlu0 %6527, %v6122
  %v6529 = vpop.permute.xlu0 %6528
  %6532 = vset.pattern.permute.xlu0 0
  %6533 = vperm.xlu0 %6532, %v6123
  %v6534 = vpop.permute.xlu0 %6533
  %6537 = vset.pattern.permute.xlu0 0
  %6538 = vperm.xlu0 %6537, %v6124
  %v6539 = vpop.permute.xlu0 %6538
  %6542 = vset.pattern.permute.xlu0 0
  %6543 = vperm.xlu0 %6542, %v6125
  %v6544 = vpop.permute.xlu0 %6543
  %6547 = vset.pattern.permute.xlu0 0
  %6548 = vperm.xlu0 %6547, %v6126
  %v6549 = vpop.permute.xlu0 %6548
  %6552 = vset.pattern.permute.xlu0 0
  %6553 = vperm.xlu0 %6552, %v6127
  %v6554 = vpop.permute.xlu0 %6553
  %6557 = vset.pattern.permute.xlu0 0
  %6558 = vperm.xlu0 %6557, %v6128
  %v6559 = vpop.permute.xlu0 %6558
  %6562 = vset.pattern.permute.xlu0 0
  %6563 = vperm.xlu0 %6562, %v6129
  %v6564 = vpop.permute.xlu0 %6563
  %6567 = vset.pattern.permute.xlu0 0
  %6568 = vperm.xlu0 %6567, %v6130
  %v6569 = vpop.permute.xlu0 %6568
  %6572 = vset.pattern.permute.xlu0 0
  %6573 = vperm.xlu0 %6572, %v6131
  %v6574 = vpop.permute.xlu0 %6573
  %6577 = vset.pattern.permute.xlu0 0
  %6578 = vperm.xlu0 %6577, %v6132
  %v6579 = vpop.permute.xlu0 %6578
  %6582 = vset.pattern.permute.xlu0 0
  %6583 = vperm.xlu0 %6582, %v6133
  %v6584 = vpop.permute.xlu0 %6583
  %6587 = vset.pattern.permute.xlu0 0
  %6588 = vperm.xlu0 %6587, %v6134
  %v6589 = vpop.permute.xlu0 %6588
  %6592 = vset.pattern.permute.xlu0 0
  %6593 = vperm.xlu0 %6592, %v6135
  %v6594 = vpop.permute.xlu0 %6593
  %6597 = vset.pattern.permute.xlu0 0
  %6598 = vperm.xlu0 %6597, %v6136
  %v6599 = vpop.permute.xlu0 %6598
  %6602 = vset.pattern.permute.xlu0 0
  %6603 = vperm.xlu0 %6602, %v6137
  %v6604 = vpop.permute.xlu0 %6603
  %6607 = vset.pattern.permute.xlu0 0
  %6608 = vperm.xlu0 %6607, %v6138
  %v6609 = vpop.permute.xlu0 %6608
  %6612 = vset.pattern.permute.xlu0 0
  %6613 = vperm.xlu0 %6612, %v6139
  %v6614 = vpop.permute.xlu0 %6613
  %6617 = vset.pattern.permute.xlu0 0
  %6618 = vperm.xlu0 %6617, %v6140
  %v6619 = vpop.permute.xlu0 %6618
  %6622 = vset.pattern.permute.xlu0 0
  %6623 = vperm.xlu0 %6622, %v6141
  %v6624 = vpop.permute.xlu0 %6623
  %6627 = vset.pattern.permute.xlu0 0
  %6628 = vperm.xlu0 %6627, %v6142
  %v6629 = vpop.permute.xlu0 %6628
  %6632 = vset.pattern.permute.xlu0 0
  %6633 = vperm.xlu0 %6632, %v6143
  %v6634 = vpop.permute.xlu0 %6633
  %6637 = vset.pattern.permute.xlu0 0
  %6638 = vperm.xlu0 %6637, %v6144
  %v6639 = vpop.permute.xlu0 %6638
  %6642 = vset.pattern.permute.xlu0 0
  %6643 = vperm.xlu0 %6642, %v6145
  %v6644 = vpop.permute.xlu0 %6643
  %6647 = vset.pattern.permute.xlu0 0
  %6648 = vperm.xlu0 %6647, %v6146
  %v6649 = vpop.permute.xlu0 %6648
  %6652 = vset.pattern.permute.xlu0 0
  %6653 = vperm.xlu0 %6652, %v6147
  %v6654 = vpop.permute.xlu0 %6653
  %6657 = vset.pattern.permute.xlu0 0
  %6658 = vperm.xlu0 %6657, %v6148
  %v6659 = vpop.permute.xlu0 %6658
  %6662 = vset.pattern.permute.xlu0 0
  %6663 = vperm.xlu0 %6662, %v6149
  %v6664 = vpop.permute.xlu0 %6663
  %6667 = vset.pattern.permute.xlu0 0
  %6668 = vperm.xlu0 %6667, %v6150
  %v6669 = vpop.permute.xlu0 %6668
  %6672 = vset.pattern.permute.xlu0 0
  %6673 = vperm.xlu0 %6672, %v6151
  %v6674 = vpop.permute.xlu0 %6673
  %6677 = vset.pattern.permute.xlu0 0
  %6678 = vperm.xlu0 %6677, %v6152
  %v6679 = vpop.permute.xlu0 %6678
  %6682 = vset.pattern.permute.xlu0 0
  %6683 = vperm.xlu0 %6682, %v6153
  %v6684 = vpop.permute.xlu0 %6683
  %6687 = vset.pattern.permute.xlu0 0
  %6688 = vperm.xlu0 %6687, %v6154
  %v6689 = vpop.permute.xlu0 %6688
  %6692 = vset.pattern.permute.xlu0 0
  %6693 = vperm.xlu0 %6692, %v6155
  %v6694 = vpop.permute.xlu0 %6693
  %6697 = vset.pattern.permute.xlu0 0
  %6698 = vperm.xlu0 %6697, %v6156
  %v6699 = vpop.permute.xlu0 %6698
  %6702 = vset.pattern.permute.xlu0 0
  %6703 = vperm.xlu0 %6702, %v6157
  %v6704 = vpop.permute.xlu0 %6703
  %6707 = vset.pattern.permute.xlu0 0
  %6708 = vperm.xlu0 %6707, %v6158
  %v6709 = vpop.permute.xlu0 %6708
  %6712 = vset.pattern.permute.xlu0 0
  %6713 = vperm.xlu0 %6712, %v6159
  %v6714 = vpop.permute.xlu0 %6713
  %6717 = vset.pattern.permute.xlu0 0
  %6718 = vperm.xlu0 %6717, %v6160
  %v6719 = vpop.permute.xlu0 %6718
  %6722 = vset.pattern.permute.xlu0 0
  %6723 = vperm.xlu0 %6722, %v6161
  %v6724 = vpop.permute.xlu0 %6723
  %6727 = vset.pattern.permute.xlu0 0
  %6728 = vperm.xlu0 %6727, %v6162
  %v6729 = vpop.permute.xlu0 %6728
  %6732 = vset.pattern.permute.xlu0 0
  %6733 = vperm.xlu0 %6732, %v6163
  %v6734 = vpop.permute.xlu0 %6733
  %6737 = vset.pattern.permute.xlu0 0
  %6738 = vperm.xlu0 %6737, %v6164
  %v6739 = vpop.permute.xlu0 %6738
  %6742 = vset.pattern.permute.xlu0 0
  %6743 = vperm.xlu0 %6742, %v6165
  %v6744 = vpop.permute.xlu0 %6743
  %6747 = vset.pattern.permute.xlu0 0
  %6748 = vperm.xlu0 %6747, %v6166
  %v6749 = vpop.permute.xlu0 %6748
  %6752 = vset.pattern.permute.xlu0 0
  %6753 = vperm.xlu0 %6752, %v6167
  %v6754 = vpop.permute.xlu0 %6753
  %6757 = vset.pattern.permute.xlu0 0
  %6758 = vperm.xlu0 %6757, %v6168
  %v6759 = vpop.permute.xlu0 %6758
  %6762 = vset.pattern.permute.xlu0 0
  %6763 = vperm.xlu0 %6762, %v6169
  %v6764 = vpop.permute.xlu0 %6763
  %6767 = vset.pattern.permute.xlu0 0
  %6768 = vperm.xlu0 %6767, %v6170
  %v6769 = vpop.permute.xlu0 %6768
  %6772 = vset.pattern.permute.xlu0 0
  %6773 = vperm.xlu0 %6772, %v6171
  %v6774 = vpop.permute.xlu0 %6773
  %6777 = vset.pattern.permute.xlu0 0
  %6778 = vperm.xlu0 %6777, %v6172
  %v6779 = vpop.permute.xlu0 %6778
  %6782 = vset.pattern.permute.xlu0 0
  %6783 = vperm.xlu0 %6782, %v6173
  %v6784 = vpop.permute.xlu0 %6783
  %6787 = vset.pattern.permute.xlu0 0
  %6788 = vperm.xlu0 %6787, %v6174
  %v6789 = vpop.permute.xlu0 %6788
  %6792 = vset.pattern.permute.xlu0 0
  %6793 = vperm.xlu0 %6792, %v6175
  %v6794 = vpop.permute.xlu0 %6793
  %6797 = vset.pattern.permute.xlu0 0
  %6798 = vperm.xlu0 %6797, %v6176
  %v6799 = vpop.permute.xlu0 %6798
  %6802 = vset.pattern.permute.xlu0 0
  %6803 = vperm.xlu0 %6802, %v6177
  %v6804 = vpop.permute.xlu0 %6803
  %6807 = vset.pattern.permute.xlu0 0
  %6808 = vperm.xlu0 %6807, %v6178
  %v6809 = vpop.permute.xlu0 %6808
  %6812 = vset.pattern.permute.xlu0 0
  %6813 = vperm.xlu0 %6812, %v6179
  %v6814 = vpop.permute.xlu0 %6813
  %6817 = vset.pattern.permute.xlu0 0
  %6818 = vperm.xlu0 %6817, %v6180
  %v6819 = vpop.permute.xlu0 %6818
  %6822 = vset.pattern.permute.xlu0 0
  %6823 = vperm.xlu0 %6822, %v6181
  %v6824 = vpop.permute.xlu0 %6823
  %6827 = vset.pattern.permute.xlu0 0
  %6828 = vperm.xlu0 %6827, %v6182
  %v6829 = vpop.permute.xlu0 %6828
  %6832 = vset.pattern.permute.xlu0 0
  %6833 = vperm.xlu0 %6832, %v6183
  %v6834 = vpop.permute.xlu0 %6833
  %6837 = vset.pattern.permute.xlu0 0
  %6838 = vperm.xlu0 %6837, %v6184
  %v6839 = vpop.permute.xlu0 %6838
  %6842 = vset.pattern.permute.xlu0 0
  %6843 = vperm.xlu0 %6842, %v6185
  %v6844 = vpop.permute.xlu0 %6843
  %6847 = vset.pattern.permute.xlu0 0
  %6848 = vperm.xlu0 %6847, %v6186
  %v6849 = vpop.permute.xlu0 %6848
  %6852 = vset.pattern.permute.xlu0 0
  %6853 = vperm.xlu0 %6852, %v6187
  %v6854 = vpop.permute.xlu0 %6853
  %6857 = vset.pattern.permute.xlu0 0
  %6858 = vperm.xlu0 %6857, %v6188
  %v6859 = vpop.permute.xlu0 %6858
  %6862 = vset.pattern.permute.xlu0 0
  %6863 = vperm.xlu0 %6862, %v6189
  %v6864 = vpop.permute.xlu0 %6863
  %6867 = vset.pattern.permute.xlu0 0
  %6868 = vperm.xlu0 %6867, %v6190
  %v6869 = vpop.permute.xlu0 %6868
  %6872 = vset.pattern.permute.xlu0 0
  %6873 = vperm.xlu0 %6872, %v6191
  %v6874 = vpop.permute.xlu0 %6873
  %6877 = vset.pattern.permute.xlu0 0
  %6878 = vperm.xlu0 %6877, %v6192
  %v6879 = vpop.permute.xlu0 %6878
  %6882 = vset.pattern.permute.xlu0 0
  %6883 = vperm.xlu0 %6882, %v6193
  %v6884 = vpop.permute.xlu0 %6883
  %6887 = vset.pattern.permute.xlu0 0
  %6888 = vperm.xlu0 %6887, %v6194
  %v6889 = vpop.permute.xlu0 %6888
  %6892 = vset.pattern.permute.xlu0 0
  %6893 = vperm.xlu0 %6892, %v6195
  %v6894 = vpop.permute.xlu0 %6893
  %6897 = vset.pattern.permute.xlu0 0
  %6898 = vperm.xlu0 %6897, %v6196
  %v6899 = vpop.permute.xlu0 %6898
  %6902 = vset.pattern.permute.xlu0 0
  %6903 = vperm.xlu0 %6902, %v6197
  %v6904 = vpop.permute.xlu0 %6903
  %6907 = vset.pattern.permute.xlu0 0
  %6908 = vperm.xlu0 %6907, %v6198
  %v6909 = vpop.permute.xlu0 %6908
  %6912 = vset.pattern.permute.xlu0 0
  %6913 = vperm.xlu0 %6912, %v6199
  %v6914 = vpop.permute.xlu0 %6913
  %6917 = vset.pattern.permute.xlu0 0
  %6918 = vperm.xlu0 %6917, %v6200
  %v6919 = vpop.permute.xlu0 %6918
  %6922 = vset.pattern.permute.xlu0 0
  %6923 = vperm.xlu0 %6922, %v6201
  %v6924 = vpop.permute.xlu0 %6923
  %6927 = vset.pattern.permute.xlu0 0
  %6928 = vperm.xlu0 %6927, %v6202
  %v6929 = vpop.permute.xlu0 %6928
  %6932 = vset.pattern.permute.xlu0 0
  %6933 = vperm.xlu0 %6932, %v6203
  %v6934 = vpop.permute.xlu0 %6933
  %6937 = vset.pattern.permute.xlu0 0
  %6938 = vperm.xlu0 %6937, %v6204
  %v6939 = vpop.permute.xlu0 %6938
  %6942 = vset.pattern.permute.xlu0 0
  %6943 = vperm.xlu0 %6942, %v6205
  %v6944 = vpop.permute.xlu0 %6943
  %6947 = vset.pattern.permute.xlu0 0
  %6948 = vperm.xlu0 %6947, %v6206
  %v6949 = vpop.permute.xlu0 %6948
  %6952 = vset.pattern.permute.xlu0 0
  %6953 = vperm.xlu0 %6952, %v6207
  %v6954 = vpop.permute.xlu0 %6953
  %6957 = vset.pattern.permute.xlu0 0
  %6958 = vperm.xlu0 %6957, %v6208
  %v6959 = vpop.permute.xlu0 %6958
  %6962 = vset.pattern.permute.xlu0 0
  %6963 = vperm.xlu0 %6962, %v6209
  %v6964 = vpop.permute.xlu0 %6963
  %6967 = vset.pattern.permute.xlu0 0
  %6968 = vperm.xlu0 %6967, %v6210
  %v6969 = vpop.permute.xlu0 %6968
  %6972 = vset.pattern.permute.xlu0 0
  %6973 = vperm.xlu0 %6972, %v6211
  %v6974 = vpop.permute.xlu0 %6973
  %6977 = vset.pattern.permute.xlu0 0
  %6978 = vperm.xlu0 %6977, %v6212
  %v6979 = vpop.permute.xlu0 %6978
  %6982 = vset.pattern.permute.xlu0 0
  %6983 = vperm.xlu0 %6982, %v6213
  %v6984 = vpop.permute.xlu0 %6983
  %6987 = vset.pattern.permute.xlu0 0
  %6988 = vperm.xlu0 %6987, %v6214
  %v6989 = vpop.permute.xlu0 %6988
  %6992 = vset.pattern.permute.xlu0 0
  %6993 = vperm.xlu0 %6992, %v6215
  %v6994 = vpop.permute.xlu0 %6993
  %6997 = vset.pattern.permute.xlu0 0
  %6998 = vperm.xlu0 %6997, %v6216
  %v6999 = vpop.permute.xlu0 %6998
  %7002 = vset.pattern.permute.xlu0 0
  %7003 = vperm.xlu0 %7002, %v6217
  %v7004 = vpop.permute.xlu0 %7003
  %7007 = vset.pattern.permute.xlu0 0
  %7008 = vperm.xlu0 %7007, %v6218
  %v7009 = vpop.permute.xlu0 %7008
  %7012 = vset.pattern.permute.xlu0 0
  %7013 = vperm.xlu0 %7012, %v6219
  %v7014 = vpop.permute.xlu0 %7013
  %7017 = vset.pattern.permute.xlu0 0
  %7018 = vperm.xlu0 %7017, %v6220
  %v7019 = vpop.permute.xlu0 %7018
  %7022 = vset.pattern.permute.xlu0 0
  %7023 = vperm.xlu0 %7022, %v6221
  %v7024 = vpop.permute.xlu0 %7023
  %7027 = vset.pattern.permute.xlu0 0
  %7028 = vperm.xlu0 %7027, %v6222
  %v7029 = vpop.permute.xlu0 %7028
  %7032 = vset.pattern.permute.xlu0 0
  %7033 = vperm.xlu0 %7032, %v6223
  %v7034 = vpop.permute.xlu0 %7033
  %7037 = vset.pattern.permute.xlu0 0
  %7038 = vperm.xlu0 %7037, %v6224
  %v7039 = vpop.permute.xlu0 %7038
  %7042 = vset.pattern.permute.xlu0 0
  %7043 = vperm.xlu0 %7042, %v6225
  %v7044 = vpop.permute.xlu0 %7043
  %7047 = vset.pattern.permute.xlu0 0
  %7048 = vperm.xlu0 %7047, %v6226
  %v7049 = vpop.permute.xlu0 %7048
  %7052 = vset.pattern.permute.xlu0 0
  %7053 = vperm.xlu0 %7052, %v6227
  %v7054 = vpop.permute.xlu0 %7053
  %7057 = vset.pattern.permute.xlu0 0
  %7058 = vperm.xlu0 %7057, %v6228
  %v7059 = vpop.permute.xlu0 %7058
  %7062 = vset.pattern.permute.xlu0 0
  %7063 = vperm.xlu0 %7062, %v6229
  %v7064 = vpop.permute.xlu0 %7063
  %7067 = vset.pattern.permute.xlu0 0
  %7068 = vperm.xlu0 %7067, %v6230
  %v7069 = vpop.permute.xlu0 %7068
  %v7071 = vadd.f32 %v5727, %v6234
  %v7072 = vadd.f32 %v5728, %v6234
  %v7073 = vadd.f32 %v5729, %v6239
  %v7074 = vadd.f32 %v5730, %v6239
  %v7075 = vadd.f32 %v5731, %v6244
  %v7076 = vadd.f32 %v5732, %v6244
  %v7077 = vadd.f32 %v5733, %v6249
  %v7078 = vadd.f32 %v5734, %v6249
  %v7079 = vadd.f32 %v5735, %v6254
  %v7080 = vadd.f32 %v5736, %v6254
  %v7081 = vadd.f32 %v5737, %v6259
  %v7082 = vadd.f32 %v5738, %v6259
  %v7083 = vadd.f32 %v5739, %v6264
  %v7084 = vadd.f32 %v5740, %v6264
  %v7085 = vadd.f32 %v5741, %v6269
  %v7086 = vadd.f32 %v5742, %v6269
  %v7087 = vadd.f32 %v5743, %v6274
  %v7088 = vadd.f32 %v5744, %v6274
  %v7089 = vadd.f32 %v5745, %v6279
  %v7090 = vadd.f32 %v5746, %v6279
  %v7091 = vadd.f32 %v5747, %v6284
  %v7092 = vadd.f32 %v5748, %v6284
  %v7093 = vadd.f32 %v5749, %v6289
  %v7094 = vadd.f32 %v5750, %v6289
  %v7095 = vadd.f32 %v5751, %v6294
  %v7096 = vadd.f32 %v5752, %v6294
  %v7097 = vadd.f32 %v5753, %v6299
  %v7098 = vadd.f32 %v5754, %v6299
  %v7099 = vadd.f32 %v5755, %v6304
  %v7100 = vadd.f32 %v5756, %v6304
  %v7101 = vadd.f32 %v5757, %v6309
  %v7102 = vadd.f32 %v5758, %v6309
  %v7103 = vadd.f32 %v5759, %v6314
  %v7104 = vadd.f32 %v5760, %v6314
  %v7105 = vadd.f32 %v5761, %v6319
  %v7106 = vadd.f32 %v5762, %v6319
  %v7107 = vadd.f32 %v5763, %v6324
  %v7108 = vadd.f32 %v5764, %v6324
  %v7109 = vadd.f32 %v5765, %v6329
  %v7110 = vadd.f32 %v5766, %v6329
  %v7111 = vadd.f32 %v5767, %v6334
  %v7112 = vadd.f32 %v5768, %v6334
  %v7113 = vadd.f32 %v5769, %v6339
  %v7114 = vadd.f32 %v5770, %v6339
  %v7115 = vadd.f32 %v5771, %v6344
  %v7116 = vadd.f32 %v5772, %v6344
  %v7117 = vadd.f32 %v5773, %v6349
  %v7118 = vadd.f32 %v5774, %v6349
  %v7119 = vadd.f32 %v5775, %v6354
  %v7120 = vadd.f32 %v5776, %v6354
  %v7121 = vadd.f32 %v5777, %v6359
  %v7122 = vadd.f32 %v5778, %v6359
  %v7123 = vadd.f32 %v5779, %v6364
  %v7124 = vadd.f32 %v5780, %v6364
  %v7125 = vadd.f32 %v5781, %v6369
  %v7126 = vadd.f32 %v5782, %v6369
  %v7127 = vadd.f32 %v5783, %v6374
  %v7128 = vadd.f32 %v5784, %v6374
  %v7129 = vadd.f32 %v5785, %v6379
  %v7130 = vadd.f32 %v5786, %v6379
  %v7131 = vadd.f32 %v5787, %v6384
  %v7132 = vadd.f32 %v5788, %v6384
  %v7133 = vadd.f32 %v5789, %v6389
  %v7134 = vadd.f32 %v5790, %v6389
  %v7135 = vadd.f32 %v5791, %v6394
  %v7136 = vadd.f32 %v5792, %v6394
  %v7137 = vadd.f32 %v5793, %v6399
  %v7138 = vadd.f32 %v5794, %v6399
  %v7139 = vadd.f32 %v5795, %v6404
  %v7140 = vadd.f32 %v5796, %v6404
  %v7141 = vadd.f32 %v5797, %v6409
  %v7142 = vadd.f32 %v5798, %v6409
  %v7143 = vadd.f32 %v5799, %v6414
  %v7144 = vadd.f32 %v5800, %v6414
  %v7145 = vadd.f32 %v5801, %v6419
  %v7146 = vadd.f32 %v5802, %v6419
  %v7147 = vadd.f32 %v5803, %v6424
  %v7148 = vadd.f32 %v5804, %v6424
  %v7149 = vadd.f32 %v5805, %v6429
  %v7150 = vadd.f32 %v5806, %v6429
  %v7151 = vadd.f32 %v5807, %v6434
  %v7152 = vadd.f32 %v5808, %v6434
  %v7153 = vadd.f32 %v5809, %v6439
  %v7154 = vadd.f32 %v5810, %v6439
  %v7155 = vadd.f32 %v5811, %v6444
  %v7156 = vadd.f32 %v5812, %v6444
  %v7157 = vadd.f32 %v5813, %v6449
  %v7158 = vadd.f32 %v5814, %v6449
  %v7159 = vadd.f32 %v5815, %v6454
  %v7160 = vadd.f32 %v5816, %v6454
  %v7161 = vadd.f32 %v5817, %v6459
  %v7162 = vadd.f32 %v5818, %v6459
  %v7163 = vadd.f32 %v5819, %v6464
  %v7164 = vadd.f32 %v5820, %v6464
  %v7165 = vadd.f32 %v5821, %v6469
  %v7166 = vadd.f32 %v5822, %v6469
  %v7167 = vadd.f32 %v5823, %v6474
  %v7168 = vadd.f32 %v5824, %v6474
  %v7169 = vadd.f32 %v5825, %v6479
  %v7170 = vadd.f32 %v5826, %v6479
  %v7171 = vadd.f32 %v5827, %v6484
  %v7172 = vadd.f32 %v5828, %v6484
  %v7173 = vadd.f32 %v5829, %v6489
  %v7174 = vadd.f32 %v5830, %v6489
  %v7175 = vadd.f32 %v5831, %v6494
  %v7176 = vadd.f32 %v5832, %v6494
  %v7177 = vadd.f32 %v5833, %v6499
  %v7178 = vadd.f32 %v5834, %v6499
  %v7179 = vadd.f32 %v5835, %v6504
  %v7180 = vadd.f32 %v5836, %v6504
  %v7181 = vadd.f32 %v5837, %v6509
  %v7182 = vadd.f32 %v5838, %v6509
  %v7183 = vadd.f32 %v5839, %v6514
  %v7184 = vadd.f32 %v5840, %v6514
  %v7185 = vadd.f32 %v5841, %v6519
  %v7186 = vadd.f32 %v5842, %v6519
  %v7187 = vadd.f32 %v5843, %v6524
  %v7188 = vadd.f32 %v5844, %v6524
  %v7189 = vadd.f32 %v5845, %v6529
  %v7190 = vadd.f32 %v5846, %v6529
  %v7191 = vadd.f32 %v5847, %v6534
  %v7192 = vadd.f32 %v5848, %v6534
  %v7193 = vadd.f32 %v5849, %v6539
  %v7194 = vadd.f32 %v5850, %v6539
  %v7195 = vadd.f32 %v5851, %v6544
  %v7196 = vadd.f32 %v5852, %v6544
  %v7197 = vadd.f32 %v5853, %v6549
  %v7198 = vadd.f32 %v5854, %v6549
  %v7199 = vadd.f32 %v5855, %v6554
  %v7200 = vadd.f32 %v5856, %v6554
  %v7201 = vadd.f32 %v5857, %v6559
  %v7202 = vadd.f32 %v5858, %v6559
  %v7203 = vadd.f32 %v5859, %v6564
  %v7204 = vadd.f32 %v5860, %v6564
  %v7205 = vadd.f32 %v5861, %v6569
  %v7206 = vadd.f32 %v5862, %v6569
  %v7207 = vadd.f32 %v5863, %v6574
  %v7208 = vadd.f32 %v5864, %v6574
  %v7209 = vadd.f32 %v5865, %v6579
  %v7210 = vadd.f32 %v5866, %v6579
  %v7211 = vadd.f32 %v5867, %v6584
  %v7212 = vadd.f32 %v5868, %v6584
  %v7213 = vadd.f32 %v5869, %v6589
  %v7214 = vadd.f32 %v5870, %v6589
  %v7215 = vadd.f32 %v5871, %v6594
  %v7216 = vadd.f32 %v5872, %v6594
  %v7217 = vadd.f32 %v5873, %v6599
  %v7218 = vadd.f32 %v5874, %v6599
  %v7219 = vadd.f32 %v5875, %v6604
  %v7220 = vadd.f32 %v5876, %v6604
  %v7221 = vadd.f32 %v5877, %v6609
  %v7222 = vadd.f32 %v5878, %v6609
  %v7223 = vadd.f32 %v5879, %v6614
  %v7224 = vadd.f32 %v5880, %v6614
  %v7225 = vadd.f32 %v5881, %v6619
  %v7226 = vadd.f32 %v5882, %v6619
  %v7227 = vadd.f32 %v5883, %v6624
  %v7228 = vadd.f32 %v5884, %v6624
  %v7229 = vadd.f32 %v5885, %v6629
  %v7230 = vadd.f32 %v5886, %v6629
  %v7231 = vadd.f32 %v5887, %v6634
  %v7232 = vadd.f32 %v5888, %v6634
  %v7233 = vadd.f32 %v5889, %v6639
  %v7234 = vadd.f32 %v5890, %v6639
  %v7235 = vadd.f32 %v5891, %v6644
  %v7236 = vadd.f32 %v5892, %v6644
  %v7237 = vadd.f32 %v5893, %v6649
  %v7238 = vadd.f32 %v5894, %v6649
  %v7239 = vadd.f32 %v5895, %v6654
  %v7240 = vadd.f32 %v5896, %v6654
  %v7241 = vadd.f32 %v5897, %v6659
  %v7242 = vadd.f32 %v5898, %v6659
  %v7243 = vadd.f32 %v5899, %v6664
  %v7244 = vadd.f32 %v5900, %v6664
  %v7245 = vadd.f32 %v5901, %v6669
  %v7246 = vadd.f32 %v5902, %v6669
  %v7247 = vadd.f32 %v5903, %v6674
  %v7248 = vadd.f32 %v5904, %v6674
  %v7249 = vadd.f32 %v5905, %v6679
  %v7250 = vadd.f32 %v5906, %v6679
  %v7251 = vadd.f32 %v5907, %v6684
  %v7252 = vadd.f32 %v5908, %v6684
  %v7253 = vadd.f32 %v5909, %v6689
  %v7254 = vadd.f32 %v5910, %v6689
  %v7255 = vadd.f32 %v5911, %v6694
  %v7256 = vadd.f32 %v5912, %v6694
  %v7257 = vadd.f32 %v5913, %v6699
  %v7258 = vadd.f32 %v5914, %v6699
  %v7259 = vadd.f32 %v5915, %v6704
  %v7260 = vadd.f32 %v5916, %v6704
  %v7261 = vadd.f32 %v5917, %v6709
  %v7262 = vadd.f32 %v5918, %v6709
  %v7263 = vadd.f32 %v5919, %v6714
  %v7264 = vadd.f32 %v5920, %v6714
  %v7265 = vadd.f32 %v5921, %v6719
  %v7266 = vadd.f32 %v5922, %v6719
  %v7267 = vadd.f32 %v5923, %v6724
  %v7268 = vadd.f32 %v5924, %v6724
  %v7269 = vadd.f32 %v5925, %v6729
  %v7270 = vadd.f32 %v5926, %v6729
  %v7271 = vadd.f32 %v5927, %v6734
  %v7272 = vadd.f32 %v5928, %v6734
  %v7273 = vadd.f32 %v5929, %v6739
  %v7274 = vadd.f32 %v5930, %v6739
  %v7275 = vadd.f32 %v5931, %v6744
  %v7276 = vadd.f32 %v5932, %v6744
  %v7277 = vadd.f32 %v5933, %v6749
  %v7278 = vadd.f32 %v5934, %v6749
  %v7279 = vadd.f32 %v5935, %v6754
  %v7280 = vadd.f32 %v5936, %v6754
  %v7281 = vadd.f32 %v5937, %v6759
  %v7282 = vadd.f32 %v5938, %v6759
  %v7283 = vadd.f32 %v5939, %v6764
  %v7284 = vadd.f32 %v5940, %v6764
  %v7285 = vadd.f32 %v5941, %v6769
  %v7286 = vadd.f32 %v5942, %v6769
  %v7287 = vadd.f32 %v5943, %v6774
  %v7288 = vadd.f32 %v5944, %v6774
  %v7289 = vadd.f32 %v5945, %v6779
  %v7290 = vadd.f32 %v5946, %v6779
  %v7291 = vadd.f32 %v5947, %v6784
  %v7292 = vadd.f32 %v5948, %v6784
  %v7293 = vadd.f32 %v5949, %v6789
  %v7294 = vadd.f32 %v5950, %v6789
  %v7295 = vadd.f32 %v5951, %v6794
  %v7296 = vadd.f32 %v5952, %v6794
  %v7297 = vadd.f32 %v5953, %v6799
  %v7298 = vadd.f32 %v5954, %v6799
  %v7299 = vadd.f32 %v5955, %v6804
  %v7300 = vadd.f32 %v5956, %v6804
  %v7301 = vadd.f32 %v5957, %v6809
  %v7302 = vadd.f32 %v5958, %v6809
  %v7303 = vadd.f32 %v5959, %v6814
  %v7304 = vadd.f32 %v5960, %v6814
  %v7305 = vadd.f32 %v5961, %v6819
  %v7306 = vadd.f32 %v5962, %v6819
  %v7307 = vadd.f32 %v5963, %v6824
  %v7308 = vadd.f32 %v5964, %v6824
  %v7309 = vadd.f32 %v5965, %v6829
  %v7310 = vadd.f32 %v5966, %v6829
  %v7311 = vadd.f32 %v5967, %v6834
  %v7312 = vadd.f32 %v5968, %v6834
  %v7313 = vadd.f32 %v5969, %v6839
  %v7314 = vadd.f32 %v5970, %v6839
  %v7315 = vadd.f32 %v5971, %v6844
  %v7316 = vadd.f32 %v5972, %v6844
  %v7317 = vadd.f32 %v5973, %v6849
  %v7318 = vadd.f32 %v5974, %v6849
  %v7319 = vadd.f32 %v5975, %v6854
  %v7320 = vadd.f32 %v5976, %v6854
  %v7321 = vadd.f32 %v5977, %v6859
  %v7322 = vadd.f32 %v5978, %v6859
  %v7323 = vadd.f32 %v5979, %v6864
  %v7324 = vadd.f32 %v5980, %v6864
  %v7325 = vadd.f32 %v5981, %v6869
  %v7326 = vadd.f32 %v5982, %v6869
  %v7327 = vadd.f32 %v5983, %v6874
  %v7328 = vadd.f32 %v5984, %v6874
  %v7329 = vadd.f32 %v5985, %v6879
  %v7330 = vadd.f32 %v5986, %v6879
  %v7331 = vadd.f32 %v5987, %v6884
  %v7332 = vadd.f32 %v5988, %v6884
  %v7333 = vadd.f32 %v5989, %v6889
  %v7334 = vadd.f32 %v5990, %v6889
  %v7335 = vadd.f32 %v5991, %v6894
  %v7336 = vadd.f32 %v5992, %v6894
  %v7337 = vadd.f32 %v5993, %v6899
  %v7338 = vadd.f32 %v5994, %v6899
  %v7339 = vadd.f32 %v5995, %v6904
  %v7340 = vadd.f32 %v5996, %v6904
  %v7341 = vadd.f32 %v5997, %v6909
  %v7342 = vadd.f32 %v5998, %v6909
  %v7343 = vadd.f32 %v5999, %v6914
  %v7344 = vadd.f32 %v6000, %v6914
  %v7345 = vadd.f32 %v6001, %v6919
  %v7346 = vadd.f32 %v6002, %v6919
  %v7347 = vadd.f32 %v6003, %v6924
  %v7348 = vadd.f32 %v6004, %v6924
  %v7349 = vadd.f32 %v6005, %v6929
  %v7350 = vadd.f32 %v6006, %v6929
  %v7351 = vadd.f32 %v6007, %v6934
  %v7352 = vadd.f32 %v6008, %v6934
  %v7353 = vadd.f32 %v6009, %v6939
  %v7354 = vadd.f32 %v6010, %v6939
  %v7355 = vadd.f32 %v6011, %v6944
  %v7356 = vadd.f32 %v6012, %v6944
  %v7357 = vadd.f32 %v6013, %v6949
  %v7358 = vadd.f32 %v6014, %v6949
  %v7359 = vadd.f32 %v6015, %v6954
  %v7360 = vadd.f32 %v6016, %v6954
  %v7361 = vadd.f32 %v6017, %v6959
  %v7362 = vadd.f32 %v6018, %v6959
  %v7363 = vadd.f32 %v6019, %v6964
  %v7364 = vadd.f32 %v6020, %v6964
  %v7365 = vadd.f32 %v6021, %v6969
  %v7366 = vadd.f32 %v6022, %v6969
  %v7367 = vadd.f32 %v6023, %v6974
  %v7368 = vadd.f32 %v6024, %v6974
  %v7369 = vadd.f32 %v6025, %v6979
  %v7370 = vadd.f32 %v6026, %v6979
  %v7371 = vadd.f32 %v6027, %v6984
  %v7372 = vadd.f32 %v6028, %v6984
  %v7373 = vadd.f32 %v6029, %v6989
  %v7374 = vadd.f32 %v6030, %v6989
  %v7375 = vadd.f32 %v6031, %v6994
  %v7376 = vadd.f32 %v6032, %v6994
  %v7377 = vadd.f32 %v6033, %v6999
  %v7378 = vadd.f32 %v6034, %v6999
  %v7379 = vadd.f32 %v6035, %v7004
  %v7380 = vadd.f32 %v6036, %v7004
  %v7381 = vadd.f32 %v6037, %v7009
  %v7382 = vadd.f32 %v6038, %v7009
  %v7383 = vadd.f32 %v6039, %v7014
  %v7384 = vadd.f32 %v6040, %v7014
  %v7385 = vadd.f32 %v6041, %v7019
  %v7386 = vadd.f32 %v6042, %v7019
  %v7387 = vadd.f32 %v6043, %v7024
  %v7388 = vadd.f32 %v6044, %v7024
  %v7389 = vadd.f32 %v6045, %v7029
  %v7390 = vadd.f32 %v6046, %v7029
  %v7391 = vadd.f32 %v6047, %v7034
  %v7392 = vadd.f32 %v6048, %v7034
  %v7393 = vadd.f32 %v6049, %v7039
  %v7394 = vadd.f32 %v6050, %v7039
  %v7395 = vadd.f32 %v6051, %v7044
  %v7396 = vadd.f32 %v6052, %v7044
  %v7397 = vadd.f32 %v6053, %v7049
  %v7398 = vadd.f32 %v6054, %v7049
  %v7399 = vadd.f32 %v6055, %v7054
  %v7400 = vadd.f32 %v6056, %v7054
  %v7401 = vadd.f32 %v6057, %v7059
  %v7402 = vadd.f32 %v6058, %v7059
  %v7403 = vadd.f32 %v6059, %v7064
  %v7404 = vadd.f32 %v6060, %v7064
  %v7405 = vadd.f32 %v6061, %v7069
  %v7406 = vadd.f32 %v6062, %v7069
  %7407 = vst [vmem:[%s3] sm:$0xff] %v7071
  %7408 = vst.msk [vmem:[%s3 + $0x8] sm:$0xff] %vm350, %v7072
  %7409 = vst [vmem:[%s3 + $0x10] sm:$0xff] %v7073
  %7410 = vst.msk [vmem:[%s3 + $0x18] sm:$0xff] %vm350, %v7074
  %7411 = vst [vmem:[%s3 + $0x20] sm:$0xff] %v7075
  %7412 = vst.msk [vmem:[%s3 + $0x28] sm:$0xff] %vm350, %v7076
  %7413 = vst [vmem:[%s3 + $0x30] sm:$0xff] %v7077
  %7414 = vst.msk [vmem:[%s3 + $0x38] sm:$0xff] %vm350, %v7078
  %7415 = vst [vmem:[%s3 + $0x40] sm:$0xff] %v7079
  %7416 = vst.msk [vmem:[%s3 + $0x48] sm:$0xff] %vm350, %v7080
  %7417 = vst [vmem:[%s3 + $0x50] sm:$0xff] %v7081
  %7418 = vst.msk [vmem:[%s3 + $0x58] sm:$0xff] %vm350, %v7082
  %7419 = vst [vmem:[%s3 + $0x60] sm:$0xff] %v7083
  %7420 = vst.msk [vmem:[%s3 + $0x68] sm:$0xff] %vm350, %v7084
  %7421 = vst [vmem:[%s3 + $0x70] sm:$0xff] %v7085
  %7422 = vst.msk [vmem:[%s3 + $0x78] sm:$0xff] %vm350, %v7086
  %7423 = vst [vmem:[%s3 + $0x80] sm:$0xff] %v7087
  %7424 = vst.msk [vmem:[%s3 + $0x88] sm:$0xff] %vm350, %v7088
  %7425 = vst [vmem:[%s3 + $0x90] sm:$0xff] %v7089
  %7426 = vst.msk [vmem:[%s3 + $0x98] sm:$0xff] %vm350, %v7090
  %7427 = vst [vmem:[%s3 + $0xa0] sm:$0xff] %v7091
  %7428 = vst.msk [vmem:[%s3 + $0xa8] sm:$0xff] %vm350, %v7092
  %7429 = vst [vmem:[%s3 + $0xb0] sm:$0xff] %v7093
  %7430 = vst.msk [vmem:[%s3 + $0xb8] sm:$0xff] %vm350, %v7094
  %7431 = vst [vmem:[%s3 + $0xc0] sm:$0xff] %v7095
  %7432 = vst.msk [vmem:[%s3 + $0xc8] sm:$0xff] %vm350, %v7096
  %7433 = vst [vmem:[%s3 + $0xd0] sm:$0xff] %v7097
  %7434 = vst.msk [vmem:[%s3 + $0xd8] sm:$0xff] %vm350, %v7098
  %7435 = vst [vmem:[%s3 + $0xe0] sm:$0xff] %v7099
  %7436 = vst.msk [vmem:[%s3 + $0xe8] sm:$0xff] %vm350, %v7100
  %7437 = vst [vmem:[%s3 + $0xf0] sm:$0xff] %v7101
  %7438 = vst.msk [vmem:[%s3 + $0xf8] sm:$0xff] %vm350, %v7102
  %7439 = vst [vmem:[%s3 + $0x100] sm:$0xff] %v7103
  %7440 = vst.msk [vmem:[%s3 + $0x108] sm:$0xff] %vm350, %v7104
  %7441 = vst [vmem:[%s3 + $0x110] sm:$0xff] %v7105
  %7442 = vst.msk [vmem:[%s3 + $0x118] sm:$0xff] %vm350, %v7106
  %7443 = vst [vmem:[%s3 + $0x120] sm:$0xff] %v7107
  %7444 = vst.msk [vmem:[%s3 + $0x128] sm:$0xff] %vm350, %v7108
  %7445 = vst [vmem:[%s3 + $0x130] sm:$0xff] %v7109
  %7446 = vst.msk [vmem:[%s3 + $0x138] sm:$0xff] %vm350, %v7110
  %7447 = vst [vmem:[%s3 + $0x140] sm:$0xff] %v7111
  %7448 = vst.msk [vmem:[%s3 + $0x148] sm:$0xff] %vm350, %v7112
  %7449 = vst [vmem:[%s3 + $0x150] sm:$0xff] %v7113
  %7450 = vst.msk [vmem:[%s3 + $0x158] sm:$0xff] %vm350, %v7114
  %7451 = vst [vmem:[%s3 + $0x160] sm:$0xff] %v7115
  %7452 = vst.msk [vmem:[%s3 + $0x168] sm:$0xff] %vm350, %v7116
  %7453 = vst [vmem:[%s3 + $0x170] sm:$0xff] %v7117
  %7454 = vst.msk [vmem:[%s3 + $0x178] sm:$0xff] %vm350, %v7118
  %7455 = vst [vmem:[%s3 + $0x180] sm:$0xff] %v7119
  %7456 = vst.msk [vmem:[%s3 + $0x188] sm:$0xff] %vm350, %v7120
  %7457 = vst [vmem:[%s3 + $0x190] sm:$0xff] %v7121
  %7458 = vst.msk [vmem:[%s3 + $0x198] sm:$0xff] %vm350, %v7122
  %7459 = vst [vmem:[%s3 + $0x1a0] sm:$0xff] %v7123
  %7460 = vst.msk [vmem:[%s3 + $0x1a8] sm:$0xff] %vm350, %v7124
  %7461 = vst [vmem:[%s3 + $0x1b0] sm:$0xff] %v7125
  %7462 = vst.msk [vmem:[%s3 + $0x1b8] sm:$0xff] %vm350, %v7126
  %7463 = vst [vmem:[%s3 + $0x1c0] sm:$0xff] %v7127
  %7464 = vst.msk [vmem:[%s3 + $0x1c8] sm:$0xff] %vm350, %v7128
  %7465 = vst [vmem:[%s3 + $0x1d0] sm:$0xff] %v7129
  %7466 = vst.msk [vmem:[%s3 + $0x1d8] sm:$0xff] %vm350, %v7130
  %7467 = vst [vmem:[%s3 + $0x1e0] sm:$0xff] %v7131
  %7468 = vst.msk [vmem:[%s3 + $0x1e8] sm:$0xff] %vm350, %v7132
  %7469 = vst [vmem:[%s3 + $0x1f0] sm:$0xff] %v7133
  %7470 = vst.msk [vmem:[%s3 + $0x1f8] sm:$0xff] %vm350, %v7134
  %7471 = vst [vmem:[%s3 + $0x200] sm:$0xff] %v7135
  %7472 = vst.msk [vmem:[%s3 + $0x208] sm:$0xff] %vm350, %v7136
  %7473 = vst [vmem:[%s3 + $0x210] sm:$0xff] %v7137
  %7474 = vst.msk [vmem:[%s3 + $0x218] sm:$0xff] %vm350, %v7138
  %7475 = vst [vmem:[%s3 + $0x220] sm:$0xff] %v7139
  %7476 = vst.msk [vmem:[%s3 + $0x228] sm:$0xff] %vm350, %v7140
  %7477 = vst [vmem:[%s3 + $0x230] sm:$0xff] %v7141
  %7478 = vst.msk [vmem:[%s3 + $0x238] sm:$0xff] %vm350, %v7142
  %7479 = vst [vmem:[%s3 + $0x240] sm:$0xff] %v7143
  %7480 = vst.msk [vmem:[%s3 + $0x248] sm:$0xff] %vm350, %v7144
  %7481 = vst [vmem:[%s3 + $0x250] sm:$0xff] %v7145
  %7482 = vst.msk [vmem:[%s3 + $0x258] sm:$0xff] %vm350, %v7146
  %7483 = vst [vmem:[%s3 + $0x260] sm:$0xff] %v7147
  %7484 = vst.msk [vmem:[%s3 + $0x268] sm:$0xff] %vm350, %v7148
  %7485 = vst [vmem:[%s3 + $0x270] sm:$0xff] %v7149
  %7486 = vst.msk [vmem:[%s3 + $0x278] sm:$0xff] %vm350, %v7150
  %7487 = vst [vmem:[%s3 + $0x280] sm:$0xff] %v7151
  %7488 = vst.msk [vmem:[%s3 + $0x288] sm:$0xff] %vm350, %v7152
  %7489 = vst [vmem:[%s3 + $0x290] sm:$0xff] %v7153
  %7490 = vst.msk [vmem:[%s3 + $0x298] sm:$0xff] %vm350, %v7154
  %7491 = vst [vmem:[%s3 + $0x2a0] sm:$0xff] %v7155
  %7492 = vst.msk [vmem:[%s3 + $0x2a8] sm:$0xff] %vm350, %v7156
  %7493 = vst [vmem:[%s3 + $0x2b0] sm:$0xff] %v7157
  %7494 = vst.msk [vmem:[%s3 + $0x2b8] sm:$0xff] %vm350, %v7158
  %7495 = vst [vmem:[%s3 + $0x2c0] sm:$0xff] %v7159
  %7496 = vst.msk [vmem:[%s3 + $0x2c8] sm:$0xff] %vm350, %v7160
  %7497 = vst [vmem:[%s3 + $0x2d0] sm:$0xff] %v7161
  %7498 = vst.msk [vmem:[%s3 + $0x2d8] sm:$0xff] %vm350, %v7162
  %7499 = vst [vmem:[%s3 + $0x2e0] sm:$0xff] %v7163
  %7500 = vst.msk [vmem:[%s3 + $0x2e8] sm:$0xff] %vm350, %v7164
  %7501 = vst [vmem:[%s3 + $0x2f0] sm:$0xff] %v7165
  %7502 = vst.msk [vmem:[%s3 + $0x2f8] sm:$0xff] %vm350, %v7166
  %7503 = vst [vmem:[%s3 + $0x300] sm:$0xff] %v7167
  %7504 = vst.msk [vmem:[%s3 + $0x308] sm:$0xff] %vm350, %v7168
  %7505 = vst [vmem:[%s3 + $0x310] sm:$0xff] %v7169
  %7506 = vst.msk [vmem:[%s3 + $0x318] sm:$0xff] %vm350, %v7170
  %7507 = vst [vmem:[%s3 + $0x320] sm:$0xff] %v7171
  %7508 = vst.msk [vmem:[%s3 + $0x328] sm:$0xff] %vm350, %v7172
  %7509 = vst [vmem:[%s3 + $0x330] sm:$0xff] %v7173
  %7510 = vst.msk [vmem:[%s3 + $0x338] sm:$0xff] %vm350, %v7174
  %7511 = vst [vmem:[%s3 + $0x340] sm:$0xff] %v7175
  %7512 = vst.msk [vmem:[%s3 + $0x348] sm:$0xff] %vm350, %v7176
  %7513 = vst [vmem:[%s3 + $0x350] sm:$0xff] %v7177
  %7514 = vst.msk [vmem:[%s3 + $0x358] sm:$0xff] %vm350, %v7178
  %7515 = vst [vmem:[%s3 + $0x360] sm:$0xff] %v7179
  %7516 = vst.msk [vmem:[%s3 + $0x368] sm:$0xff] %vm350, %v7180
  %7517 = vst [vmem:[%s3 + $0x370] sm:$0xff] %v7181
  %7518 = vst.msk [vmem:[%s3 + $0x378] sm:$0xff] %vm350, %v7182
  %7519 = vst [vmem:[%s3 + $0x380] sm:$0xff] %v7183
  %7520 = vst.msk [vmem:[%s3 + $0x388] sm:$0xff] %vm350, %v7184
  %7521 = vst [vmem:[%s3 + $0x390] sm:$0xff] %v7185
  %7522 = vst.msk [vmem:[%s3 + $0x398] sm:$0xff] %vm350, %v7186
  %7523 = vst [vmem:[%s3 + $0x3a0] sm:$0xff] %v7187
  %7524 = vst.msk [vmem:[%s3 + $0x3a8] sm:$0xff] %vm350, %v7188
  %7525 = vst [vmem:[%s3 + $0x3b0] sm:$0xff] %v7189
  %7526 = vst.msk [vmem:[%s3 + $0x3b8] sm:$0xff] %vm350, %v7190
  %7527 = vst [vmem:[%s3 + $0x3c0] sm:$0xff] %v7191
  %7528 = vst.msk [vmem:[%s3 + $0x3c8] sm:$0xff] %vm350, %v7192
  %7529 = vst [vmem:[%s3 + $0x3d0] sm:$0xff] %v7193
  %7530 = vst.msk [vmem:[%s3 + $0x3d8] sm:$0xff] %vm350, %v7194
  %7531 = vst [vmem:[%s3 + $0x3e0] sm:$0xff] %v7195
  %7532 = vst.msk [vmem:[%s3 + $0x3e8] sm:$0xff] %vm350, %v7196
  %7533 = vst [vmem:[%s3 + $0x3f0] sm:$0xff] %v7197
  %7534 = vst.msk [vmem:[%s3 + $0x3f8] sm:$0xff] %vm350, %v7198
  %7535 = vst [vmem:[%s3 + $0x400] sm:$0xff] %v7199
  %7536 = vst.msk [vmem:[%s3 + $0x408] sm:$0xff] %vm350, %v7200
  %7537 = vst [vmem:[%s3 + $0x410] sm:$0xff] %v7201
  %7538 = vst.msk [vmem:[%s3 + $0x418] sm:$0xff] %vm350, %v7202
  %7539 = vst [vmem:[%s3 + $0x420] sm:$0xff] %v7203
  %7540 = vst.msk [vmem:[%s3 + $0x428] sm:$0xff] %vm350, %v7204
  %7541 = vst [vmem:[%s3 + $0x430] sm:$0xff] %v7205
  %7542 = vst.msk [vmem:[%s3 + $0x438] sm:$0xff] %vm350, %v7206
  %7543 = vst [vmem:[%s3 + $0x440] sm:$0xff] %v7207
  %7544 = vst.msk [vmem:[%s3 + $0x448] sm:$0xff] %vm350, %v7208
  %7545 = vst [vmem:[%s3 + $0x450] sm:$0xff] %v7209
  %7546 = vst.msk [vmem:[%s3 + $0x458] sm:$0xff] %vm350, %v7210
  %7547 = vst [vmem:[%s3 + $0x460] sm:$0xff] %v7211
  %7548 = vst.msk [vmem:[%s3 + $0x468] sm:$0xff] %vm350, %v7212
  %7549 = vst [vmem:[%s3 + $0x470] sm:$0xff] %v7213
  %7550 = vst.msk [vmem:[%s3 + $0x478] sm:$0xff] %vm350, %v7214
  %7551 = vst [vmem:[%s3 + $0x480] sm:$0xff] %v7215
  %7552 = vst.msk [vmem:[%s3 + $0x488] sm:$0xff] %vm350, %v7216
  %7553 = vst [vmem:[%s3 + $0x490] sm:$0xff] %v7217
  %7554 = vst.msk [vmem:[%s3 + $0x498] sm:$0xff] %vm350, %v7218
  %7555 = vst [vmem:[%s3 + $0x4a0] sm:$0xff] %v7219
  %7556 = vst.msk [vmem:[%s3 + $0x4a8] sm:$0xff] %vm350, %v7220
  %7557 = vst [vmem:[%s3 + $0x4b0] sm:$0xff] %v7221
  %7558 = vst.msk [vmem:[%s3 + $0x4b8] sm:$0xff] %vm350, %v7222
  %7559 = vst [vmem:[%s3 + $0x4c0] sm:$0xff] %v7223
  %7560 = vst.msk [vmem:[%s3 + $0x4c8] sm:$0xff] %vm350, %v7224
  %7561 = vst [vmem:[%s3 + $0x4d0] sm:$0xff] %v7225
  %7562 = vst.msk [vmem:[%s3 + $0x4d8] sm:$0xff] %vm350, %v7226
  %7563 = vst [vmem:[%s3 + $0x4e0] sm:$0xff] %v7227
  %7564 = vst.msk [vmem:[%s3 + $0x4e8] sm:$0xff] %vm350, %v7228
  %7565 = vst [vmem:[%s3 + $0x4f0] sm:$0xff] %v7229
  %7566 = vst.msk [vmem:[%s3 + $0x4f8] sm:$0xff] %vm350, %v7230
  %7567 = vst [vmem:[%s3 + $0x500] sm:$0xff] %v7231
  %7568 = vst.msk [vmem:[%s3 + $0x508] sm:$0xff] %vm350, %v7232
  %7569 = vst [vmem:[%s3 + $0x510] sm:$0xff] %v7233
  %7570 = vst.msk [vmem:[%s3 + $0x518] sm:$0xff] %vm350, %v7234
  %7571 = vst [vmem:[%s3 + $0x520] sm:$0xff] %v7235
  %7572 = vst.msk [vmem:[%s3 + $0x528] sm:$0xff] %vm350, %v7236
  %7573 = vst [vmem:[%s3 + $0x530] sm:$0xff] %v7237
  %7574 = vst.msk [vmem:[%s3 + $0x538] sm:$0xff] %vm350, %v7238
  %7575 = vst [vmem:[%s3 + $0x540] sm:$0xff] %v7239
  %7576 = vst.msk [vmem:[%s3 + $0x548] sm:$0xff] %vm350, %v7240
  %7577 = vst [vmem:[%s3 + $0x550] sm:$0xff] %v7241
  %7578 = vst.msk [vmem:[%s3 + $0x558] sm:$0xff] %vm350, %v7242
  %7579 = vst [vmem:[%s3 + $0x560] sm:$0xff] %v7243
  %7580 = vst.msk [vmem:[%s3 + $0x568] sm:$0xff] %vm350, %v7244
  %7581 = vst [vmem:[%s3 + $0x570] sm:$0xff] %v7245
  %7582 = vst.msk [vmem:[%s3 + $0x578] sm:$0xff] %vm350, %v7246
  %7583 = vst [vmem:[%s3 + $0x580] sm:$0xff] %v7247
  %7584 = vst.msk [vmem:[%s3 + $0x588] sm:$0xff] %vm350, %v7248
  %7585 = vst [vmem:[%s3 + $0x590] sm:$0xff] %v7249
  %7586 = vst.msk [vmem:[%s3 + $0x598] sm:$0xff] %vm350, %v7250
  %7587 = vst [vmem:[%s3 + $0x5a0] sm:$0xff] %v7251
  %7588 = vst.msk [vmem:[%s3 + $0x5a8] sm:$0xff] %vm350, %v7252
  %7589 = vst [vmem:[%s3 + $0x5b0] sm:$0xff] %v7253
  %7590 = vst.msk [vmem:[%s3 + $0x5b8] sm:$0xff] %vm350, %v7254
  %7591 = vst [vmem:[%s3 + $0x5c0] sm:$0xff] %v7255
  %7592 = vst.msk [vmem:[%s3 + $0x5c8] sm:$0xff] %vm350, %v7256
  %7593 = vst [vmem:[%s3 + $0x5d0] sm:$0xff] %v7257
  %7594 = vst.msk [vmem:[%s3 + $0x5d8] sm:$0xff] %vm350, %v7258
  %7595 = vst [vmem:[%s3 + $0x5e0] sm:$0xff] %v7259
  %7596 = vst.msk [vmem:[%s3 + $0x5e8] sm:$0xff] %vm350, %v7260
  %7597 = vst [vmem:[%s3 + $0x5f0] sm:$0xff] %v7261
  %7598 = vst.msk [vmem:[%s3 + $0x5f8] sm:$0xff] %vm350, %v7262
  %7599 = vst [vmem:[%s3 + $0x600] sm:$0xff] %v7263
  %7600 = vst.msk [vmem:[%s3 + $0x608] sm:$0xff] %vm350, %v7264
  %7601 = vst [vmem:[%s3 + $0x610] sm:$0xff] %v7265
  %7602 = vst.msk [vmem:[%s3 + $0x618] sm:$0xff] %vm350, %v7266
  %7603 = vst [vmem:[%s3 + $0x620] sm:$0xff] %v7267
  %7604 = vst.msk [vmem:[%s3 + $0x628] sm:$0xff] %vm350, %v7268
  %7605 = vst [vmem:[%s3 + $0x630] sm:$0xff] %v7269
  %7606 = vst.msk [vmem:[%s3 + $0x638] sm:$0xff] %vm350, %v7270
  %7607 = vst [vmem:[%s3 + $0x640] sm:$0xff] %v7271
  %7608 = vst.msk [vmem:[%s3 + $0x648] sm:$0xff] %vm350, %v7272
  %7609 = vst [vmem:[%s3 + $0x650] sm:$0xff] %v7273
  %7610 = vst.msk [vmem:[%s3 + $0x658] sm:$0xff] %vm350, %v7274
  %7611 = vst [vmem:[%s3 + $0x660] sm:$0xff] %v7275
  %7612 = vst.msk [vmem:[%s3 + $0x668] sm:$0xff] %vm350, %v7276
  %7613 = vst [vmem:[%s3 + $0x670] sm:$0xff] %v7277
  %7614 = vst.msk [vmem:[%s3 + $0x678] sm:$0xff] %vm350, %v7278
  %7615 = vst [vmem:[%s3 + $0x680] sm:$0xff] %v7279
  %7616 = vst.msk [vmem:[%s3 + $0x688] sm:$0xff] %vm350, %v7280
  %7617 = vst [vmem:[%s3 + $0x690] sm:$0xff] %v7281
  %7618 = vst.msk [vmem:[%s3 + $0x698] sm:$0xff] %vm350, %v7282
  %7619 = vst [vmem:[%s3 + $0x6a0] sm:$0xff] %v7283
  %7620 = vst.msk [vmem:[%s3 + $0x6a8] sm:$0xff] %vm350, %v7284
  %7621 = vst [vmem:[%s3 + $0x6b0] sm:$0xff] %v7285
  %7622 = vst.msk [vmem:[%s3 + $0x6b8] sm:$0xff] %vm350, %v7286
  %7623 = vst [vmem:[%s3 + $0x6c0] sm:$0xff] %v7287
  %7624 = vst.msk [vmem:[%s3 + $0x6c8] sm:$0xff] %vm350, %v7288
  %7625 = vst [vmem:[%s3 + $0x6d0] sm:$0xff] %v7289
  %7626 = vst.msk [vmem:[%s3 + $0x6d8] sm:$0xff] %vm350, %v7290
  %7627 = vst [vmem:[%s3 + $0x6e0] sm:$0xff] %v7291
  %7628 = vst.msk [vmem:[%s3 + $0x6e8] sm:$0xff] %vm350, %v7292
  %7629 = vst [vmem:[%s3 + $0x6f0] sm:$0xff] %v7293
  %7630 = vst.msk [vmem:[%s3 + $0x6f8] sm:$0xff] %vm350, %v7294
  %7631 = vst [vmem:[%s3 + $0x700] sm:$0xff] %v7295
  %7632 = vst.msk [vmem:[%s3 + $0x708] sm:$0xff] %vm350, %v7296
  %7633 = vst [vmem:[%s3 + $0x710] sm:$0xff] %v7297
  %7634 = vst.msk [vmem:[%s3 + $0x718] sm:$0xff] %vm350, %v7298
  %7635 = vst [vmem:[%s3 + $0x720] sm:$0xff] %v7299
  %7636 = vst.msk [vmem:[%s3 + $0x728] sm:$0xff] %vm350, %v7300
  %7637 = vst [vmem:[%s3 + $0x730] sm:$0xff] %v7301
  %7638 = vst.msk [vmem:[%s3 + $0x738] sm:$0xff] %vm350, %v7302
  %7639 = vst [vmem:[%s3 + $0x740] sm:$0xff] %v7303
  %7640 = vst.msk [vmem:[%s3 + $0x748] sm:$0xff] %vm350, %v7304
  %7641 = vst [vmem:[%s3 + $0x750] sm:$0xff] %v7305
  %7642 = vst.msk [vmem:[%s3 + $0x758] sm:$0xff] %vm350, %v7306
  %7643 = vst [vmem:[%s3 + $0x760] sm:$0xff] %v7307
  %7644 = vst.msk [vmem:[%s3 + $0x768] sm:$0xff] %vm350, %v7308
  %7645 = vst [vmem:[%s3 + $0x770] sm:$0xff] %v7309
  %7646 = vst.msk [vmem:[%s3 + $0x778] sm:$0xff] %vm350, %v7310
  %7647 = vst [vmem:[%s3 + $0x780] sm:$0xff] %v7311
  %7648 = vst.msk [vmem:[%s3 + $0x788] sm:$0xff] %vm350, %v7312
  %7649 = vst [vmem:[%s3 + $0x790] sm:$0xff] %v7313
  %7650 = vst.msk [vmem:[%s3 + $0x798] sm:$0xff] %vm350, %v7314
  %7651 = vst [vmem:[%s3 + $0x7a0] sm:$0xff] %v7315
  %7652 = vst.msk [vmem:[%s3 + $0x7a8] sm:$0xff] %vm350, %v7316
  %7653 = vst [vmem:[%s3 + $0x7b0] sm:$0xff] %v7317
  %7654 = vst.msk [vmem:[%s3 + $0x7b8] sm:$0xff] %vm350, %v7318
  %7655 = vst [vmem:[%s3 + $0x7c0] sm:$0xff] %v7319
  %7656 = vst.msk [vmem:[%s3 + $0x7c8] sm:$0xff] %vm350, %v7320
  %7657 = vst [vmem:[%s3 + $0x7d0] sm:$0xff] %v7321
  %7658 = vst.msk [vmem:[%s3 + $0x7d8] sm:$0xff] %vm350, %v7322
  %7659 = vst [vmem:[%s3 + $0x7e0] sm:$0xff] %v7323
  %7660 = vst.msk [vmem:[%s3 + $0x7e8] sm:$0xff] %vm350, %v7324
  %7661 = vst [vmem:[%s3 + $0x7f0] sm:$0xff] %v7325
  %7662 = vst.msk [vmem:[%s3 + $0x7f8] sm:$0xff] %vm350, %v7326
  %7663 = vst [vmem:[%s3 + $0x800] sm:$0xff] %v7327
  %7664 = vst.msk [vmem:[%s3 + $0x808] sm:$0xff] %vm350, %v7328
  %7665 = vst [vmem:[%s3 + $0x810] sm:$0xff] %v7329
  %7666 = vst.msk [vmem:[%s3 + $0x818] sm:$0xff] %vm350, %v7330
  %7667 = vst [vmem:[%s3 + $0x820] sm:$0xff] %v7331
  %7668 = vst.msk [vmem:[%s3 + $0x828] sm:$0xff] %vm350, %v7332
  %7669 = vst [vmem:[%s3 + $0x830] sm:$0xff] %v7333
  %7670 = vst.msk [vmem:[%s3 + $0x838] sm:$0xff] %vm350, %v7334
  %7671 = vst [vmem:[%s3 + $0x840] sm:$0xff] %v7335
  %7672 = vst.msk [vmem:[%s3 + $0x848] sm:$0xff] %vm350, %v7336
  %7673 = vst [vmem:[%s3 + $0x850] sm:$0xff] %v7337
  %7674 = vst.msk [vmem:[%s3 + $0x858] sm:$0xff] %vm350, %v7338
  %7675 = vst [vmem:[%s3 + $0x860] sm:$0xff] %v7339
  %7676 = vst.msk [vmem:[%s3 + $0x868] sm:$0xff] %vm350, %v7340
  %7677 = vst [vmem:[%s3 + $0x870] sm:$0xff] %v7341
  %7678 = vst.msk [vmem:[%s3 + $0x878] sm:$0xff] %vm350, %v7342
  %7679 = vst [vmem:[%s3 + $0x880] sm:$0xff] %v7343
  %7680 = vst.msk [vmem:[%s3 + $0x888] sm:$0xff] %vm350, %v7344
  %7681 = vst [vmem:[%s3 + $0x890] sm:$0xff] %v7345
  %7682 = vst.msk [vmem:[%s3 + $0x898] sm:$0xff] %vm350, %v7346
  %7683 = vst [vmem:[%s3 + $0x8a0] sm:$0xff] %v7347
  %7684 = vst.msk [vmem:[%s3 + $0x8a8] sm:$0xff] %vm350, %v7348
  %7685 = vst [vmem:[%s3 + $0x8b0] sm:$0xff] %v7349
  %7686 = vst.msk [vmem:[%s3 + $0x8b8] sm:$0xff] %vm350, %v7350
  %7687 = vst [vmem:[%s3 + $0x8c0] sm:$0xff] %v7351
  %7688 = vst.msk [vmem:[%s3 + $0x8c8] sm:$0xff] %vm350, %v7352
  %7689 = vst [vmem:[%s3 + $0x8d0] sm:$0xff] %v7353
  %7690 = vst.msk [vmem:[%s3 + $0x8d8] sm:$0xff] %vm350, %v7354
  %7691 = vst [vmem:[%s3 + $0x8e0] sm:$0xff] %v7355
  %7692 = vst.msk [vmem:[%s3 + $0x8e8] sm:$0xff] %vm350, %v7356
  %7693 = vst [vmem:[%s3 + $0x8f0] sm:$0xff] %v7357
  %7694 = vst.msk [vmem:[%s3 + $0x8f8] sm:$0xff] %vm350, %v7358
  %7695 = vst [vmem:[%s3 + $0x900] sm:$0xff] %v7359
  %7696 = vst.msk [vmem:[%s3 + $0x908] sm:$0xff] %vm350, %v7360
  %7697 = vst [vmem:[%s3 + $0x910] sm:$0xff] %v7361
  %7698 = vst.msk [vmem:[%s3 + $0x918] sm:$0xff] %vm350, %v7362
  %7699 = vst [vmem:[%s3 + $0x920] sm:$0xff] %v7363
  %7700 = vst.msk [vmem:[%s3 + $0x928] sm:$0xff] %vm350, %v7364
  %7701 = vst [vmem:[%s3 + $0x930] sm:$0xff] %v7365
  %7702 = vst.msk [vmem:[%s3 + $0x938] sm:$0xff] %vm350, %v7366
  %7703 = vst [vmem:[%s3 + $0x940] sm:$0xff] %v7367
  %7704 = vst.msk [vmem:[%s3 + $0x948] sm:$0xff] %vm350, %v7368
  %7705 = vst [vmem:[%s3 + $0x950] sm:$0xff] %v7369
  %7706 = vst.msk [vmem:[%s3 + $0x958] sm:$0xff] %vm350, %v7370
  %7707 = vst [vmem:[%s3 + $0x960] sm:$0xff] %v7371
  %7708 = vst.msk [vmem:[%s3 + $0x968] sm:$0xff] %vm350, %v7372
  %7709 = vst [vmem:[%s3 + $0x970] sm:$0xff] %v7373
  %7710 = vst.msk [vmem:[%s3 + $0x978] sm:$0xff] %vm350, %v7374
  %7711 = vst [vmem:[%s3 + $0x980] sm:$0xff] %v7375
  %7712 = vst.msk [vmem:[%s3 + $0x988] sm:$0xff] %vm350, %v7376
  %7713 = vst [vmem:[%s3 + $0x990] sm:$0xff] %v7377
  %7714 = vst.msk [vmem:[%s3 + $0x998] sm:$0xff] %vm350, %v7378
  %7715 = vst [vmem:[%s3 + $0x9a0] sm:$0xff] %v7379
  %7716 = vst.msk [vmem:[%s3 + $0x9a8] sm:$0xff] %vm350, %v7380
  %7717 = vst [vmem:[%s3 + $0x9b0] sm:$0xff] %v7381
  %7718 = vst.msk [vmem:[%s3 + $0x9b8] sm:$0xff] %vm350, %v7382
  %7719 = vst [vmem:[%s3 + $0x9c0] sm:$0xff] %v7383
  %7720 = vst.msk [vmem:[%s3 + $0x9c8] sm:$0xff] %vm350, %v7384
  %7721 = vst [vmem:[%s3 + $0x9d0] sm:$0xff] %v7385
  %7722 = vst.msk [vmem:[%s3 + $0x9d8] sm:$0xff] %vm350, %v7386
  %7723 = vst [vmem:[%s3 + $0x9e0] sm:$0xff] %v7387
  %7724 = vst.msk [vmem:[%s3 + $0x9e8] sm:$0xff] %vm350, %v7388
  %7725 = vst [vmem:[%s3 + $0x9f0] sm:$0xff] %v7389
  %7726 = vst.msk [vmem:[%s3 + $0x9f8] sm:$0xff] %vm350, %v7390
  %7727 = vst [vmem:[%s3 + $0xa00] sm:$0xff] %v7391
  %7728 = vst.msk [vmem:[%s3 + $0xa08] sm:$0xff] %vm350, %v7392
  %7729 = vst [vmem:[%s3 + $0xa10] sm:$0xff] %v7393
  %7730 = vst.msk [vmem:[%s3 + $0xa18] sm:$0xff] %vm350, %v7394
  %7731 = vst [vmem:[%s3 + $0xa20] sm:$0xff] %v7395
  %7732 = vst.msk [vmem:[%s3 + $0xa28] sm:$0xff] %vm350, %v7396
  %7733 = vst [vmem:[%s3 + $0xa30] sm:$0xff] %v7397
  %7734 = vst.msk [vmem:[%s3 + $0xa38] sm:$0xff] %vm350, %v7398
  %7735 = vst [vmem:[%s3 + $0xa40] sm:$0xff] %v7399
  %7736 = vst.msk [vmem:[%s3 + $0xa48] sm:$0xff] %vm350, %v7400
  %7737 = vst [vmem:[%s3 + $0xa50] sm:$0xff] %v7401
  %7738 = vst.msk [vmem:[%s3 + $0xa58] sm:$0xff] %vm350, %v7402
  %7739 = vst [vmem:[%s3 + $0xa60] sm:$0xff] %v7403
  %7740 = vst.msk [vmem:[%s3 + $0xa68] sm:$0xff] %vm350, %v7404
  %7741 = vst [vmem:[%s3 + $0xa70] sm:$0xff] %v7405
  %7742 = vst.msk [vmem:[%s3 + $0xa78] sm:$0xff] %vm350, %v7406
  // Predicated region
  $region14: #{tpu_custom_call.1} parent=0 // pred_check
    _
  $region15: #{tpu_custom_call.1} parent=0 // pred_check_branch
    %7744 = sbr.rel (0) target = $region17
  $region16: #{tpu_custom_call.1} parent=0 // pred_region
    _
  $region17: #{tpu_custom_call.1} parent=0 // pred_fallthru
    _
  // Predicated region
  $region18: #{tpu_custom_call.1} parent=0 // pred_check
    _
  $region19: #{tpu_custom_call.1} parent=0 // pred_check_branch
    %7746 = sbr.rel (0) target = $region21
  $region20: #{tpu_custom_call.1} parent=0 // pred_region
    _
  $region21: #{tpu_custom_call.1} parent=0 // pred_fallthru
    _

</llo_original>
